<compile_context>
chip_gen: v5e
topology: v5e:2x2
jax: 0.10.0
libtpu: 0.0.40
codegen_flags: <defaults>
</compile_context>

<pallas_src>
import functools

import jax
import jax.numpy as jnp
from jax import lax
from jax.experimental import pallas as pl
from jax.experimental.pallas import tpu as pltpu


def _basic_block_kernel(x_ref, w1_ref, b1_ref, w2_ref, b2_ref, o_ref,
                        xpad_ref, y1pad_ref, *, H, W, Cin, Cpad):
    """One batch element: fused conv1+bn1+relu -> conv2+bn2+add+relu."""
    HW = H * W

    def conv3x3(src_ref, w_ref):
        # 9 accumulating MXU matmuls on shifted windows of the padded source
        # (held in VMEM) -- no materialized im2col patch.
        acc = jnp.zeros((HW, Cpad), jnp.float32)
        for kh in range(3):
            for kw in range(3):
                k = kh * 3 + kw
                win = src_ref[kh:kh + H, kw:kw + W, :].reshape(HW, Cpad)
                acc = acc + jnp.dot(win, w_ref[k * Cpad:(k + 1) * Cpad, :],
                                    preferred_element_type=jnp.float32)
        return acc  # (HW, Cpad) f32

    # One-time zero init of the halo + channel-pad regions: they are never
    # written afterwards, and the interiors are fully overwritten each step,
    # so the zeros persist across the (sequential) batch grid.
    @pl.when(pl.program_id(0) == 0)
    def _init():
        xpad_ref[...] = jnp.zeros_like(xpad_ref)
        y1pad_ref[...] = jnp.zeros_like(y1pad_ref)

    # Stage 0: place this batch element into the padded-x scratch interior.
    xpad_ref[1:H + 1, 1:W + 1, 0:Cin] = x_ref[0]

    # Stage 1: conv1 (BN1 scale pre-folded into w1) + bias + ReLU, kept in VMEM.
    y1 = jnp.maximum(conv3x3(xpad_ref, w1_ref) + b1_ref[...], 0.0)
    y1pad_ref[1:H + 1, 1:W + 1, :] = (
        y1.astype(y1pad_ref.dtype).reshape(H, W, Cpad))

    # Stage 2: conv2 (BN2 scale pre-folded) + bias + identity add + ReLU.
    identity = xpad_ref[1:H + 1, 1:W + 1, :].reshape(HW, Cpad).astype(jnp.float32)
    y2 = conv3x3(y1pad_ref, w2_ref) + b2_ref[...] + identity
    o_ref[0] = jnp.maximum(y2, 0.0).astype(o_ref.dtype)


def _round_up(x, m):
    return ((x + m - 1) // m) * m


def _fold_bn(gamma, beta, mean, var, eps=1e-5):
    scale = gamma / jnp.sqrt(var + eps)
    bias = beta - mean * scale
    return scale, bias


def _prep_conv_bn(w_oihw, gamma, beta, mean, var, cpad):
    """OIHW conv weight + eval-mode BN -> (9*cpad, cpad) bf16 matrix, (1,cpad) f32 bias."""
    scale, bias = _fold_bn(gamma, beta, mean, var)
    w = jnp.transpose(w_oihw, (2, 3, 1, 0))              # OIHW -> (kh,kw,cin,cout)
    w = w * scale[None, None, None, :]                   # fold BN scale into weights
    kh, kw, cin, cout = w.shape
    w = jnp.pad(w, ((0, 0), (0, 0), (0, cpad - cin), (0, cpad - cout)))
    w = w.reshape(kh * kw * cpad, cpad).astype(jnp.bfloat16)
    b = jnp.pad(bias, (0, cpad - cout)).reshape(1, cpad).astype(jnp.float32)
    return w, b


def _const_spec(shape):
    """BlockSpec for a grid-invariant operand; single-buffered when supported."""
    index_map = lambda n: (0,) * len(shape)
    try:
        return pl.BlockSpec(shape, index_map, pipeline_mode=pl.Buffered(1))
    except Exception:  # older jax without pipeline_mode / Buffered
        return pl.BlockSpec(shape, index_map)


def basic_block_forward(x_nchw, params):
    """BasicBlock.forward with stride=1, downsample=None, eval-mode BN."""
    N, C, H, W = x_nchw.shape
    cout, cin = params["w1"].shape[0], params["w1"].shape[1]
    assert cin == C and cout == C, "kernel assumes in_channel == out_channel"
    assert params["w2"].shape[0] == C and params["w2"].shape[1] == C

    Cpad = _round_up(max(C, 128), 128)      # lane-dense channel width
    HW = H * W
    Hp, Wp = H + 2, W + 2

    x = jnp.transpose(x_nchw, (0, 2, 3, 1)).astype(jnp.bfloat16)   # NHWC, bf16

    w1, b1 = _prep_conv_bn(params["w1"], params["gamma1"], params["beta1"],
                           params["mean1"], params["var1"], Cpad)
    w2, b2 = _prep_conv_bn(params["w2"], params["gamma2"], params["beta2"],
                           params["mean2"], params["var2"], Cpad)

    kernel = functools.partial(_basic_block_kernel, H=H, W=W, Cin=C, Cpad=Cpad)

    out = pl.pallas_call(
        kernel,
        out_shape=jax.ShapeDtypeStruct((N, HW, Cpad), jnp.bfloat16),
        grid_spec=pltpu.PrefetchScalarGridSpec(
            num_scalar_prefetch=0,
            grid=(N,),
            in_specs=[
                pl.BlockSpec((1, H, W, C), lambda n: (n, 0, 0, 0)),
                _const_spec((9 * Cpad, Cpad)),
                _const_spec((1, Cpad)),
                _const_spec((9 * Cpad, Cpad)),
                _const_spec((1, Cpad)),
            ],
            out_specs=pl.BlockSpec((1, HW, Cpad), lambda n: (n, 0, 0)),
            scratch_shapes=[
                pltpu.VMEM((Hp, Wp, Cpad), jnp.bfloat16),   # padded x (halo + ch-pad)
                pltpu.VMEM((Hp, Wp, Cpad), jnp.bfloat16),   # padded y1 (never hits HBM)
            ]),
        # Sequential grid so the one-time zero-init of the scratch halos is
        # valid; measured "parallel" vs "arbitrary" impact is ~0 on 1-TC chips.
        compiler_params=pltpu.CompilerParams(
            dimension_semantics=("arbitrary",)),
    )(x, w1, b1, w2, b2)

    # Model-boundary layout conversion only (drop lane padding, NHWC -> NCHW).
    out = out[:, :, :C].reshape(N, H, W, C)
    return jnp.transpose(out, (0, 3, 1, 2)).astype(jnp.float32)


def _reference_forward(x_nchw, params):
    """Plain-JAX f32 reference (eval-mode BN) for a correctness cross-check."""
    def conv(x, w_oihw):
        return lax.conv_general_dilated(
            x, w_oihw, window_strides=(1, 1), padding=((1, 1), (1, 1)),
            dimension_numbers=("NCHW", "OIHW", "NCHW"))

    def bn(x, g, b, m, v, eps=1e-5):
        g, b, m, v = (a.reshape(1, -1, 1, 1) for a in (g, b, m, v))
        return (x - m) / jnp.sqrt(v + eps) * g + b

    identity = x_nchw
    out = conv(x_nchw, params["w1"])
    out = bn(out, params["gamma1"], params["beta1"], params["mean1"], params["var1"])
    out = jnp.maximum(out, 0.0)
    out = conv(out, params["w2"])
    out = bn(out, params["gamma2"], params["beta2"], params["mean2"], params["var2"])
    out = out + identity
    return jnp.maximum(out, 0.0)


if __name__ == "__main__":
    N, C, Hs, Ws = 2, 4, 16, 16  # in_channel = out_channel = 4, stride=1
    key = jax.random.PRNGKey(0)
    keys = jax.random.split(key, 9)

    x = jax.random.normal(keys[0], (N, C, Hs, Ws), jnp.float32)
    params = {
        "w1": jax.random.normal(keys[1], (C, C, 3, 3), jnp.float32) * 0.1,
        "w2": jax.random.normal(keys[2], (C, C, 3, 3), jnp.float32) * 0.1,
        "gamma1": jax.random.uniform(keys[3], (C,), jnp.float32, 0.5, 1.5),
        "beta1": jax.random.normal(keys[4], (C,), jnp.float32) * 0.1,
        "mean1": jax.random.normal(keys[5], (C,), jnp.float32) * 0.1,
        "var1": jax.random.uniform(keys[6], (C,), jnp.float32, 0.5, 1.5),
        "gamma2": jax.random.uniform(keys[7], (C,), jnp.float32, 0.5, 1.5),
        "beta2": jax.random.normal(keys[8], (C,), jnp.float32) * 0.1,
        "mean2": jnp.zeros((C,), jnp.float32),
        "var2": jnp.ones((C,), jnp.float32),
    }

    out = jax.block_until_ready(basic_block_forward(x, params))
    ref = jax.block_until_ready(_reference_forward(x, params))

    assert out.shape == (N, C, Hs, Ws)
    max_err = float(jnp.max(jnp.abs(out - ref)))
    mean_err = float(jnp.mean(jnp.abs(out - ref)))
    # bf16 activations/weights/output (f32 accumulation) vs. pure-f32 reference.
    assert jnp.allclose(out, ref, atol=1e-1, rtol=1e-1), (max_err, mean_err)
    assert mean_err < 3e-2, (max_err, mean_err)
    print("KERNEL_OK")
</pallas_src>

<mosaic_0001>
module attributes {stable_mosaic.version = 11 : i64} {
  func.func @_basic_block_kernel(%arg0: i32, %arg1: memref<1x16x16x4xbf16, #tpu.memory_space<vmem>>, %arg2: memref<1152x128xbf16, #tpu.memory_space<vmem>>, %arg3: memref<1x128xf32, #tpu.memory_space<vmem>>, %arg4: memref<1152x128xbf16, #tpu.memory_space<vmem>>, %arg5: memref<1x128xf32, #tpu.memory_space<vmem>>, %arg6: memref<1x256x128xbf16, #tpu.memory_space<vmem>>, %arg7: memref<18x18x128xbf16, #tpu.memory_space<vmem>>, %arg8: memref<18x18x128xbf16, #tpu.memory_space<vmem>>) attributes {dimension_semantics = [#tpu.dimension_semantics<arbitrary>], iteration_bounds = array<i64: 2>, scalar_prefetch = 0 : i64, scratch_operands = 2 : i64, tpu.core_type = #tpu.core_type<tc>, window_params = [{transform_indices = @transform_0, window_bounds = array<i64: 1, 16, 16, 4>}, {pipeline_mode = #tpu.pipeline_mode<synchronous>, transform_indices = @transform_1, window_bounds = array<i64: 1152, 128>}, {pipeline_mode = #tpu.pipeline_mode<synchronous>, transform_indices = @transform_2, window_bounds = array<i64: 1, 128>}, {pipeline_mode = #tpu.pipeline_mode<synchronous>, transform_indices = @transform_3, window_bounds = array<i64: 1152, 128>}, {pipeline_mode = #tpu.pipeline_mode<synchronous>, transform_indices = @transform_4, window_bounds = array<i64: 1, 128>}, {transform_indices = @transform_5, window_bounds = array<i64: 1, 256, 128>}]} {
    %c0_i32 = arith.constant 0 : i32
    %0 = arith.cmpi eq, %arg0, %c0_i32 : i32
    %1 = arith.extui %0 : i1 to i32
    %c0_i32_0 = arith.constant 0 : i32
    %2 = arith.cmpi ne, %1, %c0_i32_0 : i32
    scf.if %2 {
      %cst_121 = arith.constant 0.000000e+00 : bf16
      %119 = vector.broadcast %cst_121 : bf16 to vector<18x18x128xbf16>
      %c0_122 = arith.constant 0 : index
      %c0_123 = arith.constant 0 : index
      %c0_124 = arith.constant 0 : index
      %120 = vector.load %arg7[%c0_122, %c0_123, %c0_124] : memref<18x18x128xbf16, #tpu.memory_space<vmem>>, vector<18x18x128xbf16>
      tpu.vector_store %arg7[%c0_122, %c0_123, %c0_124], %119 {strides = array<i32>} : memref<18x18x128xbf16, #tpu.memory_space<vmem>>, vector<18x18x128xbf16>,
      %cst_125 = arith.constant 0.000000e+00 : bf16
      %121 = vector.broadcast %cst_125 : bf16 to vector<18x18x128xbf16>
      %c0_126 = arith.constant 0 : index
      %c0_127 = arith.constant 0 : index
      %c0_128 = arith.constant 0 : index
      %122 = vector.load %arg8[%c0_126, %c0_127, %c0_128] : memref<18x18x128xbf16, #tpu.memory_space<vmem>>, vector<18x18x128xbf16>
      tpu.vector_store %arg8[%c0_126, %c0_127, %c0_128], %121 {strides = array<i32>} : memref<18x18x128xbf16, #tpu.memory_space<vmem>>, vector<18x18x128xbf16>,
    } else {
    }
    %c0 = arith.constant 0 : index
    %c0_1 = arith.constant 0 : index
    %c0_2 = arith.constant 0 : index
    %c0_3 = arith.constant 0 : index
    %3 = vector.load %arg1[%c0, %c0_1, %c0_2, %c0_3] : memref<1x16x16x4xbf16, #tpu.memory_space<vmem>>, vector<1x16x16x4xbf16>
    %4 = vector.shape_cast %3 : vector<1x16x16x4xbf16> to vector<16x16x4xbf16>
    %c1 = arith.constant 1 : index
    %c1_4 = arith.constant 1 : index
    %c0_5 = arith.constant 0 : index
    %5 = vector.load %arg7[%c1, %c1_4, %c0_5] : memref<18x18x128xbf16, #tpu.memory_space<vmem>>, vector<16x16x4xbf16>
    tpu.vector_store %arg7[%c1, %c1_4, %c0_5], %4 {strides = array<i32>} : memref<18x18x128xbf16, #tpu.memory_space<vmem>>, vector<16x16x4xbf16>,
    %cst = arith.constant 0.000000e+00 : f32
    %6 = vector.broadcast %cst : f32 to vector<256x128xf32>
    %c0_6 = arith.constant 0 : index
    %c0_7 = arith.constant 0 : index
    %c0_8 = arith.constant 0 : index
    %7 = vector.load %arg7[%c0_6, %c0_7, %c0_8] : memref<18x18x128xbf16, #tpu.memory_space<vmem>>, vector<16x16x128xbf16>
    %8 = vector.shape_cast %7 : vector<16x16x128xbf16> to vector<256x128xbf16>
    %c0_9 = arith.constant 0 : index
    %c0_10 = arith.constant 0 : index
    %9 = vector.load %arg2[%c0_9, %c0_10] : memref<1152x128xbf16, #tpu.memory_space<vmem>>, vector<128x128xbf16>
    %cst_11 = arith.constant dense<0.000000e+00> : vector<256x128xf32>
    %10 = tpu.matmul %8, %9, %cst_11 {dimension_numbers = #tpu.dot_dimension_numbers<[1], [0], [0], [1], [0, 0, 1, 1], [], []>} : vector<256x128xbf16>, vector<128x128xbf16>, vector<256x128xf32> -> vector<256x128xf32>
    %11 = arith.addf %6, %10 : vector<256x128xf32>
    %c0_12 = arith.constant 0 : index
    %c1_13 = arith.constant 1 : index
    %c0_14 = arith.constant 0 : index
    %12 = vector.load %arg7[%c0_12, %c1_13, %c0_14] : memref<18x18x128xbf16, #tpu.memory_space<vmem>>, vector<16x16x128xbf16>
    %13 = vector.shape_cast %12 : vector<16x16x128xbf16> to vector<256x128xbf16>
    %c128 = arith.constant 128 : index
    %c0_15 = arith.constant 0 : index
    %14 = vector.load %arg2[%c128, %c0_15] : memref<1152x128xbf16, #tpu.memory_space<vmem>>, vector<128x128xbf16>
    %cst_16 = arith.constant dense<0.000000e+00> : vector<256x128xf32>
    %15 = tpu.matmul %13, %14, %cst_16 {dimension_numbers = #tpu.dot_dimension_numbers<[1], [0], [0], [1], [0, 0, 1, 1], [], []>} : vector<256x128xbf16>, vector<128x128xbf16>, vector<256x128xf32> -> vector<256x128xf32>
    %16 = arith.addf %11, %15 : vector<256x128xf32>
    %c0_17 = arith.constant 0 : index
    %c2 = arith.constant 2 : index
    %c0_18 = arith.constant 0 : index
    %17 = vector.load %arg7[%c0_17, %c2, %c0_18] : memref<18x18x128xbf16, #tpu.memory_space<vmem>>, vector<16x16x128xbf16>
    %18 = vector.shape_cast %17 : vector<16x16x128xbf16> to vector<256x128xbf16>
    %c256 = arith.constant 256 : index
    %c0_19 = arith.constant 0 : index
    %19 = vector.load %arg2[%c256, %c0_19] : memref<1152x128xbf16, #tpu.memory_space<vmem>>, vector<128x128xbf16>
    %cst_20 = arith.constant dense<0.000000e+00> : vector<256x128xf32>
    %20 = tpu.matmul %18, %19, %cst_20 {dimension_numbers = #tpu.dot_dimension_numbers<[1], [0], [0], [1], [0, 0, 1, 1], [], []>} : vector<256x128xbf16>, vector<128x128xbf16>, vector<256x128xf32> -> vector<256x128xf32>
    %21 = arith.addf %16, %20 : vector<256x128xf32>
    %c1_21 = arith.constant 1 : index
    %c0_22 = arith.constant 0 : index
    %c0_23 = arith.constant 0 : index
    %22 = vector.load %arg7[%c1_21, %c0_22, %c0_23] : memref<18x18x128xbf16, #tpu.memory_space<vmem>>, vector<16x16x128xbf16>
    %23 = vector.shape_cast %22 : vector<16x16x128xbf16> to vector<256x128xbf16>
    %c384 = arith.constant 384 : index
    %c0_24 = arith.constant 0 : index
    %24 = vector.load %arg2[%c384, %c0_24] : memref<1152x128xbf16, #tpu.memory_space<vmem>>, vector<128x128xbf16>
    %cst_25 = arith.constant dense<0.000000e+00> : vector<256x128xf32>
    %25 = tpu.matmul %23, %24, %cst_25 {dimension_numbers = #tpu.dot_dimension_numbers<[1], [0], [0], [1], [0, 0, 1, 1], [], []>} : vector<256x128xbf16>, vector<128x128xbf16>, vector<256x128xf32> -> vector<256x128xf32>
    %26 = arith.addf %21, %25 : vector<256x128xf32>
    %c1_26 = arith.constant 1 : index
    %c1_27 = arith.constant 1 : index
    %c0_28 = arith.constant 0 : index
    %27 = vector.load %arg7[%c1_26, %c1_27, %c0_28] : memref<18x18x128xbf16, #tpu.memory_space<vmem>>, vector<16x16x128xbf16>
    %28 = vector.shape_cast %27 : vector<16x16x128xbf16> to vector<256x128xbf16>
    %c512 = arith.constant 512 : index
    %c0_29 = arith.constant 0 : index
    %29 = vector.load %arg2[%c512, %c0_29] : memref<1152x128xbf16, #tpu.memory_space<vmem>>, vector<128x128xbf16>
    %cst_30 = arith.constant dense<0.000000e+00> : vector<256x128xf32>
    %30 = tpu.matmul %28, %29, %cst_30 {dimension_numbers = #tpu.dot_dimension_numbers<[1], [0], [0], [1], [0, 0, 1, 1], [], []>} : vector<256x128xbf16>, vector<128x128xbf16>, vector<256x128xf32> -> vector<256x128xf32>
    %31 = arith.addf %26, %30 : vector<256x128xf32>
    %c1_31 = arith.constant 1 : index
    %c2_32 = arith.constant 2 : index
    %c0_33 = arith.constant 0 : index
    %32 = vector.load %arg7[%c1_31, %c2_32, %c0_33] : memref<18x18x128xbf16, #tpu.memory_space<vmem>>, vector<16x16x128xbf16>
    %33 = vector.shape_cast %32 : vector<16x16x128xbf16> to vector<256x128xbf16>
    %c640 = arith.constant 640 : index
    %c0_34 = arith.constant 0 : index
    %34 = vector.load %arg2[%c640, %c0_34] : memref<1152x128xbf16, #tpu.memory_space<vmem>>, vector<128x128xbf16>
    %cst_35 = arith.constant dense<0.000000e+00> : vector<256x128xf32>
    %35 = tpu.matmul %33, %34, %cst_35 {dimension_numbers = #tpu.dot_dimension_numbers<[1], [0], [0], [1], [0, 0, 1, 1], [], []>} : vector<256x128xbf16>, vector<128x128xbf16>, vector<256x128xf32> -> vector<256x128xf32>
    %36 = arith.addf %31, %35 : vector<256x128xf32>
    %c2_36 = arith.constant 2 : index
    %c0_37 = arith.constant 0 : index
    %c0_38 = arith.constant 0 : index
    %37 = vector.load %arg7[%c2_36, %c0_37, %c0_38] : memref<18x18x128xbf16, #tpu.memory_space<vmem>>, vector<16x16x128xbf16>
    %38 = vector.shape_cast %37 : vector<16x16x128xbf16> to vector<256x128xbf16>
    %c768 = arith.constant 768 : index
    %c0_39 = arith.constant 0 : index
    %39 = vector.load %arg2[%c768, %c0_39] : memref<1152x128xbf16, #tpu.memory_space<vmem>>, vector<128x128xbf16>
    %cst_40 = arith.constant dense<0.000000e+00> : vector<256x128xf32>
    %40 = tpu.matmul %38, %39, %cst_40 {dimension_numbers = #tpu.dot_dimension_numbers<[1], [0], [0], [1], [0, 0, 1, 1], [], []>} : vector<256x128xbf16>, vector<128x128xbf16>, vector<256x128xf32> -> vector<256x128xf32>
    %41 = arith.addf %36, %40 : vector<256x128xf32>
    %c2_41 = arith.constant 2 : index
    %c1_42 = arith.constant 1 : index
    %c0_43 = arith.constant 0 : index
    %42 = vector.load %arg7[%c2_41, %c1_42, %c0_43] : memref<18x18x128xbf16, #tpu.memory_space<vmem>>, vector<16x16x128xbf16>
    %43 = vector.shape_cast %42 : vector<16x16x128xbf16> to vector<256x128xbf16>
    %c896 = arith.constant 896 : index
    %c0_44 = arith.constant 0 : index
    %44 = vector.load %arg2[%c896, %c0_44] : memref<1152x128xbf16, #tpu.memory_space<vmem>>, vector<128x128xbf16>
    %cst_45 = arith.constant dense<0.000000e+00> : vector<256x128xf32>
    %45 = tpu.matmul %43, %44, %cst_45 {dimension_numbers = #tpu.dot_dimension_numbers<[1], [0], [0], [1], [0, 0, 1, 1], [], []>} : vector<256x128xbf16>, vector<128x128xbf16>, vector<256x128xf32> -> vector<256x128xf32>
    %46 = arith.addf %41, %45 : vector<256x128xf32>
    %c2_46 = arith.constant 2 : index
    %c2_47 = arith.constant 2 : index
    %c0_48 = arith.constant 0 : index
    %47 = vector.load %arg7[%c2_46, %c2_47, %c0_48] : memref<18x18x128xbf16, #tpu.memory_space<vmem>>, vector<16x16x128xbf16>
    %48 = vector.shape_cast %47 : vector<16x16x128xbf16> to vector<256x128xbf16>
    %c1024 = arith.constant 1024 : index
    %c0_49 = arith.constant 0 : index
    %49 = vector.load %arg2[%c1024, %c0_49] : memref<1152x128xbf16, #tpu.memory_space<vmem>>, vector<128x128xbf16>
    %cst_50 = arith.constant dense<0.000000e+00> : vector<256x128xf32>
    %50 = tpu.matmul %48, %49, %cst_50 {dimension_numbers = #tpu.dot_dimension_numbers<[1], [0], [0], [1], [0, 0, 1, 1], [], []>} : vector<256x128xbf16>, vector<128x128xbf16>, vector<256x128xf32> -> vector<256x128xf32>
    %51 = arith.addf %46, %50 : vector<256x128xf32>
    %c0_51 = arith.constant 0 : index
    %c0_52 = arith.constant 0 : index
    %52 = vector.load %arg3[%c0_51, %c0_52] : memref<1x128xf32, #tpu.memory_space<vmem>>, vector<1x128xf32>
    %53 = vector.broadcast %52 : vector<1x128xf32> to vector<256x128xf32>
    %54 = arith.addf %51, %53 : vector<256x128xf32>
    %cst_53 = arith.constant 0.000000e+00 : f32
    %55 = vector.broadcast %cst_53 : f32 to vector<256x128xf32>
    %56 = arith.maximumf %54, %55 : vector<256x128xf32>
    %57 = arith.truncf %56 : vector<256x128xf32> to vector<256x128xbf16>
    %58 = vector.shape_cast %57 : vector<256x128xbf16> to vector<16x16x128xbf16>
    %c1_54 = arith.constant 1 : index
    %c1_55 = arith.constant 1 : index
    %c0_56 = arith.constant 0 : index
    %59 = vector.load %arg8[%c1_54, %c1_55, %c0_56] : memref<18x18x128xbf16, #tpu.memory_space<vmem>>, vector<16x16x128xbf16>
    tpu.vector_store %arg8[%c1_54, %c1_55, %c0_56], %58 {strides = array<i32>} : memref<18x18x128xbf16, #tpu.memory_space<vmem>>, vector<16x16x128xbf16>,
    %c1_57 = arith.constant 1 : index
    %c1_58 = arith.constant 1 : index
    %c0_59 = arith.constant 0 : index
    %60 = vector.load %arg7[%c1_57, %c1_58, %c0_59] : memref<18x18x128xbf16, #tpu.memory_space<vmem>>, vector<16x16x128xbf16>
    %61 = vector.shape_cast %60 : vector<16x16x128xbf16> to vector<256x128xbf16>
    %62 = arith.extf %61 : vector<256x128xbf16> to vector<256x128xf32>
    %cst_60 = arith.constant 0.000000e+00 : f32
    %63 = vector.broadcast %cst_60 : f32 to vector<256x128xf32>
    %c0_61 = arith.constant 0 : index
    %c0_62 = arith.constant 0 : index
    %c0_63 = arith.constant 0 : index
    %64 = vector.load %arg8[%c0_61, %c0_62, %c0_63] : memref<18x18x128xbf16, #tpu.memory_space<vmem>>, vector<16x16x128xbf16>
    %65 = vector.shape_cast %64 : vector<16x16x128xbf16> to vector<256x128xbf16>
    %c0_64 = arith.constant 0 : index
    %c0_65 = arith.constant 0 : index
    %66 = vector.load %arg4[%c0_64, %c0_65] : memref<1152x128xbf16, #tpu.memory_space<vmem>>, vector<128x128xbf16>
    %cst_66 = arith.constant dense<0.000000e+00> : vector<256x128xf32>
    %67 = tpu.matmul %65, %66, %cst_66 {dimension_numbers = #tpu.dot_dimension_numbers<[1], [0], [0], [1], [0, 0, 1, 1], [], []>} : vector<256x128xbf16>, vector<128x128xbf16>, vector<256x128xf32> -> vector<256x128xf32>
    %68 = arith.addf %63, %67 : vector<256x128xf32>
    %c0_67 = arith.constant 0 : index
    %c1_68 = arith.constant 1 : index
    %c0_69 = arith.constant 0 : index
    %69 = vector.load %arg8[%c0_67, %c1_68, %c0_69] : memref<18x18x128xbf16, #tpu.memory_space<vmem>>, vector<16x16x128xbf16>
    %70 = vector.shape_cast %69 : vector<16x16x128xbf16> to vector<256x128xbf16>
    %c128_70 = arith.constant 128 : index
    %c0_71 = arith.constant 0 : index
    %71 = vector.load %arg4[%c128_70, %c0_71] : memref<1152x128xbf16, #tpu.memory_space<vmem>>, vector<128x128xbf16>
    %cst_72 = arith.constant dense<0.000000e+00> : vector<256x128xf32>
    %72 = tpu.matmul %70, %71, %cst_72 {dimension_numbers = #tpu.dot_dimension_numbers<[1], [0], [0], [1], [0, 0, 1, 1], [], []>} : vector<256x128xbf16>, vector<128x128xbf16>, vector<256x128xf32> -> vector<256x128xf32>
    %73 = arith.addf %68, %72 : vector<256x128xf32>
    %c0_73 = arith.constant 0 : index
    %c2_74 = arith.constant 2 : index
    %c0_75 = arith.constant 0 : index
    %74 = vector.load %arg8[%c0_73, %c2_74, %c0_75] : memref<18x18x128xbf16, #tpu.memory_space<vmem>>, vector<16x16x128xbf16>
    %75 = vector.shape_cast %74 : vector<16x16x128xbf16> to vector<256x128xbf16>
    %c256_76 = arith.constant 256 : index
    %c0_77 = arith.constant 0 : index
    %76 = vector.load %arg4[%c256_76, %c0_77] : memref<1152x128xbf16, #tpu.memory_space<vmem>>, vector<128x128xbf16>
    %cst_78 = arith.constant dense<0.000000e+00> : vector<256x128xf32>
    %77 = tpu.matmul %75, %76, %cst_78 {dimension_numbers = #tpu.dot_dimension_numbers<[1], [0], [0], [1], [0, 0, 1, 1], [], []>} : vector<256x128xbf16>, vector<128x128xbf16>, vector<256x128xf32> -> vector<256x128xf32>
    %78 = arith.addf %73, %77 : vector<256x128xf32>
    %c1_79 = arith.constant 1 : index
    %c0_80 = arith.constant 0 : index
    %c0_81 = arith.constant 0 : index
    %79 = vector.load %arg8[%c1_79, %c0_80, %c0_81] : memref<18x18x128xbf16, #tpu.memory_space<vmem>>, vector<16x16x128xbf16>
    %80 = vector.shape_cast %79 : vector<16x16x128xbf16> to vector<256x128xbf16>
    %c384_82 = arith.constant 384 : index
    %c0_83 = arith.constant 0 : index
    %81 = vector.load %arg4[%c384_82, %c0_83] : memref<1152x128xbf16, #tpu.memory_space<vmem>>, vector<128x128xbf16>
    %cst_84 = arith.constant dense<0.000000e+00> : vector<256x128xf32>
    %82 = tpu.matmul %80, %81, %cst_84 {dimension_numbers = #tpu.dot_dimension_numbers<[1], [0], [0], [1], [0, 0, 1, 1], [], []>} : vector<256x128xbf16>, vector<128x128xbf16>, vector<256x128xf32> -> vector<256x128xf32>
    %83 = arith.addf %78, %82 : vector<256x128xf32>
    %c1_85 = arith.constant 1 : index
    %c1_86 = arith.constant 1 : index
    %c0_87 = arith.constant 0 : index
    %84 = vector.load %arg8[%c1_85, %c1_86, %c0_87] : memref<18x18x128xbf16, #tpu.memory_space<vmem>>, vector<16x16x128xbf16>
    %85 = vector.shape_cast %84 : vector<16x16x128xbf16> to vector<256x128xbf16>
    %c512_88 = arith.constant 512 : index
    %c0_89 = arith.constant 0 : index
    %86 = vector.load %arg4[%c512_88, %c0_89] : memref<1152x128xbf16, #tpu.memory_space<vmem>>, vector<128x128xbf16>
    %cst_90 = arith.constant dense<0.000000e+00> : vector<256x128xf32>
    %87 = tpu.matmul %85, %86, %cst_90 {dimension_numbers = #tpu.dot_dimension_numbers<[1], [0], [0], [1], [0, 0, 1, 1], [], []>} : vector<256x128xbf16>, vector<128x128xbf16>, vector<256x128xf32> -> vector<256x128xf32>
    %88 = arith.addf %83, %87 : vector<256x128xf32>
    %c1_91 = arith.constant 1 : index
    %c2_92 = arith.constant 2 : index
    %c0_93 = arith.constant 0 : index
    %89 = vector.load %arg8[%c1_91, %c2_92, %c0_93] : memref<18x18x128xbf16, #tpu.memory_space<vmem>>, vector<16x16x128xbf16>
    %90 = vector.shape_cast %89 : vector<16x16x128xbf16> to vector<256x128xbf16>
    %c640_94 = arith.constant 640 : index
    %c0_95 = arith.constant 0 : index
    %91 = vector.load %arg4[%c640_94, %c0_95] : memref<1152x128xbf16, #tpu.memory_space<vmem>>, vector<128x128xbf16>
    %cst_96 = arith.constant dense<0.000000e+00> : vector<256x128xf32>
    %92 = tpu.matmul %90, %91, %cst_96 {dimension_numbers = #tpu.dot_dimension_numbers<[1], [0], [0], [1], [0, 0, 1, 1], [], []>} : vector<256x128xbf16>, vector<128x128xbf16>, vector<256x128xf32> -> vector<256x128xf32>
    %93 = arith.addf %88, %92 : vector<256x128xf32>
    %c2_97 = arith.constant 2 : index
    %c0_98 = arith.constant 0 : index
    %c0_99 = arith.constant 0 : index
    %94 = vector.load %arg8[%c2_97, %c0_98, %c0_99] : memref<18x18x128xbf16, #tpu.memory_space<vmem>>, vector<16x16x128xbf16>
    %95 = vector.shape_cast %94 : vector<16x16x128xbf16> to vector<256x128xbf16>
    %c768_100 = arith.constant 768 : index
    %c0_101 = arith.constant 0 : index
    %96 = vector.load %arg4[%c768_100, %c0_101] : memref<1152x128xbf16, #tpu.memory_space<vmem>>, vector<128x128xbf16>
    %cst_102 = arith.constant dense<0.000000e+00> : vector<256x128xf32>
    %97 = tpu.matmul %95, %96, %cst_102 {dimension_numbers = #tpu.dot_dimension_numbers<[1], [0], [0], [1], [0, 0, 1, 1], [], []>} : vector<256x128xbf16>, vector<128x128xbf16>, vector<256x128xf32> -> vector<256x128xf32>
    %98 = arith.addf %93, %97 : vector<256x128xf32>
    %c2_103 = arith.constant 2 : index
    %c1_104 = arith.constant 1 : index
    %c0_105 = arith.constant 0 : index
    %99 = vector.load %arg8[%c2_103, %c1_104, %c0_105] : memref<18x18x128xbf16, #tpu.memory_space<vmem>>, vector<16x16x128xbf16>
    %100 = vector.shape_cast %99 : vector<16x16x128xbf16> to vector<256x128xbf16>
    %c896_106 = arith.constant 896 : index
    %c0_107 = arith.constant 0 : index
    %101 = vector.load %arg4[%c896_106, %c0_107] : memref<1152x128xbf16, #tpu.memory_space<vmem>>, vector<128x128xbf16>
    %cst_108 = arith.constant dense<0.000000e+00> : vector<256x128xf32>
    %102 = tpu.matmul %100, %101, %cst_108 {dimension_numbers = #tpu.dot_dimension_numbers<[1], [0], [0], [1], [0, 0, 1, 1], [], []>} : vector<256x128xbf16>, vector<128x128xbf16>, vector<256x128xf32> -> vector<256x128xf32>
    %103 = arith.addf %98, %102 : vector<256x128xf32>
    %c2_109 = arith.constant 2 : index
    %c2_110 = arith.constant 2 : index
    %c0_111 = arith.constant 0 : index
    %104 = vector.load %arg8[%c2_109, %c2_110, %c0_111] : memref<18x18x128xbf16, #tpu.memory_space<vmem>>, vector<16x16x128xbf16>
    %105 = vector.shape_cast %104 : vector<16x16x128xbf16> to vector<256x128xbf16>
    %c1024_112 = arith.constant 1024 : index
    %c0_113 = arith.constant 0 : index
    %106 = vector.load %arg4[%c1024_112, %c0_113] : memref<1152x128xbf16, #tpu.memory_space<vmem>>, vector<128x128xbf16>
    %cst_114 = arith.constant dense<0.000000e+00> : vector<256x128xf32>
    %107 = tpu.matmul %105, %106, %cst_114 {dimension_numbers = #tpu.dot_dimension_numbers<[1], [0], [0], [1], [0, 0, 1, 1], [], []>} : vector<256x128xbf16>, vector<128x128xbf16>, vector<256x128xf32> -> vector<256x128xf32>
    %108 = arith.addf %103, %107 : vector<256x128xf32>
    %c0_115 = arith.constant 0 : index
    %c0_116 = arith.constant 0 : index
    %109 = vector.load %arg5[%c0_115, %c0_116] : memref<1x128xf32, #tpu.memory_space<vmem>>, vector<1x128xf32>
    %110 = vector.broadcast %109 : vector<1x128xf32> to vector<256x128xf32>
    %111 = arith.addf %108, %110 : vector<256x128xf32>
    %112 = arith.addf %111, %62 : vector<256x128xf32>
    %cst_117 = arith.constant 0.000000e+00 : f32
    %113 = vector.broadcast %cst_117 : f32 to vector<256x128xf32>
    %114 = arith.maximumf %112, %113 : vector<256x128xf32>
    %115 = arith.truncf %114 : vector<256x128xf32> to vector<256x128xbf16>
    %c0_118 = arith.constant 0 : index
    %c0_119 = arith.constant 0 : index
    %c0_120 = arith.constant 0 : index
    %116 = vector.load %arg6[%c0_118, %c0_119, %c0_120] : memref<1x256x128xbf16, #tpu.memory_space<vmem>>, vector<1x256x128xbf16>
    %117 = vector.shape_cast %116 : vector<1x256x128xbf16> to vector<256x128xbf16>
    %118 = vector.shape_cast %115 : vector<256x128xbf16> to vector<1x256x128xbf16>
    tpu.vector_store %arg6[%c0_118, %c0_119, %c0_120], %118 {strides = array<i32>} : memref<1x256x128xbf16, #tpu.memory_space<vmem>>, vector<1x256x128xbf16>,
    return
  }
  func.func @transform_0(%arg0: i32) -> (i32, i32, i32, i32) {
    %c0_i32 = arith.constant 0 : i32
    %c0_i32_0 = arith.constant 0 : i32
    %c0_i32_1 = arith.constant 0 : i32
    %c0_i32_2 = arith.constant 0 : i32
    return %arg0, %c0_i32, %c0_i32_0, %c0_i32_1 : i32, i32, i32, i32
  }
  func.func @transform_1(%arg0: i32) -> (i32, i32) {
    %c0_i32 = arith.constant 0 : i32
    %c0_i32_0 = arith.constant 0 : i32
    %c0_i32_1 = arith.constant 0 : i32
    return %c0_i32, %c0_i32_0 : i32, i32
  }
  func.func @transform_2(%arg0: i32) -> (i32, i32) {
    %c0_i32 = arith.constant 0 : i32
    %c0_i32_0 = arith.constant 0 : i32
    %c0_i32_1 = arith.constant 0 : i32
    return %c0_i32, %c0_i32_0 : i32, i32
  }
  func.func @transform_3(%arg0: i32) -> (i32, i32) {
    %c0_i32 = arith.constant 0 : i32
    %c0_i32_0 = arith.constant 0 : i32
    %c0_i32_1 = arith.constant 0 : i32
    return %c0_i32, %c0_i32_0 : i32, i32
  }
  func.func @transform_4(%arg0: i32) -> (i32, i32) {
    %c0_i32 = arith.constant 0 : i32
    %c0_i32_0 = arith.constant 0 : i32
    %c0_i32_1 = arith.constant 0 : i32
    return %c0_i32, %c0_i32_0 : i32, i32
  }
  func.func @transform_5(%arg0: i32) -> (i32, i32, i32) {
    %c0_i32 = arith.constant 0 : i32
    %c0_i32_0 = arith.constant 0 : i32
    %c0_i32_1 = arith.constant 0 : i32
    return %arg0, %c0_i32, %c0_i32_0 : i32, i32, i32
  }
}

</mosaic_0001>

<llo_original>
// kernel: tpu_custom_call.1
$region0: #{tpu_custom_call.1}
  #allocation0 [shape = 'u32[]', space=smem, size = 0x4, offset = 0x4, fixed_abs, tag = 'smem constant byte address 0x4 - core index']
  #allocation1 [shape = 'u32[72,128]{1,0:T(1,128)}', space=vmem, size = 0x9000, scoped, tag = 'internal scratch']
  #allocation2 [shape = 'bf16[18,18,128]{2,1,0:T(8,128)(2,1)}', space=vmem, size = 0x1b000, scoped, tag = 'scratch operand']
  #allocation3 [shape = 'bf16[18,18,128]{2,1,0:T(8,128)(2,1)}', space=vmem, size = 0x1b000, scoped, tag = 'scratch operand']
  %s0 = inlined_call_operand.vmem [shape: bf16[2,16,16,4], index: 0, kind: input, shape index: {}]
  %s1 = inlined_call_operand.hbm [shape: bf16[1152,128], index: 1, kind: input, shape index: {}]
  %s2 = inlined_call_operand.vmem [shape: f32[1,128], index: 2, kind: input, shape index: {}]
  %s3 = inlined_call_operand.hbm [shape: bf16[1152,128], index: 3, kind: input, shape index: {}]
  %s4 = inlined_call_operand.vmem [shape: f32[1,128], index: 4, kind: input, shape index: {}]
  %s5 = inlined_call_operand.hbm [shape: bf16[2,256,128], index: 5, kind: output, shape index: {}]
  %s6 = sld [smem:[#allocation0]]
  $region65: #{tpu_custom_call.1} parent=0
    _
  %s8 = ssub.s32 1, %s6
  %s9 = scalar_select 0, %s8, %s6
  $region1: #{tpu_custom_call.1} parent=0
    #allocation4 [shape = 'u8[294912]{0}', space=vmem, size = 0x48000, scoped, tag = 'input window, operand 1, single buffered']
    #allocation5 [shape = 's32[2]{0}', space=sflag, size = 0x8, scoped, tag = 'scoped memory for tpu_custom_call.1']
    #allocation6 [shape = 's32[2]{0}', space=sflag, size = 0x8, scoped, tag = 'scoped memory for tpu_custom_call.1']
    #allocation7 [shape = 'u8[294912]{0}', space=vmem, size = 0x48000, scoped, tag = 'input window, operand 3, single buffered']
    #allocation8 [shape = 's32[1]{0}', space=sflag, size = 0x4, scoped, tag = 'scoped memory for tpu_custom_call.1']
    #allocation9 [shape = 'u8[131072]{0}', space=vmem, size = 0x20000, scoped, tag = 'output window, operand 0']
    %10 = vsyncpa [#allocation5], 0
    %11 = vsyncpa [#allocation8], 0
    %12 = vsyncpa [#allocation6], 0
    %s13 = scalar_lea.sflag [#allocation6], 1
    %14 = vsyncpa %s13, 0
    loop: start=0, step=1, limit=4
    $region2: #{tpu_custom_call.1} parent=1 // loop_pre_header
      _
    $region3: #{tpu_custom_call.1} parent=1 // loop_header
      %s16 = sphi 0, %s20
      %p17 = scmp.ge.s32.totalorder %s16, 4
      %s26 = sphi 0, %s28
      %s29 = sphi 0, %s26
      %s30 = sphi 0, %s29
      %s46 = sphi 0, %s30
      %s50 = sphi 0, %s50
      %s52 = sphi 0, %s50
      %s53 = sphi 0, %s52
      %s67 = sphi 0, %s53
      %s71 = sphi 0, %s71
      %s73 = sphi 0, %s71
      %s74 = sphi 0, %s73
      %s88 = sphi 0, %s74
      %s92 = sphi 0, %s92
      %s94 = sphi 0, %s92
      %s95 = sphi 0, %s94
      %s109 = sphi 0, %s95
      %s113 = sphi 0, %s113
      %s115 = sphi 0, %s113
      %s116 = sphi 0, %s115
      %s130 = sphi 0, %s116
      %s136 = sphi 0, %s138
      %s139 = sphi 0, %s136
      %s140 = sphi 0, %s139
      %s156 = sphi 0, %s140
    $region4: #{tpu_custom_call.1} parent=1 // loop_header_branch
      %19 = sbr.rel (%p17) target = $region8
    $region5: #{tpu_custom_call.1} parent=1 // loop_body
      %s21 = ssub.s32 %s16, 1
      %s22 = ssub.s32 %s16, 2
      %s23 = sadd.s32 %s16, 1
      %s24 = ssub.s32 %s16, %s23
      %p25 = scmp.eq.s32.totalorder %s24, 0
      %s27 = sadd.s32 %s26, 1
      %s28 = scalar_select %p25, %s26, %s27
      %p31 = pneg %p25
      %p32 = scmp.eq.s32.totalorder %s16, 1
      %p33 = por %p31, %p32
      %p34 = scmp.ne.s32.totalorder %s26, %s29
      %p35 = scmp.eq.s32.totalorder %s16, 0
      %p36 = por %p34, %p35
      %p37 = scmp.ne.s32.totalorder %s26, %s29
      %p38 = scmp.eq.s32.totalorder %s21, 1
      %p39 = por %p37, %p38
      %p40 = scmp.ne.s32.totalorder %s29, %s30
      %p41 = scmp.eq.s32.totalorder %s21, 0
      %p42 = por %p40, %p41
      %p43 = scmp.ne.s32.totalorder %s29, %s30
      %p44 = scmp.eq.s32.totalorder %s22, 1
      %p45 = por %p43, %p44
      %p47 = scmp.ne.s32.totalorder %s30, %s46
      %p48 = scmp.eq.s32.totalorder %s22, 0
      %p49 = por %p47, %p48
      %s51 = sadd.s32 %s50, 1
      %p54 = scmp.eq.s32.totalorder %s16, 1
      %p55 = scmp.ne.s32.totalorder %s50, %s52
      %p56 = scmp.eq.s32.totalorder %s16, 0
      %p57 = por %p55, %p56
      %p58 = scmp.ne.s32.totalorder %s50, %s52
      %p59 = scmp.eq.s32.totalorder %s21, 1
      %p60 = por %p58, %p59
      %p61 = scmp.ne.s32.totalorder %s52, %s53
      %p62 = scmp.eq.s32.totalorder %s21, 0
      %p63 = por %p61, %p62
      %p64 = scmp.ne.s32.totalorder %s52, %s53
      %p65 = scmp.eq.s32.totalorder %s22, 1
      %p66 = por %p64, %p65
      %p68 = scmp.ne.s32.totalorder %s53, %s67
      %p69 = scmp.eq.s32.totalorder %s22, 0
      %p70 = por %p68, %p69
      %s72 = sadd.s32 %s71, 1
      %p75 = scmp.eq.s32.totalorder %s16, 1
      %p76 = scmp.ne.s32.totalorder %s71, %s73
      %p77 = scmp.eq.s32.totalorder %s16, 0
      %p78 = por %p76, %p77
      %p79 = scmp.ne.s32.totalorder %s71, %s73
      %p80 = scmp.eq.s32.totalorder %s21, 1
      %p81 = por %p79, %p80
      %p82 = scmp.ne.s32.totalorder %s73, %s74
      %p83 = scmp.eq.s32.totalorder %s21, 0
      %p84 = por %p82, %p83
      %p85 = scmp.ne.s32.totalorder %s73, %s74
      %p86 = scmp.eq.s32.totalorder %s22, 1
      %p87 = por %p85, %p86
      %p89 = scmp.ne.s32.totalorder %s74, %s88
      %p90 = scmp.eq.s32.totalorder %s22, 0
      %p91 = por %p89, %p90
      %s93 = sadd.s32 %s92, 1
      %p96 = scmp.eq.s32.totalorder %s16, 1
      %p97 = scmp.ne.s32.totalorder %s92, %s94
      %p98 = scmp.eq.s32.totalorder %s16, 0
      %p99 = por %p97, %p98
      %p100 = scmp.ne.s32.totalorder %s92, %s94
      %p101 = scmp.eq.s32.totalorder %s21, 1
      %p102 = por %p100, %p101
      %p103 = scmp.ne.s32.totalorder %s94, %s95
      %p104 = scmp.eq.s32.totalorder %s21, 0
      %p105 = por %p103, %p104
      %p106 = scmp.ne.s32.totalorder %s94, %s95
      %p107 = scmp.eq.s32.totalorder %s22, 1
      %p108 = por %p106, %p107
      %p110 = scmp.ne.s32.totalorder %s95, %s109
      %p111 = scmp.eq.s32.totalorder %s22, 0
      %p112 = por %p110, %p111
      %s114 = sadd.s32 %s113, 1
      %p117 = scmp.eq.s32.totalorder %s16, 1
      %p118 = scmp.ne.s32.totalorder %s113, %s115
      %p119 = scmp.eq.s32.totalorder %s16, 0
      %p120 = por %p118, %p119
      %p121 = scmp.ne.s32.totalorder %s113, %s115
      %p122 = scmp.eq.s32.totalorder %s21, 1
      %p123 = por %p121, %p122
      %p124 = scmp.ne.s32.totalorder %s115, %s116
      %p125 = scmp.eq.s32.totalorder %s21, 0
      %p126 = por %p124, %p125
      %p127 = scmp.ne.s32.totalorder %s115, %s116
      %p128 = scmp.eq.s32.totalorder %s22, 1
      %p129 = por %p127, %p128
      %p131 = scmp.ne.s32.totalorder %s116, %s130
      %p132 = scmp.eq.s32.totalorder %s22, 0
      %p133 = por %p131, %p132
      %s134 = ssub.s32 %s16, %s23
      %p135 = scmp.eq.s32.totalorder %s134, 0
      %s137 = sadd.s32 %s136, 1
      %s138 = scalar_select %p135, %s136, %s137
      %p141 = pneg %p135
      %p142 = scmp.eq.s32.totalorder %s16, 1
      %p143 = por %p141, %p142
      %p144 = scmp.ne.s32.totalorder %s136, %s139
      %p145 = scmp.eq.s32.totalorder %s16, 0
      %p146 = por %p144, %p145
      %p147 = scmp.ne.s32.totalorder %s136, %s139
      %p148 = scmp.eq.s32.totalorder %s21, 1
      %p149 = por %p147, %p148
      %p150 = scmp.ne.s32.totalorder %s139, %s140
      %p151 = scmp.eq.s32.totalorder %s21, 0
      %p152 = por %p150, %p151
      %p153 = scmp.ne.s32.totalorder %s139, %s140
      %p154 = scmp.eq.s32.totalorder %s22, 1
      %p155 = por %p153, %p154
      %p157 = scmp.ne.s32.totalorder %s140, %s156
      %p158 = scmp.eq.s32.totalorder %s22, 0
      %p159 = por %p157, %p158
      %p160 = scmp.le.s32.totalorder 1, %s16
      %p161 = scmp.lt.s32.totalorder %s16, 3
      %p162 = pnand %p160, %p161
      %p163 = pneg %p162
      // Predicated region
      $region9: #{tpu_custom_call.1} parent=5 // pred_check
        _
      $region10: #{tpu_custom_call.1} parent=5 // pred_check_branch
        %165 = sbr.rel (%p162) target = $region12
      $region11: #{tpu_custom_call.1} parent=5 // pred_region
        %s166 = ssub.s32 %s16, 1
        // Predicated region
        $region13: #{tpu_custom_call.1} parent=11 // pred_check
          %p167 = pneg %p63
        $region14: #{tpu_custom_call.1} parent=11 // pred_check_branch
          %169 = sbr.rel (%p167) target = $region16
        $region15: #{tpu_custom_call.1} parent=11 // pred_region
          %171 = vsyncadd [#allocation5], 0
          %s172 = sshll.u32 %s1, 4
          %s173 = int_to_ptr.hbm [resolvable:$true] %s172
          %s174 = sshll.u32 [#allocation4], 4
          %s175 = int_to_ptr.vmem [resolvable:$true] %s174
          %180 = dma.hbm_to_vmem [thread:$0]  %s173, 9216, %s175, [#allocation5], 64, 64, 4
        $region16: #{tpu_custom_call.1} parent=11 // pred_fallthru
          _
        // Predicated region
        $region17: #{tpu_custom_call.1} parent=11 // pred_check
          %p181 = pneg %p84
        $region18: #{tpu_custom_call.1} parent=11 // pred_check_branch
          %183 = sbr.rel (%p181) target = $region20
        $region19: #{tpu_custom_call.1} parent=11 // pred_region
          _
        $region20: #{tpu_custom_call.1} parent=11 // pred_fallthru
          _
        // Predicated region
        $region21: #{tpu_custom_call.1} parent=11 // pred_check
          %p184 = pneg %p105
        $region22: #{tpu_custom_call.1} parent=11 // pred_check_branch
          %186 = sbr.rel (%p184) target = $region24
        $region23: #{tpu_custom_call.1} parent=11 // pred_region
          %188 = vsyncadd [#allocation8], 0
          %s189 = sshll.u32 %s3, 4
          %s190 = int_to_ptr.hbm [resolvable:$true] %s189
          %s191 = sshll.u32 [#allocation7], 4
          %s192 = int_to_ptr.vmem [resolvable:$true] %s191
          %197 = dma.hbm_to_vmem [thread:$0]  %s190, 9216, %s192, [#allocation8], 64, 64, 4
        $region24: #{tpu_custom_call.1} parent=11 // pred_fallthru
          _
        // Predicated region
        $region25: #{tpu_custom_call.1} parent=11 // pred_check
          %p198 = pneg %p126
        $region26: #{tpu_custom_call.1} parent=11 // pred_check_branch
          %200 = sbr.rel (%p198) target = $region28
        $region27: #{tpu_custom_call.1} parent=11 // pred_region
          _
        $region28: #{tpu_custom_call.1} parent=11 // pred_fallthru
          _
      $region12: #{tpu_custom_call.1} parent=5 // pred_fallthru
        _
      %p201 = scmp.lt.s32.totalorder %s16, 2
      // Predicated region
      $region29: #{tpu_custom_call.1} parent=5 // pred_check
        %p202 = pneg %p201
      $region30: #{tpu_custom_call.1} parent=5 // pred_check_branch
        %204 = sbr.rel (%p202) target = $region32
      $region31: #{tpu_custom_call.1} parent=5 // pred_region
        // Predicated region
        $region33: #{tpu_custom_call.1} parent=31 // pred_check
          %p205 = pneg %p36
        $region34: #{tpu_custom_call.1} parent=31 // pred_check_branch
          %207 = sbr.rel (%p205) target = $region36
        $region35: #{tpu_custom_call.1} parent=31 // pred_region
          %p208 = scmp.lt.s32.totalorder %s16, 1
          %s209 = scalar_select %p208, %s16, 1
          %s210 = smul.addr %s209, 32
          %s211 = smul.addr %s210, 4
          %s212 = scalar_lea.vmem %s0, %s211
        $region36: #{tpu_custom_call.1} parent=31 // pred_fallthru
          _
      $region32: #{tpu_custom_call.1} parent=5 // pred_fallthru
        _
      %p213 = scmp.le.s32.totalorder 1, %s16
      %p214 = scmp.lt.s32.totalorder %s16, 3
      %p215 = pnand %p213, %p214
      %p216 = pneg %p215
      // Predicated region
      $region37: #{tpu_custom_call.1} parent=5 // pred_check
        _
      $region38: #{tpu_custom_call.1} parent=5 // pred_check_branch
        %218 = sbr.rel (%p215) target = $region40
      $region39: #{tpu_custom_call.1} parent=5 // pred_region
        %s219 = ssub.s32 %s16, 1
        // Predicated region
        $region41: #{tpu_custom_call.1} parent=39 // pred_check
          %p220 = pneg %p63
        $region42: #{tpu_custom_call.1} parent=39 // pred_check_branch
          %222 = sbr.rel (%p220) target = $region44
        $region43: #{tpu_custom_call.1} parent=39 // pred_region
          %224 = dma.done [#allocation5], 9216
        $region44: #{tpu_custom_call.1} parent=39 // pred_fallthru
          _
        // Predicated region
        $region45: #{tpu_custom_call.1} parent=39 // pred_check
          %p225 = pneg %p105
        $region46: #{tpu_custom_call.1} parent=39 // pred_check_branch
          %227 = sbr.rel (%p225) target = $region48
        $region47: #{tpu_custom_call.1} parent=39 // pred_region
          %229 = dma.done [#allocation8], 9216
        $region48: #{tpu_custom_call.1} parent=39 // pred_fallthru
          _
        %p230 = scmp.lt.s32.totalorder %s21, 1
        %s231 = scalar_select %p230, %s21, 1
        %s232 = smul.addr %s231, 32
        %s233 = smul.addr %s232, 4
        %s234 = scalar_lea.vmem %s0, %s233
        %p235 = pneg %p42
        %p236 = pneg %p39
        %p237 = pneg %p63
        %p238 = pneg %p60
        %p239 = pneg %p84
        %p240 = pneg %p81
        %p241 = pneg %p105
        %p242 = pneg %p102
        %p243 = pneg %p126
        %p244 = pneg %p123
        %p245 = pneg %p152
        %p246 = pneg %p149
        %s247 = sand.u32 %s139, 1
        %s248 = scalar_lea.sflag [#allocation6], %s247
        %s249 = sand.u32 %s139, 1
        %s250 = smul.addr %s249, 128
        %s251 = scalar_lea.vmem [#allocation9], %s250
        %p252 = scmp.lt.s32.totalorder %s21, 1
        %s253 = scalar_select %p252, %s21, 1
        %s254 = smul.addr %s253, 32
        %s255 = smul.addr %s254, 4
        %s256 = scalar_lea.vmem %s0, %s255
        %p258 = scmp.eq.s32.totalorder %s21, 0
        // Predicated region
        $region49: #{tpu_custom_call.1} parent=39 // pred_check
          %p259 = pneg %p258
        $region50: #{tpu_custom_call.1} parent=39 // pred_check_branch
          %261 = sbr.rel (%p259) target = $region52
        $region51: #{tpu_custom_call.1} parent=39 // pred_region
          %262 = vst [vmem:[#allocation2] sm:$0xf] 0
          %263 = vst [vmem:[#allocation2 + $0x4] sm:$0xf] 0
          %264 = vst [vmem:[#allocation2 + $0x8] sm:$0x1] 0
          %265 = vst [vmem:[#allocation2 + $0xc] sm:$0xf] 0
          %266 = vst [vmem:[#allocation2 + $0x10] sm:$0xf] 0
          %267 = vst [vmem:[#allocation2 + $0x14] sm:$0x1] 0
          %268 = vst [vmem:[#allocation2 + $0x18] sm:$0xf] 0
          %269 = vst [vmem:[#allocation2 + $0x1c] sm:$0xf] 0
          %270 = vst [vmem:[#allocation2 + $0x20] sm:$0x1] 0
          %271 = vst [vmem:[#allocation2 + $0x24] sm:$0xf] 0
          %272 = vst [vmem:[#allocation2 + $0x28] sm:$0xf] 0
          %273 = vst [vmem:[#allocation2 + $0x2c] sm:$0x1] 0
          %274 = vst [vmem:[#allocation2 + $0x30] sm:$0xf] 0
          %275 = vst [vmem:[#allocation2 + $0x34] sm:$0xf] 0
          %276 = vst [vmem:[#allocation2 + $0x38] sm:$0x1] 0
          %277 = vst [vmem:[#allocation2 + $0x3c] sm:$0xf] 0
          %278 = vst [vmem:[#allocation2 + $0x40] sm:$0xf] 0
          %279 = vst [vmem:[#allocation2 + $0x44] sm:$0x1] 0
          %280 = vst [vmem:[#allocation2 + $0x48] sm:$0xf] 0
          %281 = vst [vmem:[#allocation2 + $0x4c] sm:$0xf] 0
          %282 = vst [vmem:[#allocation2 + $0x50] sm:$0x1] 0
          %283 = vst [vmem:[#allocation2 + $0x54] sm:$0xf] 0
          %284 = vst [vmem:[#allocation2 + $0x58] sm:$0xf] 0
          %285 = vst [vmem:[#allocation2 + $0x5c] sm:$0x1] 0
          %286 = vst [vmem:[#allocation2 + $0x60] sm:$0xf] 0
          %287 = vst [vmem:[#allocation2 + $0x64] sm:$0xf] 0
          %288 = vst [vmem:[#allocation2 + $0x68] sm:$0x1] 0
          %289 = vst [vmem:[#allocation2 + $0x6c] sm:$0xf] 0
          %290 = vst [vmem:[#allocation2 + $0x70] sm:$0xf] 0
          %291 = vst [vmem:[#allocation2 + $0x74] sm:$0x1] 0
          %292 = vst [vmem:[#allocation2 + $0x78] sm:$0xf] 0
          %293 = vst [vmem:[#allocation2 + $0x7c] sm:$0xf] 0
          %294 = vst [vmem:[#allocation2 + $0x80] sm:$0x1] 0
          %295 = vst [vmem:[#allocation2 + $0x84] sm:$0xf] 0
          %296 = vst [vmem:[#allocation2 + $0x88] sm:$0xf] 0
          %297 = vst [vmem:[#allocation2 + $0x8c] sm:$0x1] 0
          %298 = vst [vmem:[#allocation2 + $0x90] sm:$0xf] 0
          %299 = vst [vmem:[#allocation2 + $0x94] sm:$0xf] 0
          %300 = vst [vmem:[#allocation2 + $0x98] sm:$0x1] 0
          %301 = vst [vmem:[#allocation2 + $0x9c] sm:$0xf] 0
          %302 = vst [vmem:[#allocation2 + $0xa0] sm:$0xf] 0
          %303 = vst [vmem:[#allocation2 + $0xa4] sm:$0x1] 0
          %304 = vst [vmem:[#allocation2 + $0xa8] sm:$0xf] 0
          %305 = vst [vmem:[#allocation2 + $0xac] sm:$0xf] 0
          %306 = vst [vmem:[#allocation2 + $0xb0] sm:$0x1] 0
          %307 = vst [vmem:[#allocation2 + $0xb4] sm:$0xf] 0
          %308 = vst [vmem:[#allocation2 + $0xb8] sm:$0xf] 0
          %309 = vst [vmem:[#allocation2 + $0xbc] sm:$0x1] 0
          %310 = vst [vmem:[#allocation2 + $0xc0] sm:$0xf] 0
          %311 = vst [vmem:[#allocation2 + $0xc4] sm:$0xf] 0
          %312 = vst [vmem:[#allocation2 + $0xc8] sm:$0x1] 0
          %313 = vst [vmem:[#allocation2 + $0xcc] sm:$0xf] 0
          %314 = vst [vmem:[#allocation2 + $0xd0] sm:$0xf] 0
          %315 = vst [vmem:[#allocation2 + $0xd4] sm:$0x1] 0
          %316 = vst [vmem:[#allocation3] sm:$0xf] 0
          %317 = vst [vmem:[#allocation3 + $0x4] sm:$0xf] 0
          %318 = vst [vmem:[#allocation3 + $0x8] sm:$0x1] 0
          %319 = vst [vmem:[#allocation3 + $0xc] sm:$0xf] 0
          %320 = vst [vmem:[#allocation3 + $0x10] sm:$0xf] 0
          %321 = vst [vmem:[#allocation3 + $0x14] sm:$0x1] 0
          %322 = vst [vmem:[#allocation3 + $0x18] sm:$0xf] 0
          %323 = vst [vmem:[#allocation3 + $0x1c] sm:$0xf] 0
          %324 = vst [vmem:[#allocation3 + $0x20] sm:$0x1] 0
          %325 = vst [vmem:[#allocation3 + $0x24] sm:$0xf] 0
          %326 = vst [vmem:[#allocation3 + $0x28] sm:$0xf] 0
          %327 = vst [vmem:[#allocation3 + $0x2c] sm:$0x1] 0
          %328 = vst [vmem:[#allocation3 + $0x30] sm:$0xf] 0
          %329 = vst [vmem:[#allocation3 + $0x34] sm:$0xf] 0
          %330 = vst [vmem:[#allocation3 + $0x38] sm:$0x1] 0
          %331 = vst [vmem:[#allocation3 + $0x3c] sm:$0xf] 0
          %332 = vst [vmem:[#allocation3 + $0x40] sm:$0xf] 0
          %333 = vst [vmem:[#allocation3 + $0x44] sm:$0x1] 0
          %334 = vst [vmem:[#allocation3 + $0x48] sm:$0xf] 0
          %335 = vst [vmem:[#allocation3 + $0x4c] sm:$0xf] 0
          %336 = vst [vmem:[#allocation3 + $0x50] sm:$0x1] 0
          %337 = vst [vmem:[#allocation3 + $0x54] sm:$0xf] 0
          %338 = vst [vmem:[#allocation3 + $0x58] sm:$0xf] 0
          %339 = vst [vmem:[#allocation3 + $0x5c] sm:$0x1] 0
          %340 = vst [vmem:[#allocation3 + $0x60] sm:$0xf] 0
          %341 = vst [vmem:[#allocation3 + $0x64] sm:$0xf] 0
          %342 = vst [vmem:[#allocation3 + $0x68] sm:$0x1] 0
          %343 = vst [vmem:[#allocation3 + $0x6c] sm:$0xf] 0
          %344 = vst [vmem:[#allocation3 + $0x70] sm:$0xf] 0
          %345 = vst [vmem:[#allocation3 + $0x74] sm:$0x1] 0
          %346 = vst [vmem:[#allocation3 + $0x78] sm:$0xf] 0
          %347 = vst [vmem:[#allocation3 + $0x7c] sm:$0xf] 0
          %348 = vst [vmem:[#allocation3 + $0x80] sm:$0x1] 0
          %349 = vst [vmem:[#allocation3 + $0x84] sm:$0xf] 0
          %350 = vst [vmem:[#allocation3 + $0x88] sm:$0xf] 0
          %351 = vst [vmem:[#allocation3 + $0x8c] sm:$0x1] 0
          %352 = vst [vmem:[#allocation3 + $0x90] sm:$0xf] 0
          %353 = vst [vmem:[#allocation3 + $0x94] sm:$0xf] 0
          %354 = vst [vmem:[#allocation3 + $0x98] sm:$0x1] 0
          %355 = vst [vmem:[#allocation3 + $0x9c] sm:$0xf] 0
          %356 = vst [vmem:[#allocation3 + $0xa0] sm:$0xf] 0
          %357 = vst [vmem:[#allocation3 + $0xa4] sm:$0x1] 0
          %358 = vst [vmem:[#allocation3 + $0xa8] sm:$0xf] 0
          %359 = vst [vmem:[#allocation3 + $0xac] sm:$0xf] 0
          %360 = vst [vmem:[#allocation3 + $0xb0] sm:$0x1] 0
          %361 = vst [vmem:[#allocation3 + $0xb4] sm:$0xf] 0
          %362 = vst [vmem:[#allocation3 + $0xb8] sm:$0xf] 0
          %363 = vst [vmem:[#allocation3 + $0xbc] sm:$0x1] 0
          %364 = vst [vmem:[#allocation3 + $0xc0] sm:$0xf] 0
          %365 = vst [vmem:[#allocation3 + $0xc4] sm:$0xf] 0
          %366 = vst [vmem:[#allocation3 + $0xc8] sm:$0x1] 0
          %367 = vst [vmem:[#allocation3 + $0xcc] sm:$0xf] 0
          %368 = vst [vmem:[#allocation3 + $0xd0] sm:$0xf] 0
          %369 = vst [vmem:[#allocation3 + $0xd4] sm:$0x1] 0
        $region52: #{tpu_custom_call.1} parent=39 // pred_fallthru
          _
        %v370 = vld [vmem:[%s256] sm:$0xf]
        %v371 = vld [vmem:[%s256 + $0x4] sm:$0xf]
        %v372 = vld [vmem:[%s256 + $0x8] sm:$0xf]
        %v373 = vld [vmem:[%s256 + $0xc] sm:$0xf]
        %v374 = vld [vmem:[%s256 + $0x10] sm:$0xf]
        %v375 = vld [vmem:[%s256 + $0x14] sm:$0xf]
        %v376 = vld [vmem:[%s256 + $0x18] sm:$0xf]
        %v377 = vld [vmem:[%s256 + $0x1c] sm:$0xf]
        %v378 = vld [vmem:[%s256 + $0x20] sm:$0xf]
        %v379 = vld [vmem:[%s256 + $0x24] sm:$0xf]
        %v380 = vld [vmem:[%s256 + $0x28] sm:$0xf]
        %v381 = vld [vmem:[%s256 + $0x2c] sm:$0xf]
        %v382 = vld [vmem:[%s256 + $0x30] sm:$0xf]
        %v383 = vld [vmem:[%s256 + $0x34] sm:$0xf]
        %v384 = vld [vmem:[%s256 + $0x38] sm:$0xf]
        %v385 = vld [vmem:[%s256 + $0x3c] sm:$0xf]
        %v386 = vld [vmem:[%s256 + $0x40] sm:$0xf]
        %v387 = vld [vmem:[%s256 + $0x44] sm:$0xf]
        %v388 = vld [vmem:[%s256 + $0x48] sm:$0xf]
        %v389 = vld [vmem:[%s256 + $0x4c] sm:$0xf]
        %v390 = vld [vmem:[%s256 + $0x50] sm:$0xf]
        %v391 = vld [vmem:[%s256 + $0x54] sm:$0xf]
        %v392 = vld [vmem:[%s256 + $0x58] sm:$0xf]
        %v393 = vld [vmem:[%s256 + $0x5c] sm:$0xf]
        %v394 = vld [vmem:[%s256 + $0x60] sm:$0xf]
        %v395 = vld [vmem:[%s256 + $0x64] sm:$0xf]
        %v396 = vld [vmem:[%s256 + $0x68] sm:$0xf]
        %v397 = vld [vmem:[%s256 + $0x6c] sm:$0xf]
        %v398 = vld [vmem:[%s256 + $0x70] sm:$0xf]
        %v399 = vld [vmem:[%s256 + $0x74] sm:$0xf]
        %v400 = vld [vmem:[%s256 + $0x78] sm:$0xf]
        %v401 = vld [vmem:[%s256 + $0x7c] sm:$0xf]
        %vm402 = vsmask.f32 256
        %vm403 = vsmask.f32 4368
        %vm404 = vmor %vm402, %vm403
        %v406 = vshrl.u32 %v370, 16
        %v408 = vrot.slane %v406, 7
        %v409 = vshll.u32 %v370, 16
        %v411 = vor.u32 %v408, %v409
        %v412 = vrot.slane %v408, 4
        %v414 = vshrl.u32 %v371, 16
        %v416 = vrot.slane %v414, 7
        %v417 = vshll.u32 %v371, 16
        %v419 = vor.u32 %v416, %v417
        %v420 = vsel %vm404, %v412, %v419
        %v421 = vrot.slane %v416, 4
        %v423 = vshrl.u32 %v372, 16
        %v425 = vrot.slane %v423, 7
        %v426 = vshll.u32 %v372, 16
        %v428 = vor.u32 %v425, %v426
        %v429 = vrot.slane %v425, 4
        %v431 = vshrl.u32 %v373, 16
        %v433 = vrot.slane %v431, 7
        %v434 = vshll.u32 %v373, 16
        %v436 = vor.u32 %v433, %v434
        %v437 = vsel %vm404, %v429, %v436
        %v438 = vrot.slane %v433, 4
        %v440 = vshrl.u32 %v374, 16
        %v442 = vrot.slane %v440, 7
        %v443 = vshll.u32 %v374, 16
        %v445 = vor.u32 %v442, %v443
        %v446 = vrot.slane %v442, 4
        %v448 = vshrl.u32 %v375, 16
        %v450 = vrot.slane %v448, 7
        %v451 = vshll.u32 %v375, 16
        %v453 = vor.u32 %v450, %v451
        %v454 = vsel %vm404, %v446, %v453
        %v455 = vrot.slane %v450, 4
        %v457 = vshrl.u32 %v376, 16
        %v459 = vrot.slane %v457, 7
        %v460 = vshll.u32 %v376, 16
        %v462 = vor.u32 %v459, %v460
        %v463 = vrot.slane %v459, 4
        %v465 = vshrl.u32 %v377, 16
        %v467 = vrot.slane %v465, 7
        %v468 = vshll.u32 %v377, 16
        %v470 = vor.u32 %v467, %v468
        %v471 = vsel %vm404, %v463, %v470
        %v472 = vrot.slane %v467, 4
        %v474 = vshrl.u32 %v378, 16
        %v476 = vrot.slane %v474, 7
        %v477 = vshll.u32 %v378, 16
        %v479 = vor.u32 %v476, %v477
        %v480 = vrot.slane %v476, 4
        %v482 = vshrl.u32 %v379, 16
        %v484 = vrot.slane %v482, 7
        %v485 = vshll.u32 %v379, 16
        %v487 = vor.u32 %v484, %v485
        %v488 = vsel %vm404, %v480, %v487
        %v489 = vrot.slane %v484, 4
        %v491 = vshrl.u32 %v380, 16
        %v493 = vrot.slane %v491, 7
        %v494 = vshll.u32 %v380, 16
        %v496 = vor.u32 %v493, %v494
        %v497 = vrot.slane %v493, 4
        %v499 = vshrl.u32 %v381, 16
        %v501 = vrot.slane %v499, 7
        %v502 = vshll.u32 %v381, 16
        %v504 = vor.u32 %v501, %v502
        %v505 = vsel %vm404, %v497, %v504
        %v506 = vrot.slane %v501, 4
        %v508 = vshrl.u32 %v382, 16
        %v510 = vrot.slane %v508, 7
        %v511 = vshll.u32 %v382, 16
        %v513 = vor.u32 %v510, %v511
        %v514 = vrot.slane %v510, 4
        %v516 = vshrl.u32 %v383, 16
        %v518 = vrot.slane %v516, 7
        %v519 = vshll.u32 %v383, 16
        %v521 = vor.u32 %v518, %v519
        %v522 = vsel %vm404, %v514, %v521
        %v523 = vrot.slane %v518, 4
        %v525 = vshrl.u32 %v384, 16
        %v527 = vrot.slane %v525, 7
        %v528 = vshll.u32 %v384, 16
        %v530 = vor.u32 %v527, %v528
        %v531 = vrot.slane %v527, 4
        %v533 = vshrl.u32 %v385, 16
        %v535 = vrot.slane %v533, 7
        %v536 = vshll.u32 %v385, 16
        %v538 = vor.u32 %v535, %v536
        %v539 = vsel %vm404, %v531, %v538
        %v540 = vrot.slane %v535, 4
        %v542 = vshrl.u32 %v386, 16
        %v544 = vrot.slane %v542, 7
        %v545 = vshll.u32 %v386, 16
        %v547 = vor.u32 %v544, %v545
        %v548 = vrot.slane %v544, 4
        %v550 = vshrl.u32 %v387, 16
        %v552 = vrot.slane %v550, 7
        %v553 = vshll.u32 %v387, 16
        %v555 = vor.u32 %v552, %v553
        %v556 = vsel %vm404, %v548, %v555
        %v557 = vrot.slane %v552, 4
        %v559 = vshrl.u32 %v388, 16
        %v561 = vrot.slane %v559, 7
        %v562 = vshll.u32 %v388, 16
        %v564 = vor.u32 %v561, %v562
        %v565 = vrot.slane %v561, 4
        %v567 = vshrl.u32 %v389, 16
        %v569 = vrot.slane %v567, 7
        %v570 = vshll.u32 %v389, 16
        %v572 = vor.u32 %v569, %v570
        %v573 = vsel %vm404, %v565, %v572
        %v574 = vrot.slane %v569, 4
        %v576 = vshrl.u32 %v390, 16
        %v578 = vrot.slane %v576, 7
        %v579 = vshll.u32 %v390, 16
        %v581 = vor.u32 %v578, %v579
        %v582 = vrot.slane %v578, 4
        %v584 = vshrl.u32 %v391, 16
        %v586 = vrot.slane %v584, 7
        %v587 = vshll.u32 %v391, 16
        %v589 = vor.u32 %v586, %v587
        %v590 = vsel %vm404, %v582, %v589
        %v591 = vrot.slane %v586, 4
        %v593 = vshrl.u32 %v392, 16
        %v595 = vrot.slane %v593, 7
        %v596 = vshll.u32 %v392, 16
        %v598 = vor.u32 %v595, %v596
        %v599 = vrot.slane %v595, 4
        %v601 = vshrl.u32 %v393, 16
        %v603 = vrot.slane %v601, 7
        %v604 = vshll.u32 %v393, 16
        %v606 = vor.u32 %v603, %v604
        %v607 = vsel %vm404, %v599, %v606
        %v608 = vrot.slane %v603, 4
        %v610 = vshrl.u32 %v394, 16
        %v612 = vrot.slane %v610, 7
        %v613 = vshll.u32 %v394, 16
        %v615 = vor.u32 %v612, %v613
        %v616 = vrot.slane %v612, 4
        %v618 = vshrl.u32 %v395, 16
        %v620 = vrot.slane %v618, 7
        %v621 = vshll.u32 %v395, 16
        %v623 = vor.u32 %v620, %v621
        %v624 = vsel %vm404, %v616, %v623
        %v625 = vrot.slane %v620, 4
        %v627 = vshrl.u32 %v396, 16
        %v629 = vrot.slane %v627, 7
        %v630 = vshll.u32 %v396, 16
        %v632 = vor.u32 %v629, %v630
        %v633 = vrot.slane %v629, 4
        %v635 = vshrl.u32 %v397, 16
        %v637 = vrot.slane %v635, 7
        %v638 = vshll.u32 %v397, 16
        %v640 = vor.u32 %v637, %v638
        %v641 = vsel %vm404, %v633, %v640
        %v642 = vrot.slane %v637, 4
        %v644 = vshrl.u32 %v398, 16
        %v646 = vrot.slane %v644, 7
        %v647 = vshll.u32 %v398, 16
        %v649 = vor.u32 %v646, %v647
        %v650 = vrot.slane %v646, 4
        %v652 = vshrl.u32 %v399, 16
        %v654 = vrot.slane %v652, 7
        %v655 = vshll.u32 %v399, 16
        %v657 = vor.u32 %v654, %v655
        %v658 = vsel %vm404, %v650, %v657
        %v659 = vrot.slane %v654, 4
        %v661 = vshrl.u32 %v400, 16
        %v663 = vrot.slane %v661, 7
        %v664 = vshll.u32 %v400, 16
        %v666 = vor.u32 %v663, %v664
        %v667 = vrot.slane %v663, 4
        %v669 = vshrl.u32 %v401, 16
        %v671 = vrot.slane %v669, 7
        %v672 = vshll.u32 %v401, 16
        %v674 = vor.u32 %v671, %v672
        %v675 = vsel %vm404, %v667, %v674
        %v676 = vrot.slane %v671, 4
        %s725 = scalar_lea.vmem [#allocation2], 12
        %vm726 = vcmask 27648
        %vm727 = vsmask.f32 7938
        %vm728 = vmand %vm726, %vm727
        %v729 = vld [vmem:[%s725] sm:$0xf]
        %v730 = vsel %vm728, %v411, %v729
        %731 = vst [vmem:[%s725] sm:$0xf] %v730
        %vm732 = vcmask 27648
        %733 = vst.msk [vmem:[%s725 + $0x4] sm:$0xf] %vm732, %v420
        %vm734 = vcmask 24576
        %vm735 = vmand %vm734, %vm402
        %v736 = vld [vmem:[%s725 + $0x8] sm:$0x1]
        %v737 = vsel %vm735, %v421, %v736
        %738 = vst [vmem:[%s725 + $0x8] sm:$0x1] %v737
        %v739 = vld [vmem:[%s725 + $0xc] sm:$0xf]
        %v740 = vsel %vm728, %v428, %v739
        %741 = vst [vmem:[%s725 + $0xc] sm:$0xf] %v740
        %742 = vst.msk [vmem:[%s725 + $0x10] sm:$0xf] %vm732, %v437
        %v743 = vld [vmem:[%s725 + $0x14] sm:$0x1]
        %v744 = vsel %vm735, %v438, %v743
        %745 = vst [vmem:[%s725 + $0x14] sm:$0x1] %v744
        %v746 = vld [vmem:[%s725 + $0x18] sm:$0xf]
        %v747 = vsel %vm728, %v445, %v746
        %748 = vst [vmem:[%s725 + $0x18] sm:$0xf] %v747
        %749 = vst.msk [vmem:[%s725 + $0x1c] sm:$0xf] %vm732, %v454
        %v750 = vld [vmem:[%s725 + $0x20] sm:$0x1]
        %v751 = vsel %vm735, %v455, %v750
        %752 = vst [vmem:[%s725 + $0x20] sm:$0x1] %v751
        %v753 = vld [vmem:[%s725 + $0x24] sm:$0xf]
        %v754 = vsel %vm728, %v462, %v753
        %755 = vst [vmem:[%s725 + $0x24] sm:$0xf] %v754
        %756 = vst.msk [vmem:[%s725 + $0x28] sm:$0xf] %vm732, %v471
        %v757 = vld [vmem:[%s725 + $0x2c] sm:$0x1]
        %v758 = vsel %vm735, %v472, %v757
        %759 = vst [vmem:[%s725 + $0x2c] sm:$0x1] %v758
        %v760 = vld [vmem:[%s725 + $0x30] sm:$0xf]
        %v761 = vsel %vm728, %v479, %v760
        %762 = vst [vmem:[%s725 + $0x30] sm:$0xf] %v761
        %763 = vst.msk [vmem:[%s725 + $0x34] sm:$0xf] %vm732, %v488
        %v764 = vld [vmem:[%s725 + $0x38] sm:$0x1]
        %v765 = vsel %vm735, %v489, %v764
        %766 = vst [vmem:[%s725 + $0x38] sm:$0x1] %v765
        %v767 = vld [vmem:[%s725 + $0x3c] sm:$0xf]
        %v768 = vsel %vm728, %v496, %v767
        %769 = vst [vmem:[%s725 + $0x3c] sm:$0xf] %v768
        %770 = vst.msk [vmem:[%s725 + $0x40] sm:$0xf] %vm732, %v505
        %v771 = vld [vmem:[%s725 + $0x44] sm:$0x1]
        %v772 = vsel %vm735, %v506, %v771
        %773 = vst [vmem:[%s725 + $0x44] sm:$0x1] %v772
        %v774 = vld [vmem:[%s725 + $0x48] sm:$0xf]
        %v775 = vsel %vm728, %v513, %v774
        %776 = vst [vmem:[%s725 + $0x48] sm:$0xf] %v775
        %777 = vst.msk [vmem:[%s725 + $0x4c] sm:$0xf] %vm732, %v522
        %v778 = vld [vmem:[%s725 + $0x50] sm:$0x1]
        %v779 = vsel %vm735, %v523, %v778
        %780 = vst [vmem:[%s725 + $0x50] sm:$0x1] %v779
        %v781 = vld [vmem:[%s725 + $0x54] sm:$0xf]
        %v782 = vsel %vm728, %v530, %v781
        %783 = vst [vmem:[%s725 + $0x54] sm:$0xf] %v782
        %784 = vst.msk [vmem:[%s725 + $0x58] sm:$0xf] %vm732, %v539
        %v785 = vld [vmem:[%s725 + $0x5c] sm:$0x1]
        %v786 = vsel %vm735, %v540, %v785
        %787 = vst [vmem:[%s725 + $0x5c] sm:$0x1] %v786
        %v788 = vld [vmem:[%s725 + $0x60] sm:$0xf]
        %v789 = vsel %vm728, %v547, %v788
        %790 = vst [vmem:[%s725 + $0x60] sm:$0xf] %v789
        %791 = vst.msk [vmem:[%s725 + $0x64] sm:$0xf] %vm732, %v556
        %v792 = vld [vmem:[%s725 + $0x68] sm:$0x1]
        %v793 = vsel %vm735, %v557, %v792
        %794 = vst [vmem:[%s725 + $0x68] sm:$0x1] %v793
        %v795 = vld [vmem:[%s725 + $0x6c] sm:$0xf]
        %v796 = vsel %vm728, %v564, %v795
        %797 = vst [vmem:[%s725 + $0x6c] sm:$0xf] %v796
        %798 = vst.msk [vmem:[%s725 + $0x70] sm:$0xf] %vm732, %v573
        %v799 = vld [vmem:[%s725 + $0x74] sm:$0x1]
        %v800 = vsel %vm735, %v574, %v799
        %801 = vst [vmem:[%s725 + $0x74] sm:$0x1] %v800
        %v802 = vld [vmem:[%s725 + $0x78] sm:$0xf]
        %v803 = vsel %vm728, %v581, %v802
        %804 = vst [vmem:[%s725 + $0x78] sm:$0xf] %v803
        %805 = vst.msk [vmem:[%s725 + $0x7c] sm:$0xf] %vm732, %v590
        %v806 = vld [vmem:[%s725 + $0x80] sm:$0x1]
        %v807 = vsel %vm735, %v591, %v806
        %808 = vst [vmem:[%s725 + $0x80] sm:$0x1] %v807
        %v809 = vld [vmem:[%s725 + $0x84] sm:$0xf]
        %v810 = vsel %vm728, %v598, %v809
        %811 = vst [vmem:[%s725 + $0x84] sm:$0xf] %v810
        %812 = vst.msk [vmem:[%s725 + $0x88] sm:$0xf] %vm732, %v607
        %v813 = vld [vmem:[%s725 + $0x8c] sm:$0x1]
        %v814 = vsel %vm735, %v608, %v813
        %815 = vst [vmem:[%s725 + $0x8c] sm:$0x1] %v814
        %v816 = vld [vmem:[%s725 + $0x90] sm:$0xf]
        %v817 = vsel %vm728, %v615, %v816
        %818 = vst [vmem:[%s725 + $0x90] sm:$0xf] %v817
        %819 = vst.msk [vmem:[%s725 + $0x94] sm:$0xf] %vm732, %v624
        %v820 = vld [vmem:[%s725 + $0x98] sm:$0x1]
        %v821 = vsel %vm735, %v625, %v820
        %822 = vst [vmem:[%s725 + $0x98] sm:$0x1] %v821
        %v823 = vld [vmem:[%s725 + $0x9c] sm:$0xf]
        %v824 = vsel %vm728, %v632, %v823
        %825 = vst [vmem:[%s725 + $0x9c] sm:$0xf] %v824
        %826 = vst.msk [vmem:[%s725 + $0xa0] sm:$0xf] %vm732, %v641
        %v827 = vld [vmem:[%s725 + $0xa4] sm:$0x1]
        %v828 = vsel %vm735, %v642, %v827
        %829 = vst [vmem:[%s725 + $0xa4] sm:$0x1] %v828
        %v830 = vld [vmem:[%s725 + $0xa8] sm:$0xf]
        %v831 = vsel %vm728, %v649, %v830
        %832 = vst [vmem:[%s725 + $0xa8] sm:$0xf] %v831
        %833 = vst.msk [vmem:[%s725 + $0xac] sm:$0xf] %vm732, %v658
        %v834 = vld [vmem:[%s725 + $0xb0] sm:$0x1]
        %v835 = vsel %vm735, %v659, %v834
        %836 = vst [vmem:[%s725 + $0xb0] sm:$0x1] %v835
        %v837 = vld [vmem:[%s725 + $0xb4] sm:$0xf]
        %v838 = vsel %vm728, %v666, %v837
        %839 = vst [vmem:[%s725 + $0xb4] sm:$0xf] %v838
        %840 = vst.msk [vmem:[%s725 + $0xb8] sm:$0xf] %vm732, %v675
        %v841 = vld [vmem:[%s725 + $0xbc] sm:$0x1]
        %v842 = vsel %vm735, %v676, %v841
        %843 = vst [vmem:[%s725 + $0xbc] sm:$0x1] %v842
        %v844 = vld [vmem:[#allocation2] sm:$0xf]
        %v845 = vld [vmem:[#allocation2 + $0x4] sm:$0xf]
        %v846 = vld [vmem:[#allocation2 + $0xc] sm:$0xf]
        %v847 = vld [vmem:[#allocation2 + $0x10] sm:$0xf]
        %v848 = vld [vmem:[#allocation2 + $0x18] sm:$0xf]
        %v849 = vld [vmem:[#allocation2 + $0x1c] sm:$0xf]
        %v850 = vld [vmem:[#allocation2 + $0x24] sm:$0xf]
        %v851 = vld [vmem:[#allocation2 + $0x28] sm:$0xf]
        %v852 = vld [vmem:[#allocation2 + $0x30] sm:$0xf]
        %v853 = vld [vmem:[#allocation2 + $0x34] sm:$0xf]
        %v854 = vld [vmem:[#allocation2 + $0x3c] sm:$0xf]
        %v855 = vld [vmem:[#allocation2 + $0x40] sm:$0xf]
        %v856 = vld [vmem:[#allocation2 + $0x48] sm:$0xf]
        %v857 = vld [vmem:[#allocation2 + $0x4c] sm:$0xf]
        %v858 = vld [vmem:[#allocation2 + $0x54] sm:$0xf]
        %v859 = vld [vmem:[#allocation2 + $0x58] sm:$0xf]
        %v860 = vld [vmem:[#allocation2 + $0x60] sm:$0xf]
        %v861 = vld [vmem:[#allocation2 + $0x64] sm:$0xf]
        %v862 = vld [vmem:[#allocation2 + $0x6c] sm:$0xf]
        %v863 = vld [vmem:[#allocation2 + $0x70] sm:$0xf]
        %v864 = vld [vmem:[#allocation2 + $0x78] sm:$0xf]
        %v865 = vld [vmem:[#allocation2 + $0x7c] sm:$0xf]
        %v866 = vld [vmem:[#allocation2 + $0x84] sm:$0xf]
        %v867 = vld [vmem:[#allocation2 + $0x88] sm:$0xf]
        %v868 = vld [vmem:[#allocation2 + $0x90] sm:$0xf]
        %v869 = vld [vmem:[#allocation2 + $0x94] sm:$0xf]
        %v870 = vld [vmem:[#allocation2 + $0x9c] sm:$0xf]
        %v871 = vld [vmem:[#allocation2 + $0xa0] sm:$0xf]
        %v872 = vld [vmem:[#allocation2 + $0xa8] sm:$0xf]
        %v873 = vld [vmem:[#allocation2 + $0xac] sm:$0xf]
        %v874 = vld [vmem:[#allocation2 + $0xb4] sm:$0xf]
        %v875 = vld [vmem:[#allocation2 + $0xb8] sm:$0xf]
        %v876 = vld [vmem:[#allocation4] sm:$0xf]
        %v877 = vld [vmem:[#allocation4 + $0x4] sm:$0xf]
        %v878 = vld [vmem:[#allocation4 + $0x8] sm:$0xf]
        %v879 = vld [vmem:[#allocation4 + $0xc] sm:$0xf]
        %v880 = vld [vmem:[#allocation4 + $0x10] sm:$0xf]
        %v881 = vld [vmem:[#allocation4 + $0x14] sm:$0xf]
        %v882 = vld [vmem:[#allocation4 + $0x18] sm:$0xf]
        %v883 = vld [vmem:[#allocation4 + $0x1c] sm:$0xf]
        %v884 = vld [vmem:[#allocation4 + $0x20] sm:$0xf]
        %v885 = vld [vmem:[#allocation4 + $0x24] sm:$0xf]
        %v886 = vld [vmem:[#allocation4 + $0x28] sm:$0xf]
        %v887 = vld [vmem:[#allocation4 + $0x2c] sm:$0xf]
        %v888 = vld [vmem:[#allocation4 + $0x30] sm:$0xf]
        %v889 = vld [vmem:[#allocation4 + $0x34] sm:$0xf]
        %v890 = vld [vmem:[#allocation4 + $0x38] sm:$0xf]
        %v891 = vld [vmem:[#allocation4 + $0x3c] sm:$0xf]
        %v892 = vld [vmem:[#allocation2 + $0x8] sm:$0x1]
        %v893 = vld [vmem:[#allocation2 + $0x14] sm:$0x1]
        %v894 = vld [vmem:[#allocation2 + $0x20] sm:$0x1]
        %v895 = vld [vmem:[#allocation2 + $0x2c] sm:$0x1]
        %v896 = vld [vmem:[#allocation2 + $0x38] sm:$0x1]
        %v897 = vld [vmem:[#allocation2 + $0x44] sm:$0x1]
        %v898 = vld [vmem:[#allocation2 + $0x50] sm:$0x1]
        %v899 = vld [vmem:[#allocation2 + $0x5c] sm:$0x1]
        %v900 = vld [vmem:[#allocation2 + $0x68] sm:$0x1]
        %v901 = vld [vmem:[#allocation2 + $0x74] sm:$0x1]
        %v902 = vld [vmem:[#allocation2 + $0x80] sm:$0x1]
        %v903 = vld [vmem:[#allocation2 + $0x8c] sm:$0x1]
        %v904 = vld [vmem:[#allocation2 + $0x98] sm:$0x1]
        %v905 = vld [vmem:[#allocation2 + $0xa4] sm:$0x1]
        %v906 = vld [vmem:[#allocation2 + $0xb0] sm:$0x1]
        %v907 = vld [vmem:[#allocation2 + $0xbc] sm:$0x1]
        %vm908 = vsmask.f32 3328
        %vm909 = vsmask.f32 7440
        %vm910 = vmor %vm908, %vm909
        %v912 = vshrl.u32 %v844, 16
        %v914 = vrot.slane %v912, 4
        %v915 = vshll.u32 %v844, 16
        %v917 = vrot.slane %v915, 5
        %v918 = vor.u32 %v914, %v917
        %v919 = vrot.slane %v918, 4
        %v921 = vshll.u32 %v845, 16
        %v923 = vrot.slane %v921, 5
        %v924 = vsel %vm910, %v919, %v923
        %v925 = vshrl.u32 %v845, 16
        %v927 = vrot.slane %v925, 4
        %v928 = vor.u32 %v927, %v923
        %v929 = vrot.slane %v928, 4
        %v931 = vshll.u32 %v892, 16
        %v933 = vrot.slane %v931, 5
        %v934 = vsel %vm910, %v929, %v933
        %v936 = vshrl.u32 %v846, 16
        %v938 = vrot.slane %v936, 4
        %v939 = vshll.u32 %v846, 16
        %v941 = vrot.slane %v939, 5
        %v942 = vor.u32 %v938, %v941
        %v943 = vrot.slane %v942, 4
        %v945 = vshll.u32 %v847, 16
        %v947 = vrot.slane %v945, 5
        %v948 = vsel %vm910, %v943, %v947
        %v949 = vshrl.u32 %v847, 16
        %v951 = vrot.slane %v949, 4
        %v952 = vor.u32 %v951, %v947
        %v953 = vrot.slane %v952, 4
        %v955 = vshll.u32 %v893, 16
        %v957 = vrot.slane %v955, 5
        %v958 = vsel %vm910, %v953, %v957
        %v960 = vshrl.u32 %v848, 16
        %v962 = vrot.slane %v960, 4
        %v963 = vshll.u32 %v848, 16
        %v965 = vrot.slane %v963, 5
        %v966 = vor.u32 %v962, %v965
        %v967 = vrot.slane %v966, 4
        %v969 = vshll.u32 %v849, 16
        %v971 = vrot.slane %v969, 5
        %v972 = vsel %vm910, %v967, %v971
        %v973 = vshrl.u32 %v849, 16
        %v975 = vrot.slane %v973, 4
        %v976 = vor.u32 %v975, %v971
        %v977 = vrot.slane %v976, 4
        %v979 = vshll.u32 %v894, 16
        %v981 = vrot.slane %v979, 5
        %v982 = vsel %vm910, %v977, %v981
        %v984 = vshrl.u32 %v850, 16
        %v986 = vrot.slane %v984, 4
        %v987 = vshll.u32 %v850, 16
        %v989 = vrot.slane %v987, 5
        %v990 = vor.u32 %v986, %v989
        %v991 = vrot.slane %v990, 4
        %v993 = vshll.u32 %v851, 16
        %v995 = vrot.slane %v993, 5
        %v996 = vsel %vm910, %v991, %v995
        %v997 = vshrl.u32 %v851, 16
        %v999 = vrot.slane %v997, 4
        %v1000 = vor.u32 %v999, %v995
        %v1001 = vrot.slane %v1000, 4
        %v1003 = vshll.u32 %v895, 16
        %v1005 = vrot.slane %v1003, 5
        %v1006 = vsel %vm910, %v1001, %v1005
        %v1008 = vshrl.u32 %v852, 16
        %v1010 = vrot.slane %v1008, 4
        %v1011 = vshll.u32 %v852, 16
        %v1013 = vrot.slane %v1011, 5
        %v1014 = vor.u32 %v1010, %v1013
        %v1015 = vrot.slane %v1014, 4
        %v1017 = vshll.u32 %v853, 16
        %v1019 = vrot.slane %v1017, 5
        %v1020 = vsel %vm910, %v1015, %v1019
        %v1021 = vshrl.u32 %v853, 16
        %v1023 = vrot.slane %v1021, 4
        %v1024 = vor.u32 %v1023, %v1019
        %v1025 = vrot.slane %v1024, 4
        %v1027 = vshll.u32 %v896, 16
        %v1029 = vrot.slane %v1027, 5
        %v1030 = vsel %vm910, %v1025, %v1029
        %v1032 = vshrl.u32 %v854, 16
        %v1034 = vrot.slane %v1032, 4
        %v1035 = vshll.u32 %v854, 16
        %v1037 = vrot.slane %v1035, 5
        %v1038 = vor.u32 %v1034, %v1037
        %v1039 = vrot.slane %v1038, 4
        %v1041 = vshll.u32 %v855, 16
        %v1043 = vrot.slane %v1041, 5
        %v1044 = vsel %vm910, %v1039, %v1043
        %v1045 = vshrl.u32 %v855, 16
        %v1047 = vrot.slane %v1045, 4
        %v1048 = vor.u32 %v1047, %v1043
        %v1049 = vrot.slane %v1048, 4
        %v1051 = vshll.u32 %v897, 16
        %v1053 = vrot.slane %v1051, 5
        %v1054 = vsel %vm910, %v1049, %v1053
        %v1056 = vshrl.u32 %v856, 16
        %v1058 = vrot.slane %v1056, 4
        %v1059 = vshll.u32 %v856, 16
        %v1061 = vrot.slane %v1059, 5
        %v1062 = vor.u32 %v1058, %v1061
        %v1063 = vrot.slane %v1062, 4
        %v1065 = vshll.u32 %v857, 16
        %v1067 = vrot.slane %v1065, 5
        %v1068 = vsel %vm910, %v1063, %v1067
        %v1069 = vshrl.u32 %v857, 16
        %v1071 = vrot.slane %v1069, 4
        %v1072 = vor.u32 %v1071, %v1067
        %v1073 = vrot.slane %v1072, 4
        %v1075 = vshll.u32 %v898, 16
        %v1077 = vrot.slane %v1075, 5
        %v1078 = vsel %vm910, %v1073, %v1077
        %v1080 = vshrl.u32 %v858, 16
        %v1082 = vrot.slane %v1080, 4
        %v1083 = vshll.u32 %v858, 16
        %v1085 = vrot.slane %v1083, 5
        %v1086 = vor.u32 %v1082, %v1085
        %v1087 = vrot.slane %v1086, 4
        %v1089 = vshll.u32 %v859, 16
        %v1091 = vrot.slane %v1089, 5
        %v1092 = vsel %vm910, %v1087, %v1091
        %v1093 = vshrl.u32 %v859, 16
        %v1095 = vrot.slane %v1093, 4
        %v1096 = vor.u32 %v1095, %v1091
        %v1097 = vrot.slane %v1096, 4
        %v1099 = vshll.u32 %v899, 16
        %v1101 = vrot.slane %v1099, 5
        %v1102 = vsel %vm910, %v1097, %v1101
        %v1104 = vshrl.u32 %v860, 16
        %v1106 = vrot.slane %v1104, 4
        %v1107 = vshll.u32 %v860, 16
        %v1109 = vrot.slane %v1107, 5
        %v1110 = vor.u32 %v1106, %v1109
        %v1111 = vrot.slane %v1110, 4
        %v1113 = vshll.u32 %v861, 16
        %v1115 = vrot.slane %v1113, 5
        %v1116 = vsel %vm910, %v1111, %v1115
        %v1117 = vshrl.u32 %v861, 16
        %v1119 = vrot.slane %v1117, 4
        %v1120 = vor.u32 %v1119, %v1115
        %v1121 = vrot.slane %v1120, 4
        %v1123 = vshll.u32 %v900, 16
        %v1125 = vrot.slane %v1123, 5
        %v1126 = vsel %vm910, %v1121, %v1125
        %v1128 = vshrl.u32 %v862, 16
        %v1130 = vrot.slane %v1128, 4
        %v1131 = vshll.u32 %v862, 16
        %v1133 = vrot.slane %v1131, 5
        %v1134 = vor.u32 %v1130, %v1133
        %v1135 = vrot.slane %v1134, 4
        %v1137 = vshll.u32 %v863, 16
        %v1139 = vrot.slane %v1137, 5
        %v1140 = vsel %vm910, %v1135, %v1139
        %v1141 = vshrl.u32 %v863, 16
        %v1143 = vrot.slane %v1141, 4
        %v1144 = vor.u32 %v1143, %v1139
        %v1145 = vrot.slane %v1144, 4
        %v1147 = vshll.u32 %v901, 16
        %v1149 = vrot.slane %v1147, 5
        %v1150 = vsel %vm910, %v1145, %v1149
        %v1152 = vshrl.u32 %v864, 16
        %v1154 = vrot.slane %v1152, 4
        %v1155 = vshll.u32 %v864, 16
        %v1157 = vrot.slane %v1155, 5
        %v1158 = vor.u32 %v1154, %v1157
        %v1159 = vrot.slane %v1158, 4
        %v1161 = vshll.u32 %v865, 16
        %v1163 = vrot.slane %v1161, 5
        %v1164 = vsel %vm910, %v1159, %v1163
        %v1165 = vshrl.u32 %v865, 16
        %v1167 = vrot.slane %v1165, 4
        %v1168 = vor.u32 %v1167, %v1163
        %v1169 = vrot.slane %v1168, 4
        %v1171 = vshll.u32 %v902, 16
        %v1173 = vrot.slane %v1171, 5
        %v1174 = vsel %vm910, %v1169, %v1173
        %v1176 = vshrl.u32 %v866, 16
        %v1178 = vrot.slane %v1176, 4
        %v1179 = vshll.u32 %v866, 16
        %v1181 = vrot.slane %v1179, 5
        %v1182 = vor.u32 %v1178, %v1181
        %v1183 = vrot.slane %v1182, 4
        %v1185 = vshll.u32 %v867, 16
        %v1187 = vrot.slane %v1185, 5
        %v1188 = vsel %vm910, %v1183, %v1187
        %v1189 = vshrl.u32 %v867, 16
        %v1191 = vrot.slane %v1189, 4
        %v1192 = vor.u32 %v1191, %v1187
        %v1193 = vrot.slane %v1192, 4
        %v1195 = vshll.u32 %v903, 16
        %v1197 = vrot.slane %v1195, 5
        %v1198 = vsel %vm910, %v1193, %v1197
        %v1200 = vshrl.u32 %v868, 16
        %v1202 = vrot.slane %v1200, 4
        %v1203 = vshll.u32 %v868, 16
        %v1205 = vrot.slane %v1203, 5
        %v1206 = vor.u32 %v1202, %v1205
        %v1207 = vrot.slane %v1206, 4
        %v1209 = vshll.u32 %v869, 16
        %v1211 = vrot.slane %v1209, 5
        %v1212 = vsel %vm910, %v1207, %v1211
        %v1213 = vshrl.u32 %v869, 16
        %v1215 = vrot.slane %v1213, 4
        %v1216 = vor.u32 %v1215, %v1211
        %v1217 = vrot.slane %v1216, 4
        %v1219 = vshll.u32 %v904, 16
        %v1221 = vrot.slane %v1219, 5
        %v1222 = vsel %vm910, %v1217, %v1221
        %v1224 = vshrl.u32 %v870, 16
        %v1226 = vrot.slane %v1224, 4
        %v1227 = vshll.u32 %v870, 16
        %v1229 = vrot.slane %v1227, 5
        %v1230 = vor.u32 %v1226, %v1229
        %v1231 = vrot.slane %v1230, 4
        %v1233 = vshll.u32 %v871, 16
        %v1235 = vrot.slane %v1233, 5
        %v1236 = vsel %vm910, %v1231, %v1235
        %v1237 = vshrl.u32 %v871, 16
        %v1239 = vrot.slane %v1237, 4
        %v1240 = vor.u32 %v1239, %v1235
        %v1241 = vrot.slane %v1240, 4
        %v1243 = vshll.u32 %v905, 16
        %v1245 = vrot.slane %v1243, 5
        %v1246 = vsel %vm910, %v1241, %v1245
        %v1248 = vshrl.u32 %v872, 16
        %v1250 = vrot.slane %v1248, 4
        %v1251 = vshll.u32 %v872, 16
        %v1253 = vrot.slane %v1251, 5
        %v1254 = vor.u32 %v1250, %v1253
        %v1255 = vrot.slane %v1254, 4
        %v1257 = vshll.u32 %v873, 16
        %v1259 = vrot.slane %v1257, 5
        %v1260 = vsel %vm910, %v1255, %v1259
        %v1261 = vshrl.u32 %v873, 16
        %v1263 = vrot.slane %v1261, 4
        %v1264 = vor.u32 %v1263, %v1259
        %v1265 = vrot.slane %v1264, 4
        %v1267 = vshll.u32 %v906, 16
        %v1269 = vrot.slane %v1267, 5
        %v1270 = vsel %vm910, %v1265, %v1269
        %v1272 = vshrl.u32 %v874, 16
        %v1274 = vrot.slane %v1272, 4
        %v1275 = vshll.u32 %v874, 16
        %v1277 = vrot.slane %v1275, 5
        %v1278 = vor.u32 %v1274, %v1277
        %v1279 = vrot.slane %v1278, 4
        %v1281 = vshll.u32 %v875, 16
        %v1283 = vrot.slane %v1281, 5
        %v1284 = vsel %vm910, %v1279, %v1283
        %v1285 = vshrl.u32 %v875, 16
        %v1287 = vrot.slane %v1285, 4
        %v1288 = vor.u32 %v1287, %v1283
        %v1289 = vrot.slane %v1288, 4
        %v1291 = vshll.u32 %v907, 16
        %v1293 = vrot.slane %v1291, 5
        %v1294 = vsel %vm910, %v1289, %v1293
        %v1295 = vld [vmem:[#allocation4 + $0x40] sm:$0xf]
        %v1296 = vld [vmem:[#allocation4 + $0x44] sm:$0xf]
        %v1297 = vld [vmem:[#allocation4 + $0x48] sm:$0xf]
        %v1298 = vld [vmem:[#allocation4 + $0x4c] sm:$0xf]
        %v1299 = vld [vmem:[#allocation4 + $0x50] sm:$0xf]
        %v1300 = vld [vmem:[#allocation4 + $0x54] sm:$0xf]
        %v1301 = vld [vmem:[#allocation4 + $0x58] sm:$0xf]
        %v1302 = vld [vmem:[#allocation4 + $0x5c] sm:$0xf]
        %v1303 = vld [vmem:[#allocation4 + $0x60] sm:$0xf]
        %v1304 = vld [vmem:[#allocation4 + $0x64] sm:$0xf]
        %v1305 = vld [vmem:[#allocation4 + $0x68] sm:$0xf]
        %v1306 = vld [vmem:[#allocation4 + $0x6c] sm:$0xf]
        %v1307 = vld [vmem:[#allocation4 + $0x70] sm:$0xf]
        %v1308 = vld [vmem:[#allocation4 + $0x74] sm:$0xf]
        %v1309 = vld [vmem:[#allocation4 + $0x78] sm:$0xf]
        %v1310 = vld [vmem:[#allocation4 + $0x7c] sm:$0xf]
        %v1311 = vunpack.c.l.b16 %v924
        %v1312 = vunpack.c.l.b16 %v934
        %v1313 = vunpack.c.l.b16 %v948
        %v1314 = vunpack.c.l.b16 %v958
        %v1315 = vunpack.c.l.b16 %v972
        %v1316 = vunpack.c.l.b16 %v982
        %v1317 = vunpack.c.l.b16 %v996
        %v1318 = vunpack.c.l.b16 %v1006
        %v1319 = vunpack.c.l.b16 %v1020
        %v1320 = vunpack.c.l.b16 %v1030
        %v1321 = vunpack.c.l.b16 %v1044
        %v1322 = vunpack.c.l.b16 %v1054
        %v1323 = vunpack.c.l.b16 %v1068
        %v1324 = vunpack.c.l.b16 %v1078
        %v1325 = vunpack.c.l.b16 %v1092
        %v1326 = vunpack.c.l.b16 %v1102
        %v1327 = vunpack.c.l.b16 %v1116
        %v1328 = vunpack.c.l.b16 %v1126
        %v1329 = vunpack.c.l.b16 %v1140
        %v1330 = vunpack.c.l.b16 %v1150
        %v1331 = vunpack.c.l.b16 %v1164
        %v1332 = vunpack.c.l.b16 %v1174
        %v1333 = vunpack.c.l.b16 %v1188
        %v1334 = vunpack.c.l.b16 %v1198
        %v1335 = vunpack.c.l.b16 %v1212
        %v1336 = vunpack.c.l.b16 %v1222
        %v1337 = vunpack.c.l.b16 %v1236
        %v1338 = vunpack.c.l.b16 %v1246
        %v1339 = vunpack.c.l.b16 %v1260
        %v1340 = vunpack.c.l.b16 %v1270
        %v1341 = vunpack.c.l.b16 %v1284
        %v1342 = vunpack.c.l.b16 %v1294
        %v1343 = vpack.c.b16 %v1312, %v1311
        %v1344 = vpack.c.b16 %v1314, %v1313
        %v1345 = vpack.c.b16 %v1316, %v1315
        %v1346 = vpack.c.b16 %v1318, %v1317
        %v1347 = vpack.c.b16 %v1320, %v1319
        %v1348 = vpack.c.b16 %v1322, %v1321
        %v1349 = vpack.c.b16 %v1324, %v1323
        %v1350 = vpack.c.b16 %v1326, %v1325
        %v1351 = vpack.c.b16 %v1328, %v1327
        %v1352 = vpack.c.b16 %v1330, %v1329
        %v1353 = vpack.c.b16 %v1332, %v1331
        %v1354 = vpack.c.b16 %v1334, %v1333
        %v1355 = vpack.c.b16 %v1336, %v1335
        %v1356 = vpack.c.b16 %v1338, %v1337
        %v1357 = vpack.c.b16 %v1340, %v1339
        %v1358 = vpack.c.b16 %v1342, %v1341
        %v1391 = vunpack.c.l.b16 %v1295
        %v1392 = vunpack.c.l.b16 %v1296
        %v1393 = vunpack.c.l.b16 %v1297
        %v1394 = vunpack.c.l.b16 %v1298
        %v1395 = vunpack.c.l.b16 %v1299
        %v1396 = vunpack.c.l.b16 %v1300
        %v1397 = vunpack.c.l.b16 %v1301
        %v1398 = vunpack.c.l.b16 %v1302
        %v1399 = vunpack.c.l.b16 %v1303
        %v1400 = vunpack.c.l.b16 %v1304
        %v1401 = vunpack.c.l.b16 %v1305
        %v1402 = vunpack.c.l.b16 %v1306
        %v1403 = vunpack.c.l.b16 %v1307
        %v1404 = vunpack.c.l.b16 %v1308
        %v1405 = vunpack.c.l.b16 %v1309
        %v1406 = vunpack.c.l.b16 %v1310
        %v1407 = vpack.c.b16 %v1392, %v1391
        %v1408 = vpack.c.b16 %v1394, %v1393
        %v1409 = vpack.c.b16 %v1396, %v1395
        %v1410 = vpack.c.b16 %v1398, %v1397
        %v1411 = vpack.c.b16 %v1400, %v1399
        %v1412 = vpack.c.b16 %v1402, %v1401
        %v1413 = vpack.c.b16 %v1404, %v1403
        %v1414 = vpack.c.b16 %v1406, %v1405
        %1423 = vmatpush.bf16.msra.mxu0 %v1414
        %1424 = vmatpush.bf16.msra.mxu0 %v1413
        %1425 = vmatpush.bf16.msra.mxu0 %v1412
        %1426 = vmatpush.bf16.msra.mxu0 %v1411
        %1427 = vmatpush.bf16.msra.mxu0 %v1410
        %1428 = vmatpush.bf16.msra.mxu0 %v1409
        %1429 = vmatpush.bf16.msra.mxu0 %v1408
        %1430 = vmatpush.bf16.msra.mxu0 %v1407
        %1431 = vmatmul.bf16.gmra.mxu0 %v1343
        %v1432 = vpop.f32.mrf.mxu0
        %v1433 = vadd.f32 0.0, %v1432
        %v1434 = vpop.f32.mrf.mxu0
        %v1435 = vadd.f32 0.0, %v1434
        %1436 = vmatmul.bf16.gmra.mxu0 %v1344
        %v1437 = vpop.f32.mrf.mxu0
        %v1438 = vadd.f32 0.0, %v1437
        %v1439 = vpop.f32.mrf.mxu0
        %v1440 = vadd.f32 0.0, %v1439
        %1441 = vmatmul.bf16.gmra.mxu0 %v1345
        %v1442 = vpop.f32.mrf.mxu0
        %v1443 = vadd.f32 0.0, %v1442
        %v1444 = vpop.f32.mrf.mxu0
        %v1445 = vadd.f32 0.0, %v1444
        %1446 = vmatmul.bf16.gmra.mxu0 %v1346
        %v1447 = vpop.f32.mrf.mxu0
        %v1448 = vadd.f32 0.0, %v1447
        %v1449 = vpop.f32.mrf.mxu0
        %v1450 = vadd.f32 0.0, %v1449
        %1451 = vmatmul.bf16.gmra.mxu0 %v1347
        %v1452 = vpop.f32.mrf.mxu0
        %v1453 = vadd.f32 0.0, %v1452
        %v1454 = vpop.f32.mrf.mxu0
        %v1455 = vadd.f32 0.0, %v1454
        %1456 = vmatmul.bf16.gmra.mxu0 %v1348
        %v1457 = vpop.f32.mrf.mxu0
        %v1458 = vadd.f32 0.0, %v1457
        %v1459 = vpop.f32.mrf.mxu0
        %v1460 = vadd.f32 0.0, %v1459
        %1461 = vmatmul.bf16.gmra.mxu0 %v1349
        %v1462 = vpop.f32.mrf.mxu0
        %v1463 = vadd.f32 0.0, %v1462
        %v1464 = vpop.f32.mrf.mxu0
        %v1465 = vadd.f32 0.0, %v1464
        %1466 = vmatmul.bf16.gmra.mxu0 %v1350
        %v1467 = vpop.f32.mrf.mxu0
        %v1468 = vadd.f32 0.0, %v1467
        %v1469 = vpop.f32.mrf.mxu0
        %v1470 = vadd.f32 0.0, %v1469
        %1471 = vmatmul.bf16.gmra.mxu0 %v1351
        %v1472 = vpop.f32.mrf.mxu0
        %v1473 = vadd.f32 0.0, %v1472
        %v1474 = vpop.f32.mrf.mxu0
        %v1475 = vadd.f32 0.0, %v1474
        %1476 = vmatmul.bf16.gmra.mxu0 %v1352
        %v1477 = vpop.f32.mrf.mxu0
        %v1478 = vadd.f32 0.0, %v1477
        %v1479 = vpop.f32.mrf.mxu0
        %v1480 = vadd.f32 0.0, %v1479
        %1481 = vmatmul.bf16.gmra.mxu0 %v1353
        %v1482 = vpop.f32.mrf.mxu0
        %v1483 = vadd.f32 0.0, %v1482
        %v1484 = vpop.f32.mrf.mxu0
        %v1485 = vadd.f32 0.0, %v1484
        %1486 = vmatmul.bf16.gmra.mxu0 %v1354
        %v1487 = vpop.f32.mrf.mxu0
        %v1488 = vadd.f32 0.0, %v1487
        %v1489 = vpop.f32.mrf.mxu0
        %v1490 = vadd.f32 0.0, %v1489
        %1491 = vmatmul.bf16.gmra.mxu0 %v1355
        %v1492 = vpop.f32.mrf.mxu0
        %v1493 = vadd.f32 0.0, %v1492
        %v1494 = vpop.f32.mrf.mxu0
        %v1495 = vadd.f32 0.0, %v1494
        %1496 = vmatmul.bf16.gmra.mxu0 %v1356
        %v1497 = vpop.f32.mrf.mxu0
        %v1498 = vadd.f32 0.0, %v1497
        %v1499 = vpop.f32.mrf.mxu0
        %v1500 = vadd.f32 0.0, %v1499
        %1501 = vmatmul.bf16.gmra.mxu0 %v1357
        %v1502 = vpop.f32.mrf.mxu0
        %v1503 = vadd.f32 0.0, %v1502
        %v1504 = vpop.f32.mrf.mxu0
        %v1505 = vadd.f32 0.0, %v1504
        %1506 = vmatmul.bf16.gmra.mxu0 %v1358
        %v1507 = vpop.f32.mrf.mxu0
        %v1508 = vadd.f32 0.0, %v1507
        %v1509 = vpop.f32.mrf.mxu0
        %v1510 = vadd.f32 0.0, %v1509
        %1511 = vdwg.mxu0
        %v1544 = vunpack.c.l.b16 %v844
        %v1545 = vunpack.c.l.b16 %v845
        %v1546 = vunpack.c.l.b16 %v846
        %v1547 = vunpack.c.l.b16 %v847
        %v1548 = vunpack.c.l.b16 %v848
        %v1549 = vunpack.c.l.b16 %v849
        %v1550 = vunpack.c.l.b16 %v850
        %v1551 = vunpack.c.l.b16 %v851
        %v1552 = vunpack.c.l.b16 %v852
        %v1553 = vunpack.c.l.b16 %v853
        %v1554 = vunpack.c.l.b16 %v854
        %v1555 = vunpack.c.l.b16 %v855
        %v1556 = vunpack.c.l.b16 %v856
        %v1557 = vunpack.c.l.b16 %v857
        %v1558 = vunpack.c.l.b16 %v858
        %v1559 = vunpack.c.l.b16 %v859
        %v1560 = vunpack.c.l.b16 %v860
        %v1561 = vunpack.c.l.b16 %v861
        %v1562 = vunpack.c.l.b16 %v862
        %v1563 = vunpack.c.l.b16 %v863
        %v1564 = vunpack.c.l.b16 %v864
        %v1565 = vunpack.c.l.b16 %v865
        %v1566 = vunpack.c.l.b16 %v866
        %v1567 = vunpack.c.l.b16 %v867
        %v1568 = vunpack.c.l.b16 %v868
        %v1569 = vunpack.c.l.b16 %v869
        %v1570 = vunpack.c.l.b16 %v870
        %v1571 = vunpack.c.l.b16 %v871
        %v1572 = vunpack.c.l.b16 %v872
        %v1573 = vunpack.c.l.b16 %v873
        %v1574 = vunpack.c.l.b16 %v874
        %v1575 = vunpack.c.l.b16 %v875
        %v1576 = vpack.c.b16 %v1545, %v1544
        %v1577 = vpack.c.b16 %v1547, %v1546
        %v1578 = vpack.c.b16 %v1549, %v1548
        %v1579 = vpack.c.b16 %v1551, %v1550
        %v1580 = vpack.c.b16 %v1553, %v1552
        %v1581 = vpack.c.b16 %v1555, %v1554
        %v1582 = vpack.c.b16 %v1557, %v1556
        %v1583 = vpack.c.b16 %v1559, %v1558
        %v1584 = vpack.c.b16 %v1561, %v1560
        %v1585 = vpack.c.b16 %v1563, %v1562
        %v1586 = vpack.c.b16 %v1565, %v1564
        %v1587 = vpack.c.b16 %v1567, %v1566
        %v1588 = vpack.c.b16 %v1569, %v1568
        %v1589 = vpack.c.b16 %v1571, %v1570
        %v1590 = vpack.c.b16 %v1573, %v1572
        %v1591 = vpack.c.b16 %v1575, %v1574
        %v1624 = vunpack.c.l.b16 %v876
        %v1625 = vunpack.c.l.b16 %v877
        %v1626 = vunpack.c.l.b16 %v878
        %v1627 = vunpack.c.l.b16 %v879
        %v1628 = vunpack.c.l.b16 %v880
        %v1629 = vunpack.c.l.b16 %v881
        %v1630 = vunpack.c.l.b16 %v882
        %v1631 = vunpack.c.l.b16 %v883
        %v1632 = vunpack.c.l.b16 %v884
        %v1633 = vunpack.c.l.b16 %v885
        %v1634 = vunpack.c.l.b16 %v886
        %v1635 = vunpack.c.l.b16 %v887
        %v1636 = vunpack.c.l.b16 %v888
        %v1637 = vunpack.c.l.b16 %v889
        %v1638 = vunpack.c.l.b16 %v890
        %v1639 = vunpack.c.l.b16 %v891
        %v1640 = vpack.c.b16 %v1625, %v1624
        %v1641 = vpack.c.b16 %v1627, %v1626
        %v1642 = vpack.c.b16 %v1629, %v1628
        %v1643 = vpack.c.b16 %v1631, %v1630
        %v1644 = vpack.c.b16 %v1633, %v1632
        %v1645 = vpack.c.b16 %v1635, %v1634
        %v1646 = vpack.c.b16 %v1637, %v1636
        %v1647 = vpack.c.b16 %v1639, %v1638
        %1656 = vmatpush.bf16.msra.mxu0 %v1647
        %1657 = vmatpush.bf16.msra.mxu0 %v1646
        %1658 = vmatpush.bf16.msra.mxu0 %v1645
        %1659 = vmatpush.bf16.msra.mxu0 %v1644
        %1660 = vmatpush.bf16.msra.mxu0 %v1643
        %1661 = vmatpush.bf16.msra.mxu0 %v1642
        %1662 = vmatpush.bf16.msra.mxu0 %v1641
        %1663 = vmatpush.bf16.msra.mxu0 %v1640
        %1664 = vmatmul.bf16.gmra.mxu0 %v1576
        %v1665 = vpop.f32.mrf.mxu0
        %v1666 = vadd.f32 %v1433, %v1665
        %v1667 = vpop.f32.mrf.mxu0
        %v1668 = vadd.f32 %v1435, %v1667
        %1669 = vmatmul.bf16.gmra.mxu0 %v1577
        %v1670 = vpop.f32.mrf.mxu0
        %v1671 = vadd.f32 %v1438, %v1670
        %v1672 = vpop.f32.mrf.mxu0
        %v1673 = vadd.f32 %v1440, %v1672
        %1674 = vmatmul.bf16.gmra.mxu0 %v1578
        %v1675 = vpop.f32.mrf.mxu0
        %v1676 = vadd.f32 %v1443, %v1675
        %v1677 = vpop.f32.mrf.mxu0
        %v1678 = vadd.f32 %v1445, %v1677
        %1679 = vmatmul.bf16.gmra.mxu0 %v1579
        %v1680 = vpop.f32.mrf.mxu0
        %v1681 = vadd.f32 %v1448, %v1680
        %v1682 = vpop.f32.mrf.mxu0
        %v1683 = vadd.f32 %v1450, %v1682
        %1684 = vmatmul.bf16.gmra.mxu0 %v1580
        %v1685 = vpop.f32.mrf.mxu0
        %v1686 = vadd.f32 %v1453, %v1685
        %v1687 = vpop.f32.mrf.mxu0
        %v1688 = vadd.f32 %v1455, %v1687
        %1689 = vmatmul.bf16.gmra.mxu0 %v1581
        %v1690 = vpop.f32.mrf.mxu0
        %v1691 = vadd.f32 %v1458, %v1690
        %v1692 = vpop.f32.mrf.mxu0
        %v1693 = vadd.f32 %v1460, %v1692
        %1694 = vmatmul.bf16.gmra.mxu0 %v1582
        %v1695 = vpop.f32.mrf.mxu0
        %v1696 = vadd.f32 %v1463, %v1695
        %v1697 = vpop.f32.mrf.mxu0
        %v1698 = vadd.f32 %v1465, %v1697
        %1699 = vmatmul.bf16.gmra.mxu0 %v1583
        %v1700 = vpop.f32.mrf.mxu0
        %v1701 = vadd.f32 %v1468, %v1700
        %v1702 = vpop.f32.mrf.mxu0
        %v1703 = vadd.f32 %v1470, %v1702
        %1704 = vmatmul.bf16.gmra.mxu0 %v1584
        %v1705 = vpop.f32.mrf.mxu0
        %v1706 = vadd.f32 %v1473, %v1705
        %v1707 = vpop.f32.mrf.mxu0
        %v1708 = vadd.f32 %v1475, %v1707
        %1709 = vmatmul.bf16.gmra.mxu0 %v1585
        %v1710 = vpop.f32.mrf.mxu0
        %v1711 = vadd.f32 %v1478, %v1710
        %v1712 = vpop.f32.mrf.mxu0
        %v1713 = vadd.f32 %v1480, %v1712
        %1714 = vmatmul.bf16.gmra.mxu0 %v1586
        %v1715 = vpop.f32.mrf.mxu0
        %v1716 = vadd.f32 %v1483, %v1715
        %v1717 = vpop.f32.mrf.mxu0
        %v1718 = vadd.f32 %v1485, %v1717
        %1719 = vmatmul.bf16.gmra.mxu0 %v1587
        %v1720 = vpop.f32.mrf.mxu0
        %v1721 = vadd.f32 %v1488, %v1720
        %v1722 = vpop.f32.mrf.mxu0
        %v1723 = vadd.f32 %v1490, %v1722
        %1724 = vmatmul.bf16.gmra.mxu0 %v1588
        %v1725 = vpop.f32.mrf.mxu0
        %v1726 = vadd.f32 %v1493, %v1725
        %v1727 = vpop.f32.mrf.mxu0
        %v1728 = vadd.f32 %v1495, %v1727
        %1729 = vmatmul.bf16.gmra.mxu0 %v1589
        %v1730 = vpop.f32.mrf.mxu0
        %v1731 = vadd.f32 %v1498, %v1730
        %v1732 = vpop.f32.mrf.mxu0
        %v1733 = vadd.f32 %v1500, %v1732
        %1734 = vmatmul.bf16.gmra.mxu0 %v1590
        %v1735 = vpop.f32.mrf.mxu0
        %v1736 = vadd.f32 %v1503, %v1735
        %v1737 = vpop.f32.mrf.mxu0
        %v1738 = vadd.f32 %v1505, %v1737
        %1739 = vmatmul.bf16.gmra.mxu0 %v1591
        %v1740 = vpop.f32.mrf.mxu0
        %v1741 = vadd.f32 %v1508, %v1740
        %v1742 = vpop.f32.mrf.mxu0
        %v1743 = vadd.f32 %v1510, %v1742
        %1744 = vdwg.mxu0
        %v1745 = vld [vmem:[#allocation2] sm:$0xe]
        %v1746 = vld [vmem:[#allocation2 + $0xc] sm:$0xe]
        %v1747 = vld [vmem:[#allocation2 + $0x18] sm:$0xe]
        %v1748 = vld [vmem:[#allocation2 + $0x24] sm:$0xe]
        %v1749 = vld [vmem:[#allocation2 + $0x30] sm:$0xe]
        %v1750 = vld [vmem:[#allocation2 + $0x3c] sm:$0xe]
        %v1751 = vld [vmem:[#allocation2 + $0x48] sm:$0xe]
        %v1752 = vld [vmem:[#allocation2 + $0x54] sm:$0xe]
        %v1753 = vld [vmem:[#allocation2 + $0x60] sm:$0xe]
        %v1754 = vld [vmem:[#allocation2 + $0x6c] sm:$0xe]
        %v1755 = vld [vmem:[#allocation2 + $0x78] sm:$0xe]
        %v1756 = vld [vmem:[#allocation2 + $0x84] sm:$0xe]
        %v1757 = vld [vmem:[#allocation2 + $0x90] sm:$0xe]
        %v1758 = vld [vmem:[#allocation2 + $0x9c] sm:$0xe]
        %v1759 = vld [vmem:[#allocation2 + $0xa8] sm:$0xe]
        %v1760 = vld [vmem:[#allocation2 + $0xb4] sm:$0xe]
        %vm1793 = vcmask 1042432
        %vm1794 = vcmask 1046532
        %vm1795 = vmor %vm1793, %vm1794
        %v1796 = vrot.slane %v1745, 5
        %v1797 = vrot.slane %v1796, 4
        %v1798 = vrot.slane %v845, 5
        %v1799 = vsel %vm1795, %v1797, %v1798
        %v1800 = vrot.slane %v1798, 4
        %v1801 = vrot.slane %v892, 5
        %v1802 = vsel %vm1795, %v1800, %v1801
        %v1803 = vrot.slane %v1746, 5
        %v1804 = vrot.slane %v1803, 4
        %v1805 = vrot.slane %v847, 5
        %v1806 = vsel %vm1795, %v1804, %v1805
        %v1807 = vrot.slane %v1805, 4
        %v1808 = vrot.slane %v893, 5
        %v1809 = vsel %vm1795, %v1807, %v1808
        %v1810 = vrot.slane %v1747, 5
        %v1811 = vrot.slane %v1810, 4
        %v1812 = vrot.slane %v849, 5
        %v1813 = vsel %vm1795, %v1811, %v1812
        %v1814 = vrot.slane %v1812, 4
        %v1815 = vrot.slane %v894, 5
        %v1816 = vsel %vm1795, %v1814, %v1815
        %v1817 = vrot.slane %v1748, 5
        %v1818 = vrot.slane %v1817, 4
        %v1819 = vrot.slane %v851, 5
        %v1820 = vsel %vm1795, %v1818, %v1819
        %v1821 = vrot.slane %v1819, 4
        %v1822 = vrot.slane %v895, 5
        %v1823 = vsel %vm1795, %v1821, %v1822
        %v1824 = vrot.slane %v1749, 5
        %v1825 = vrot.slane %v1824, 4
        %v1826 = vrot.slane %v853, 5
        %v1827 = vsel %vm1795, %v1825, %v1826
        %v1828 = vrot.slane %v1826, 4
        %v1829 = vrot.slane %v896, 5
        %v1830 = vsel %vm1795, %v1828, %v1829
        %v1831 = vrot.slane %v1750, 5
        %v1832 = vrot.slane %v1831, 4
        %v1833 = vrot.slane %v855, 5
        %v1834 = vsel %vm1795, %v1832, %v1833
        %v1835 = vrot.slane %v1833, 4
        %v1836 = vrot.slane %v897, 5
        %v1837 = vsel %vm1795, %v1835, %v1836
        %v1838 = vrot.slane %v1751, 5
        %v1839 = vrot.slane %v1838, 4
        %v1840 = vrot.slane %v857, 5
        %v1841 = vsel %vm1795, %v1839, %v1840
        %v1842 = vrot.slane %v1840, 4
        %v1843 = vrot.slane %v898, 5
        %v1844 = vsel %vm1795, %v1842, %v1843
        %v1845 = vrot.slane %v1752, 5
        %v1846 = vrot.slane %v1845, 4
        %v1847 = vrot.slane %v859, 5
        %v1848 = vsel %vm1795, %v1846, %v1847
        %v1849 = vrot.slane %v1847, 4
        %v1850 = vrot.slane %v899, 5
        %v1851 = vsel %vm1795, %v1849, %v1850
        %v1852 = vrot.slane %v1753, 5
        %v1853 = vrot.slane %v1852, 4
        %v1854 = vrot.slane %v861, 5
        %v1855 = vsel %vm1795, %v1853, %v1854
        %v1856 = vrot.slane %v1854, 4
        %v1857 = vrot.slane %v900, 5
        %v1858 = vsel %vm1795, %v1856, %v1857
        %v1859 = vrot.slane %v1754, 5
        %v1860 = vrot.slane %v1859, 4
        %v1861 = vrot.slane %v863, 5
        %v1862 = vsel %vm1795, %v1860, %v1861
        %v1863 = vrot.slane %v1861, 4
        %v1864 = vrot.slane %v901, 5
        %v1865 = vsel %vm1795, %v1863, %v1864
        %v1866 = vrot.slane %v1755, 5
        %v1867 = vrot.slane %v1866, 4
        %v1868 = vrot.slane %v865, 5
        %v1869 = vsel %vm1795, %v1867, %v1868
        %v1870 = vrot.slane %v1868, 4
        %v1871 = vrot.slane %v902, 5
        %v1872 = vsel %vm1795, %v1870, %v1871
        %v1873 = vrot.slane %v1756, 5
        %v1874 = vrot.slane %v1873, 4
        %v1875 = vrot.slane %v867, 5
        %v1876 = vsel %vm1795, %v1874, %v1875
        %v1877 = vrot.slane %v1875, 4
        %v1878 = vrot.slane %v903, 5
        %v1879 = vsel %vm1795, %v1877, %v1878
        %v1880 = vrot.slane %v1757, 5
        %v1881 = vrot.slane %v1880, 4
        %v1882 = vrot.slane %v869, 5
        %v1883 = vsel %vm1795, %v1881, %v1882
        %v1884 = vrot.slane %v1882, 4
        %v1885 = vrot.slane %v904, 5
        %v1886 = vsel %vm1795, %v1884, %v1885
        %v1887 = vrot.slane %v1758, 5
        %v1888 = vrot.slane %v1887, 4
        %v1889 = vrot.slane %v871, 5
        %v1890 = vsel %vm1795, %v1888, %v1889
        %v1891 = vrot.slane %v1889, 4
        %v1892 = vrot.slane %v905, 5
        %v1893 = vsel %vm1795, %v1891, %v1892
        %v1894 = vrot.slane %v1759, 5
        %v1895 = vrot.slane %v1894, 4
        %v1896 = vrot.slane %v873, 5
        %v1897 = vsel %vm1795, %v1895, %v1896
        %v1898 = vrot.slane %v1896, 4
        %v1899 = vrot.slane %v906, 5
        %v1900 = vsel %vm1795, %v1898, %v1899
        %v1901 = vrot.slane %v1760, 5
        %v1902 = vrot.slane %v1901, 4
        %v1903 = vrot.slane %v875, 5
        %v1904 = vsel %vm1795, %v1902, %v1903
        %v1905 = vrot.slane %v1903, 4
        %v1906 = vrot.slane %v907, 5
        %v1907 = vsel %vm1795, %v1905, %v1906
        %v1908 = vld [vmem:[#allocation4 + $0x80] sm:$0xf]
        %v1909 = vld [vmem:[#allocation4 + $0x84] sm:$0xf]
        %v1910 = vld [vmem:[#allocation4 + $0x88] sm:$0xf]
        %v1911 = vld [vmem:[#allocation4 + $0x8c] sm:$0xf]
        %v1912 = vld [vmem:[#allocation4 + $0x90] sm:$0xf]
        %v1913 = vld [vmem:[#allocation4 + $0x94] sm:$0xf]
        %v1914 = vld [vmem:[#allocation4 + $0x98] sm:$0xf]
        %v1915 = vld [vmem:[#allocation4 + $0x9c] sm:$0xf]
        %v1916 = vld [vmem:[#allocation4 + $0xa0] sm:$0xf]
        %v1917 = vld [vmem:[#allocation4 + $0xa4] sm:$0xf]
        %v1918 = vld [vmem:[#allocation4 + $0xa8] sm:$0xf]
        %v1919 = vld [vmem:[#allocation4 + $0xac] sm:$0xf]
        %v1920 = vld [vmem:[#allocation4 + $0xb0] sm:$0xf]
        %v1921 = vld [vmem:[#allocation4 + $0xb4] sm:$0xf]
        %v1922 = vld [vmem:[#allocation4 + $0xb8] sm:$0xf]
        %v1923 = vld [vmem:[#allocation4 + $0xbc] sm:$0xf]
        %v1924 = vunpack.c.l.b16 %v1799
        %v1925 = vunpack.c.l.b16 %v1802
        %v1926 = vunpack.c.l.b16 %v1806
        %v1927 = vunpack.c.l.b16 %v1809
        %v1928 = vunpack.c.l.b16 %v1813
        %v1929 = vunpack.c.l.b16 %v1816
        %v1930 = vunpack.c.l.b16 %v1820
        %v1931 = vunpack.c.l.b16 %v1823
        %v1932 = vunpack.c.l.b16 %v1827
        %v1933 = vunpack.c.l.b16 %v1830
        %v1934 = vunpack.c.l.b16 %v1834
        %v1935 = vunpack.c.l.b16 %v1837
        %v1936 = vunpack.c.l.b16 %v1841
        %v1937 = vunpack.c.l.b16 %v1844
        %v1938 = vunpack.c.l.b16 %v1848
        %v1939 = vunpack.c.l.b16 %v1851
        %v1940 = vunpack.c.l.b16 %v1855
        %v1941 = vunpack.c.l.b16 %v1858
        %v1942 = vunpack.c.l.b16 %v1862
        %v1943 = vunpack.c.l.b16 %v1865
        %v1944 = vunpack.c.l.b16 %v1869
        %v1945 = vunpack.c.l.b16 %v1872
        %v1946 = vunpack.c.l.b16 %v1876
        %v1947 = vunpack.c.l.b16 %v1879
        %v1948 = vunpack.c.l.b16 %v1883
        %v1949 = vunpack.c.l.b16 %v1886
        %v1950 = vunpack.c.l.b16 %v1890
        %v1951 = vunpack.c.l.b16 %v1893
        %v1952 = vunpack.c.l.b16 %v1897
        %v1953 = vunpack.c.l.b16 %v1900
        %v1954 = vunpack.c.l.b16 %v1904
        %v1955 = vunpack.c.l.b16 %v1907
        %v1956 = vpack.c.b16 %v1925, %v1924
        %v1957 = vpack.c.b16 %v1927, %v1926
        %v1958 = vpack.c.b16 %v1929, %v1928
        %v1959 = vpack.c.b16 %v1931, %v1930
        %v1960 = vpack.c.b16 %v1933, %v1932
        %v1961 = vpack.c.b16 %v1935, %v1934
        %v1962 = vpack.c.b16 %v1937, %v1936
        %v1963 = vpack.c.b16 %v1939, %v1938
        %v1964 = vpack.c.b16 %v1941, %v1940
        %v1965 = vpack.c.b16 %v1943, %v1942
        %v1966 = vpack.c.b16 %v1945, %v1944
        %v1967 = vpack.c.b16 %v1947, %v1946
        %v1968 = vpack.c.b16 %v1949, %v1948
        %v1969 = vpack.c.b16 %v1951, %v1950
        %v1970 = vpack.c.b16 %v1953, %v1952
        %v1971 = vpack.c.b16 %v1955, %v1954
        %v2004 = vunpack.c.l.b16 %v1908
        %v2005 = vunpack.c.l.b16 %v1909
        %v2006 = vunpack.c.l.b16 %v1910
        %v2007 = vunpack.c.l.b16 %v1911
        %v2008 = vunpack.c.l.b16 %v1912
        %v2009 = vunpack.c.l.b16 %v1913
        %v2010 = vunpack.c.l.b16 %v1914
        %v2011 = vunpack.c.l.b16 %v1915
        %v2012 = vunpack.c.l.b16 %v1916
        %v2013 = vunpack.c.l.b16 %v1917
        %v2014 = vunpack.c.l.b16 %v1918
        %v2015 = vunpack.c.l.b16 %v1919
        %v2016 = vunpack.c.l.b16 %v1920
        %v2017 = vunpack.c.l.b16 %v1921
        %v2018 = vunpack.c.l.b16 %v1922
        %v2019 = vunpack.c.l.b16 %v1923
        %v2020 = vpack.c.b16 %v2005, %v2004
        %v2021 = vpack.c.b16 %v2007, %v2006
        %v2022 = vpack.c.b16 %v2009, %v2008
        %v2023 = vpack.c.b16 %v2011, %v2010
        %v2024 = vpack.c.b16 %v2013, %v2012
        %v2025 = vpack.c.b16 %v2015, %v2014
        %v2026 = vpack.c.b16 %v2017, %v2016
        %v2027 = vpack.c.b16 %v2019, %v2018
        %2036 = vmatpush.bf16.msra.mxu0 %v2027
        %2037 = vmatpush.bf16.msra.mxu0 %v2026
        %2038 = vmatpush.bf16.msra.mxu0 %v2025
        %2039 = vmatpush.bf16.msra.mxu0 %v2024
        %2040 = vmatpush.bf16.msra.mxu0 %v2023
        %2041 = vmatpush.bf16.msra.mxu0 %v2022
        %2042 = vmatpush.bf16.msra.mxu0 %v2021
        %2043 = vmatpush.bf16.msra.mxu0 %v2020
        %2044 = vmatmul.bf16.gmra.mxu0 %v1956
        %v2045 = vpop.f32.mrf.mxu0
        %v2046 = vadd.f32 0.0, %v2045
        %v2047 = vpop.f32.mrf.mxu0
        %v2048 = vadd.f32 0.0, %v2047
        %2049 = vmatmul.bf16.gmra.mxu0 %v1957
        %v2050 = vpop.f32.mrf.mxu0
        %v2051 = vadd.f32 0.0, %v2050
        %v2052 = vpop.f32.mrf.mxu0
        %v2053 = vadd.f32 0.0, %v2052
        %2054 = vmatmul.bf16.gmra.mxu0 %v1958
        %v2055 = vpop.f32.mrf.mxu0
        %v2056 = vadd.f32 0.0, %v2055
        %v2057 = vpop.f32.mrf.mxu0
        %v2058 = vadd.f32 0.0, %v2057
        %2059 = vmatmul.bf16.gmra.mxu0 %v1959
        %v2060 = vpop.f32.mrf.mxu0
        %v2061 = vadd.f32 0.0, %v2060
        %v2062 = vpop.f32.mrf.mxu0
        %v2063 = vadd.f32 0.0, %v2062
        %2064 = vmatmul.bf16.gmra.mxu0 %v1960
        %v2065 = vpop.f32.mrf.mxu0
        %v2066 = vadd.f32 0.0, %v2065
        %v2067 = vpop.f32.mrf.mxu0
        %v2068 = vadd.f32 0.0, %v2067
        %2069 = vmatmul.bf16.gmra.mxu0 %v1961
        %v2070 = vpop.f32.mrf.mxu0
        %v2071 = vadd.f32 0.0, %v2070
        %v2072 = vpop.f32.mrf.mxu0
        %v2073 = vadd.f32 0.0, %v2072
        %2074 = vmatmul.bf16.gmra.mxu0 %v1962
        %v2075 = vpop.f32.mrf.mxu0
        %v2076 = vadd.f32 0.0, %v2075
        %v2077 = vpop.f32.mrf.mxu0
        %v2078 = vadd.f32 0.0, %v2077
        %2079 = vmatmul.bf16.gmra.mxu0 %v1963
        %v2080 = vpop.f32.mrf.mxu0
        %v2081 = vadd.f32 0.0, %v2080
        %v2082 = vpop.f32.mrf.mxu0
        %v2083 = vadd.f32 0.0, %v2082
        %2084 = vmatmul.bf16.gmra.mxu0 %v1964
        %v2085 = vpop.f32.mrf.mxu0
        %v2086 = vadd.f32 0.0, %v2085
        %v2087 = vpop.f32.mrf.mxu0
        %v2088 = vadd.f32 0.0, %v2087
        %2089 = vmatmul.bf16.gmra.mxu0 %v1965
        %v2090 = vpop.f32.mrf.mxu0
        %v2091 = vadd.f32 0.0, %v2090
        %v2092 = vpop.f32.mrf.mxu0
        %v2093 = vadd.f32 0.0, %v2092
        %2094 = vmatmul.bf16.gmra.mxu0 %v1966
        %v2095 = vpop.f32.mrf.mxu0
        %v2096 = vadd.f32 0.0, %v2095
        %v2097 = vpop.f32.mrf.mxu0
        %v2098 = vadd.f32 0.0, %v2097
        %2099 = vmatmul.bf16.gmra.mxu0 %v1967
        %v2100 = vpop.f32.mrf.mxu0
        %v2101 = vadd.f32 0.0, %v2100
        %v2102 = vpop.f32.mrf.mxu0
        %v2103 = vadd.f32 0.0, %v2102
        %2104 = vmatmul.bf16.gmra.mxu0 %v1968
        %v2105 = vpop.f32.mrf.mxu0
        %v2106 = vadd.f32 0.0, %v2105
        %v2107 = vpop.f32.mrf.mxu0
        %v2108 = vadd.f32 0.0, %v2107
        %2109 = vmatmul.bf16.gmra.mxu0 %v1969
        %v2110 = vpop.f32.mrf.mxu0
        %v2111 = vadd.f32 0.0, %v2110
        %v2112 = vpop.f32.mrf.mxu0
        %v2113 = vadd.f32 0.0, %v2112
        %2114 = vmatmul.bf16.gmra.mxu0 %v1970
        %v2115 = vpop.f32.mrf.mxu0
        %v2116 = vadd.f32 0.0, %v2115
        %v2117 = vpop.f32.mrf.mxu0
        %v2118 = vadd.f32 0.0, %v2117
        %2119 = vmatmul.bf16.gmra.mxu0 %v1971
        %v2120 = vpop.f32.mrf.mxu0
        %v2121 = vadd.f32 0.0, %v2120
        %v2122 = vpop.f32.mrf.mxu0
        %v2123 = vadd.f32 0.0, %v2122
        %2124 = vdwg.mxu0
        %v2125 = vadd.f32 %v1666, %v2046
        %v2126 = vadd.f32 %v1668, %v2048
        %v2127 = vadd.f32 %v1671, %v2051
        %v2128 = vadd.f32 %v1673, %v2053
        %v2129 = vadd.f32 %v1676, %v2056
        %v2130 = vadd.f32 %v1678, %v2058
        %v2131 = vadd.f32 %v1681, %v2061
        %v2132 = vadd.f32 %v1683, %v2063
        %v2133 = vadd.f32 %v1686, %v2066
        %v2134 = vadd.f32 %v1688, %v2068
        %v2135 = vadd.f32 %v1691, %v2071
        %v2136 = vadd.f32 %v1693, %v2073
        %v2137 = vadd.f32 %v1696, %v2076
        %v2138 = vadd.f32 %v1698, %v2078
        %v2139 = vadd.f32 %v1701, %v2081
        %v2140 = vadd.f32 %v1703, %v2083
        %v2141 = vadd.f32 %v1706, %v2086
        %v2142 = vadd.f32 %v1708, %v2088
        %v2143 = vadd.f32 %v1711, %v2091
        %v2144 = vadd.f32 %v1713, %v2093
        %v2145 = vadd.f32 %v1716, %v2096
        %v2146 = vadd.f32 %v1718, %v2098
        %v2147 = vadd.f32 %v1721, %v2101
        %v2148 = vadd.f32 %v1723, %v2103
        %v2149 = vadd.f32 %v1726, %v2106
        %v2150 = vadd.f32 %v1728, %v2108
        %v2151 = vadd.f32 %v1731, %v2111
        %v2152 = vadd.f32 %v1733, %v2113
        %v2153 = vadd.f32 %v1736, %v2116
        %v2154 = vadd.f32 %v1738, %v2118
        %v2155 = vadd.f32 %v1741, %v2121
        %v2156 = vadd.f32 %v1743, %v2123
        %v2157 = vld [vmem:[%s725] sm:$0xf]
        %v2158 = vld [vmem:[%s725 + $0x4] sm:$0xf]
        %v2159 = vld [vmem:[%s725 + $0xc] sm:$0xf]
        %v2160 = vld [vmem:[%s725 + $0x10] sm:$0xf]
        %v2161 = vld [vmem:[%s725 + $0x18] sm:$0xf]
        %v2162 = vld [vmem:[%s725 + $0x1c] sm:$0xf]
        %v2163 = vld [vmem:[%s725 + $0x24] sm:$0xf]
        %v2164 = vld [vmem:[%s725 + $0x28] sm:$0xf]
        %v2165 = vld [vmem:[%s725 + $0x30] sm:$0xf]
        %v2166 = vld [vmem:[%s725 + $0x34] sm:$0xf]
        %v2167 = vld [vmem:[%s725 + $0x3c] sm:$0xf]
        %v2168 = vld [vmem:[%s725 + $0x40] sm:$0xf]
        %v2169 = vld [vmem:[%s725 + $0x48] sm:$0xf]
        %v2170 = vld [vmem:[%s725 + $0x4c] sm:$0xf]
        %v2171 = vld [vmem:[%s725 + $0x54] sm:$0xf]
        %v2172 = vld [vmem:[%s725 + $0x58] sm:$0xf]
        %v2173 = vld [vmem:[%s725 + $0x60] sm:$0xf]
        %v2174 = vld [vmem:[%s725 + $0x64] sm:$0xf]
        %v2175 = vld [vmem:[%s725 + $0x6c] sm:$0xf]
        %v2176 = vld [vmem:[%s725 + $0x70] sm:$0xf]
        %v2177 = vld [vmem:[%s725 + $0x78] sm:$0xf]
        %v2178 = vld [vmem:[%s725 + $0x7c] sm:$0xf]
        %v2179 = vld [vmem:[%s725 + $0x84] sm:$0xf]
        %v2180 = vld [vmem:[%s725 + $0x88] sm:$0xf]
        %v2181 = vld [vmem:[%s725 + $0x90] sm:$0xf]
        %v2182 = vld [vmem:[%s725 + $0x94] sm:$0xf]
        %v2183 = vld [vmem:[%s725 + $0x9c] sm:$0xf]
        %v2184 = vld [vmem:[%s725 + $0xa0] sm:$0xf]
        %v2185 = vld [vmem:[%s725 + $0xa8] sm:$0xf]
        %v2186 = vld [vmem:[%s725 + $0xac] sm:$0xf]
        %v2187 = vld [vmem:[%s725 + $0xb4] sm:$0xf]
        %v2188 = vld [vmem:[%s725 + $0xb8] sm:$0xf]
        %v2189 = vld [vmem:[#allocation4 + $0xc0] sm:$0xf]
        %v2190 = vld [vmem:[#allocation4 + $0xc4] sm:$0xf]
        %v2191 = vld [vmem:[#allocation4 + $0xc8] sm:$0xf]
        %v2192 = vld [vmem:[#allocation4 + $0xcc] sm:$0xf]
        %v2193 = vld [vmem:[#allocation4 + $0xd0] sm:$0xf]
        %v2194 = vld [vmem:[#allocation4 + $0xd4] sm:$0xf]
        %v2195 = vld [vmem:[#allocation4 + $0xd8] sm:$0xf]
        %v2196 = vld [vmem:[#allocation4 + $0xdc] sm:$0xf]
        %v2197 = vld [vmem:[#allocation4 + $0xe0] sm:$0xf]
        %v2198 = vld [vmem:[#allocation4 + $0xe4] sm:$0xf]
        %v2199 = vld [vmem:[#allocation4 + $0xe8] sm:$0xf]
        %v2200 = vld [vmem:[#allocation4 + $0xec] sm:$0xf]
        %v2201 = vld [vmem:[#allocation4 + $0xf0] sm:$0xf]
        %v2202 = vld [vmem:[#allocation4 + $0xf4] sm:$0xf]
        %v2203 = vld [vmem:[#allocation4 + $0xf8] sm:$0xf]
        %v2204 = vld [vmem:[#allocation4 + $0xfc] sm:$0xf]
        %v2237 = vunpack.c.l.b16 %v2157
        %v2238 = vunpack.c.l.b16 %v2158
        %v2239 = vunpack.c.l.b16 %v2159
        %v2240 = vunpack.c.l.b16 %v2160
        %v2241 = vunpack.c.l.b16 %v2161
        %v2242 = vunpack.c.l.b16 %v2162
        %v2243 = vunpack.c.l.b16 %v2163
        %v2244 = vunpack.c.l.b16 %v2164
        %v2245 = vunpack.c.l.b16 %v2165
        %v2246 = vunpack.c.l.b16 %v2166
        %v2247 = vunpack.c.l.b16 %v2167
        %v2248 = vunpack.c.l.b16 %v2168
        %v2249 = vunpack.c.l.b16 %v2169
        %v2250 = vunpack.c.l.b16 %v2170
        %v2251 = vunpack.c.l.b16 %v2171
        %v2252 = vunpack.c.l.b16 %v2172
        %v2253 = vunpack.c.l.b16 %v2173
        %v2254 = vunpack.c.l.b16 %v2174
        %v2255 = vunpack.c.l.b16 %v2175
        %v2256 = vunpack.c.l.b16 %v2176
        %v2257 = vunpack.c.l.b16 %v2177
        %v2258 = vunpack.c.l.b16 %v2178
        %v2259 = vunpack.c.l.b16 %v2179
        %v2260 = vunpack.c.l.b16 %v2180
        %v2261 = vunpack.c.l.b16 %v2181
        %v2262 = vunpack.c.l.b16 %v2182
        %v2263 = vunpack.c.l.b16 %v2183
        %v2264 = vunpack.c.l.b16 %v2184
        %v2265 = vunpack.c.l.b16 %v2185
        %v2266 = vunpack.c.l.b16 %v2186
        %v2267 = vunpack.c.l.b16 %v2187
        %v2268 = vunpack.c.l.b16 %v2188
        %v2269 = vpack.c.b16 %v2238, %v2237
        %v2270 = vpack.c.b16 %v2240, %v2239
        %v2271 = vpack.c.b16 %v2242, %v2241
        %v2272 = vpack.c.b16 %v2244, %v2243
        %v2273 = vpack.c.b16 %v2246, %v2245
        %v2274 = vpack.c.b16 %v2248, %v2247
        %v2275 = vpack.c.b16 %v2250, %v2249
        %v2276 = vpack.c.b16 %v2252, %v2251
        %v2277 = vpack.c.b16 %v2254, %v2253
        %v2278 = vpack.c.b16 %v2256, %v2255
        %v2279 = vpack.c.b16 %v2258, %v2257
        %v2280 = vpack.c.b16 %v2260, %v2259
        %v2281 = vpack.c.b16 %v2262, %v2261
        %v2282 = vpack.c.b16 %v2264, %v2263
        %v2283 = vpack.c.b16 %v2266, %v2265
        %v2284 = vpack.c.b16 %v2268, %v2267
        %v2317 = vunpack.c.l.b16 %v2189
        %v2318 = vunpack.c.l.b16 %v2190
        %v2319 = vunpack.c.l.b16 %v2191
        %v2320 = vunpack.c.l.b16 %v2192
        %v2321 = vunpack.c.l.b16 %v2193
        %v2322 = vunpack.c.l.b16 %v2194
        %v2323 = vunpack.c.l.b16 %v2195
        %v2324 = vunpack.c.l.b16 %v2196
        %v2325 = vunpack.c.l.b16 %v2197
        %v2326 = vunpack.c.l.b16 %v2198
        %v2327 = vunpack.c.l.b16 %v2199
        %v2328 = vunpack.c.l.b16 %v2200
        %v2329 = vunpack.c.l.b16 %v2201
        %v2330 = vunpack.c.l.b16 %v2202
        %v2331 = vunpack.c.l.b16 %v2203
        %v2332 = vunpack.c.l.b16 %v2204
        %v2333 = vpack.c.b16 %v2318, %v2317
        %v2334 = vpack.c.b16 %v2320, %v2319
        %v2335 = vpack.c.b16 %v2322, %v2321
        %v2336 = vpack.c.b16 %v2324, %v2323
        %v2337 = vpack.c.b16 %v2326, %v2325
        %v2338 = vpack.c.b16 %v2328, %v2327
        %v2339 = vpack.c.b16 %v2330, %v2329
        %v2340 = vpack.c.b16 %v2332, %v2331
        %2349 = vmatpush.bf16.msra.mxu0 %v2340
        %2350 = vmatpush.bf16.msra.mxu0 %v2339
        %2351 = vmatpush.bf16.msra.mxu0 %v2338
        %2352 = vmatpush.bf16.msra.mxu0 %v2337
        %2353 = vmatpush.bf16.msra.mxu0 %v2336
        %2354 = vmatpush.bf16.msra.mxu0 %v2335
        %2355 = vmatpush.bf16.msra.mxu0 %v2334
        %2356 = vmatpush.bf16.msra.mxu0 %v2333
        %2357 = vmatmul.bf16.gmra.mxu0 %v2269
        %v2358 = vpop.f32.mrf.mxu0
        %v2359 = vadd.f32 0.0, %v2358
        %v2360 = vpop.f32.mrf.mxu0
        %v2361 = vadd.f32 0.0, %v2360
        %2362 = vmatmul.bf16.gmra.mxu0 %v2270
        %v2363 = vpop.f32.mrf.mxu0
        %v2364 = vadd.f32 0.0, %v2363
        %v2365 = vpop.f32.mrf.mxu0
        %v2366 = vadd.f32 0.0, %v2365
        %2367 = vmatmul.bf16.gmra.mxu0 %v2271
        %v2368 = vpop.f32.mrf.mxu0
        %v2369 = vadd.f32 0.0, %v2368
        %v2370 = vpop.f32.mrf.mxu0
        %v2371 = vadd.f32 0.0, %v2370
        %2372 = vmatmul.bf16.gmra.mxu0 %v2272
        %v2373 = vpop.f32.mrf.mxu0
        %v2374 = vadd.f32 0.0, %v2373
        %v2375 = vpop.f32.mrf.mxu0
        %v2376 = vadd.f32 0.0, %v2375
        %2377 = vmatmul.bf16.gmra.mxu0 %v2273
        %v2378 = vpop.f32.mrf.mxu0
        %v2379 = vadd.f32 0.0, %v2378
        %v2380 = vpop.f32.mrf.mxu0
        %v2381 = vadd.f32 0.0, %v2380
        %2382 = vmatmul.bf16.gmra.mxu0 %v2274
        %v2383 = vpop.f32.mrf.mxu0
        %v2384 = vadd.f32 0.0, %v2383
        %v2385 = vpop.f32.mrf.mxu0
        %v2386 = vadd.f32 0.0, %v2385
        %2387 = vmatmul.bf16.gmra.mxu0 %v2275
        %v2388 = vpop.f32.mrf.mxu0
        %v2389 = vadd.f32 0.0, %v2388
        %v2390 = vpop.f32.mrf.mxu0
        %v2391 = vadd.f32 0.0, %v2390
        %2392 = vmatmul.bf16.gmra.mxu0 %v2276
        %v2393 = vpop.f32.mrf.mxu0
        %v2394 = vadd.f32 0.0, %v2393
        %v2395 = vpop.f32.mrf.mxu0
        %v2396 = vadd.f32 0.0, %v2395
        %2397 = vmatmul.bf16.gmra.mxu0 %v2277
        %v2398 = vpop.f32.mrf.mxu0
        %v2399 = vadd.f32 0.0, %v2398
        %v2400 = vpop.f32.mrf.mxu0
        %v2401 = vadd.f32 0.0, %v2400
        %2402 = vmatmul.bf16.gmra.mxu0 %v2278
        %v2403 = vpop.f32.mrf.mxu0
        %v2404 = vadd.f32 0.0, %v2403
        %v2405 = vpop.f32.mrf.mxu0
        %v2406 = vadd.f32 0.0, %v2405
        %2407 = vmatmul.bf16.gmra.mxu0 %v2279
        %v2408 = vpop.f32.mrf.mxu0
        %v2409 = vadd.f32 0.0, %v2408
        %v2410 = vpop.f32.mrf.mxu0
        %v2411 = vadd.f32 0.0, %v2410
        %2412 = vmatmul.bf16.gmra.mxu0 %v2280
        %v2413 = vpop.f32.mrf.mxu0
        %v2414 = vadd.f32 0.0, %v2413
        %v2415 = vpop.f32.mrf.mxu0
        %v2416 = vadd.f32 0.0, %v2415
        %2417 = vmatmul.bf16.gmra.mxu0 %v2281
        %v2418 = vpop.f32.mrf.mxu0
        %v2419 = vadd.f32 0.0, %v2418
        %v2420 = vpop.f32.mrf.mxu0
        %v2421 = vadd.f32 0.0, %v2420
        %2422 = vmatmul.bf16.gmra.mxu0 %v2282
        %v2423 = vpop.f32.mrf.mxu0
        %v2424 = vadd.f32 0.0, %v2423
        %v2425 = vpop.f32.mrf.mxu0
        %v2426 = vadd.f32 0.0, %v2425
        %2427 = vmatmul.bf16.gmra.mxu0 %v2283
        %v2428 = vpop.f32.mrf.mxu0
        %v2429 = vadd.f32 0.0, %v2428
        %v2430 = vpop.f32.mrf.mxu0
        %v2431 = vadd.f32 0.0, %v2430
        %2432 = vmatmul.bf16.gmra.mxu0 %v2284
        %v2433 = vpop.f32.mrf.mxu0
        %v2434 = vadd.f32 0.0, %v2433
        %v2435 = vpop.f32.mrf.mxu0
        %v2436 = vadd.f32 0.0, %v2435
        %2437 = vdwg.mxu0
        %v2438 = vadd.f32 %v2125, %v2359
        %v2439 = vadd.f32 %v2126, %v2361
        %v2440 = vadd.f32 %v2127, %v2364
        %v2441 = vadd.f32 %v2128, %v2366
        %v2442 = vadd.f32 %v2129, %v2369
        %v2443 = vadd.f32 %v2130, %v2371
        %v2444 = vadd.f32 %v2131, %v2374
        %v2445 = vadd.f32 %v2132, %v2376
        %v2446 = vadd.f32 %v2133, %v2379
        %v2447 = vadd.f32 %v2134, %v2381
        %v2448 = vadd.f32 %v2135, %v2384
        %v2449 = vadd.f32 %v2136, %v2386
        %v2450 = vadd.f32 %v2137, %v2389
        %v2451 = vadd.f32 %v2138, %v2391
        %v2452 = vadd.f32 %v2139, %v2394
        %v2453 = vadd.f32 %v2140, %v2396
        %v2454 = vadd.f32 %v2141, %v2399
        %v2455 = vadd.f32 %v2142, %v2401
        %v2456 = vadd.f32 %v2143, %v2404
        %v2457 = vadd.f32 %v2144, %v2406
        %v2458 = vadd.f32 %v2145, %v2409
        %v2459 = vadd.f32 %v2146, %v2411
        %v2460 = vadd.f32 %v2147, %v2414
        %v2461 = vadd.f32 %v2148, %v2416
        %v2462 = vadd.f32 %v2149, %v2419
        %v2463 = vadd.f32 %v2150, %v2421
        %v2464 = vadd.f32 %v2151, %v2424
        %v2465 = vadd.f32 %v2152, %v2426
        %v2466 = vadd.f32 %v2153, %v2429
        %v2467 = vadd.f32 %v2154, %v2431
        %v2468 = vadd.f32 %v2155, %v2434
        %v2469 = vadd.f32 %v2156, %v2436
        %v2470 = vld [vmem:[%s725] sm:$0xf]
        %v2471 = vld [vmem:[%s725 + $0x4] sm:$0xf]
        %v2472 = vld [vmem:[%s725 + $0x8] sm:$0x1]
        %v2473 = vld [vmem:[%s725 + $0xc] sm:$0xf]
        %v2474 = vld [vmem:[%s725 + $0x10] sm:$0xf]
        %v2475 = vld [vmem:[%s725 + $0x14] sm:$0x1]
        %v2476 = vld [vmem:[%s725 + $0x18] sm:$0xf]
        %v2477 = vld [vmem:[%s725 + $0x1c] sm:$0xf]
        %v2478 = vld [vmem:[%s725 + $0x20] sm:$0x1]
        %v2479 = vld [vmem:[%s725 + $0x24] sm:$0xf]
        %v2480 = vld [vmem:[%s725 + $0x28] sm:$0xf]
        %v2481 = vld [vmem:[%s725 + $0x2c] sm:$0x1]
        %v2482 = vld [vmem:[%s725 + $0x30] sm:$0xf]
        %v2483 = vld [vmem:[%s725 + $0x34] sm:$0xf]
        %v2484 = vld [vmem:[%s725 + $0x38] sm:$0x1]
        %v2485 = vld [vmem:[%s725 + $0x3c] sm:$0xf]
        %v2486 = vld [vmem:[%s725 + $0x40] sm:$0xf]
        %v2487 = vld [vmem:[%s725 + $0x44] sm:$0x1]
        %v2488 = vld [vmem:[%s725 + $0x48] sm:$0xf]
        %v2489 = vld [vmem:[%s725 + $0x4c] sm:$0xf]
        %v2490 = vld [vmem:[%s725 + $0x50] sm:$0x1]
        %v2491 = vld [vmem:[%s725 + $0x54] sm:$0xf]
        %v2492 = vld [vmem:[%s725 + $0x58] sm:$0xf]
        %v2493 = vld [vmem:[%s725 + $0x5c] sm:$0x1]
        %v2494 = vld [vmem:[%s725 + $0x60] sm:$0xf]
        %v2495 = vld [vmem:[%s725 + $0x64] sm:$0xf]
        %v2496 = vld [vmem:[%s725 + $0x68] sm:$0x1]
        %v2497 = vld [vmem:[%s725 + $0x6c] sm:$0xf]
        %v2498 = vld [vmem:[%s725 + $0x70] sm:$0xf]
        %v2499 = vld [vmem:[%s725 + $0x74] sm:$0x1]
        %v2500 = vld [vmem:[%s725 + $0x78] sm:$0xf]
        %v2501 = vld [vmem:[%s725 + $0x7c] sm:$0xf]
        %v2502 = vld [vmem:[%s725 + $0x80] sm:$0x1]
        %v2503 = vld [vmem:[%s725 + $0x84] sm:$0xf]
        %v2504 = vld [vmem:[%s725 + $0x88] sm:$0xf]
        %v2505 = vld [vmem:[%s725 + $0x8c] sm:$0x1]
        %v2506 = vld [vmem:[%s725 + $0x90] sm:$0xf]
        %v2507 = vld [vmem:[%s725 + $0x94] sm:$0xf]
        %v2508 = vld [vmem:[%s725 + $0x98] sm:$0x1]
        %v2509 = vld [vmem:[%s725 + $0x9c] sm:$0xf]
        %v2510 = vld [vmem:[%s725 + $0xa0] sm:$0xf]
        %v2511 = vld [vmem:[%s725 + $0xa4] sm:$0x1]
        %v2512 = vld [vmem:[%s725 + $0xa8] sm:$0xf]
        %v2513 = vld [vmem:[%s725 + $0xac] sm:$0xf]
        %v2514 = vld [vmem:[%s725 + $0xb0] sm:$0x1]
        %v2515 = vld [vmem:[%s725 + $0xb4] sm:$0xf]
        %v2516 = vld [vmem:[%s725 + $0xb8] sm:$0xf]
        %v2517 = vld [vmem:[%s725 + $0xbc] sm:$0x1]
        %v2519 = vshrl.u32 %v2470, 16
        %v2521 = vrot.slane %v2519, 4
        %v2522 = vshll.u32 %v2470, 16
        %v2524 = vrot.slane %v2522, 5
        %v2525 = vor.u32 %v2521, %v2524
        %v2526 = vrot.slane %v2525, 4
        %v2528 = vshll.u32 %v2471, 16
        %v2530 = vrot.slane %v2528, 5
        %v2531 = vsel %vm910, %v2526, %v2530
        %v2532 = vshrl.u32 %v2471, 16
        %v2534 = vrot.slane %v2532, 4
        %v2535 = vor.u32 %v2534, %v2530
        %v2536 = vrot.slane %v2535, 4
        %v2538 = vshll.u32 %v2472, 16
        %v2540 = vrot.slane %v2538, 5
        %v2541 = vsel %vm910, %v2536, %v2540
        %v2543 = vshrl.u32 %v2473, 16
        %v2545 = vrot.slane %v2543, 4
        %v2546 = vshll.u32 %v2473, 16
        %v2548 = vrot.slane %v2546, 5
        %v2549 = vor.u32 %v2545, %v2548
        %v2550 = vrot.slane %v2549, 4
        %v2552 = vshll.u32 %v2474, 16
        %v2554 = vrot.slane %v2552, 5
        %v2555 = vsel %vm910, %v2550, %v2554
        %v2556 = vshrl.u32 %v2474, 16
        %v2558 = vrot.slane %v2556, 4
        %v2559 = vor.u32 %v2558, %v2554
        %v2560 = vrot.slane %v2559, 4
        %v2562 = vshll.u32 %v2475, 16
        %v2564 = vrot.slane %v2562, 5
        %v2565 = vsel %vm910, %v2560, %v2564
        %v2567 = vshrl.u32 %v2476, 16
        %v2569 = vrot.slane %v2567, 4
        %v2570 = vshll.u32 %v2476, 16
        %v2572 = vrot.slane %v2570, 5
        %v2573 = vor.u32 %v2569, %v2572
        %v2574 = vrot.slane %v2573, 4
        %v2576 = vshll.u32 %v2477, 16
        %v2578 = vrot.slane %v2576, 5
        %v2579 = vsel %vm910, %v2574, %v2578
        %v2580 = vshrl.u32 %v2477, 16
        %v2582 = vrot.slane %v2580, 4
        %v2583 = vor.u32 %v2582, %v2578
        %v2584 = vrot.slane %v2583, 4
        %v2586 = vshll.u32 %v2478, 16
        %v2588 = vrot.slane %v2586, 5
        %v2589 = vsel %vm910, %v2584, %v2588
        %v2591 = vshrl.u32 %v2479, 16
        %v2593 = vrot.slane %v2591, 4
        %v2594 = vshll.u32 %v2479, 16
        %v2596 = vrot.slane %v2594, 5
        %v2597 = vor.u32 %v2593, %v2596
        %v2598 = vrot.slane %v2597, 4
        %v2600 = vshll.u32 %v2480, 16
        %v2602 = vrot.slane %v2600, 5
        %v2603 = vsel %vm910, %v2598, %v2602
        %v2604 = vshrl.u32 %v2480, 16
        %v2606 = vrot.slane %v2604, 4
        %v2607 = vor.u32 %v2606, %v2602
        %v2608 = vrot.slane %v2607, 4
        %v2610 = vshll.u32 %v2481, 16
        %v2612 = vrot.slane %v2610, 5
        %v2613 = vsel %vm910, %v2608, %v2612
        %v2615 = vshrl.u32 %v2482, 16
        %v2617 = vrot.slane %v2615, 4
        %v2618 = vshll.u32 %v2482, 16
        %v2620 = vrot.slane %v2618, 5
        %v2621 = vor.u32 %v2617, %v2620
        %v2622 = vrot.slane %v2621, 4
        %v2624 = vshll.u32 %v2483, 16
        %v2626 = vrot.slane %v2624, 5
        %v2627 = vsel %vm910, %v2622, %v2626
        %v2628 = vshrl.u32 %v2483, 16
        %v2630 = vrot.slane %v2628, 4
        %v2631 = vor.u32 %v2630, %v2626
        %v2632 = vrot.slane %v2631, 4
        %v2634 = vshll.u32 %v2484, 16
        %v2636 = vrot.slane %v2634, 5
        %v2637 = vsel %vm910, %v2632, %v2636
        %v2639 = vshrl.u32 %v2485, 16
        %v2641 = vrot.slane %v2639, 4
        %v2642 = vshll.u32 %v2485, 16
        %v2644 = vrot.slane %v2642, 5
        %v2645 = vor.u32 %v2641, %v2644
        %v2646 = vrot.slane %v2645, 4
        %v2648 = vshll.u32 %v2486, 16
        %v2650 = vrot.slane %v2648, 5
        %v2651 = vsel %vm910, %v2646, %v2650
        %v2652 = vshrl.u32 %v2486, 16
        %v2654 = vrot.slane %v2652, 4
        %v2655 = vor.u32 %v2654, %v2650
        %v2656 = vrot.slane %v2655, 4
        %v2658 = vshll.u32 %v2487, 16
        %v2660 = vrot.slane %v2658, 5
        %v2661 = vsel %vm910, %v2656, %v2660
        %v2663 = vshrl.u32 %v2488, 16
        %v2665 = vrot.slane %v2663, 4
        %v2666 = vshll.u32 %v2488, 16
        %v2668 = vrot.slane %v2666, 5
        %v2669 = vor.u32 %v2665, %v2668
        %v2670 = vrot.slane %v2669, 4
        %v2672 = vshll.u32 %v2489, 16
        %v2674 = vrot.slane %v2672, 5
        %v2675 = vsel %vm910, %v2670, %v2674
        %v2676 = vshrl.u32 %v2489, 16
        %v2678 = vrot.slane %v2676, 4
        %v2679 = vor.u32 %v2678, %v2674
        %v2680 = vrot.slane %v2679, 4
        %v2682 = vshll.u32 %v2490, 16
        %v2684 = vrot.slane %v2682, 5
        %v2685 = vsel %vm910, %v2680, %v2684
        %v2687 = vshrl.u32 %v2491, 16
        %v2689 = vrot.slane %v2687, 4
        %v2690 = vshll.u32 %v2491, 16
        %v2692 = vrot.slane %v2690, 5
        %v2693 = vor.u32 %v2689, %v2692
        %v2694 = vrot.slane %v2693, 4
        %v2696 = vshll.u32 %v2492, 16
        %v2698 = vrot.slane %v2696, 5
        %v2699 = vsel %vm910, %v2694, %v2698
        %v2700 = vshrl.u32 %v2492, 16
        %v2702 = vrot.slane %v2700, 4
        %v2703 = vor.u32 %v2702, %v2698
        %v2704 = vrot.slane %v2703, 4
        %v2706 = vshll.u32 %v2493, 16
        %v2708 = vrot.slane %v2706, 5
        %v2709 = vsel %vm910, %v2704, %v2708
        %v2711 = vshrl.u32 %v2494, 16
        %v2713 = vrot.slane %v2711, 4
        %v2714 = vshll.u32 %v2494, 16
        %v2716 = vrot.slane %v2714, 5
        %v2717 = vor.u32 %v2713, %v2716
        %v2718 = vrot.slane %v2717, 4
        %v2720 = vshll.u32 %v2495, 16
        %v2722 = vrot.slane %v2720, 5
        %v2723 = vsel %vm910, %v2718, %v2722
        %v2724 = vshrl.u32 %v2495, 16
        %v2726 = vrot.slane %v2724, 4
        %v2727 = vor.u32 %v2726, %v2722
        %v2728 = vrot.slane %v2727, 4
        %v2730 = vshll.u32 %v2496, 16
        %v2732 = vrot.slane %v2730, 5
        %v2733 = vsel %vm910, %v2728, %v2732
        %v2735 = vshrl.u32 %v2497, 16
        %v2737 = vrot.slane %v2735, 4
        %v2738 = vshll.u32 %v2497, 16
        %v2740 = vrot.slane %v2738, 5
        %v2741 = vor.u32 %v2737, %v2740
        %v2742 = vrot.slane %v2741, 4
        %v2744 = vshll.u32 %v2498, 16
        %v2746 = vrot.slane %v2744, 5
        %v2747 = vsel %vm910, %v2742, %v2746
        %v2748 = vshrl.u32 %v2498, 16
        %v2750 = vrot.slane %v2748, 4
        %v2751 = vor.u32 %v2750, %v2746
        %v2752 = vrot.slane %v2751, 4
        %v2754 = vshll.u32 %v2499, 16
        %v2756 = vrot.slane %v2754, 5
        %v2757 = vsel %vm910, %v2752, %v2756
        %v2759 = vshrl.u32 %v2500, 16
        %v2761 = vrot.slane %v2759, 4
        %v2762 = vshll.u32 %v2500, 16
        %v2764 = vrot.slane %v2762, 5
        %v2765 = vor.u32 %v2761, %v2764
        %v2766 = vrot.slane %v2765, 4
        %v2768 = vshll.u32 %v2501, 16
        %v2770 = vrot.slane %v2768, 5
        %v2771 = vsel %vm910, %v2766, %v2770
        %v2772 = vshrl.u32 %v2501, 16
        %v2774 = vrot.slane %v2772, 4
        %v2775 = vor.u32 %v2774, %v2770
        %v2776 = vrot.slane %v2775, 4
        %v2778 = vshll.u32 %v2502, 16
        %v2780 = vrot.slane %v2778, 5
        %v2781 = vsel %vm910, %v2776, %v2780
        %v2783 = vshrl.u32 %v2503, 16
        %v2785 = vrot.slane %v2783, 4
        %v2786 = vshll.u32 %v2503, 16
        %v2788 = vrot.slane %v2786, 5
        %v2789 = vor.u32 %v2785, %v2788
        %v2790 = vrot.slane %v2789, 4
        %v2792 = vshll.u32 %v2504, 16
        %v2794 = vrot.slane %v2792, 5
        %v2795 = vsel %vm910, %v2790, %v2794
        %v2796 = vshrl.u32 %v2504, 16
        %v2798 = vrot.slane %v2796, 4
        %v2799 = vor.u32 %v2798, %v2794
        %v2800 = vrot.slane %v2799, 4
        %v2802 = vshll.u32 %v2505, 16
        %v2804 = vrot.slane %v2802, 5
        %v2805 = vsel %vm910, %v2800, %v2804
        %v2807 = vshrl.u32 %v2506, 16
        %v2809 = vrot.slane %v2807, 4
        %v2810 = vshll.u32 %v2506, 16
        %v2812 = vrot.slane %v2810, 5
        %v2813 = vor.u32 %v2809, %v2812
        %v2814 = vrot.slane %v2813, 4
        %v2816 = vshll.u32 %v2507, 16
        %v2818 = vrot.slane %v2816, 5
        %v2819 = vsel %vm910, %v2814, %v2818
        %v2820 = vshrl.u32 %v2507, 16
        %v2822 = vrot.slane %v2820, 4
        %v2823 = vor.u32 %v2822, %v2818
        %v2824 = vrot.slane %v2823, 4
        %v2826 = vshll.u32 %v2508, 16
        %v2828 = vrot.slane %v2826, 5
        %v2829 = vsel %vm910, %v2824, %v2828
        %v2831 = vshrl.u32 %v2509, 16
        %v2833 = vrot.slane %v2831, 4
        %v2834 = vshll.u32 %v2509, 16
        %v2836 = vrot.slane %v2834, 5
        %v2837 = vor.u32 %v2833, %v2836
        %v2838 = vrot.slane %v2837, 4
        %v2840 = vshll.u32 %v2510, 16
        %v2842 = vrot.slane %v2840, 5
        %v2843 = vsel %vm910, %v2838, %v2842
        %v2844 = vshrl.u32 %v2510, 16
        %v2846 = vrot.slane %v2844, 4
        %v2847 = vor.u32 %v2846, %v2842
        %v2848 = vrot.slane %v2847, 4
        %v2850 = vshll.u32 %v2511, 16
        %v2852 = vrot.slane %v2850, 5
        %v2853 = vsel %vm910, %v2848, %v2852
        %v2855 = vshrl.u32 %v2512, 16
        %v2857 = vrot.slane %v2855, 4
        %v2858 = vshll.u32 %v2512, 16
        %v2860 = vrot.slane %v2858, 5
        %v2861 = vor.u32 %v2857, %v2860
        %v2862 = vrot.slane %v2861, 4
        %v2864 = vshll.u32 %v2513, 16
        %v2866 = vrot.slane %v2864, 5
        %v2867 = vsel %vm910, %v2862, %v2866
        %v2868 = vshrl.u32 %v2513, 16
        %v2870 = vrot.slane %v2868, 4
        %v2871 = vor.u32 %v2870, %v2866
        %v2872 = vrot.slane %v2871, 4
        %v2874 = vshll.u32 %v2514, 16
        %v2876 = vrot.slane %v2874, 5
        %v2877 = vsel %vm910, %v2872, %v2876
        %v2879 = vshrl.u32 %v2515, 16
        %v2881 = vrot.slane %v2879, 4
        %v2882 = vshll.u32 %v2515, 16
        %v2884 = vrot.slane %v2882, 5
        %v2885 = vor.u32 %v2881, %v2884
        %v2886 = vrot.slane %v2885, 4
        %v2888 = vshll.u32 %v2516, 16
        %v2890 = vrot.slane %v2888, 5
        %v2891 = vsel %vm910, %v2886, %v2890
        %v2892 = vshrl.u32 %v2516, 16
        %v2894 = vrot.slane %v2892, 4
        %v2895 = vor.u32 %v2894, %v2890
        %v2896 = vrot.slane %v2895, 4
        %v2898 = vshll.u32 %v2517, 16
        %v2900 = vrot.slane %v2898, 5
        %v2901 = vsel %vm910, %v2896, %v2900
        %v2902 = vld [vmem:[#allocation4 + $0x100] sm:$0xf]
        %v2903 = vld [vmem:[#allocation4 + $0x104] sm:$0xf]
        %v2904 = vld [vmem:[#allocation4 + $0x108] sm:$0xf]
        %v2905 = vld [vmem:[#allocation4 + $0x10c] sm:$0xf]
        %v2906 = vld [vmem:[#allocation4 + $0x110] sm:$0xf]
        %v2907 = vld [vmem:[#allocation4 + $0x114] sm:$0xf]
        %v2908 = vld [vmem:[#allocation4 + $0x118] sm:$0xf]
        %v2909 = vld [vmem:[#allocation4 + $0x11c] sm:$0xf]
        %v2910 = vld [vmem:[#allocation4 + $0x120] sm:$0xf]
        %v2911 = vld [vmem:[#allocation4 + $0x124] sm:$0xf]
        %v2912 = vld [vmem:[#allocation4 + $0x128] sm:$0xf]
        %v2913 = vld [vmem:[#allocation4 + $0x12c] sm:$0xf]
        %v2914 = vld [vmem:[#allocation4 + $0x130] sm:$0xf]
        %v2915 = vld [vmem:[#allocation4 + $0x134] sm:$0xf]
        %v2916 = vld [vmem:[#allocation4 + $0x138] sm:$0xf]
        %v2917 = vld [vmem:[#allocation4 + $0x13c] sm:$0xf]
        %v2918 = vunpack.c.l.b16 %v2531
        %v2919 = vunpack.c.l.b16 %v2541
        %v2920 = vunpack.c.l.b16 %v2555
        %v2921 = vunpack.c.l.b16 %v2565
        %v2922 = vunpack.c.l.b16 %v2579
        %v2923 = vunpack.c.l.b16 %v2589
        %v2924 = vunpack.c.l.b16 %v2603
        %v2925 = vunpack.c.l.b16 %v2613
        %v2926 = vunpack.c.l.b16 %v2627
        %v2927 = vunpack.c.l.b16 %v2637
        %v2928 = vunpack.c.l.b16 %v2651
        %v2929 = vunpack.c.l.b16 %v2661
        %v2930 = vunpack.c.l.b16 %v2675
        %v2931 = vunpack.c.l.b16 %v2685
        %v2932 = vunpack.c.l.b16 %v2699
        %v2933 = vunpack.c.l.b16 %v2709
        %v2934 = vunpack.c.l.b16 %v2723
        %v2935 = vunpack.c.l.b16 %v2733
        %v2936 = vunpack.c.l.b16 %v2747
        %v2937 = vunpack.c.l.b16 %v2757
        %v2938 = vunpack.c.l.b16 %v2771
        %v2939 = vunpack.c.l.b16 %v2781
        %v2940 = vunpack.c.l.b16 %v2795
        %v2941 = vunpack.c.l.b16 %v2805
        %v2942 = vunpack.c.l.b16 %v2819
        %v2943 = vunpack.c.l.b16 %v2829
        %v2944 = vunpack.c.l.b16 %v2843
        %v2945 = vunpack.c.l.b16 %v2853
        %v2946 = vunpack.c.l.b16 %v2867
        %v2947 = vunpack.c.l.b16 %v2877
        %v2948 = vunpack.c.l.b16 %v2891
        %v2949 = vunpack.c.l.b16 %v2901
        %v2950 = vpack.c.b16 %v2919, %v2918
        %v2951 = vpack.c.b16 %v2921, %v2920
        %v2952 = vpack.c.b16 %v2923, %v2922
        %v2953 = vpack.c.b16 %v2925, %v2924
        %v2954 = vpack.c.b16 %v2927, %v2926
        %v2955 = vpack.c.b16 %v2929, %v2928
        %v2956 = vpack.c.b16 %v2931, %v2930
        %v2957 = vpack.c.b16 %v2933, %v2932
        %v2958 = vpack.c.b16 %v2935, %v2934
        %v2959 = vpack.c.b16 %v2937, %v2936
        %v2960 = vpack.c.b16 %v2939, %v2938
        %v2961 = vpack.c.b16 %v2941, %v2940
        %v2962 = vpack.c.b16 %v2943, %v2942
        %v2963 = vpack.c.b16 %v2945, %v2944
        %v2964 = vpack.c.b16 %v2947, %v2946
        %v2965 = vpack.c.b16 %v2949, %v2948
        %v2998 = vunpack.c.l.b16 %v2902
        %v2999 = vunpack.c.l.b16 %v2903
        %v3000 = vunpack.c.l.b16 %v2904
        %v3001 = vunpack.c.l.b16 %v2905
        %v3002 = vunpack.c.l.b16 %v2906
        %v3003 = vunpack.c.l.b16 %v2907
        %v3004 = vunpack.c.l.b16 %v2908
        %v3005 = vunpack.c.l.b16 %v2909
        %v3006 = vunpack.c.l.b16 %v2910
        %v3007 = vunpack.c.l.b16 %v2911
        %v3008 = vunpack.c.l.b16 %v2912
        %v3009 = vunpack.c.l.b16 %v2913
        %v3010 = vunpack.c.l.b16 %v2914
        %v3011 = vunpack.c.l.b16 %v2915
        %v3012 = vunpack.c.l.b16 %v2916
        %v3013 = vunpack.c.l.b16 %v2917
        %v3014 = vpack.c.b16 %v2999, %v2998
        %v3015 = vpack.c.b16 %v3001, %v3000
        %v3016 = vpack.c.b16 %v3003, %v3002
        %v3017 = vpack.c.b16 %v3005, %v3004
        %v3018 = vpack.c.b16 %v3007, %v3006
        %v3019 = vpack.c.b16 %v3009, %v3008
        %v3020 = vpack.c.b16 %v3011, %v3010
        %v3021 = vpack.c.b16 %v3013, %v3012
        %3030 = vmatpush.bf16.msra.mxu0 %v3021
        %3031 = vmatpush.bf16.msra.mxu0 %v3020
        %3032 = vmatpush.bf16.msra.mxu0 %v3019
        %3033 = vmatpush.bf16.msra.mxu0 %v3018
        %3034 = vmatpush.bf16.msra.mxu0 %v3017
        %3035 = vmatpush.bf16.msra.mxu0 %v3016
        %3036 = vmatpush.bf16.msra.mxu0 %v3015
        %3037 = vmatpush.bf16.msra.mxu0 %v3014
        %3038 = vmatmul.bf16.gmra.mxu0 %v2950
        %v3039 = vpop.f32.mrf.mxu0
        %v3040 = vadd.f32 0.0, %v3039
        %v3041 = vpop.f32.mrf.mxu0
        %v3042 = vadd.f32 0.0, %v3041
        %3043 = vmatmul.bf16.gmra.mxu0 %v2951
        %v3044 = vpop.f32.mrf.mxu0
        %v3045 = vadd.f32 0.0, %v3044
        %v3046 = vpop.f32.mrf.mxu0
        %v3047 = vadd.f32 0.0, %v3046
        %3048 = vmatmul.bf16.gmra.mxu0 %v2952
        %v3049 = vpop.f32.mrf.mxu0
        %v3050 = vadd.f32 0.0, %v3049
        %v3051 = vpop.f32.mrf.mxu0
        %v3052 = vadd.f32 0.0, %v3051
        %3053 = vmatmul.bf16.gmra.mxu0 %v2953
        %v3054 = vpop.f32.mrf.mxu0
        %v3055 = vadd.f32 0.0, %v3054
        %v3056 = vpop.f32.mrf.mxu0
        %v3057 = vadd.f32 0.0, %v3056
        %3058 = vmatmul.bf16.gmra.mxu0 %v2954
        %v3059 = vpop.f32.mrf.mxu0
        %v3060 = vadd.f32 0.0, %v3059
        %v3061 = vpop.f32.mrf.mxu0
        %v3062 = vadd.f32 0.0, %v3061
        %3063 = vmatmul.bf16.gmra.mxu0 %v2955
        %v3064 = vpop.f32.mrf.mxu0
        %v3065 = vadd.f32 0.0, %v3064
        %v3066 = vpop.f32.mrf.mxu0
        %v3067 = vadd.f32 0.0, %v3066
        %3068 = vmatmul.bf16.gmra.mxu0 %v2956
        %v3069 = vpop.f32.mrf.mxu0
        %v3070 = vadd.f32 0.0, %v3069
        %v3071 = vpop.f32.mrf.mxu0
        %v3072 = vadd.f32 0.0, %v3071
        %3073 = vmatmul.bf16.gmra.mxu0 %v2957
        %v3074 = vpop.f32.mrf.mxu0
        %v3075 = vadd.f32 0.0, %v3074
        %v3076 = vpop.f32.mrf.mxu0
        %v3077 = vadd.f32 0.0, %v3076
        %3078 = vmatmul.bf16.gmra.mxu0 %v2958
        %v3079 = vpop.f32.mrf.mxu0
        %v3080 = vadd.f32 0.0, %v3079
        %v3081 = vpop.f32.mrf.mxu0
        %v3082 = vadd.f32 0.0, %v3081
        %3083 = vmatmul.bf16.gmra.mxu0 %v2959
        %v3084 = vpop.f32.mrf.mxu0
        %v3085 = vadd.f32 0.0, %v3084
        %v3086 = vpop.f32.mrf.mxu0
        %v3087 = vadd.f32 0.0, %v3086
        %3088 = vmatmul.bf16.gmra.mxu0 %v2960
        %v3089 = vpop.f32.mrf.mxu0
        %v3090 = vadd.f32 0.0, %v3089
        %v3091 = vpop.f32.mrf.mxu0
        %v3092 = vadd.f32 0.0, %v3091
        %3093 = vmatmul.bf16.gmra.mxu0 %v2961
        %v3094 = vpop.f32.mrf.mxu0
        %v3095 = vadd.f32 0.0, %v3094
        %v3096 = vpop.f32.mrf.mxu0
        %v3097 = vadd.f32 0.0, %v3096
        %3098 = vmatmul.bf16.gmra.mxu0 %v2962
        %v3099 = vpop.f32.mrf.mxu0
        %v3100 = vadd.f32 0.0, %v3099
        %v3101 = vpop.f32.mrf.mxu0
        %v3102 = vadd.f32 0.0, %v3101
        %3103 = vmatmul.bf16.gmra.mxu0 %v2963
        %v3104 = vpop.f32.mrf.mxu0
        %v3105 = vadd.f32 0.0, %v3104
        %v3106 = vpop.f32.mrf.mxu0
        %v3107 = vadd.f32 0.0, %v3106
        %3108 = vmatmul.bf16.gmra.mxu0 %v2964
        %v3109 = vpop.f32.mrf.mxu0
        %v3110 = vadd.f32 0.0, %v3109
        %v3111 = vpop.f32.mrf.mxu0
        %v3112 = vadd.f32 0.0, %v3111
        %3113 = vmatmul.bf16.gmra.mxu0 %v2965
        %v3114 = vpop.f32.mrf.mxu0
        %v3115 = vadd.f32 0.0, %v3114
        %v3116 = vpop.f32.mrf.mxu0
        %v3117 = vadd.f32 0.0, %v3116
        %3118 = vdwg.mxu0
        %v3119 = vadd.f32 %v2438, %v3040
        %v3120 = vadd.f32 %v2439, %v3042
        %v3121 = vadd.f32 %v2440, %v3045
        %v3122 = vadd.f32 %v2441, %v3047
        %v3123 = vadd.f32 %v2442, %v3050
        %v3124 = vadd.f32 %v2443, %v3052
        %v3125 = vadd.f32 %v2444, %v3055
        %v3126 = vadd.f32 %v2445, %v3057
        %v3127 = vadd.f32 %v2446, %v3060
        %v3128 = vadd.f32 %v2447, %v3062
        %v3129 = vadd.f32 %v2448, %v3065
        %v3130 = vadd.f32 %v2449, %v3067
        %v3131 = vadd.f32 %v2450, %v3070
        %v3132 = vadd.f32 %v2451, %v3072
        %v3133 = vadd.f32 %v2452, %v3075
        %v3134 = vadd.f32 %v2453, %v3077
        %v3135 = vadd.f32 %v2454, %v3080
        %v3136 = vadd.f32 %v2455, %v3082
        %v3137 = vadd.f32 %v2456, %v3085
        %v3138 = vadd.f32 %v2457, %v3087
        %v3139 = vadd.f32 %v2458, %v3090
        %v3140 = vadd.f32 %v2459, %v3092
        %v3141 = vadd.f32 %v2460, %v3095
        %v3142 = vadd.f32 %v2461, %v3097
        %v3143 = vadd.f32 %v2462, %v3100
        %v3144 = vadd.f32 %v2463, %v3102
        %v3145 = vadd.f32 %v2464, %v3105
        %v3146 = vadd.f32 %v2465, %v3107
        %v3147 = vadd.f32 %v2466, %v3110
        %v3148 = vadd.f32 %v2467, %v3112
        %v3149 = vadd.f32 %v2468, %v3115
        %v3150 = vadd.f32 %v2469, %v3117
        %v3151 = vld [vmem:[%s725] sm:$0xe]
        %v3152 = vld [vmem:[%s725 + $0xc] sm:$0xe]
        %v3153 = vld [vmem:[%s725 + $0x18] sm:$0xe]
        %v3154 = vld [vmem:[%s725 + $0x24] sm:$0xe]
        %v3155 = vld [vmem:[%s725 + $0x30] sm:$0xe]
        %v3156 = vld [vmem:[%s725 + $0x3c] sm:$0xe]
        %v3157 = vld [vmem:[%s725 + $0x48] sm:$0xe]
        %v3158 = vld [vmem:[%s725 + $0x54] sm:$0xe]
        %v3159 = vld [vmem:[%s725 + $0x60] sm:$0xe]
        %v3160 = vld [vmem:[%s725 + $0x6c] sm:$0xe]
        %v3161 = vld [vmem:[%s725 + $0x78] sm:$0xe]
        %v3162 = vld [vmem:[%s725 + $0x84] sm:$0xe]
        %v3163 = vld [vmem:[%s725 + $0x90] sm:$0xe]
        %v3164 = vld [vmem:[%s725 + $0x9c] sm:$0xe]
        %v3165 = vld [vmem:[%s725 + $0xa8] sm:$0xe]
        %v3166 = vld [vmem:[%s725 + $0xb4] sm:$0xe]
        %v3215 = vrot.slane %v3151, 5
        %v3216 = vrot.slane %v3215, 4
        %v3217 = vrot.slane %v2471, 5
        %v3218 = vsel %vm1795, %v3216, %v3217
        %v3219 = vrot.slane %v3217, 4
        %v3220 = vrot.slane %v2472, 5
        %v3221 = vsel %vm1795, %v3219, %v3220
        %v3222 = vrot.slane %v3152, 5
        %v3223 = vrot.slane %v3222, 4
        %v3224 = vrot.slane %v2474, 5
        %v3225 = vsel %vm1795, %v3223, %v3224
        %v3226 = vrot.slane %v3224, 4
        %v3227 = vrot.slane %v2475, 5
        %v3228 = vsel %vm1795, %v3226, %v3227
        %v3229 = vrot.slane %v3153, 5
        %v3230 = vrot.slane %v3229, 4
        %v3231 = vrot.slane %v2477, 5
        %v3232 = vsel %vm1795, %v3230, %v3231
        %v3233 = vrot.slane %v3231, 4
        %v3234 = vrot.slane %v2478, 5
        %v3235 = vsel %vm1795, %v3233, %v3234
        %v3236 = vrot.slane %v3154, 5
        %v3237 = vrot.slane %v3236, 4
        %v3238 = vrot.slane %v2480, 5
        %v3239 = vsel %vm1795, %v3237, %v3238
        %v3240 = vrot.slane %v3238, 4
        %v3241 = vrot.slane %v2481, 5
        %v3242 = vsel %vm1795, %v3240, %v3241
        %v3243 = vrot.slane %v3155, 5
        %v3244 = vrot.slane %v3243, 4
        %v3245 = vrot.slane %v2483, 5
        %v3246 = vsel %vm1795, %v3244, %v3245
        %v3247 = vrot.slane %v3245, 4
        %v3248 = vrot.slane %v2484, 5
        %v3249 = vsel %vm1795, %v3247, %v3248
        %v3250 = vrot.slane %v3156, 5
        %v3251 = vrot.slane %v3250, 4
        %v3252 = vrot.slane %v2486, 5
        %v3253 = vsel %vm1795, %v3251, %v3252
        %v3254 = vrot.slane %v3252, 4
        %v3255 = vrot.slane %v2487, 5
        %v3256 = vsel %vm1795, %v3254, %v3255
        %v3257 = vrot.slane %v3157, 5
        %v3258 = vrot.slane %v3257, 4
        %v3259 = vrot.slane %v2489, 5
        %v3260 = vsel %vm1795, %v3258, %v3259
        %v3261 = vrot.slane %v3259, 4
        %v3262 = vrot.slane %v2490, 5
        %v3263 = vsel %vm1795, %v3261, %v3262
        %v3264 = vrot.slane %v3158, 5
        %v3265 = vrot.slane %v3264, 4
        %v3266 = vrot.slane %v2492, 5
        %v3267 = vsel %vm1795, %v3265, %v3266
        %v3268 = vrot.slane %v3266, 4
        %v3269 = vrot.slane %v2493, 5
        %v3270 = vsel %vm1795, %v3268, %v3269
        %v3271 = vrot.slane %v3159, 5
        %v3272 = vrot.slane %v3271, 4
        %v3273 = vrot.slane %v2495, 5
        %v3274 = vsel %vm1795, %v3272, %v3273
        %v3275 = vrot.slane %v3273, 4
        %v3276 = vrot.slane %v2496, 5
        %v3277 = vsel %vm1795, %v3275, %v3276
        %v3278 = vrot.slane %v3160, 5
        %v3279 = vrot.slane %v3278, 4
        %v3280 = vrot.slane %v2498, 5
        %v3281 = vsel %vm1795, %v3279, %v3280
        %v3282 = vrot.slane %v3280, 4
        %v3283 = vrot.slane %v2499, 5
        %v3284 = vsel %vm1795, %v3282, %v3283
        %v3285 = vrot.slane %v3161, 5
        %v3286 = vrot.slane %v3285, 4
        %v3287 = vrot.slane %v2501, 5
        %v3288 = vsel %vm1795, %v3286, %v3287
        %v3289 = vrot.slane %v3287, 4
        %v3290 = vrot.slane %v2502, 5
        %v3291 = vsel %vm1795, %v3289, %v3290
        %v3292 = vrot.slane %v3162, 5
        %v3293 = vrot.slane %v3292, 4
        %v3294 = vrot.slane %v2504, 5
        %v3295 = vsel %vm1795, %v3293, %v3294
        %v3296 = vrot.slane %v3294, 4
        %v3297 = vrot.slane %v2505, 5
        %v3298 = vsel %vm1795, %v3296, %v3297
        %v3299 = vrot.slane %v3163, 5
        %v3300 = vrot.slane %v3299, 4
        %v3301 = vrot.slane %v2507, 5
        %v3302 = vsel %vm1795, %v3300, %v3301
        %v3303 = vrot.slane %v3301, 4
        %v3304 = vrot.slane %v2508, 5
        %v3305 = vsel %vm1795, %v3303, %v3304
        %v3306 = vrot.slane %v3164, 5
        %v3307 = vrot.slane %v3306, 4
        %v3308 = vrot.slane %v2510, 5
        %v3309 = vsel %vm1795, %v3307, %v3308
        %v3310 = vrot.slane %v3308, 4
        %v3311 = vrot.slane %v2511, 5
        %v3312 = vsel %vm1795, %v3310, %v3311
        %v3313 = vrot.slane %v3165, 5
        %v3314 = vrot.slane %v3313, 4
        %v3315 = vrot.slane %v2513, 5
        %v3316 = vsel %vm1795, %v3314, %v3315
        %v3317 = vrot.slane %v3315, 4
        %v3318 = vrot.slane %v2514, 5
        %v3319 = vsel %vm1795, %v3317, %v3318
        %v3320 = vrot.slane %v3166, 5
        %v3321 = vrot.slane %v3320, 4
        %v3322 = vrot.slane %v2516, 5
        %v3323 = vsel %vm1795, %v3321, %v3322
        %v3324 = vrot.slane %v3322, 4
        %v3325 = vrot.slane %v2517, 5
        %v3326 = vsel %vm1795, %v3324, %v3325
        %v3327 = vld [vmem:[#allocation4 + $0x140] sm:$0xf]
        %v3328 = vld [vmem:[#allocation4 + $0x144] sm:$0xf]
        %v3329 = vld [vmem:[#allocation4 + $0x148] sm:$0xf]
        %v3330 = vld [vmem:[#allocation4 + $0x14c] sm:$0xf]
        %v3331 = vld [vmem:[#allocation4 + $0x150] sm:$0xf]
        %v3332 = vld [vmem:[#allocation4 + $0x154] sm:$0xf]
        %v3333 = vld [vmem:[#allocation4 + $0x158] sm:$0xf]
        %v3334 = vld [vmem:[#allocation4 + $0x15c] sm:$0xf]
        %v3335 = vld [vmem:[#allocation4 + $0x160] sm:$0xf]
        %v3336 = vld [vmem:[#allocation4 + $0x164] sm:$0xf]
        %v3337 = vld [vmem:[#allocation4 + $0x168] sm:$0xf]
        %v3338 = vld [vmem:[#allocation4 + $0x16c] sm:$0xf]
        %v3339 = vld [vmem:[#allocation4 + $0x170] sm:$0xf]
        %v3340 = vld [vmem:[#allocation4 + $0x174] sm:$0xf]
        %v3341 = vld [vmem:[#allocation4 + $0x178] sm:$0xf]
        %v3342 = vld [vmem:[#allocation4 + $0x17c] sm:$0xf]
        %v3343 = vunpack.c.l.b16 %v3218
        %v3344 = vunpack.c.l.b16 %v3221
        %v3345 = vunpack.c.l.b16 %v3225
        %v3346 = vunpack.c.l.b16 %v3228
        %v3347 = vunpack.c.l.b16 %v3232
        %v3348 = vunpack.c.l.b16 %v3235
        %v3349 = vunpack.c.l.b16 %v3239
        %v3350 = vunpack.c.l.b16 %v3242
        %v3351 = vunpack.c.l.b16 %v3246
        %v3352 = vunpack.c.l.b16 %v3249
        %v3353 = vunpack.c.l.b16 %v3253
        %v3354 = vunpack.c.l.b16 %v3256
        %v3355 = vunpack.c.l.b16 %v3260
        %v3356 = vunpack.c.l.b16 %v3263
        %v3357 = vunpack.c.l.b16 %v3267
        %v3358 = vunpack.c.l.b16 %v3270
        %v3359 = vunpack.c.l.b16 %v3274
        %v3360 = vunpack.c.l.b16 %v3277
        %v3361 = vunpack.c.l.b16 %v3281
        %v3362 = vunpack.c.l.b16 %v3284
        %v3363 = vunpack.c.l.b16 %v3288
        %v3364 = vunpack.c.l.b16 %v3291
        %v3365 = vunpack.c.l.b16 %v3295
        %v3366 = vunpack.c.l.b16 %v3298
        %v3367 = vunpack.c.l.b16 %v3302
        %v3368 = vunpack.c.l.b16 %v3305
        %v3369 = vunpack.c.l.b16 %v3309
        %v3370 = vunpack.c.l.b16 %v3312
        %v3371 = vunpack.c.l.b16 %v3316
        %v3372 = vunpack.c.l.b16 %v3319
        %v3373 = vunpack.c.l.b16 %v3323
        %v3374 = vunpack.c.l.b16 %v3326
        %v3375 = vpack.c.b16 %v3344, %v3343
        %v3376 = vpack.c.b16 %v3346, %v3345
        %v3377 = vpack.c.b16 %v3348, %v3347
        %v3378 = vpack.c.b16 %v3350, %v3349
        %v3379 = vpack.c.b16 %v3352, %v3351
        %v3380 = vpack.c.b16 %v3354, %v3353
        %v3381 = vpack.c.b16 %v3356, %v3355
        %v3382 = vpack.c.b16 %v3358, %v3357
        %v3383 = vpack.c.b16 %v3360, %v3359
        %v3384 = vpack.c.b16 %v3362, %v3361
        %v3385 = vpack.c.b16 %v3364, %v3363
        %v3386 = vpack.c.b16 %v3366, %v3365
        %v3387 = vpack.c.b16 %v3368, %v3367
        %v3388 = vpack.c.b16 %v3370, %v3369
        %v3389 = vpack.c.b16 %v3372, %v3371
        %v3390 = vpack.c.b16 %v3374, %v3373
        %v3423 = vunpack.c.l.b16 %v3327
        %v3424 = vunpack.c.l.b16 %v3328
        %v3425 = vunpack.c.l.b16 %v3329
        %v3426 = vunpack.c.l.b16 %v3330
        %v3427 = vunpack.c.l.b16 %v3331
        %v3428 = vunpack.c.l.b16 %v3332
        %v3429 = vunpack.c.l.b16 %v3333
        %v3430 = vunpack.c.l.b16 %v3334
        %v3431 = vunpack.c.l.b16 %v3335
        %v3432 = vunpack.c.l.b16 %v3336
        %v3433 = vunpack.c.l.b16 %v3337
        %v3434 = vunpack.c.l.b16 %v3338
        %v3435 = vunpack.c.l.b16 %v3339
        %v3436 = vunpack.c.l.b16 %v3340
        %v3437 = vunpack.c.l.b16 %v3341
        %v3438 = vunpack.c.l.b16 %v3342
        %v3439 = vpack.c.b16 %v3424, %v3423
        %v3440 = vpack.c.b16 %v3426, %v3425
        %v3441 = vpack.c.b16 %v3428, %v3427
        %v3442 = vpack.c.b16 %v3430, %v3429
        %v3443 = vpack.c.b16 %v3432, %v3431
        %v3444 = vpack.c.b16 %v3434, %v3433
        %v3445 = vpack.c.b16 %v3436, %v3435
        %v3446 = vpack.c.b16 %v3438, %v3437
        %3455 = vmatpush.bf16.msra.mxu0 %v3446
        %3456 = vmatpush.bf16.msra.mxu0 %v3445
        %3457 = vmatpush.bf16.msra.mxu0 %v3444
        %3458 = vmatpush.bf16.msra.mxu0 %v3443
        %3459 = vmatpush.bf16.msra.mxu0 %v3442
        %3460 = vmatpush.bf16.msra.mxu0 %v3441
        %3461 = vmatpush.bf16.msra.mxu0 %v3440
        %3462 = vmatpush.bf16.msra.mxu0 %v3439
        %3463 = vmatmul.bf16.gmra.mxu0 %v3375
        %v3464 = vpop.f32.mrf.mxu0
        %v3465 = vadd.f32 0.0, %v3464
        %v3466 = vpop.f32.mrf.mxu0
        %v3467 = vadd.f32 0.0, %v3466
        %3468 = vmatmul.bf16.gmra.mxu0 %v3376
        %v3469 = vpop.f32.mrf.mxu0
        %v3470 = vadd.f32 0.0, %v3469
        %v3471 = vpop.f32.mrf.mxu0
        %v3472 = vadd.f32 0.0, %v3471
        %3473 = vmatmul.bf16.gmra.mxu0 %v3377
        %v3474 = vpop.f32.mrf.mxu0
        %v3475 = vadd.f32 0.0, %v3474
        %v3476 = vpop.f32.mrf.mxu0
        %v3477 = vadd.f32 0.0, %v3476
        %3478 = vmatmul.bf16.gmra.mxu0 %v3378
        %v3479 = vpop.f32.mrf.mxu0
        %v3480 = vadd.f32 0.0, %v3479
        %v3481 = vpop.f32.mrf.mxu0
        %v3482 = vadd.f32 0.0, %v3481
        %3483 = vmatmul.bf16.gmra.mxu0 %v3379
        %v3484 = vpop.f32.mrf.mxu0
        %v3485 = vadd.f32 0.0, %v3484
        %v3486 = vpop.f32.mrf.mxu0
        %v3487 = vadd.f32 0.0, %v3486
        %3488 = vmatmul.bf16.gmra.mxu0 %v3380
        %v3489 = vpop.f32.mrf.mxu0
        %v3490 = vadd.f32 0.0, %v3489
        %v3491 = vpop.f32.mrf.mxu0
        %v3492 = vadd.f32 0.0, %v3491
        %3493 = vmatmul.bf16.gmra.mxu0 %v3381
        %v3494 = vpop.f32.mrf.mxu0
        %v3495 = vadd.f32 0.0, %v3494
        %v3496 = vpop.f32.mrf.mxu0
        %v3497 = vadd.f32 0.0, %v3496
        %3498 = vmatmul.bf16.gmra.mxu0 %v3382
        %v3499 = vpop.f32.mrf.mxu0
        %v3500 = vadd.f32 0.0, %v3499
        %v3501 = vpop.f32.mrf.mxu0
        %v3502 = vadd.f32 0.0, %v3501
        %3503 = vmatmul.bf16.gmra.mxu0 %v3383
        %v3504 = vpop.f32.mrf.mxu0
        %v3505 = vadd.f32 0.0, %v3504
        %v3506 = vpop.f32.mrf.mxu0
        %v3507 = vadd.f32 0.0, %v3506
        %3508 = vmatmul.bf16.gmra.mxu0 %v3384
        %v3509 = vpop.f32.mrf.mxu0
        %v3510 = vadd.f32 0.0, %v3509
        %v3511 = vpop.f32.mrf.mxu0
        %v3512 = vadd.f32 0.0, %v3511
        %3513 = vmatmul.bf16.gmra.mxu0 %v3385
        %v3514 = vpop.f32.mrf.mxu0
        %v3515 = vadd.f32 0.0, %v3514
        %v3516 = vpop.f32.mrf.mxu0
        %v3517 = vadd.f32 0.0, %v3516
        %3518 = vmatmul.bf16.gmra.mxu0 %v3386
        %v3519 = vpop.f32.mrf.mxu0
        %v3520 = vadd.f32 0.0, %v3519
        %v3521 = vpop.f32.mrf.mxu0
        %v3522 = vadd.f32 0.0, %v3521
        %3523 = vmatmul.bf16.gmra.mxu0 %v3387
        %v3524 = vpop.f32.mrf.mxu0
        %v3525 = vadd.f32 0.0, %v3524
        %v3526 = vpop.f32.mrf.mxu0
        %v3527 = vadd.f32 0.0, %v3526
        %3528 = vmatmul.bf16.gmra.mxu0 %v3388
        %v3529 = vpop.f32.mrf.mxu0
        %v3530 = vadd.f32 0.0, %v3529
        %v3531 = vpop.f32.mrf.mxu0
        %v3532 = vadd.f32 0.0, %v3531
        %3533 = vmatmul.bf16.gmra.mxu0 %v3389
        %v3534 = vpop.f32.mrf.mxu0
        %v3535 = vadd.f32 0.0, %v3534
        %v3536 = vpop.f32.mrf.mxu0
        %v3537 = vadd.f32 0.0, %v3536
        %3538 = vmatmul.bf16.gmra.mxu0 %v3390
        %v3539 = vpop.f32.mrf.mxu0
        %v3540 = vadd.f32 0.0, %v3539
        %v3541 = vpop.f32.mrf.mxu0
        %v3542 = vadd.f32 0.0, %v3541
        %3543 = vdwg.mxu0
        %v3544 = vadd.f32 %v3119, %v3465
        %v3545 = vadd.f32 %v3120, %v3467
        %v3546 = vadd.f32 %v3121, %v3470
        %v3547 = vadd.f32 %v3122, %v3472
        %v3548 = vadd.f32 %v3123, %v3475
        %v3549 = vadd.f32 %v3124, %v3477
        %v3550 = vadd.f32 %v3125, %v3480
        %v3551 = vadd.f32 %v3126, %v3482
        %v3552 = vadd.f32 %v3127, %v3485
        %v3553 = vadd.f32 %v3128, %v3487
        %v3554 = vadd.f32 %v3129, %v3490
        %v3555 = vadd.f32 %v3130, %v3492
        %v3556 = vadd.f32 %v3131, %v3495
        %v3557 = vadd.f32 %v3132, %v3497
        %v3558 = vadd.f32 %v3133, %v3500
        %v3559 = vadd.f32 %v3134, %v3502
        %v3560 = vadd.f32 %v3135, %v3505
        %v3561 = vadd.f32 %v3136, %v3507
        %v3562 = vadd.f32 %v3137, %v3510
        %v3563 = vadd.f32 %v3138, %v3512
        %v3564 = vadd.f32 %v3139, %v3515
        %v3565 = vadd.f32 %v3140, %v3517
        %v3566 = vadd.f32 %v3141, %v3520
        %v3567 = vadd.f32 %v3142, %v3522
        %v3568 = vadd.f32 %v3143, %v3525
        %v3569 = vadd.f32 %v3144, %v3527
        %v3570 = vadd.f32 %v3145, %v3530
        %v3571 = vadd.f32 %v3146, %v3532
        %v3572 = vadd.f32 %v3147, %v3535
        %v3573 = vadd.f32 %v3148, %v3537
        %v3574 = vadd.f32 %v3149, %v3540
        %v3575 = vadd.f32 %v3150, %v3542
        %s3576 = scalar_lea.vmem [#allocation2], 24
        %v3577 = vld [vmem:[%s3576] sm:$0xf]
        %v3578 = vld [vmem:[%s3576 + $0x4] sm:$0xf]
        %v3579 = vld [vmem:[%s3576 + $0xc] sm:$0xf]
        %v3580 = vld [vmem:[%s3576 + $0x10] sm:$0xf]
        %v3581 = vld [vmem:[%s3576 + $0x18] sm:$0xf]
        %v3582 = vld [vmem:[%s3576 + $0x1c] sm:$0xf]
        %v3583 = vld [vmem:[%s3576 + $0x24] sm:$0xf]
        %v3584 = vld [vmem:[%s3576 + $0x28] sm:$0xf]
        %v3585 = vld [vmem:[%s3576 + $0x30] sm:$0xf]
        %v3586 = vld [vmem:[%s3576 + $0x34] sm:$0xf]
        %v3587 = vld [vmem:[%s3576 + $0x3c] sm:$0xf]
        %v3588 = vld [vmem:[%s3576 + $0x40] sm:$0xf]
        %v3589 = vld [vmem:[%s3576 + $0x48] sm:$0xf]
        %v3590 = vld [vmem:[%s3576 + $0x4c] sm:$0xf]
        %v3591 = vld [vmem:[%s3576 + $0x54] sm:$0xf]
        %v3592 = vld [vmem:[%s3576 + $0x58] sm:$0xf]
        %v3593 = vld [vmem:[%s3576 + $0x60] sm:$0xf]
        %v3594 = vld [vmem:[%s3576 + $0x64] sm:$0xf]
        %v3595 = vld [vmem:[%s3576 + $0x6c] sm:$0xf]
        %v3596 = vld [vmem:[%s3576 + $0x70] sm:$0xf]
        %v3597 = vld [vmem:[%s3576 + $0x78] sm:$0xf]
        %v3598 = vld [vmem:[%s3576 + $0x7c] sm:$0xf]
        %v3599 = vld [vmem:[%s3576 + $0x84] sm:$0xf]
        %v3600 = vld [vmem:[%s3576 + $0x88] sm:$0xf]
        %v3601 = vld [vmem:[%s3576 + $0x90] sm:$0xf]
        %v3602 = vld [vmem:[%s3576 + $0x94] sm:$0xf]
        %v3603 = vld [vmem:[%s3576 + $0x9c] sm:$0xf]
        %v3604 = vld [vmem:[%s3576 + $0xa0] sm:$0xf]
        %v3605 = vld [vmem:[%s3576 + $0xa8] sm:$0xf]
        %v3606 = vld [vmem:[%s3576 + $0xac] sm:$0xf]
        %v3607 = vld [vmem:[%s3576 + $0xb4] sm:$0xf]
        %v3608 = vld [vmem:[%s3576 + $0xb8] sm:$0xf]
        %v3609 = vld [vmem:[#allocation4 + $0x180] sm:$0xf]
        %v3610 = vld [vmem:[#allocation4 + $0x184] sm:$0xf]
        %v3611 = vld [vmem:[#allocation4 + $0x188] sm:$0xf]
        %v3612 = vld [vmem:[#allocation4 + $0x18c] sm:$0xf]
        %v3613 = vld [vmem:[#allocation4 + $0x190] sm:$0xf]
        %v3614 = vld [vmem:[#allocation4 + $0x194] sm:$0xf]
        %v3615 = vld [vmem:[#allocation4 + $0x198] sm:$0xf]
        %v3616 = vld [vmem:[#allocation4 + $0x19c] sm:$0xf]
        %v3617 = vld [vmem:[#allocation4 + $0x1a0] sm:$0xf]
        %v3618 = vld [vmem:[#allocation4 + $0x1a4] sm:$0xf]
        %v3619 = vld [vmem:[#allocation4 + $0x1a8] sm:$0xf]
        %v3620 = vld [vmem:[#allocation4 + $0x1ac] sm:$0xf]
        %v3621 = vld [vmem:[#allocation4 + $0x1b0] sm:$0xf]
        %v3622 = vld [vmem:[#allocation4 + $0x1b4] sm:$0xf]
        %v3623 = vld [vmem:[#allocation4 + $0x1b8] sm:$0xf]
        %v3624 = vld [vmem:[#allocation4 + $0x1bc] sm:$0xf]
        %v3657 = vunpack.c.l.b16 %v3577
        %v3658 = vunpack.c.l.b16 %v3578
        %v3659 = vunpack.c.l.b16 %v3579
        %v3660 = vunpack.c.l.b16 %v3580
        %v3661 = vunpack.c.l.b16 %v3581
        %v3662 = vunpack.c.l.b16 %v3582
        %v3663 = vunpack.c.l.b16 %v3583
        %v3664 = vunpack.c.l.b16 %v3584
        %v3665 = vunpack.c.l.b16 %v3585
        %v3666 = vunpack.c.l.b16 %v3586
        %v3667 = vunpack.c.l.b16 %v3587
        %v3668 = vunpack.c.l.b16 %v3588
        %v3669 = vunpack.c.l.b16 %v3589
        %v3670 = vunpack.c.l.b16 %v3590
        %v3671 = vunpack.c.l.b16 %v3591
        %v3672 = vunpack.c.l.b16 %v3592
        %v3673 = vunpack.c.l.b16 %v3593
        %v3674 = vunpack.c.l.b16 %v3594
        %v3675 = vunpack.c.l.b16 %v3595
        %v3676 = vunpack.c.l.b16 %v3596
        %v3677 = vunpack.c.l.b16 %v3597
        %v3678 = vunpack.c.l.b16 %v3598
        %v3679 = vunpack.c.l.b16 %v3599
        %v3680 = vunpack.c.l.b16 %v3600
        %v3681 = vunpack.c.l.b16 %v3601
        %v3682 = vunpack.c.l.b16 %v3602
        %v3683 = vunpack.c.l.b16 %v3603
        %v3684 = vunpack.c.l.b16 %v3604
        %v3685 = vunpack.c.l.b16 %v3605
        %v3686 = vunpack.c.l.b16 %v3606
        %v3687 = vunpack.c.l.b16 %v3607
        %v3688 = vunpack.c.l.b16 %v3608
        %v3689 = vpack.c.b16 %v3658, %v3657
        %v3690 = vpack.c.b16 %v3660, %v3659
        %v3691 = vpack.c.b16 %v3662, %v3661
        %v3692 = vpack.c.b16 %v3664, %v3663
        %v3693 = vpack.c.b16 %v3666, %v3665
        %v3694 = vpack.c.b16 %v3668, %v3667
        %v3695 = vpack.c.b16 %v3670, %v3669
        %v3696 = vpack.c.b16 %v3672, %v3671
        %v3697 = vpack.c.b16 %v3674, %v3673
        %v3698 = vpack.c.b16 %v3676, %v3675
        %v3699 = vpack.c.b16 %v3678, %v3677
        %v3700 = vpack.c.b16 %v3680, %v3679
        %v3701 = vpack.c.b16 %v3682, %v3681
        %v3702 = vpack.c.b16 %v3684, %v3683
        %v3703 = vpack.c.b16 %v3686, %v3685
        %v3704 = vpack.c.b16 %v3688, %v3687
        %v3737 = vunpack.c.l.b16 %v3609
        %v3738 = vunpack.c.l.b16 %v3610
        %v3739 = vunpack.c.l.b16 %v3611
        %v3740 = vunpack.c.l.b16 %v3612
        %v3741 = vunpack.c.l.b16 %v3613
        %v3742 = vunpack.c.l.b16 %v3614
        %v3743 = vunpack.c.l.b16 %v3615
        %v3744 = vunpack.c.l.b16 %v3616
        %v3745 = vunpack.c.l.b16 %v3617
        %v3746 = vunpack.c.l.b16 %v3618
        %v3747 = vunpack.c.l.b16 %v3619
        %v3748 = vunpack.c.l.b16 %v3620
        %v3749 = vunpack.c.l.b16 %v3621
        %v3750 = vunpack.c.l.b16 %v3622
        %v3751 = vunpack.c.l.b16 %v3623
        %v3752 = vunpack.c.l.b16 %v3624
        %v3753 = vpack.c.b16 %v3738, %v3737
        %v3754 = vpack.c.b16 %v3740, %v3739
        %v3755 = vpack.c.b16 %v3742, %v3741
        %v3756 = vpack.c.b16 %v3744, %v3743
        %v3757 = vpack.c.b16 %v3746, %v3745
        %v3758 = vpack.c.b16 %v3748, %v3747
        %v3759 = vpack.c.b16 %v3750, %v3749
        %v3760 = vpack.c.b16 %v3752, %v3751
        %3769 = vmatpush.bf16.msra.mxu0 %v3760
        %3770 = vmatpush.bf16.msra.mxu0 %v3759
        %3771 = vmatpush.bf16.msra.mxu0 %v3758
        %3772 = vmatpush.bf16.msra.mxu0 %v3757
        %3773 = vmatpush.bf16.msra.mxu0 %v3756
        %3774 = vmatpush.bf16.msra.mxu0 %v3755
        %3775 = vmatpush.bf16.msra.mxu0 %v3754
        %3776 = vmatpush.bf16.msra.mxu0 %v3753
        %3777 = vmatmul.bf16.gmra.mxu0 %v3689
        %v3778 = vpop.f32.mrf.mxu0
        %v3779 = vadd.f32 0.0, %v3778
        %v3780 = vpop.f32.mrf.mxu0
        %v3781 = vadd.f32 0.0, %v3780
        %3782 = vmatmul.bf16.gmra.mxu0 %v3690
        %v3783 = vpop.f32.mrf.mxu0
        %v3784 = vadd.f32 0.0, %v3783
        %v3785 = vpop.f32.mrf.mxu0
        %v3786 = vadd.f32 0.0, %v3785
        %3787 = vmatmul.bf16.gmra.mxu0 %v3691
        %v3788 = vpop.f32.mrf.mxu0
        %v3789 = vadd.f32 0.0, %v3788
        %v3790 = vpop.f32.mrf.mxu0
        %v3791 = vadd.f32 0.0, %v3790
        %3792 = vmatmul.bf16.gmra.mxu0 %v3692
        %v3793 = vpop.f32.mrf.mxu0
        %v3794 = vadd.f32 0.0, %v3793
        %v3795 = vpop.f32.mrf.mxu0
        %v3796 = vadd.f32 0.0, %v3795
        %3797 = vmatmul.bf16.gmra.mxu0 %v3693
        %v3798 = vpop.f32.mrf.mxu0
        %v3799 = vadd.f32 0.0, %v3798
        %v3800 = vpop.f32.mrf.mxu0
        %v3801 = vadd.f32 0.0, %v3800
        %3802 = vmatmul.bf16.gmra.mxu0 %v3694
        %v3803 = vpop.f32.mrf.mxu0
        %v3804 = vadd.f32 0.0, %v3803
        %v3805 = vpop.f32.mrf.mxu0
        %v3806 = vadd.f32 0.0, %v3805
        %3807 = vmatmul.bf16.gmra.mxu0 %v3695
        %v3808 = vpop.f32.mrf.mxu0
        %v3809 = vadd.f32 0.0, %v3808
        %v3810 = vpop.f32.mrf.mxu0
        %v3811 = vadd.f32 0.0, %v3810
        %3812 = vmatmul.bf16.gmra.mxu0 %v3696
        %v3813 = vpop.f32.mrf.mxu0
        %v3814 = vadd.f32 0.0, %v3813
        %v3815 = vpop.f32.mrf.mxu0
        %v3816 = vadd.f32 0.0, %v3815
        %3817 = vmatmul.bf16.gmra.mxu0 %v3697
        %v3818 = vpop.f32.mrf.mxu0
        %v3819 = vadd.f32 0.0, %v3818
        %v3820 = vpop.f32.mrf.mxu0
        %v3821 = vadd.f32 0.0, %v3820
        %3822 = vmatmul.bf16.gmra.mxu0 %v3698
        %v3823 = vpop.f32.mrf.mxu0
        %v3824 = vadd.f32 0.0, %v3823
        %v3825 = vpop.f32.mrf.mxu0
        %v3826 = vadd.f32 0.0, %v3825
        %3827 = vmatmul.bf16.gmra.mxu0 %v3699
        %v3828 = vpop.f32.mrf.mxu0
        %v3829 = vadd.f32 0.0, %v3828
        %v3830 = vpop.f32.mrf.mxu0
        %v3831 = vadd.f32 0.0, %v3830
        %3832 = vmatmul.bf16.gmra.mxu0 %v3700
        %v3833 = vpop.f32.mrf.mxu0
        %v3834 = vadd.f32 0.0, %v3833
        %v3835 = vpop.f32.mrf.mxu0
        %v3836 = vadd.f32 0.0, %v3835
        %3837 = vmatmul.bf16.gmra.mxu0 %v3701
        %v3838 = vpop.f32.mrf.mxu0
        %v3839 = vadd.f32 0.0, %v3838
        %v3840 = vpop.f32.mrf.mxu0
        %v3841 = vadd.f32 0.0, %v3840
        %3842 = vmatmul.bf16.gmra.mxu0 %v3702
        %v3843 = vpop.f32.mrf.mxu0
        %v3844 = vadd.f32 0.0, %v3843
        %v3845 = vpop.f32.mrf.mxu0
        %v3846 = vadd.f32 0.0, %v3845
        %3847 = vmatmul.bf16.gmra.mxu0 %v3703
        %v3848 = vpop.f32.mrf.mxu0
        %v3849 = vadd.f32 0.0, %v3848
        %v3850 = vpop.f32.mrf.mxu0
        %v3851 = vadd.f32 0.0, %v3850
        %3852 = vmatmul.bf16.gmra.mxu0 %v3704
        %v3853 = vpop.f32.mrf.mxu0
        %v3854 = vadd.f32 0.0, %v3853
        %v3855 = vpop.f32.mrf.mxu0
        %v3856 = vadd.f32 0.0, %v3855
        %3857 = vdwg.mxu0
        %v3858 = vadd.f32 %v3544, %v3779
        %v3859 = vadd.f32 %v3545, %v3781
        %v3860 = vadd.f32 %v3546, %v3784
        %v3861 = vadd.f32 %v3547, %v3786
        %v3862 = vadd.f32 %v3548, %v3789
        %v3863 = vadd.f32 %v3549, %v3791
        %v3864 = vadd.f32 %v3550, %v3794
        %v3865 = vadd.f32 %v3551, %v3796
        %v3866 = vadd.f32 %v3552, %v3799
        %v3867 = vadd.f32 %v3553, %v3801
        %v3868 = vadd.f32 %v3554, %v3804
        %v3869 = vadd.f32 %v3555, %v3806
        %v3870 = vadd.f32 %v3556, %v3809
        %v3871 = vadd.f32 %v3557, %v3811
        %v3872 = vadd.f32 %v3558, %v3814
        %v3873 = vadd.f32 %v3559, %v3816
        %v3874 = vadd.f32 %v3560, %v3819
        %v3875 = vadd.f32 %v3561, %v3821
        %v3876 = vadd.f32 %v3562, %v3824
        %v3877 = vadd.f32 %v3563, %v3826
        %v3878 = vadd.f32 %v3564, %v3829
        %v3879 = vadd.f32 %v3565, %v3831
        %v3880 = vadd.f32 %v3566, %v3834
        %v3881 = vadd.f32 %v3567, %v3836
        %v3882 = vadd.f32 %v3568, %v3839
        %v3883 = vadd.f32 %v3569, %v3841
        %v3884 = vadd.f32 %v3570, %v3844
        %v3885 = vadd.f32 %v3571, %v3846
        %v3886 = vadd.f32 %v3572, %v3849
        %v3887 = vadd.f32 %v3573, %v3851
        %v3888 = vadd.f32 %v3574, %v3854
        %v3889 = vadd.f32 %v3575, %v3856
        %v3890 = vld [vmem:[%s3576] sm:$0xf]
        %v3891 = vld [vmem:[%s3576 + $0x4] sm:$0xf]
        %v3892 = vld [vmem:[%s3576 + $0x8] sm:$0x1]
        %v3893 = vld [vmem:[%s3576 + $0xc] sm:$0xf]
        %v3894 = vld [vmem:[%s3576 + $0x10] sm:$0xf]
        %v3895 = vld [vmem:[%s3576 + $0x14] sm:$0x1]
        %v3896 = vld [vmem:[%s3576 + $0x18] sm:$0xf]
        %v3897 = vld [vmem:[%s3576 + $0x1c] sm:$0xf]
        %v3898 = vld [vmem:[%s3576 + $0x20] sm:$0x1]
        %v3899 = vld [vmem:[%s3576 + $0x24] sm:$0xf]
        %v3900 = vld [vmem:[%s3576 + $0x28] sm:$0xf]
        %v3901 = vld [vmem:[%s3576 + $0x2c] sm:$0x1]
        %v3902 = vld [vmem:[%s3576 + $0x30] sm:$0xf]
        %v3903 = vld [vmem:[%s3576 + $0x34] sm:$0xf]
        %v3904 = vld [vmem:[%s3576 + $0x38] sm:$0x1]
        %v3905 = vld [vmem:[%s3576 + $0x3c] sm:$0xf]
        %v3906 = vld [vmem:[%s3576 + $0x40] sm:$0xf]
        %v3907 = vld [vmem:[%s3576 + $0x44] sm:$0x1]
        %v3908 = vld [vmem:[%s3576 + $0x48] sm:$0xf]
        %v3909 = vld [vmem:[%s3576 + $0x4c] sm:$0xf]
        %v3910 = vld [vmem:[%s3576 + $0x50] sm:$0x1]
        %v3911 = vld [vmem:[%s3576 + $0x54] sm:$0xf]
        %v3912 = vld [vmem:[%s3576 + $0x58] sm:$0xf]
        %v3913 = vld [vmem:[%s3576 + $0x5c] sm:$0x1]
        %v3914 = vld [vmem:[%s3576 + $0x60] sm:$0xf]
        %v3915 = vld [vmem:[%s3576 + $0x64] sm:$0xf]
        %v3916 = vld [vmem:[%s3576 + $0x68] sm:$0x1]
        %v3917 = vld [vmem:[%s3576 + $0x6c] sm:$0xf]
        %v3918 = vld [vmem:[%s3576 + $0x70] sm:$0xf]
        %v3919 = vld [vmem:[%s3576 + $0x74] sm:$0x1]
        %v3920 = vld [vmem:[%s3576 + $0x78] sm:$0xf]
        %v3921 = vld [vmem:[%s3576 + $0x7c] sm:$0xf]
        %v3922 = vld [vmem:[%s3576 + $0x80] sm:$0x1]
        %v3923 = vld [vmem:[%s3576 + $0x84] sm:$0xf]
        %v3924 = vld [vmem:[%s3576 + $0x88] sm:$0xf]
        %v3925 = vld [vmem:[%s3576 + $0x8c] sm:$0x1]
        %v3926 = vld [vmem:[%s3576 + $0x90] sm:$0xf]
        %v3927 = vld [vmem:[%s3576 + $0x94] sm:$0xf]
        %v3928 = vld [vmem:[%s3576 + $0x98] sm:$0x1]
        %v3929 = vld [vmem:[%s3576 + $0x9c] sm:$0xf]
        %v3930 = vld [vmem:[%s3576 + $0xa0] sm:$0xf]
        %v3931 = vld [vmem:[%s3576 + $0xa4] sm:$0x1]
        %v3932 = vld [vmem:[%s3576 + $0xa8] sm:$0xf]
        %v3933 = vld [vmem:[%s3576 + $0xac] sm:$0xf]
        %v3934 = vld [vmem:[%s3576 + $0xb0] sm:$0x1]
        %v3935 = vld [vmem:[%s3576 + $0xb4] sm:$0xf]
        %v3936 = vld [vmem:[%s3576 + $0xb8] sm:$0xf]
        %v3937 = vld [vmem:[%s3576 + $0xbc] sm:$0x1]
        %v3939 = vshrl.u32 %v3890, 16
        %v3941 = vrot.slane %v3939, 4
        %v3942 = vshll.u32 %v3890, 16
        %v3944 = vrot.slane %v3942, 5
        %v3945 = vor.u32 %v3941, %v3944
        %v3946 = vrot.slane %v3945, 4
        %v3948 = vshll.u32 %v3891, 16
        %v3950 = vrot.slane %v3948, 5
        %v3951 = vsel %vm910, %v3946, %v3950
        %v3952 = vshrl.u32 %v3891, 16
        %v3954 = vrot.slane %v3952, 4
        %v3955 = vor.u32 %v3954, %v3950
        %v3956 = vrot.slane %v3955, 4
        %v3958 = vshll.u32 %v3892, 16
        %v3960 = vrot.slane %v3958, 5
        %v3961 = vsel %vm910, %v3956, %v3960
        %v3963 = vshrl.u32 %v3893, 16
        %v3965 = vrot.slane %v3963, 4
        %v3966 = vshll.u32 %v3893, 16
        %v3968 = vrot.slane %v3966, 5
        %v3969 = vor.u32 %v3965, %v3968
        %v3970 = vrot.slane %v3969, 4
        %v3972 = vshll.u32 %v3894, 16
        %v3974 = vrot.slane %v3972, 5
        %v3975 = vsel %vm910, %v3970, %v3974
        %v3976 = vshrl.u32 %v3894, 16
        %v3978 = vrot.slane %v3976, 4
        %v3979 = vor.u32 %v3978, %v3974
        %v3980 = vrot.slane %v3979, 4
        %v3982 = vshll.u32 %v3895, 16
        %v3984 = vrot.slane %v3982, 5
        %v3985 = vsel %vm910, %v3980, %v3984
        %v3987 = vshrl.u32 %v3896, 16
        %v3989 = vrot.slane %v3987, 4
        %v3990 = vshll.u32 %v3896, 16
        %v3992 = vrot.slane %v3990, 5
        %v3993 = vor.u32 %v3989, %v3992
        %v3994 = vrot.slane %v3993, 4
        %v3996 = vshll.u32 %v3897, 16
        %v3998 = vrot.slane %v3996, 5
        %v3999 = vsel %vm910, %v3994, %v3998
        %v4000 = vshrl.u32 %v3897, 16
        %v4002 = vrot.slane %v4000, 4
        %v4003 = vor.u32 %v4002, %v3998
        %v4004 = vrot.slane %v4003, 4
        %v4006 = vshll.u32 %v3898, 16
        %v4008 = vrot.slane %v4006, 5
        %v4009 = vsel %vm910, %v4004, %v4008
        %v4011 = vshrl.u32 %v3899, 16
        %v4013 = vrot.slane %v4011, 4
        %v4014 = vshll.u32 %v3899, 16
        %v4016 = vrot.slane %v4014, 5
        %v4017 = vor.u32 %v4013, %v4016
        %v4018 = vrot.slane %v4017, 4
        %v4020 = vshll.u32 %v3900, 16
        %v4022 = vrot.slane %v4020, 5
        %v4023 = vsel %vm910, %v4018, %v4022
        %v4024 = vshrl.u32 %v3900, 16
        %v4026 = vrot.slane %v4024, 4
        %v4027 = vor.u32 %v4026, %v4022
        %v4028 = vrot.slane %v4027, 4
        %v4030 = vshll.u32 %v3901, 16
        %v4032 = vrot.slane %v4030, 5
        %v4033 = vsel %vm910, %v4028, %v4032
        %v4035 = vshrl.u32 %v3902, 16
        %v4037 = vrot.slane %v4035, 4
        %v4038 = vshll.u32 %v3902, 16
        %v4040 = vrot.slane %v4038, 5
        %v4041 = vor.u32 %v4037, %v4040
        %v4042 = vrot.slane %v4041, 4
        %v4044 = vshll.u32 %v3903, 16
        %v4046 = vrot.slane %v4044, 5
        %v4047 = vsel %vm910, %v4042, %v4046
        %v4048 = vshrl.u32 %v3903, 16
        %v4050 = vrot.slane %v4048, 4
        %v4051 = vor.u32 %v4050, %v4046
        %v4052 = vrot.slane %v4051, 4
        %v4054 = vshll.u32 %v3904, 16
        %v4056 = vrot.slane %v4054, 5
        %v4057 = vsel %vm910, %v4052, %v4056
        %v4059 = vshrl.u32 %v3905, 16
        %v4061 = vrot.slane %v4059, 4
        %v4062 = vshll.u32 %v3905, 16
        %v4064 = vrot.slane %v4062, 5
        %v4065 = vor.u32 %v4061, %v4064
        %v4066 = vrot.slane %v4065, 4
        %v4068 = vshll.u32 %v3906, 16
        %v4070 = vrot.slane %v4068, 5
        %v4071 = vsel %vm910, %v4066, %v4070
        %v4072 = vshrl.u32 %v3906, 16
        %v4074 = vrot.slane %v4072, 4
        %v4075 = vor.u32 %v4074, %v4070
        %v4076 = vrot.slane %v4075, 4
        %v4078 = vshll.u32 %v3907, 16
        %v4080 = vrot.slane %v4078, 5
        %v4081 = vsel %vm910, %v4076, %v4080
        %v4083 = vshrl.u32 %v3908, 16
        %v4085 = vrot.slane %v4083, 4
        %v4086 = vshll.u32 %v3908, 16
        %v4088 = vrot.slane %v4086, 5
        %v4089 = vor.u32 %v4085, %v4088
        %v4090 = vrot.slane %v4089, 4
        %v4092 = vshll.u32 %v3909, 16
        %v4094 = vrot.slane %v4092, 5
        %v4095 = vsel %vm910, %v4090, %v4094
        %v4096 = vshrl.u32 %v3909, 16
        %v4098 = vrot.slane %v4096, 4
        %v4099 = vor.u32 %v4098, %v4094
        %v4100 = vrot.slane %v4099, 4
        %v4102 = vshll.u32 %v3910, 16
        %v4104 = vrot.slane %v4102, 5
        %v4105 = vsel %vm910, %v4100, %v4104
        %v4107 = vshrl.u32 %v3911, 16
        %v4109 = vrot.slane %v4107, 4
        %v4110 = vshll.u32 %v3911, 16
        %v4112 = vrot.slane %v4110, 5
        %v4113 = vor.u32 %v4109, %v4112
        %v4114 = vrot.slane %v4113, 4
        %v4116 = vshll.u32 %v3912, 16
        %v4118 = vrot.slane %v4116, 5
        %v4119 = vsel %vm910, %v4114, %v4118
        %v4120 = vshrl.u32 %v3912, 16
        %v4122 = vrot.slane %v4120, 4
        %v4123 = vor.u32 %v4122, %v4118
        %v4124 = vrot.slane %v4123, 4
        %v4126 = vshll.u32 %v3913, 16
        %v4128 = vrot.slane %v4126, 5
        %v4129 = vsel %vm910, %v4124, %v4128
        %v4131 = vshrl.u32 %v3914, 16
        %v4133 = vrot.slane %v4131, 4
        %v4134 = vshll.u32 %v3914, 16
        %v4136 = vrot.slane %v4134, 5
        %v4137 = vor.u32 %v4133, %v4136
        %v4138 = vrot.slane %v4137, 4
        %v4140 = vshll.u32 %v3915, 16
        %v4142 = vrot.slane %v4140, 5
        %v4143 = vsel %vm910, %v4138, %v4142
        %v4144 = vshrl.u32 %v3915, 16
        %v4146 = vrot.slane %v4144, 4
        %v4147 = vor.u32 %v4146, %v4142
        %v4148 = vrot.slane %v4147, 4
        %v4150 = vshll.u32 %v3916, 16
        %v4152 = vrot.slane %v4150, 5
        %v4153 = vsel %vm910, %v4148, %v4152
        %v4155 = vshrl.u32 %v3917, 16
        %v4157 = vrot.slane %v4155, 4
        %v4158 = vshll.u32 %v3917, 16
        %v4160 = vrot.slane %v4158, 5
        %v4161 = vor.u32 %v4157, %v4160
        %v4162 = vrot.slane %v4161, 4
        %v4164 = vshll.u32 %v3918, 16
        %v4166 = vrot.slane %v4164, 5
        %v4167 = vsel %vm910, %v4162, %v4166
        %v4168 = vshrl.u32 %v3918, 16
        %v4170 = vrot.slane %v4168, 4
        %v4171 = vor.u32 %v4170, %v4166
        %v4172 = vrot.slane %v4171, 4
        %v4174 = vshll.u32 %v3919, 16
        %v4176 = vrot.slane %v4174, 5
        %v4177 = vsel %vm910, %v4172, %v4176
        %v4179 = vshrl.u32 %v3920, 16
        %v4181 = vrot.slane %v4179, 4
        %v4182 = vshll.u32 %v3920, 16
        %v4184 = vrot.slane %v4182, 5
        %v4185 = vor.u32 %v4181, %v4184
        %v4186 = vrot.slane %v4185, 4
        %v4188 = vshll.u32 %v3921, 16
        %v4190 = vrot.slane %v4188, 5
        %v4191 = vsel %vm910, %v4186, %v4190
        %v4192 = vshrl.u32 %v3921, 16
        %v4194 = vrot.slane %v4192, 4
        %v4195 = vor.u32 %v4194, %v4190
        %v4196 = vrot.slane %v4195, 4
        %v4198 = vshll.u32 %v3922, 16
        %v4200 = vrot.slane %v4198, 5
        %v4201 = vsel %vm910, %v4196, %v4200
        %v4203 = vshrl.u32 %v3923, 16
        %v4205 = vrot.slane %v4203, 4
        %v4206 = vshll.u32 %v3923, 16
        %v4208 = vrot.slane %v4206, 5
        %v4209 = vor.u32 %v4205, %v4208
        %v4210 = vrot.slane %v4209, 4
        %v4212 = vshll.u32 %v3924, 16
        %v4214 = vrot.slane %v4212, 5
        %v4215 = vsel %vm910, %v4210, %v4214
        %v4216 = vshrl.u32 %v3924, 16
        %v4218 = vrot.slane %v4216, 4
        %v4219 = vor.u32 %v4218, %v4214
        %v4220 = vrot.slane %v4219, 4
        %v4222 = vshll.u32 %v3925, 16
        %v4224 = vrot.slane %v4222, 5
        %v4225 = vsel %vm910, %v4220, %v4224
        %v4227 = vshrl.u32 %v3926, 16
        %v4229 = vrot.slane %v4227, 4
        %v4230 = vshll.u32 %v3926, 16
        %v4232 = vrot.slane %v4230, 5
        %v4233 = vor.u32 %v4229, %v4232
        %v4234 = vrot.slane %v4233, 4
        %v4236 = vshll.u32 %v3927, 16
        %v4238 = vrot.slane %v4236, 5
        %v4239 = vsel %vm910, %v4234, %v4238
        %v4240 = vshrl.u32 %v3927, 16
        %v4242 = vrot.slane %v4240, 4
        %v4243 = vor.u32 %v4242, %v4238
        %v4244 = vrot.slane %v4243, 4
        %v4246 = vshll.u32 %v3928, 16
        %v4248 = vrot.slane %v4246, 5
        %v4249 = vsel %vm910, %v4244, %v4248
        %v4251 = vshrl.u32 %v3929, 16
        %v4253 = vrot.slane %v4251, 4
        %v4254 = vshll.u32 %v3929, 16
        %v4256 = vrot.slane %v4254, 5
        %v4257 = vor.u32 %v4253, %v4256
        %v4258 = vrot.slane %v4257, 4
        %v4260 = vshll.u32 %v3930, 16
        %v4262 = vrot.slane %v4260, 5
        %v4263 = vsel %vm910, %v4258, %v4262
        %v4264 = vshrl.u32 %v3930, 16
        %v4266 = vrot.slane %v4264, 4
        %v4267 = vor.u32 %v4266, %v4262
        %v4268 = vrot.slane %v4267, 4
        %v4270 = vshll.u32 %v3931, 16
        %v4272 = vrot.slane %v4270, 5
        %v4273 = vsel %vm910, %v4268, %v4272
        %v4275 = vshrl.u32 %v3932, 16
        %v4277 = vrot.slane %v4275, 4
        %v4278 = vshll.u32 %v3932, 16
        %v4280 = vrot.slane %v4278, 5
        %v4281 = vor.u32 %v4277, %v4280
        %v4282 = vrot.slane %v4281, 4
        %v4284 = vshll.u32 %v3933, 16
        %v4286 = vrot.slane %v4284, 5
        %v4287 = vsel %vm910, %v4282, %v4286
        %v4288 = vshrl.u32 %v3933, 16
        %v4290 = vrot.slane %v4288, 4
        %v4291 = vor.u32 %v4290, %v4286
        %v4292 = vrot.slane %v4291, 4
        %v4294 = vshll.u32 %v3934, 16
        %v4296 = vrot.slane %v4294, 5
        %v4297 = vsel %vm910, %v4292, %v4296
        %v4299 = vshrl.u32 %v3935, 16
        %v4301 = vrot.slane %v4299, 4
        %v4302 = vshll.u32 %v3935, 16
        %v4304 = vrot.slane %v4302, 5
        %v4305 = vor.u32 %v4301, %v4304
        %v4306 = vrot.slane %v4305, 4
        %v4308 = vshll.u32 %v3936, 16
        %v4310 = vrot.slane %v4308, 5
        %v4311 = vsel %vm910, %v4306, %v4310
        %v4312 = vshrl.u32 %v3936, 16
        %v4314 = vrot.slane %v4312, 4
        %v4315 = vor.u32 %v4314, %v4310
        %v4316 = vrot.slane %v4315, 4
        %v4318 = vshll.u32 %v3937, 16
        %v4320 = vrot.slane %v4318, 5
        %v4321 = vsel %vm910, %v4316, %v4320
        %v4322 = vld [vmem:[#allocation4 + $0x1c0] sm:$0xf]
        %v4323 = vld [vmem:[#allocation4 + $0x1c4] sm:$0xf]
        %v4324 = vld [vmem:[#allocation4 + $0x1c8] sm:$0xf]
        %v4325 = vld [vmem:[#allocation4 + $0x1cc] sm:$0xf]
        %v4326 = vld [vmem:[#allocation4 + $0x1d0] sm:$0xf]
        %v4327 = vld [vmem:[#allocation4 + $0x1d4] sm:$0xf]
        %v4328 = vld [vmem:[#allocation4 + $0x1d8] sm:$0xf]
        %v4329 = vld [vmem:[#allocation4 + $0x1dc] sm:$0xf]
        %v4330 = vld [vmem:[#allocation4 + $0x1e0] sm:$0xf]
        %v4331 = vld [vmem:[#allocation4 + $0x1e4] sm:$0xf]
        %v4332 = vld [vmem:[#allocation4 + $0x1e8] sm:$0xf]
        %v4333 = vld [vmem:[#allocation4 + $0x1ec] sm:$0xf]
        %v4334 = vld [vmem:[#allocation4 + $0x1f0] sm:$0xf]
        %v4335 = vld [vmem:[#allocation4 + $0x1f4] sm:$0xf]
        %v4336 = vld [vmem:[#allocation4 + $0x1f8] sm:$0xf]
        %v4337 = vld [vmem:[#allocation4 + $0x1fc] sm:$0xf]
        %v4338 = vunpack.c.l.b16 %v3951
        %v4339 = vunpack.c.l.b16 %v3961
        %v4340 = vunpack.c.l.b16 %v3975
        %v4341 = vunpack.c.l.b16 %v3985
        %v4342 = vunpack.c.l.b16 %v3999
        %v4343 = vunpack.c.l.b16 %v4009
        %v4344 = vunpack.c.l.b16 %v4023
        %v4345 = vunpack.c.l.b16 %v4033
        %v4346 = vunpack.c.l.b16 %v4047
        %v4347 = vunpack.c.l.b16 %v4057
        %v4348 = vunpack.c.l.b16 %v4071
        %v4349 = vunpack.c.l.b16 %v4081
        %v4350 = vunpack.c.l.b16 %v4095
        %v4351 = vunpack.c.l.b16 %v4105
        %v4352 = vunpack.c.l.b16 %v4119
        %v4353 = vunpack.c.l.b16 %v4129
        %v4354 = vunpack.c.l.b16 %v4143
        %v4355 = vunpack.c.l.b16 %v4153
        %v4356 = vunpack.c.l.b16 %v4167
        %v4357 = vunpack.c.l.b16 %v4177
        %v4358 = vunpack.c.l.b16 %v4191
        %v4359 = vunpack.c.l.b16 %v4201
        %v4360 = vunpack.c.l.b16 %v4215
        %v4361 = vunpack.c.l.b16 %v4225
        %v4362 = vunpack.c.l.b16 %v4239
        %v4363 = vunpack.c.l.b16 %v4249
        %v4364 = vunpack.c.l.b16 %v4263
        %v4365 = vunpack.c.l.b16 %v4273
        %v4366 = vunpack.c.l.b16 %v4287
        %v4367 = vunpack.c.l.b16 %v4297
        %v4368 = vunpack.c.l.b16 %v4311
        %v4369 = vunpack.c.l.b16 %v4321
        %v4370 = vpack.c.b16 %v4339, %v4338
        %v4371 = vpack.c.b16 %v4341, %v4340
        %v4372 = vpack.c.b16 %v4343, %v4342
        %v4373 = vpack.c.b16 %v4345, %v4344
        %v4374 = vpack.c.b16 %v4347, %v4346
        %v4375 = vpack.c.b16 %v4349, %v4348
        %v4376 = vpack.c.b16 %v4351, %v4350
        %v4377 = vpack.c.b16 %v4353, %v4352
        %v4378 = vpack.c.b16 %v4355, %v4354
        %v4379 = vpack.c.b16 %v4357, %v4356
        %v4380 = vpack.c.b16 %v4359, %v4358
        %v4381 = vpack.c.b16 %v4361, %v4360
        %v4382 = vpack.c.b16 %v4363, %v4362
        %v4383 = vpack.c.b16 %v4365, %v4364
        %v4384 = vpack.c.b16 %v4367, %v4366
        %v4385 = vpack.c.b16 %v4369, %v4368
        %v4418 = vunpack.c.l.b16 %v4322
        %v4419 = vunpack.c.l.b16 %v4323
        %v4420 = vunpack.c.l.b16 %v4324
        %v4421 = vunpack.c.l.b16 %v4325
        %v4422 = vunpack.c.l.b16 %v4326
        %v4423 = vunpack.c.l.b16 %v4327
        %v4424 = vunpack.c.l.b16 %v4328
        %v4425 = vunpack.c.l.b16 %v4329
        %v4426 = vunpack.c.l.b16 %v4330
        %v4427 = vunpack.c.l.b16 %v4331
        %v4428 = vunpack.c.l.b16 %v4332
        %v4429 = vunpack.c.l.b16 %v4333
        %v4430 = vunpack.c.l.b16 %v4334
        %v4431 = vunpack.c.l.b16 %v4335
        %v4432 = vunpack.c.l.b16 %v4336
        %v4433 = vunpack.c.l.b16 %v4337
        %v4434 = vpack.c.b16 %v4419, %v4418
        %v4435 = vpack.c.b16 %v4421, %v4420
        %v4436 = vpack.c.b16 %v4423, %v4422
        %v4437 = vpack.c.b16 %v4425, %v4424
        %v4438 = vpack.c.b16 %v4427, %v4426
        %v4439 = vpack.c.b16 %v4429, %v4428
        %v4440 = vpack.c.b16 %v4431, %v4430
        %v4441 = vpack.c.b16 %v4433, %v4432
        %4450 = vmatpush.bf16.msra.mxu0 %v4441
        %4451 = vmatpush.bf16.msra.mxu0 %v4440
        %4452 = vmatpush.bf16.msra.mxu0 %v4439
        %4453 = vmatpush.bf16.msra.mxu0 %v4438
        %4454 = vmatpush.bf16.msra.mxu0 %v4437
        %4455 = vmatpush.bf16.msra.mxu0 %v4436
        %4456 = vmatpush.bf16.msra.mxu0 %v4435
        %4457 = vmatpush.bf16.msra.mxu0 %v4434
        %4458 = vmatmul.bf16.gmra.mxu0 %v4370
        %v4459 = vpop.f32.mrf.mxu0
        %v4460 = vadd.f32 0.0, %v4459
        %v4461 = vpop.f32.mrf.mxu0
        %v4462 = vadd.f32 0.0, %v4461
        %4463 = vmatmul.bf16.gmra.mxu0 %v4371
        %v4464 = vpop.f32.mrf.mxu0
        %v4465 = vadd.f32 0.0, %v4464
        %v4466 = vpop.f32.mrf.mxu0
        %v4467 = vadd.f32 0.0, %v4466
        %4468 = vmatmul.bf16.gmra.mxu0 %v4372
        %v4469 = vpop.f32.mrf.mxu0
        %v4470 = vadd.f32 0.0, %v4469
        %v4471 = vpop.f32.mrf.mxu0
        %v4472 = vadd.f32 0.0, %v4471
        %4473 = vmatmul.bf16.gmra.mxu0 %v4373
        %v4474 = vpop.f32.mrf.mxu0
        %v4475 = vadd.f32 0.0, %v4474
        %v4476 = vpop.f32.mrf.mxu0
        %v4477 = vadd.f32 0.0, %v4476
        %4478 = vmatmul.bf16.gmra.mxu0 %v4374
        %v4479 = vpop.f32.mrf.mxu0
        %v4480 = vadd.f32 0.0, %v4479
        %v4481 = vpop.f32.mrf.mxu0
        %v4482 = vadd.f32 0.0, %v4481
        %4483 = vmatmul.bf16.gmra.mxu0 %v4375
        %v4484 = vpop.f32.mrf.mxu0
        %v4485 = vadd.f32 0.0, %v4484
        %v4486 = vpop.f32.mrf.mxu0
        %v4487 = vadd.f32 0.0, %v4486
        %4488 = vmatmul.bf16.gmra.mxu0 %v4376
        %v4489 = vpop.f32.mrf.mxu0
        %v4490 = vadd.f32 0.0, %v4489
        %v4491 = vpop.f32.mrf.mxu0
        %v4492 = vadd.f32 0.0, %v4491
        %4493 = vmatmul.bf16.gmra.mxu0 %v4377
        %v4494 = vpop.f32.mrf.mxu0
        %v4495 = vadd.f32 0.0, %v4494
        %v4496 = vpop.f32.mrf.mxu0
        %v4497 = vadd.f32 0.0, %v4496
        %4498 = vmatmul.bf16.gmra.mxu0 %v4378
        %v4499 = vpop.f32.mrf.mxu0
        %v4500 = vadd.f32 0.0, %v4499
        %v4501 = vpop.f32.mrf.mxu0
        %v4502 = vadd.f32 0.0, %v4501
        %4503 = vmatmul.bf16.gmra.mxu0 %v4379
        %v4504 = vpop.f32.mrf.mxu0
        %v4505 = vadd.f32 0.0, %v4504
        %v4506 = vpop.f32.mrf.mxu0
        %v4507 = vadd.f32 0.0, %v4506
        %4508 = vmatmul.bf16.gmra.mxu0 %v4380
        %v4509 = vpop.f32.mrf.mxu0
        %v4510 = vadd.f32 0.0, %v4509
        %v4511 = vpop.f32.mrf.mxu0
        %v4512 = vadd.f32 0.0, %v4511
        %4513 = vmatmul.bf16.gmra.mxu0 %v4381
        %v4514 = vpop.f32.mrf.mxu0
        %v4515 = vadd.f32 0.0, %v4514
        %v4516 = vpop.f32.mrf.mxu0
        %v4517 = vadd.f32 0.0, %v4516
        %4518 = vmatmul.bf16.gmra.mxu0 %v4382
        %v4519 = vpop.f32.mrf.mxu0
        %v4520 = vadd.f32 0.0, %v4519
        %v4521 = vpop.f32.mrf.mxu0
        %v4522 = vadd.f32 0.0, %v4521
        %4523 = vmatmul.bf16.gmra.mxu0 %v4383
        %v4524 = vpop.f32.mrf.mxu0
        %v4525 = vadd.f32 0.0, %v4524
        %v4526 = vpop.f32.mrf.mxu0
        %v4527 = vadd.f32 0.0, %v4526
        %4528 = vmatmul.bf16.gmra.mxu0 %v4384
        %v4529 = vpop.f32.mrf.mxu0
        %v4530 = vadd.f32 0.0, %v4529
        %v4531 = vpop.f32.mrf.mxu0
        %v4532 = vadd.f32 0.0, %v4531
        %4533 = vmatmul.bf16.gmra.mxu0 %v4385
        %v4534 = vpop.f32.mrf.mxu0
        %v4535 = vadd.f32 0.0, %v4534
        %v4536 = vpop.f32.mrf.mxu0
        %v4537 = vadd.f32 0.0, %v4536
        %4538 = vdwg.mxu0
        %v4539 = vadd.f32 %v3858, %v4460
        %v4540 = vadd.f32 %v3859, %v4462
        %v4541 = vadd.f32 %v3860, %v4465
        %v4542 = vadd.f32 %v3861, %v4467
        %v4543 = vadd.f32 %v3862, %v4470
        %v4544 = vadd.f32 %v3863, %v4472
        %v4545 = vadd.f32 %v3864, %v4475
        %v4546 = vadd.f32 %v3865, %v4477
        %v4547 = vadd.f32 %v3866, %v4480
        %v4548 = vadd.f32 %v3867, %v4482
        %v4549 = vadd.f32 %v3868, %v4485
        %v4550 = vadd.f32 %v3869, %v4487
        %v4551 = vadd.f32 %v3870, %v4490
        %v4552 = vadd.f32 %v3871, %v4492
        %v4553 = vadd.f32 %v3872, %v4495
        %v4554 = vadd.f32 %v3873, %v4497
        %v4555 = vadd.f32 %v3874, %v4500
        %v4556 = vadd.f32 %v3875, %v4502
        %v4557 = vadd.f32 %v3876, %v4505
        %v4558 = vadd.f32 %v3877, %v4507
        %v4559 = vadd.f32 %v3878, %v4510
        %v4560 = vadd.f32 %v3879, %v4512
        %v4561 = vadd.f32 %v3880, %v4515
        %v4562 = vadd.f32 %v3881, %v4517
        %v4563 = vadd.f32 %v3882, %v4520
        %v4564 = vadd.f32 %v3883, %v4522
        %v4565 = vadd.f32 %v3884, %v4525
        %v4566 = vadd.f32 %v3885, %v4527
        %v4567 = vadd.f32 %v3886, %v4530
        %v4568 = vadd.f32 %v3887, %v4532
        %v4569 = vadd.f32 %v3888, %v4535
        %v4570 = vadd.f32 %v3889, %v4537
        %v4571 = vld [vmem:[%s3576] sm:$0xe]
        %v4572 = vld [vmem:[%s3576 + $0xc] sm:$0xe]
        %v4573 = vld [vmem:[%s3576 + $0x18] sm:$0xe]
        %v4574 = vld [vmem:[%s3576 + $0x24] sm:$0xe]
        %v4575 = vld [vmem:[%s3576 + $0x30] sm:$0xe]
        %v4576 = vld [vmem:[%s3576 + $0x3c] sm:$0xe]
        %v4577 = vld [vmem:[%s3576 + $0x48] sm:$0xe]
        %v4578 = vld [vmem:[%s3576 + $0x54] sm:$0xe]
        %v4579 = vld [vmem:[%s3576 + $0x60] sm:$0xe]
        %v4580 = vld [vmem:[%s3576 + $0x6c] sm:$0xe]
        %v4581 = vld [vmem:[%s3576 + $0x78] sm:$0xe]
        %v4582 = vld [vmem:[%s3576 + $0x84] sm:$0xe]
        %v4583 = vld [vmem:[%s3576 + $0x90] sm:$0xe]
        %v4584 = vld [vmem:[%s3576 + $0x9c] sm:$0xe]
        %v4585 = vld [vmem:[%s3576 + $0xa8] sm:$0xe]
        %v4586 = vld [vmem:[%s3576 + $0xb4] sm:$0xe]
        %v4635 = vrot.slane %v4571, 5
        %v4636 = vrot.slane %v4635, 4
        %v4637 = vrot.slane %v3891, 5
        %v4638 = vsel %vm1795, %v4636, %v4637
        %v4639 = vrot.slane %v4637, 4
        %v4640 = vrot.slane %v3892, 5
        %v4641 = vsel %vm1795, %v4639, %v4640
        %v4642 = vrot.slane %v4572, 5
        %v4643 = vrot.slane %v4642, 4
        %v4644 = vrot.slane %v3894, 5
        %v4645 = vsel %vm1795, %v4643, %v4644
        %v4646 = vrot.slane %v4644, 4
        %v4647 = vrot.slane %v3895, 5
        %v4648 = vsel %vm1795, %v4646, %v4647
        %v4649 = vrot.slane %v4573, 5
        %v4650 = vrot.slane %v4649, 4
        %v4651 = vrot.slane %v3897, 5
        %v4652 = vsel %vm1795, %v4650, %v4651
        %v4653 = vrot.slane %v4651, 4
        %v4654 = vrot.slane %v3898, 5
        %v4655 = vsel %vm1795, %v4653, %v4654
        %v4656 = vrot.slane %v4574, 5
        %v4657 = vrot.slane %v4656, 4
        %v4658 = vrot.slane %v3900, 5
        %v4659 = vsel %vm1795, %v4657, %v4658
        %v4660 = vrot.slane %v4658, 4
        %v4661 = vrot.slane %v3901, 5
        %v4662 = vsel %vm1795, %v4660, %v4661
        %v4663 = vrot.slane %v4575, 5
        %v4664 = vrot.slane %v4663, 4
        %v4665 = vrot.slane %v3903, 5
        %v4666 = vsel %vm1795, %v4664, %v4665
        %v4667 = vrot.slane %v4665, 4
        %v4668 = vrot.slane %v3904, 5
        %v4669 = vsel %vm1795, %v4667, %v4668
        %v4670 = vrot.slane %v4576, 5
        %v4671 = vrot.slane %v4670, 4
        %v4672 = vrot.slane %v3906, 5
        %v4673 = vsel %vm1795, %v4671, %v4672
        %v4674 = vrot.slane %v4672, 4
        %v4675 = vrot.slane %v3907, 5
        %v4676 = vsel %vm1795, %v4674, %v4675
        %v4677 = vrot.slane %v4577, 5
        %v4678 = vrot.slane %v4677, 4
        %v4679 = vrot.slane %v3909, 5
        %v4680 = vsel %vm1795, %v4678, %v4679
        %v4681 = vrot.slane %v4679, 4
        %v4682 = vrot.slane %v3910, 5
        %v4683 = vsel %vm1795, %v4681, %v4682
        %v4684 = vrot.slane %v4578, 5
        %v4685 = vrot.slane %v4684, 4
        %v4686 = vrot.slane %v3912, 5
        %v4687 = vsel %vm1795, %v4685, %v4686
        %v4688 = vrot.slane %v4686, 4
        %v4689 = vrot.slane %v3913, 5
        %v4690 = vsel %vm1795, %v4688, %v4689
        %v4691 = vrot.slane %v4579, 5
        %v4692 = vrot.slane %v4691, 4
        %v4693 = vrot.slane %v3915, 5
        %v4694 = vsel %vm1795, %v4692, %v4693
        %v4695 = vrot.slane %v4693, 4
        %v4696 = vrot.slane %v3916, 5
        %v4697 = vsel %vm1795, %v4695, %v4696
        %v4698 = vrot.slane %v4580, 5
        %v4699 = vrot.slane %v4698, 4
        %v4700 = vrot.slane %v3918, 5
        %v4701 = vsel %vm1795, %v4699, %v4700
        %v4702 = vrot.slane %v4700, 4
        %v4703 = vrot.slane %v3919, 5
        %v4704 = vsel %vm1795, %v4702, %v4703
        %v4705 = vrot.slane %v4581, 5
        %v4706 = vrot.slane %v4705, 4
        %v4707 = vrot.slane %v3921, 5
        %v4708 = vsel %vm1795, %v4706, %v4707
        %v4709 = vrot.slane %v4707, 4
        %v4710 = vrot.slane %v3922, 5
        %v4711 = vsel %vm1795, %v4709, %v4710
        %v4712 = vrot.slane %v4582, 5
        %v4713 = vrot.slane %v4712, 4
        %v4714 = vrot.slane %v3924, 5
        %v4715 = vsel %vm1795, %v4713, %v4714
        %v4716 = vrot.slane %v4714, 4
        %v4717 = vrot.slane %v3925, 5
        %v4718 = vsel %vm1795, %v4716, %v4717
        %v4719 = vrot.slane %v4583, 5
        %v4720 = vrot.slane %v4719, 4
        %v4721 = vrot.slane %v3927, 5
        %v4722 = vsel %vm1795, %v4720, %v4721
        %v4723 = vrot.slane %v4721, 4
        %v4724 = vrot.slane %v3928, 5
        %v4725 = vsel %vm1795, %v4723, %v4724
        %v4726 = vrot.slane %v4584, 5
        %v4727 = vrot.slane %v4726, 4
        %v4728 = vrot.slane %v3930, 5
        %v4729 = vsel %vm1795, %v4727, %v4728
        %v4730 = vrot.slane %v4728, 4
        %v4731 = vrot.slane %v3931, 5
        %v4732 = vsel %vm1795, %v4730, %v4731
        %v4733 = vrot.slane %v4585, 5
        %v4734 = vrot.slane %v4733, 4
        %v4735 = vrot.slane %v3933, 5
        %v4736 = vsel %vm1795, %v4734, %v4735
        %v4737 = vrot.slane %v4735, 4
        %v4738 = vrot.slane %v3934, 5
        %v4739 = vsel %vm1795, %v4737, %v4738
        %v4740 = vrot.slane %v4586, 5
        %v4741 = vrot.slane %v4740, 4
        %v4742 = vrot.slane %v3936, 5
        %v4743 = vsel %vm1795, %v4741, %v4742
        %v4744 = vrot.slane %v4742, 4
        %v4745 = vrot.slane %v3937, 5
        %v4746 = vsel %vm1795, %v4744, %v4745
        %v4747 = vld [vmem:[#allocation4 + $0x200] sm:$0xf]
        %v4748 = vld [vmem:[#allocation4 + $0x204] sm:$0xf]
        %v4749 = vld [vmem:[#allocation4 + $0x208] sm:$0xf]
        %v4750 = vld [vmem:[#allocation4 + $0x20c] sm:$0xf]
        %v4751 = vld [vmem:[#allocation4 + $0x210] sm:$0xf]
        %v4752 = vld [vmem:[#allocation4 + $0x214] sm:$0xf]
        %v4753 = vld [vmem:[#allocation4 + $0x218] sm:$0xf]
        %v4754 = vld [vmem:[#allocation4 + $0x21c] sm:$0xf]
        %v4755 = vld [vmem:[#allocation4 + $0x220] sm:$0xf]
        %v4756 = vld [vmem:[#allocation4 + $0x224] sm:$0xf]
        %v4757 = vld [vmem:[#allocation4 + $0x228] sm:$0xf]
        %v4758 = vld [vmem:[#allocation4 + $0x22c] sm:$0xf]
        %v4759 = vld [vmem:[#allocation4 + $0x230] sm:$0xf]
        %v4760 = vld [vmem:[#allocation4 + $0x234] sm:$0xf]
        %v4761 = vld [vmem:[#allocation4 + $0x238] sm:$0xf]
        %v4762 = vld [vmem:[#allocation4 + $0x23c] sm:$0xf]
        %v4763 = vunpack.c.l.b16 %v4638
        %v4764 = vunpack.c.l.b16 %v4641
        %v4765 = vunpack.c.l.b16 %v4645
        %v4766 = vunpack.c.l.b16 %v4648
        %v4767 = vunpack.c.l.b16 %v4652
        %v4768 = vunpack.c.l.b16 %v4655
        %v4769 = vunpack.c.l.b16 %v4659
        %v4770 = vunpack.c.l.b16 %v4662
        %v4771 = vunpack.c.l.b16 %v4666
        %v4772 = vunpack.c.l.b16 %v4669
        %v4773 = vunpack.c.l.b16 %v4673
        %v4774 = vunpack.c.l.b16 %v4676
        %v4775 = vunpack.c.l.b16 %v4680
        %v4776 = vunpack.c.l.b16 %v4683
        %v4777 = vunpack.c.l.b16 %v4687
        %v4778 = vunpack.c.l.b16 %v4690
        %v4779 = vunpack.c.l.b16 %v4694
        %v4780 = vunpack.c.l.b16 %v4697
        %v4781 = vunpack.c.l.b16 %v4701
        %v4782 = vunpack.c.l.b16 %v4704
        %v4783 = vunpack.c.l.b16 %v4708
        %v4784 = vunpack.c.l.b16 %v4711
        %v4785 = vunpack.c.l.b16 %v4715
        %v4786 = vunpack.c.l.b16 %v4718
        %v4787 = vunpack.c.l.b16 %v4722
        %v4788 = vunpack.c.l.b16 %v4725
        %v4789 = vunpack.c.l.b16 %v4729
        %v4790 = vunpack.c.l.b16 %v4732
        %v4791 = vunpack.c.l.b16 %v4736
        %v4792 = vunpack.c.l.b16 %v4739
        %v4793 = vunpack.c.l.b16 %v4743
        %v4794 = vunpack.c.l.b16 %v4746
        %v4795 = vpack.c.b16 %v4764, %v4763
        %v4796 = vpack.c.b16 %v4766, %v4765
        %v4797 = vpack.c.b16 %v4768, %v4767
        %v4798 = vpack.c.b16 %v4770, %v4769
        %v4799 = vpack.c.b16 %v4772, %v4771
        %v4800 = vpack.c.b16 %v4774, %v4773
        %v4801 = vpack.c.b16 %v4776, %v4775
        %v4802 = vpack.c.b16 %v4778, %v4777
        %v4803 = vpack.c.b16 %v4780, %v4779
        %v4804 = vpack.c.b16 %v4782, %v4781
        %v4805 = vpack.c.b16 %v4784, %v4783
        %v4806 = vpack.c.b16 %v4786, %v4785
        %v4807 = vpack.c.b16 %v4788, %v4787
        %v4808 = vpack.c.b16 %v4790, %v4789
        %v4809 = vpack.c.b16 %v4792, %v4791
        %v4810 = vpack.c.b16 %v4794, %v4793
        %v4843 = vunpack.c.l.b16 %v4747
        %v4844 = vunpack.c.l.b16 %v4748
        %v4845 = vunpack.c.l.b16 %v4749
        %v4846 = vunpack.c.l.b16 %v4750
        %v4847 = vunpack.c.l.b16 %v4751
        %v4848 = vunpack.c.l.b16 %v4752
        %v4849 = vunpack.c.l.b16 %v4753
        %v4850 = vunpack.c.l.b16 %v4754
        %v4851 = vunpack.c.l.b16 %v4755
        %v4852 = vunpack.c.l.b16 %v4756
        %v4853 = vunpack.c.l.b16 %v4757
        %v4854 = vunpack.c.l.b16 %v4758
        %v4855 = vunpack.c.l.b16 %v4759
        %v4856 = vunpack.c.l.b16 %v4760
        %v4857 = vunpack.c.l.b16 %v4761
        %v4858 = vunpack.c.l.b16 %v4762
        %v4859 = vpack.c.b16 %v4844, %v4843
        %v4860 = vpack.c.b16 %v4846, %v4845
        %v4861 = vpack.c.b16 %v4848, %v4847
        %v4862 = vpack.c.b16 %v4850, %v4849
        %v4863 = vpack.c.b16 %v4852, %v4851
        %v4864 = vpack.c.b16 %v4854, %v4853
        %v4865 = vpack.c.b16 %v4856, %v4855
        %v4866 = vpack.c.b16 %v4858, %v4857
        %4875 = vmatpush.bf16.msra.mxu0 %v4866
        %4876 = vmatpush.bf16.msra.mxu0 %v4865
        %4877 = vmatpush.bf16.msra.mxu0 %v4864
        %4878 = vmatpush.bf16.msra.mxu0 %v4863
        %4879 = vmatpush.bf16.msra.mxu0 %v4862
        %4880 = vmatpush.bf16.msra.mxu0 %v4861
        %4881 = vmatpush.bf16.msra.mxu0 %v4860
        %4882 = vmatpush.bf16.msra.mxu0 %v4859
        %4883 = vmatmul.bf16.gmra.mxu0 %v4795
        %v4884 = vpop.f32.mrf.mxu0
        %v4885 = vadd.f32 0.0, %v4884
        %v4886 = vpop.f32.mrf.mxu0
        %v4887 = vadd.f32 0.0, %v4886
        %4888 = vmatmul.bf16.gmra.mxu0 %v4796
        %v4889 = vpop.f32.mrf.mxu0
        %v4890 = vadd.f32 0.0, %v4889
        %v4891 = vpop.f32.mrf.mxu0
        %v4892 = vadd.f32 0.0, %v4891
        %4893 = vmatmul.bf16.gmra.mxu0 %v4797
        %v4894 = vpop.f32.mrf.mxu0
        %v4895 = vadd.f32 0.0, %v4894
        %v4896 = vpop.f32.mrf.mxu0
        %v4897 = vadd.f32 0.0, %v4896
        %4898 = vmatmul.bf16.gmra.mxu0 %v4798
        %v4899 = vpop.f32.mrf.mxu0
        %v4900 = vadd.f32 0.0, %v4899
        %v4901 = vpop.f32.mrf.mxu0
        %v4902 = vadd.f32 0.0, %v4901
        %4903 = vmatmul.bf16.gmra.mxu0 %v4799
        %v4904 = vpop.f32.mrf.mxu0
        %v4905 = vadd.f32 0.0, %v4904
        %v4906 = vpop.f32.mrf.mxu0
        %v4907 = vadd.f32 0.0, %v4906
        %4908 = vmatmul.bf16.gmra.mxu0 %v4800
        %v4909 = vpop.f32.mrf.mxu0
        %v4910 = vadd.f32 0.0, %v4909
        %v4911 = vpop.f32.mrf.mxu0
        %v4912 = vadd.f32 0.0, %v4911
        %4913 = vmatmul.bf16.gmra.mxu0 %v4801
        %v4914 = vpop.f32.mrf.mxu0
        %v4915 = vadd.f32 0.0, %v4914
        %v4916 = vpop.f32.mrf.mxu0
        %v4917 = vadd.f32 0.0, %v4916
        %4918 = vmatmul.bf16.gmra.mxu0 %v4802
        %v4919 = vpop.f32.mrf.mxu0
        %v4920 = vadd.f32 0.0, %v4919
        %v4921 = vpop.f32.mrf.mxu0
        %v4922 = vadd.f32 0.0, %v4921
        %4923 = vmatmul.bf16.gmra.mxu0 %v4803
        %v4924 = vpop.f32.mrf.mxu0
        %v4925 = vadd.f32 0.0, %v4924
        %v4926 = vpop.f32.mrf.mxu0
        %v4927 = vadd.f32 0.0, %v4926
        %4928 = vmatmul.bf16.gmra.mxu0 %v4804
        %v4929 = vpop.f32.mrf.mxu0
        %v4930 = vadd.f32 0.0, %v4929
        %v4931 = vpop.f32.mrf.mxu0
        %v4932 = vadd.f32 0.0, %v4931
        %4933 = vmatmul.bf16.gmra.mxu0 %v4805
        %v4934 = vpop.f32.mrf.mxu0
        %v4935 = vadd.f32 0.0, %v4934
        %v4936 = vpop.f32.mrf.mxu0
        %v4937 = vadd.f32 0.0, %v4936
        %4938 = vmatmul.bf16.gmra.mxu0 %v4806
        %v4939 = vpop.f32.mrf.mxu0
        %v4940 = vadd.f32 0.0, %v4939
        %v4941 = vpop.f32.mrf.mxu0
        %v4942 = vadd.f32 0.0, %v4941
        %4943 = vmatmul.bf16.gmra.mxu0 %v4807
        %v4944 = vpop.f32.mrf.mxu0
        %v4945 = vadd.f32 0.0, %v4944
        %v4946 = vpop.f32.mrf.mxu0
        %v4947 = vadd.f32 0.0, %v4946
        %4948 = vmatmul.bf16.gmra.mxu0 %v4808
        %v4949 = vpop.f32.mrf.mxu0
        %v4950 = vadd.f32 0.0, %v4949
        %v4951 = vpop.f32.mrf.mxu0
        %v4952 = vadd.f32 0.0, %v4951
        %4953 = vmatmul.bf16.gmra.mxu0 %v4809
        %v4954 = vpop.f32.mrf.mxu0
        %v4955 = vadd.f32 0.0, %v4954
        %v4956 = vpop.f32.mrf.mxu0
        %v4957 = vadd.f32 0.0, %v4956
        %4958 = vmatmul.bf16.gmra.mxu0 %v4810
        %v4959 = vpop.f32.mrf.mxu0
        %v4960 = vadd.f32 0.0, %v4959
        %v4961 = vpop.f32.mrf.mxu0
        %v4962 = vadd.f32 0.0, %v4961
        %4963 = vdwg.mxu0
        %v4964 = vadd.f32 %v4539, %v4885
        %v4965 = vadd.f32 %v4540, %v4887
        %v4966 = vadd.f32 %v4541, %v4890
        %v4967 = vadd.f32 %v4542, %v4892
        %v4968 = vadd.f32 %v4543, %v4895
        %v4969 = vadd.f32 %v4544, %v4897
        %v4970 = vadd.f32 %v4545, %v4900
        %v4971 = vadd.f32 %v4546, %v4902
        %v4972 = vadd.f32 %v4547, %v4905
        %v4973 = vadd.f32 %v4548, %v4907
        %v4974 = vadd.f32 %v4549, %v4910
        %v4975 = vadd.f32 %v4550, %v4912
        %v4976 = vadd.f32 %v4551, %v4915
        %v4977 = vadd.f32 %v4552, %v4917
        %v4978 = vadd.f32 %v4553, %v4920
        %v4979 = vadd.f32 %v4554, %v4922
        %v4980 = vadd.f32 %v4555, %v4925
        %v4981 = vadd.f32 %v4556, %v4927
        %v4982 = vadd.f32 %v4557, %v4930
        %v4983 = vadd.f32 %v4558, %v4932
        %v4984 = vadd.f32 %v4559, %v4935
        %v4985 = vadd.f32 %v4560, %v4937
        %v4986 = vadd.f32 %v4561, %v4940
        %v4987 = vadd.f32 %v4562, %v4942
        %v4988 = vadd.f32 %v4563, %v4945
        %v4989 = vadd.f32 %v4564, %v4947
        %v4990 = vadd.f32 %v4565, %v4950
        %v4991 = vadd.f32 %v4566, %v4952
        %v4992 = vadd.f32 %v4567, %v4955
        %v4993 = vadd.f32 %v4568, %v4957
        %v4994 = vadd.f32 %v4569, %v4960
        %v4995 = vadd.f32 %v4570, %v4962
        %v4996 = vld [vmem:[%s2] sm:$0x1]
        %v4998 = vperm.slane %v4996, 0
        %v5000 = vadd.f32 %v4964, %v4998
        %v5001 = vadd.f32 %v4965, %v4998
        %v5002 = vadd.f32 %v4966, %v4998
        %v5003 = vadd.f32 %v4967, %v4998
        %v5004 = vadd.f32 %v4968, %v4998
        %v5005 = vadd.f32 %v4969, %v4998
        %v5006 = vadd.f32 %v4970, %v4998
        %v5007 = vadd.f32 %v4971, %v4998
        %v5008 = vadd.f32 %v4972, %v4998
        %v5009 = vadd.f32 %v4973, %v4998
        %v5010 = vadd.f32 %v4974, %v4998
        %v5011 = vadd.f32 %v4975, %v4998
        %v5012 = vadd.f32 %v4976, %v4998
        %v5013 = vadd.f32 %v4977, %v4998
        %v5014 = vadd.f32 %v4978, %v4998
        %v5015 = vadd.f32 %v4979, %v4998
        %v5016 = vadd.f32 %v4980, %v4998
        %v5017 = vadd.f32 %v4981, %v4998
        %v5018 = vadd.f32 %v4982, %v4998
        %v5019 = vadd.f32 %v4983, %v4998
        %v5020 = vadd.f32 %v4984, %v4998
        %v5021 = vadd.f32 %v4985, %v4998
        %v5022 = vadd.f32 %v4986, %v4998
        %v5023 = vadd.f32 %v4987, %v4998
        %v5024 = vadd.f32 %v4988, %v4998
        %v5025 = vadd.f32 %v4989, %v4998
        %v5026 = vadd.f32 %v4990, %v4998
        %v5027 = vadd.f32 %v4991, %v4998
        %v5028 = vadd.f32 %v4992, %v4998
        %v5029 = vadd.f32 %v4993, %v4998
        %v5030 = vadd.f32 %v4994, %v4998
        %v5031 = vadd.f32 %v4995, %v4998
        %v5032 = vmax.f32 %v5000, 0.0
        %v5033 = vmax.f32 %v5001, 0.0
        %v5034 = vmax.f32 %v5002, 0.0
        %v5035 = vmax.f32 %v5003, 0.0
        %v5036 = vmax.f32 %v5004, 0.0
        %v5037 = vmax.f32 %v5005, 0.0
        %v5038 = vmax.f32 %v5006, 0.0
        %v5039 = vmax.f32 %v5007, 0.0
        %v5040 = vmax.f32 %v5008, 0.0
        %v5041 = vmax.f32 %v5009, 0.0
        %v5042 = vmax.f32 %v5010, 0.0
        %v5043 = vmax.f32 %v5011, 0.0
        %v5044 = vmax.f32 %v5012, 0.0
        %v5045 = vmax.f32 %v5013, 0.0
        %v5046 = vmax.f32 %v5014, 0.0
        %v5047 = vmax.f32 %v5015, 0.0
        %v5048 = vmax.f32 %v5016, 0.0
        %v5049 = vmax.f32 %v5017, 0.0
        %v5050 = vmax.f32 %v5018, 0.0
        %v5051 = vmax.f32 %v5019, 0.0
        %v5052 = vmax.f32 %v5020, 0.0
        %v5053 = vmax.f32 %v5021, 0.0
        %v5054 = vmax.f32 %v5022, 0.0
        %v5055 = vmax.f32 %v5023, 0.0
        %v5056 = vmax.f32 %v5024, 0.0
        %v5057 = vmax.f32 %v5025, 0.0
        %v5058 = vmax.f32 %v5026, 0.0
        %v5059 = vmax.f32 %v5027, 0.0
        %v5060 = vmax.f32 %v5028, 0.0
        %v5061 = vmax.f32 %v5029, 0.0
        %v5062 = vmax.f32 %v5030, 0.0
        %v5063 = vmax.f32 %v5031, 0.0
        %v5064 = vpack.c.bf16 %v5032, %v5032
        %v5065 = vpack.c.bf16 %v5033, %v5033
        %v5066 = vpack.c.bf16 %v5034, %v5034
        %v5067 = vpack.c.bf16 %v5035, %v5035
        %v5068 = vpack.c.bf16 %v5036, %v5036
        %v5069 = vpack.c.bf16 %v5037, %v5037
        %v5070 = vpack.c.bf16 %v5038, %v5038
        %v5071 = vpack.c.bf16 %v5039, %v5039
        %v5072 = vpack.c.bf16 %v5040, %v5040
        %v5073 = vpack.c.bf16 %v5041, %v5041
        %v5074 = vpack.c.bf16 %v5042, %v5042
        %v5075 = vpack.c.bf16 %v5043, %v5043
        %v5076 = vpack.c.bf16 %v5044, %v5044
        %v5077 = vpack.c.bf16 %v5045, %v5045
        %v5078 = vpack.c.bf16 %v5046, %v5046
        %v5079 = vpack.c.bf16 %v5047, %v5047
        %v5080 = vpack.c.bf16 %v5048, %v5048
        %v5081 = vpack.c.bf16 %v5049, %v5049
        %v5082 = vpack.c.bf16 %v5050, %v5050
        %v5083 = vpack.c.bf16 %v5051, %v5051
        %v5084 = vpack.c.bf16 %v5052, %v5052
        %v5085 = vpack.c.bf16 %v5053, %v5053
        %v5086 = vpack.c.bf16 %v5054, %v5054
        %v5087 = vpack.c.bf16 %v5055, %v5055
        %v5088 = vpack.c.bf16 %v5056, %v5056
        %v5089 = vpack.c.bf16 %v5057, %v5057
        %v5090 = vpack.c.bf16 %v5058, %v5058
        %v5091 = vpack.c.bf16 %v5059, %v5059
        %v5092 = vpack.c.bf16 %v5060, %v5060
        %v5093 = vpack.c.bf16 %v5061, %v5061
        %v5094 = vpack.c.bf16 %v5062, %v5062
        %v5095 = vpack.c.bf16 %v5063, %v5063
        %v5097 = vshrl.u32 %v5064, 16
        %v5099 = vrot.slane %v5097, 7
        %v5100 = vshll.u32 %v5064, 16
        %v5102 = vor.u32 %v5099, %v5100
        %v5103 = vrot.slane %v5099, 4
        %v5105 = vshrl.u32 %v5065, 16
        %v5107 = vrot.slane %v5105, 7
        %v5108 = vshll.u32 %v5065, 16
        %v5110 = vor.u32 %v5107, %v5108
        %v5111 = vsel %vm404, %v5103, %v5110
        %v5112 = vrot.slane %v5107, 4
        %v5114 = vshrl.u32 %v5066, 16
        %v5116 = vrot.slane %v5114, 7
        %v5117 = vshll.u32 %v5066, 16
        %v5119 = vor.u32 %v5116, %v5117
        %v5120 = vrot.slane %v5116, 4
        %v5122 = vshrl.u32 %v5067, 16
        %v5124 = vrot.slane %v5122, 7
        %v5125 = vshll.u32 %v5067, 16
        %v5127 = vor.u32 %v5124, %v5125
        %v5128 = vsel %vm404, %v5120, %v5127
        %v5129 = vrot.slane %v5124, 4
        %v5131 = vshrl.u32 %v5068, 16
        %v5133 = vrot.slane %v5131, 7
        %v5134 = vshll.u32 %v5068, 16
        %v5136 = vor.u32 %v5133, %v5134
        %v5137 = vrot.slane %v5133, 4
        %v5139 = vshrl.u32 %v5069, 16
        %v5141 = vrot.slane %v5139, 7
        %v5142 = vshll.u32 %v5069, 16
        %v5144 = vor.u32 %v5141, %v5142
        %v5145 = vsel %vm404, %v5137, %v5144
        %v5146 = vrot.slane %v5141, 4
        %v5148 = vshrl.u32 %v5070, 16
        %v5150 = vrot.slane %v5148, 7
        %v5151 = vshll.u32 %v5070, 16
        %v5153 = vor.u32 %v5150, %v5151
        %v5154 = vrot.slane %v5150, 4
        %v5156 = vshrl.u32 %v5071, 16
        %v5158 = vrot.slane %v5156, 7
        %v5159 = vshll.u32 %v5071, 16
        %v5161 = vor.u32 %v5158, %v5159
        %v5162 = vsel %vm404, %v5154, %v5161
        %v5163 = vrot.slane %v5158, 4
        %v5165 = vshrl.u32 %v5072, 16
        %v5167 = vrot.slane %v5165, 7
        %v5168 = vshll.u32 %v5072, 16
        %v5170 = vor.u32 %v5167, %v5168
        %v5171 = vrot.slane %v5167, 4
        %v5173 = vshrl.u32 %v5073, 16
        %v5175 = vrot.slane %v5173, 7
        %v5176 = vshll.u32 %v5073, 16
        %v5178 = vor.u32 %v5175, %v5176
        %v5179 = vsel %vm404, %v5171, %v5178
        %v5180 = vrot.slane %v5175, 4
        %v5182 = vshrl.u32 %v5074, 16
        %v5184 = vrot.slane %v5182, 7
        %v5185 = vshll.u32 %v5074, 16
        %v5187 = vor.u32 %v5184, %v5185
        %v5188 = vrot.slane %v5184, 4
        %v5190 = vshrl.u32 %v5075, 16
        %v5192 = vrot.slane %v5190, 7
        %v5193 = vshll.u32 %v5075, 16
        %v5195 = vor.u32 %v5192, %v5193
        %v5196 = vsel %vm404, %v5188, %v5195
        %v5197 = vrot.slane %v5192, 4
        %v5199 = vshrl.u32 %v5076, 16
        %v5201 = vrot.slane %v5199, 7
        %v5202 = vshll.u32 %v5076, 16
        %v5204 = vor.u32 %v5201, %v5202
        %v5205 = vrot.slane %v5201, 4
        %v5207 = vshrl.u32 %v5077, 16
        %v5209 = vrot.slane %v5207, 7
        %v5210 = vshll.u32 %v5077, 16
        %v5212 = vor.u32 %v5209, %v5210
        %v5213 = vsel %vm404, %v5205, %v5212
        %v5214 = vrot.slane %v5209, 4
        %v5216 = vshrl.u32 %v5078, 16
        %v5218 = vrot.slane %v5216, 7
        %v5219 = vshll.u32 %v5078, 16
        %v5221 = vor.u32 %v5218, %v5219
        %v5222 = vrot.slane %v5218, 4
        %v5224 = vshrl.u32 %v5079, 16
        %v5226 = vrot.slane %v5224, 7
        %v5227 = vshll.u32 %v5079, 16
        %v5229 = vor.u32 %v5226, %v5227
        %v5230 = vsel %vm404, %v5222, %v5229
        %v5231 = vrot.slane %v5226, 4
        %v5233 = vshrl.u32 %v5080, 16
        %v5235 = vrot.slane %v5233, 7
        %v5236 = vshll.u32 %v5080, 16
        %v5238 = vor.u32 %v5235, %v5236
        %v5239 = vrot.slane %v5235, 4
        %v5241 = vshrl.u32 %v5081, 16
        %v5243 = vrot.slane %v5241, 7
        %v5244 = vshll.u32 %v5081, 16
        %v5246 = vor.u32 %v5243, %v5244
        %v5247 = vsel %vm404, %v5239, %v5246
        %v5248 = vrot.slane %v5243, 4
        %v5250 = vshrl.u32 %v5082, 16
        %v5252 = vrot.slane %v5250, 7
        %v5253 = vshll.u32 %v5082, 16
        %v5255 = vor.u32 %v5252, %v5253
        %v5256 = vrot.slane %v5252, 4
        %v5258 = vshrl.u32 %v5083, 16
        %v5260 = vrot.slane %v5258, 7
        %v5261 = vshll.u32 %v5083, 16
        %v5263 = vor.u32 %v5260, %v5261
        %v5264 = vsel %vm404, %v5256, %v5263
        %v5265 = vrot.slane %v5260, 4
        %v5267 = vshrl.u32 %v5084, 16
        %v5269 = vrot.slane %v5267, 7
        %v5270 = vshll.u32 %v5084, 16
        %v5272 = vor.u32 %v5269, %v5270
        %v5273 = vrot.slane %v5269, 4
        %v5275 = vshrl.u32 %v5085, 16
        %v5277 = vrot.slane %v5275, 7
        %v5278 = vshll.u32 %v5085, 16
        %v5280 = vor.u32 %v5277, %v5278
        %v5281 = vsel %vm404, %v5273, %v5280
        %v5282 = vrot.slane %v5277, 4
        %v5284 = vshrl.u32 %v5086, 16
        %v5286 = vrot.slane %v5284, 7
        %v5287 = vshll.u32 %v5086, 16
        %v5289 = vor.u32 %v5286, %v5287
        %v5290 = vrot.slane %v5286, 4
        %v5292 = vshrl.u32 %v5087, 16
        %v5294 = vrot.slane %v5292, 7
        %v5295 = vshll.u32 %v5087, 16
        %v5297 = vor.u32 %v5294, %v5295
        %v5298 = vsel %vm404, %v5290, %v5297
        %v5299 = vrot.slane %v5294, 4
        %v5301 = vshrl.u32 %v5088, 16
        %v5303 = vrot.slane %v5301, 7
        %v5304 = vshll.u32 %v5088, 16
        %v5306 = vor.u32 %v5303, %v5304
        %v5307 = vrot.slane %v5303, 4
        %v5309 = vshrl.u32 %v5089, 16
        %v5311 = vrot.slane %v5309, 7
        %v5312 = vshll.u32 %v5089, 16
        %v5314 = vor.u32 %v5311, %v5312
        %v5315 = vsel %vm404, %v5307, %v5314
        %v5316 = vrot.slane %v5311, 4
        %v5318 = vshrl.u32 %v5090, 16
        %v5320 = vrot.slane %v5318, 7
        %v5321 = vshll.u32 %v5090, 16
        %v5323 = vor.u32 %v5320, %v5321
        %v5324 = vrot.slane %v5320, 4
        %v5326 = vshrl.u32 %v5091, 16
        %v5328 = vrot.slane %v5326, 7
        %v5329 = vshll.u32 %v5091, 16
        %v5331 = vor.u32 %v5328, %v5329
        %v5332 = vsel %vm404, %v5324, %v5331
        %v5333 = vrot.slane %v5328, 4
        %v5335 = vshrl.u32 %v5092, 16
        %v5337 = vrot.slane %v5335, 7
        %v5338 = vshll.u32 %v5092, 16
        %v5340 = vor.u32 %v5337, %v5338
        %v5341 = vrot.slane %v5337, 4
        %v5343 = vshrl.u32 %v5093, 16
        %v5345 = vrot.slane %v5343, 7
        %v5346 = vshll.u32 %v5093, 16
        %v5348 = vor.u32 %v5345, %v5346
        %v5349 = vsel %vm404, %v5341, %v5348
        %v5350 = vrot.slane %v5345, 4
        %v5352 = vshrl.u32 %v5094, 16
        %v5354 = vrot.slane %v5352, 7
        %v5355 = vshll.u32 %v5094, 16
        %v5357 = vor.u32 %v5354, %v5355
        %v5358 = vrot.slane %v5354, 4
        %v5360 = vshrl.u32 %v5095, 16
        %v5362 = vrot.slane %v5360, 7
        %v5363 = vshll.u32 %v5095, 16
        %v5365 = vor.u32 %v5362, %v5363
        %v5366 = vsel %vm404, %v5358, %v5365
        %v5367 = vrot.slane %v5362, 4
        %s5416 = scalar_lea.vmem [#allocation3], 12
        %vm5417 = vcmask 1043456
        %vm5418 = vmand %vm5417, %vm727
        %v5419 = vld [vmem:[%s5416] sm:$0xf]
        %v5420 = vsel %vm5418, %v5102, %v5419
        %5421 = vst [vmem:[%s5416] sm:$0xf] %v5420
        %5422 = vst [vmem:[%s5416 + $0x4] sm:$0xf] %v5111
        %vm5423 = vcmask 1040384
        %vm5424 = vmand %vm5423, %vm402
        %v5425 = vld [vmem:[%s5416 + $0x8] sm:$0x1]
        %v5426 = vsel %vm5424, %v5112, %v5425
        %5427 = vst [vmem:[%s5416 + $0x8] sm:$0x1] %v5426
        %v5428 = vld [vmem:[%s5416 + $0xc] sm:$0xf]
        %v5429 = vsel %vm5418, %v5119, %v5428
        %5430 = vst [vmem:[%s5416 + $0xc] sm:$0xf] %v5429
        %5431 = vst [vmem:[%s5416 + $0x10] sm:$0xf] %v5128
        %v5432 = vld [vmem:[%s5416 + $0x14] sm:$0x1]
        %v5433 = vsel %vm5424, %v5129, %v5432
        %5434 = vst [vmem:[%s5416 + $0x14] sm:$0x1] %v5433
        %v5435 = vld [vmem:[%s5416 + $0x18] sm:$0xf]
        %v5436 = vsel %vm5418, %v5136, %v5435
        %5437 = vst [vmem:[%s5416 + $0x18] sm:$0xf] %v5436
        %5438 = vst [vmem:[%s5416 + $0x1c] sm:$0xf] %v5145
        %v5439 = vld [vmem:[%s5416 + $0x20] sm:$0x1]
        %v5440 = vsel %vm5424, %v5146, %v5439
        %5441 = vst [vmem:[%s5416 + $0x20] sm:$0x1] %v5440
        %v5442 = vld [vmem:[%s5416 + $0x24] sm:$0xf]
        %v5443 = vsel %vm5418, %v5153, %v5442
        %5444 = vst [vmem:[%s5416 + $0x24] sm:$0xf] %v5443
        %5445 = vst [vmem:[%s5416 + $0x28] sm:$0xf] %v5162
        %v5446 = vld [vmem:[%s5416 + $0x2c] sm:$0x1]
        %v5447 = vsel %vm5424, %v5163, %v5446
        %5448 = vst [vmem:[%s5416 + $0x2c] sm:$0x1] %v5447
        %v5449 = vld [vmem:[%s5416 + $0x30] sm:$0xf]
        %v5450 = vsel %vm5418, %v5170, %v5449
        %5451 = vst [vmem:[%s5416 + $0x30] sm:$0xf] %v5450
        %5452 = vst [vmem:[%s5416 + $0x34] sm:$0xf] %v5179
        %v5453 = vld [vmem:[%s5416 + $0x38] sm:$0x1]
        %v5454 = vsel %vm5424, %v5180, %v5453
        %5455 = vst [vmem:[%s5416 + $0x38] sm:$0x1] %v5454
        %v5456 = vld [vmem:[%s5416 + $0x3c] sm:$0xf]
        %v5457 = vsel %vm5418, %v5187, %v5456
        %5458 = vst [vmem:[%s5416 + $0x3c] sm:$0xf] %v5457
        %5459 = vst [vmem:[%s5416 + $0x40] sm:$0xf] %v5196
        %v5460 = vld [vmem:[%s5416 + $0x44] sm:$0x1]
        %v5461 = vsel %vm5424, %v5197, %v5460
        %5462 = vst [vmem:[%s5416 + $0x44] sm:$0x1] %v5461
        %v5463 = vld [vmem:[%s5416 + $0x48] sm:$0xf]
        %v5464 = vsel %vm5418, %v5204, %v5463
        %5465 = vst [vmem:[%s5416 + $0x48] sm:$0xf] %v5464
        %5466 = vst [vmem:[%s5416 + $0x4c] sm:$0xf] %v5213
        %v5467 = vld [vmem:[%s5416 + $0x50] sm:$0x1]
        %v5468 = vsel %vm5424, %v5214, %v5467
        %5469 = vst [vmem:[%s5416 + $0x50] sm:$0x1] %v5468
        %v5470 = vld [vmem:[%s5416 + $0x54] sm:$0xf]
        %v5471 = vsel %vm5418, %v5221, %v5470
        %5472 = vst [vmem:[%s5416 + $0x54] sm:$0xf] %v5471
        %5473 = vst [vmem:[%s5416 + $0x58] sm:$0xf] %v5230
        %v5474 = vld [vmem:[%s5416 + $0x5c] sm:$0x1]
        %v5475 = vsel %vm5424, %v5231, %v5474
        %5476 = vst [vmem:[%s5416 + $0x5c] sm:$0x1] %v5475
        %v5477 = vld [vmem:[%s5416 + $0x60] sm:$0xf]
        %v5478 = vsel %vm5418, %v5238, %v5477
        %5479 = vst [vmem:[%s5416 + $0x60] sm:$0xf] %v5478
        %5480 = vst [vmem:[%s5416 + $0x64] sm:$0xf] %v5247
        %v5481 = vld [vmem:[%s5416 + $0x68] sm:$0x1]
        %v5482 = vsel %vm5424, %v5248, %v5481
        %5483 = vst [vmem:[%s5416 + $0x68] sm:$0x1] %v5482
        %v5484 = vld [vmem:[%s5416 + $0x6c] sm:$0xf]
        %v5485 = vsel %vm5418, %v5255, %v5484
        %5486 = vst [vmem:[%s5416 + $0x6c] sm:$0xf] %v5485
        %5487 = vst [vmem:[%s5416 + $0x70] sm:$0xf] %v5264
        %v5488 = vld [vmem:[%s5416 + $0x74] sm:$0x1]
        %v5489 = vsel %vm5424, %v5265, %v5488
        %5490 = vst [vmem:[%s5416 + $0x74] sm:$0x1] %v5489
        %v5491 = vld [vmem:[%s5416 + $0x78] sm:$0xf]
        %v5492 = vsel %vm5418, %v5272, %v5491
        %5493 = vst [vmem:[%s5416 + $0x78] sm:$0xf] %v5492
        %5494 = vst [vmem:[%s5416 + $0x7c] sm:$0xf] %v5281
        %v5495 = vld [vmem:[%s5416 + $0x80] sm:$0x1]
        %v5496 = vsel %vm5424, %v5282, %v5495
        %5497 = vst [vmem:[%s5416 + $0x80] sm:$0x1] %v5496
        %v5498 = vld [vmem:[%s5416 + $0x84] sm:$0xf]
        %v5499 = vsel %vm5418, %v5289, %v5498
        %5500 = vst [vmem:[%s5416 + $0x84] sm:$0xf] %v5499
        %5501 = vst [vmem:[%s5416 + $0x88] sm:$0xf] %v5298
        %v5502 = vld [vmem:[%s5416 + $0x8c] sm:$0x1]
        %v5503 = vsel %vm5424, %v5299, %v5502
        %5504 = vst [vmem:[%s5416 + $0x8c] sm:$0x1] %v5503
        %v5505 = vld [vmem:[%s5416 + $0x90] sm:$0xf]
        %v5506 = vsel %vm5418, %v5306, %v5505
        %5507 = vst [vmem:[%s5416 + $0x90] sm:$0xf] %v5506
        %5508 = vst [vmem:[%s5416 + $0x94] sm:$0xf] %v5315
        %v5509 = vld [vmem:[%s5416 + $0x98] sm:$0x1]
        %v5510 = vsel %vm5424, %v5316, %v5509
        %5511 = vst [vmem:[%s5416 + $0x98] sm:$0x1] %v5510
        %v5512 = vld [vmem:[%s5416 + $0x9c] sm:$0xf]
        %v5513 = vsel %vm5418, %v5323, %v5512
        %5514 = vst [vmem:[%s5416 + $0x9c] sm:$0xf] %v5513
        %5515 = vst [vmem:[%s5416 + $0xa0] sm:$0xf] %v5332
        %v5516 = vld [vmem:[%s5416 + $0xa4] sm:$0x1]
        %v5517 = vsel %vm5424, %v5333, %v5516
        %5518 = vst [vmem:[%s5416 + $0xa4] sm:$0x1] %v5517
        %v5519 = vld [vmem:[%s5416 + $0xa8] sm:$0xf]
        %v5520 = vsel %vm5418, %v5340, %v5519
        %5521 = vst [vmem:[%s5416 + $0xa8] sm:$0xf] %v5520
        %5522 = vst [vmem:[%s5416 + $0xac] sm:$0xf] %v5349
        %v5523 = vld [vmem:[%s5416 + $0xb0] sm:$0x1]
        %v5524 = vsel %vm5424, %v5350, %v5523
        %5525 = vst [vmem:[%s5416 + $0xb0] sm:$0x1] %v5524
        %v5526 = vld [vmem:[%s5416 + $0xb4] sm:$0xf]
        %v5527 = vsel %vm5418, %v5357, %v5526
        %5528 = vst [vmem:[%s5416 + $0xb4] sm:$0xf] %v5527
        %5529 = vst [vmem:[%s5416 + $0xb8] sm:$0xf] %v5366
        %v5530 = vld [vmem:[%s5416 + $0xbc] sm:$0x1]
        %v5531 = vsel %vm5424, %v5367, %v5530
        %5532 = vst [vmem:[%s5416 + $0xbc] sm:$0x1] %v5531
        %v5533 = vld [vmem:[%s725] sm:$0xf]
        %v5534 = vld [vmem:[%s725 + $0x4] sm:$0xf]
        %v5535 = vld [vmem:[%s725 + $0x8] sm:$0x1]
        %v5536 = vld [vmem:[%s725 + $0xc] sm:$0xf]
        %v5537 = vld [vmem:[%s725 + $0x10] sm:$0xf]
        %v5538 = vld [vmem:[%s725 + $0x14] sm:$0x1]
        %v5539 = vld [vmem:[%s725 + $0x18] sm:$0xf]
        %v5540 = vld [vmem:[%s725 + $0x1c] sm:$0xf]
        %v5541 = vld [vmem:[%s725 + $0x20] sm:$0x1]
        %v5542 = vld [vmem:[%s725 + $0x24] sm:$0xf]
        %v5543 = vld [vmem:[%s725 + $0x28] sm:$0xf]
        %v5544 = vld [vmem:[%s725 + $0x2c] sm:$0x1]
        %v5545 = vld [vmem:[%s725 + $0x30] sm:$0xf]
        %v5546 = vld [vmem:[%s725 + $0x34] sm:$0xf]
        %v5547 = vld [vmem:[%s725 + $0x38] sm:$0x1]
        %v5548 = vld [vmem:[%s725 + $0x3c] sm:$0xf]
        %v5549 = vld [vmem:[%s725 + $0x40] sm:$0xf]
        %v5550 = vld [vmem:[%s725 + $0x44] sm:$0x1]
        %v5551 = vld [vmem:[%s725 + $0x48] sm:$0xf]
        %v5552 = vld [vmem:[%s725 + $0x4c] sm:$0xf]
        %v5553 = vld [vmem:[%s725 + $0x50] sm:$0x1]
        %v5554 = vld [vmem:[%s725 + $0x54] sm:$0xf]
        %v5555 = vld [vmem:[%s725 + $0x58] sm:$0xf]
        %v5556 = vld [vmem:[%s725 + $0x5c] sm:$0x1]
        %v5557 = vld [vmem:[%s725 + $0x60] sm:$0xf]
        %v5558 = vld [vmem:[%s725 + $0x64] sm:$0xf]
        %v5559 = vld [vmem:[%s725 + $0x68] sm:$0x1]
        %v5560 = vld [vmem:[%s725 + $0x6c] sm:$0xf]
        %v5561 = vld [vmem:[%s725 + $0x70] sm:$0xf]
        %v5562 = vld [vmem:[%s725 + $0x74] sm:$0x1]
        %v5563 = vld [vmem:[%s725 + $0x78] sm:$0xf]
        %v5564 = vld [vmem:[%s725 + $0x7c] sm:$0xf]
        %v5565 = vld [vmem:[%s725 + $0x80] sm:$0x1]
        %v5566 = vld [vmem:[%s725 + $0x84] sm:$0xf]
        %v5567 = vld [vmem:[%s725 + $0x88] sm:$0xf]
        %v5568 = vld [vmem:[%s725 + $0x8c] sm:$0x1]
        %v5569 = vld [vmem:[%s725 + $0x90] sm:$0xf]
        %v5570 = vld [vmem:[%s725 + $0x94] sm:$0xf]
        %v5571 = vld [vmem:[%s725 + $0x98] sm:$0x1]
        %v5572 = vld [vmem:[%s725 + $0x9c] sm:$0xf]
        %v5573 = vld [vmem:[%s725 + $0xa0] sm:$0xf]
        %v5574 = vld [vmem:[%s725 + $0xa4] sm:$0x1]
        %v5575 = vld [vmem:[%s725 + $0xa8] sm:$0xf]
        %v5576 = vld [vmem:[%s725 + $0xac] sm:$0xf]
        %v5577 = vld [vmem:[%s725 + $0xb0] sm:$0x1]
        %v5578 = vld [vmem:[%s725 + $0xb4] sm:$0xf]
        %v5579 = vld [vmem:[%s725 + $0xb8] sm:$0xf]
        %v5580 = vld [vmem:[%s725 + $0xbc] sm:$0x1]
        %v5582 = vshrl.u32 %v5533, 16
        %v5584 = vrot.slane %v5582, 4
        %v5585 = vshll.u32 %v5533, 16
        %v5587 = vrot.slane %v5585, 5
        %v5588 = vor.u32 %v5584, %v5587
        %v5589 = vrot.slane %v5588, 4
        %v5591 = vshll.u32 %v5534, 16
        %v5593 = vrot.slane %v5591, 5
        %v5594 = vsel %vm910, %v5589, %v5593
        %v5595 = vshrl.u32 %v5534, 16
        %v5597 = vrot.slane %v5595, 4
        %v5598 = vor.u32 %v5597, %v5593
        %v5599 = vrot.slane %v5598, 4
        %v5601 = vshll.u32 %v5535, 16
        %v5603 = vrot.slane %v5601, 5
        %v5604 = vsel %vm910, %v5599, %v5603
        %v5606 = vshrl.u32 %v5536, 16
        %v5608 = vrot.slane %v5606, 4
        %v5609 = vshll.u32 %v5536, 16
        %v5611 = vrot.slane %v5609, 5
        %v5612 = vor.u32 %v5608, %v5611
        %v5613 = vrot.slane %v5612, 4
        %v5615 = vshll.u32 %v5537, 16
        %v5617 = vrot.slane %v5615, 5
        %v5618 = vsel %vm910, %v5613, %v5617
        %v5619 = vshrl.u32 %v5537, 16
        %v5621 = vrot.slane %v5619, 4
        %v5622 = vor.u32 %v5621, %v5617
        %v5623 = vrot.slane %v5622, 4
        %v5625 = vshll.u32 %v5538, 16
        %v5627 = vrot.slane %v5625, 5
        %v5628 = vsel %vm910, %v5623, %v5627
        %v5630 = vshrl.u32 %v5539, 16
        %v5632 = vrot.slane %v5630, 4
        %v5633 = vshll.u32 %v5539, 16
        %v5635 = vrot.slane %v5633, 5
        %v5636 = vor.u32 %v5632, %v5635
        %v5637 = vrot.slane %v5636, 4
        %v5639 = vshll.u32 %v5540, 16
        %v5641 = vrot.slane %v5639, 5
        %v5642 = vsel %vm910, %v5637, %v5641
        %v5643 = vshrl.u32 %v5540, 16
        %v5645 = vrot.slane %v5643, 4
        %v5646 = vor.u32 %v5645, %v5641
        %v5647 = vrot.slane %v5646, 4
        %v5649 = vshll.u32 %v5541, 16
        %v5651 = vrot.slane %v5649, 5
        %v5652 = vsel %vm910, %v5647, %v5651
        %v5654 = vshrl.u32 %v5542, 16
        %v5656 = vrot.slane %v5654, 4
        %v5657 = vshll.u32 %v5542, 16
        %v5659 = vrot.slane %v5657, 5
        %v5660 = vor.u32 %v5656, %v5659
        %v5661 = vrot.slane %v5660, 4
        %v5663 = vshll.u32 %v5543, 16
        %v5665 = vrot.slane %v5663, 5
        %v5666 = vsel %vm910, %v5661, %v5665
        %v5667 = vshrl.u32 %v5543, 16
        %v5669 = vrot.slane %v5667, 4
        %v5670 = vor.u32 %v5669, %v5665
        %v5671 = vrot.slane %v5670, 4
        %v5673 = vshll.u32 %v5544, 16
        %v5675 = vrot.slane %v5673, 5
        %v5676 = vsel %vm910, %v5671, %v5675
        %v5678 = vshrl.u32 %v5545, 16
        %v5680 = vrot.slane %v5678, 4
        %v5681 = vshll.u32 %v5545, 16
        %v5683 = vrot.slane %v5681, 5
        %v5684 = vor.u32 %v5680, %v5683
        %v5685 = vrot.slane %v5684, 4
        %v5687 = vshll.u32 %v5546, 16
        %v5689 = vrot.slane %v5687, 5
        %v5690 = vsel %vm910, %v5685, %v5689
        %v5691 = vshrl.u32 %v5546, 16
        %v5693 = vrot.slane %v5691, 4
        %v5694 = vor.u32 %v5693, %v5689
        %v5695 = vrot.slane %v5694, 4
        %v5697 = vshll.u32 %v5547, 16
        %v5699 = vrot.slane %v5697, 5
        %v5700 = vsel %vm910, %v5695, %v5699
        %v5702 = vshrl.u32 %v5548, 16
        %v5704 = vrot.slane %v5702, 4
        %v5705 = vshll.u32 %v5548, 16
        %v5707 = vrot.slane %v5705, 5
        %v5708 = vor.u32 %v5704, %v5707
        %v5709 = vrot.slane %v5708, 4
        %v5711 = vshll.u32 %v5549, 16
        %v5713 = vrot.slane %v5711, 5
        %v5714 = vsel %vm910, %v5709, %v5713
        %v5715 = vshrl.u32 %v5549, 16
        %v5717 = vrot.slane %v5715, 4
        %v5718 = vor.u32 %v5717, %v5713
        %v5719 = vrot.slane %v5718, 4
        %v5721 = vshll.u32 %v5550, 16
        %v5723 = vrot.slane %v5721, 5
        %v5724 = vsel %vm910, %v5719, %v5723
        %v5726 = vshrl.u32 %v5551, 16
        %v5728 = vrot.slane %v5726, 4
        %v5729 = vshll.u32 %v5551, 16
        %v5731 = vrot.slane %v5729, 5
        %v5732 = vor.u32 %v5728, %v5731
        %v5733 = vrot.slane %v5732, 4
        %v5735 = vshll.u32 %v5552, 16
        %v5737 = vrot.slane %v5735, 5
        %v5738 = vsel %vm910, %v5733, %v5737
        %v5739 = vshrl.u32 %v5552, 16
        %v5741 = vrot.slane %v5739, 4
        %v5742 = vor.u32 %v5741, %v5737
        %v5743 = vrot.slane %v5742, 4
        %v5745 = vshll.u32 %v5553, 16
        %v5747 = vrot.slane %v5745, 5
        %v5748 = vsel %vm910, %v5743, %v5747
        %v5750 = vshrl.u32 %v5554, 16
        %v5752 = vrot.slane %v5750, 4
        %v5753 = vshll.u32 %v5554, 16
        %v5755 = vrot.slane %v5753, 5
        %v5756 = vor.u32 %v5752, %v5755
        %v5757 = vrot.slane %v5756, 4
        %v5759 = vshll.u32 %v5555, 16
        %v5761 = vrot.slane %v5759, 5
        %v5762 = vsel %vm910, %v5757, %v5761
        %v5763 = vshrl.u32 %v5555, 16
        %v5765 = vrot.slane %v5763, 4
        %v5766 = vor.u32 %v5765, %v5761
        %v5767 = vrot.slane %v5766, 4
        %v5769 = vshll.u32 %v5556, 16
        %v5771 = vrot.slane %v5769, 5
        %v5772 = vsel %vm910, %v5767, %v5771
        %v5774 = vshrl.u32 %v5557, 16
        %v5776 = vrot.slane %v5774, 4
        %v5777 = vshll.u32 %v5557, 16
        %v5779 = vrot.slane %v5777, 5
        %v5780 = vor.u32 %v5776, %v5779
        %v5781 = vrot.slane %v5780, 4
        %v5783 = vshll.u32 %v5558, 16
        %v5785 = vrot.slane %v5783, 5
        %v5786 = vsel %vm910, %v5781, %v5785
        %v5787 = vshrl.u32 %v5558, 16
        %v5789 = vrot.slane %v5787, 4
        %v5790 = vor.u32 %v5789, %v5785
        %v5791 = vrot.slane %v5790, 4
        %v5793 = vshll.u32 %v5559, 16
        %v5795 = vrot.slane %v5793, 5
        %v5796 = vsel %vm910, %v5791, %v5795
        %v5798 = vshrl.u32 %v5560, 16
        %v5800 = vrot.slane %v5798, 4
        %v5801 = vshll.u32 %v5560, 16
        %v5803 = vrot.slane %v5801, 5
        %v5804 = vor.u32 %v5800, %v5803
        %v5805 = vrot.slane %v5804, 4
        %v5807 = vshll.u32 %v5561, 16
        %v5809 = vrot.slane %v5807, 5
        %v5810 = vsel %vm910, %v5805, %v5809
        %v5811 = vshrl.u32 %v5561, 16
        %v5813 = vrot.slane %v5811, 4
        %v5814 = vor.u32 %v5813, %v5809
        %v5815 = vrot.slane %v5814, 4
        %v5817 = vshll.u32 %v5562, 16
        %v5819 = vrot.slane %v5817, 5
        %v5820 = vsel %vm910, %v5815, %v5819
        %v5822 = vshrl.u32 %v5563, 16
        %v5824 = vrot.slane %v5822, 4
        %v5825 = vshll.u32 %v5563, 16
        %v5827 = vrot.slane %v5825, 5
        %v5828 = vor.u32 %v5824, %v5827
        %v5829 = vrot.slane %v5828, 4
        %v5831 = vshll.u32 %v5564, 16
        %v5833 = vrot.slane %v5831, 5
        %v5834 = vsel %vm910, %v5829, %v5833
        %v5835 = vshrl.u32 %v5564, 16
        %v5837 = vrot.slane %v5835, 4
        %v5838 = vor.u32 %v5837, %v5833
        %v5839 = vrot.slane %v5838, 4
        %v5841 = vshll.u32 %v5565, 16
        %v5843 = vrot.slane %v5841, 5
        %v5844 = vsel %vm910, %v5839, %v5843
        %v5846 = vshrl.u32 %v5566, 16
        %v5848 = vrot.slane %v5846, 4
        %v5849 = vshll.u32 %v5566, 16
        %v5851 = vrot.slane %v5849, 5
        %v5852 = vor.u32 %v5848, %v5851
        %v5853 = vrot.slane %v5852, 4
        %v5855 = vshll.u32 %v5567, 16
        %v5857 = vrot.slane %v5855, 5
        %v5858 = vsel %vm910, %v5853, %v5857
        %v5859 = vshrl.u32 %v5567, 16
        %v5861 = vrot.slane %v5859, 4
        %v5862 = vor.u32 %v5861, %v5857
        %v5863 = vrot.slane %v5862, 4
        %v5865 = vshll.u32 %v5568, 16
        %v5867 = vrot.slane %v5865, 5
        %v5868 = vsel %vm910, %v5863, %v5867
        %v5870 = vshrl.u32 %v5569, 16
        %v5872 = vrot.slane %v5870, 4
        %v5873 = vshll.u32 %v5569, 16
        %v5875 = vrot.slane %v5873, 5
        %v5876 = vor.u32 %v5872, %v5875
        %v5877 = vrot.slane %v5876, 4
        %v5879 = vshll.u32 %v5570, 16
        %v5881 = vrot.slane %v5879, 5
        %v5882 = vsel %vm910, %v5877, %v5881
        %v5883 = vshrl.u32 %v5570, 16
        %v5885 = vrot.slane %v5883, 4
        %v5886 = vor.u32 %v5885, %v5881
        %v5887 = vrot.slane %v5886, 4
        %v5889 = vshll.u32 %v5571, 16
        %v5891 = vrot.slane %v5889, 5
        %v5892 = vsel %vm910, %v5887, %v5891
        %v5894 = vshrl.u32 %v5572, 16
        %v5896 = vrot.slane %v5894, 4
        %v5897 = vshll.u32 %v5572, 16
        %v5899 = vrot.slane %v5897, 5
        %v5900 = vor.u32 %v5896, %v5899
        %v5901 = vrot.slane %v5900, 4
        %v5903 = vshll.u32 %v5573, 16
        %v5905 = vrot.slane %v5903, 5
        %v5906 = vsel %vm910, %v5901, %v5905
        %v5907 = vshrl.u32 %v5573, 16
        %v5909 = vrot.slane %v5907, 4
        %v5910 = vor.u32 %v5909, %v5905
        %v5911 = vrot.slane %v5910, 4
        %v5913 = vshll.u32 %v5574, 16
        %v5915 = vrot.slane %v5913, 5
        %v5916 = vsel %vm910, %v5911, %v5915
        %v5918 = vshrl.u32 %v5575, 16
        %v5920 = vrot.slane %v5918, 4
        %v5921 = vshll.u32 %v5575, 16
        %v5923 = vrot.slane %v5921, 5
        %v5924 = vor.u32 %v5920, %v5923
        %v5925 = vrot.slane %v5924, 4
        %v5927 = vshll.u32 %v5576, 16
        %v5929 = vrot.slane %v5927, 5
        %v5930 = vsel %vm910, %v5925, %v5929
        %v5931 = vshrl.u32 %v5576, 16
        %v5933 = vrot.slane %v5931, 4
        %v5934 = vor.u32 %v5933, %v5929
        %v5935 = vrot.slane %v5934, 4
        %v5937 = vshll.u32 %v5577, 16
        %v5939 = vrot.slane %v5937, 5
        %v5940 = vsel %vm910, %v5935, %v5939
        %v5942 = vshrl.u32 %v5578, 16
        %v5944 = vrot.slane %v5942, 4
        %v5945 = vshll.u32 %v5578, 16
        %v5947 = vrot.slane %v5945, 5
        %v5948 = vor.u32 %v5944, %v5947
        %v5949 = vrot.slane %v5948, 4
        %v5951 = vshll.u32 %v5579, 16
        %v5953 = vrot.slane %v5951, 5
        %v5954 = vsel %vm910, %v5949, %v5953
        %v5955 = vshrl.u32 %v5579, 16
        %v5957 = vrot.slane %v5955, 4
        %v5958 = vor.u32 %v5957, %v5953
        %v5959 = vrot.slane %v5958, 4
        %v5961 = vshll.u32 %v5580, 16
        %v5963 = vrot.slane %v5961, 5
        %v5964 = vsel %vm910, %v5959, %v5963
        %v5997 = vunpack.c.l.bf16 %v5594
        %v5998 = vunpack.c.l.bf16 %v5604
        %v5999 = vunpack.c.l.bf16 %v5618
        %v6000 = vunpack.c.l.bf16 %v5628
        %v6001 = vunpack.c.l.bf16 %v5642
        %v6002 = vunpack.c.l.bf16 %v5652
        %v6003 = vunpack.c.l.bf16 %v5666
        %v6004 = vunpack.c.l.bf16 %v5676
        %v6005 = vunpack.c.l.bf16 %v5690
        %v6006 = vunpack.c.l.bf16 %v5700
        %v6007 = vunpack.c.l.bf16 %v5714
        %v6008 = vunpack.c.l.bf16 %v5724
        %v6009 = vunpack.c.l.bf16 %v5738
        %v6010 = vunpack.c.l.bf16 %v5748
        %v6011 = vunpack.c.l.bf16 %v5762
        %v6012 = vunpack.c.l.bf16 %v5772
        %v6013 = vunpack.c.l.bf16 %v5786
        %v6014 = vunpack.c.l.bf16 %v5796
        %v6015 = vunpack.c.l.bf16 %v5810
        %v6016 = vunpack.c.l.bf16 %v5820
        %v6017 = vunpack.c.l.bf16 %v5834
        %v6018 = vunpack.c.l.bf16 %v5844
        %v6019 = vunpack.c.l.bf16 %v5858
        %v6020 = vunpack.c.l.bf16 %v5868
        %v6021 = vunpack.c.l.bf16 %v5882
        %v6022 = vunpack.c.l.bf16 %v5892
        %v6023 = vunpack.c.l.bf16 %v5906
        %v6024 = vunpack.c.l.bf16 %v5916
        %v6025 = vunpack.c.l.bf16 %v5930
        %v6026 = vunpack.c.l.bf16 %v5940
        %v6027 = vunpack.c.l.bf16 %v5954
        %v6028 = vunpack.c.l.bf16 %v5964
        %v6029 = vld [vmem:[#allocation3] sm:$0xf]
        %v6030 = vld [vmem:[#allocation3 + $0x4] sm:$0xf]
        %v6031 = vld [vmem:[#allocation3 + $0xc] sm:$0xf]
        %v6032 = vld [vmem:[#allocation3 + $0x10] sm:$0xf]
        %v6033 = vld [vmem:[#allocation3 + $0x18] sm:$0xf]
        %v6034 = vld [vmem:[#allocation3 + $0x1c] sm:$0xf]
        %v6035 = vld [vmem:[#allocation3 + $0x24] sm:$0xf]
        %v6036 = vld [vmem:[#allocation3 + $0x28] sm:$0xf]
        %v6037 = vld [vmem:[#allocation3 + $0x30] sm:$0xf]
        %v6038 = vld [vmem:[#allocation3 + $0x34] sm:$0xf]
        %v6039 = vld [vmem:[#allocation3 + $0x3c] sm:$0xf]
        %v6040 = vld [vmem:[#allocation3 + $0x40] sm:$0xf]
        %v6041 = vld [vmem:[#allocation3 + $0x48] sm:$0xf]
        %v6042 = vld [vmem:[#allocation3 + $0x4c] sm:$0xf]
        %v6043 = vld [vmem:[#allocation3 + $0x54] sm:$0xf]
        %v6044 = vld [vmem:[#allocation3 + $0x58] sm:$0xf]
        %v6045 = vld [vmem:[#allocation3 + $0x60] sm:$0xf]
        %v6046 = vld [vmem:[#allocation3 + $0x64] sm:$0xf]
        %v6047 = vld [vmem:[#allocation3 + $0x6c] sm:$0xf]
        %v6048 = vld [vmem:[#allocation3 + $0x70] sm:$0xf]
        %v6049 = vld [vmem:[#allocation3 + $0x78] sm:$0xf]
        %v6050 = vld [vmem:[#allocation3 + $0x7c] sm:$0xf]
        %v6051 = vld [vmem:[#allocation3 + $0x84] sm:$0xf]
        %v6052 = vld [vmem:[#allocation3 + $0x88] sm:$0xf]
        %v6053 = vld [vmem:[#allocation3 + $0x90] sm:$0xf]
        %v6054 = vld [vmem:[#allocation3 + $0x94] sm:$0xf]
        %v6055 = vld [vmem:[#allocation3 + $0x9c] sm:$0xf]
        %v6056 = vld [vmem:[#allocation3 + $0xa0] sm:$0xf]
        %v6057 = vld [vmem:[#allocation3 + $0xa8] sm:$0xf]
        %v6058 = vld [vmem:[#allocation3 + $0xac] sm:$0xf]
        %v6059 = vld [vmem:[#allocation3 + $0xb4] sm:$0xf]
        %v6060 = vld [vmem:[#allocation3 + $0xb8] sm:$0xf]
        %v6061 = vld [vmem:[#allocation7] sm:$0xf]
        %v6062 = vld [vmem:[#allocation7 + $0x4] sm:$0xf]
        %v6063 = vld [vmem:[#allocation7 + $0x8] sm:$0xf]
        %v6064 = vld [vmem:[#allocation7 + $0xc] sm:$0xf]
        %v6065 = vld [vmem:[#allocation7 + $0x10] sm:$0xf]
        %v6066 = vld [vmem:[#allocation7 + $0x14] sm:$0xf]
        %v6067 = vld [vmem:[#allocation7 + $0x18] sm:$0xf]
        %v6068 = vld [vmem:[#allocation7 + $0x1c] sm:$0xf]
        %v6069 = vld [vmem:[#allocation7 + $0x20] sm:$0xf]
        %v6070 = vld [vmem:[#allocation7 + $0x24] sm:$0xf]
        %v6071 = vld [vmem:[#allocation7 + $0x28] sm:$0xf]
        %v6072 = vld [vmem:[#allocation7 + $0x2c] sm:$0xf]
        %v6073 = vld [vmem:[#allocation7 + $0x30] sm:$0xf]
        %v6074 = vld [vmem:[#allocation7 + $0x34] sm:$0xf]
        %v6075 = vld [vmem:[#allocation7 + $0x38] sm:$0xf]
        %v6076 = vld [vmem:[#allocation7 + $0x3c] sm:$0xf]
        %v6077 = vld [vmem:[#allocation3 + $0x8] sm:$0x1]
        %v6078 = vld [vmem:[#allocation3 + $0x14] sm:$0x1]
        %v6079 = vld [vmem:[#allocation3 + $0x20] sm:$0x1]
        %v6080 = vld [vmem:[#allocation3 + $0x2c] sm:$0x1]
        %v6081 = vld [vmem:[#allocation3 + $0x38] sm:$0x1]
        %v6082 = vld [vmem:[#allocation3 + $0x44] sm:$0x1]
        %v6083 = vld [vmem:[#allocation3 + $0x50] sm:$0x1]
        %v6084 = vld [vmem:[#allocation3 + $0x5c] sm:$0x1]
        %v6085 = vld [vmem:[#allocation3 + $0x68] sm:$0x1]
        %v6086 = vld [vmem:[#allocation3 + $0x74] sm:$0x1]
        %v6087 = vld [vmem:[#allocation3 + $0x80] sm:$0x1]
        %v6088 = vld [vmem:[#allocation3 + $0x8c] sm:$0x1]
        %v6089 = vld [vmem:[#allocation3 + $0x98] sm:$0x1]
        %v6090 = vld [vmem:[#allocation3 + $0xa4] sm:$0x1]
        %v6091 = vld [vmem:[#allocation3 + $0xb0] sm:$0x1]
        %v6092 = vld [vmem:[#allocation3 + $0xbc] sm:$0x1]
        %v6094 = vshrl.u32 %v6029, 16
        %v6096 = vrot.slane %v6094, 4
        %v6097 = vshll.u32 %v6029, 16
        %v6099 = vrot.slane %v6097, 5
        %v6100 = vor.u32 %v6096, %v6099
        %v6101 = vrot.slane %v6100, 4
        %v6103 = vshll.u32 %v6030, 16
        %v6105 = vrot.slane %v6103, 5
        %v6106 = vsel %vm910, %v6101, %v6105
        %v6107 = vshrl.u32 %v6030, 16
        %v6109 = vrot.slane %v6107, 4
        %v6110 = vor.u32 %v6109, %v6105
        %v6111 = vrot.slane %v6110, 4
        %v6113 = vshll.u32 %v6077, 16
        %v6115 = vrot.slane %v6113, 5
        %v6116 = vsel %vm910, %v6111, %v6115
        %v6118 = vshrl.u32 %v6031, 16
        %v6120 = vrot.slane %v6118, 4
        %v6121 = vshll.u32 %v6031, 16
        %v6123 = vrot.slane %v6121, 5
        %v6124 = vor.u32 %v6120, %v6123
        %v6125 = vrot.slane %v6124, 4
        %v6127 = vshll.u32 %v6032, 16
        %v6129 = vrot.slane %v6127, 5
        %v6130 = vsel %vm910, %v6125, %v6129
        %v6131 = vshrl.u32 %v6032, 16
        %v6133 = vrot.slane %v6131, 4
        %v6134 = vor.u32 %v6133, %v6129
        %v6135 = vrot.slane %v6134, 4
        %v6137 = vshll.u32 %v6078, 16
        %v6139 = vrot.slane %v6137, 5
        %v6140 = vsel %vm910, %v6135, %v6139
        %v6142 = vshrl.u32 %v6033, 16
        %v6144 = vrot.slane %v6142, 4
        %v6145 = vshll.u32 %v6033, 16
        %v6147 = vrot.slane %v6145, 5
        %v6148 = vor.u32 %v6144, %v6147
        %v6149 = vrot.slane %v6148, 4
        %v6151 = vshll.u32 %v6034, 16
        %v6153 = vrot.slane %v6151, 5
        %v6154 = vsel %vm910, %v6149, %v6153
        %v6155 = vshrl.u32 %v6034, 16
        %v6157 = vrot.slane %v6155, 4
        %v6158 = vor.u32 %v6157, %v6153
        %v6159 = vrot.slane %v6158, 4
        %v6161 = vshll.u32 %v6079, 16
        %v6163 = vrot.slane %v6161, 5
        %v6164 = vsel %vm910, %v6159, %v6163
        %v6166 = vshrl.u32 %v6035, 16
        %v6168 = vrot.slane %v6166, 4
        %v6169 = vshll.u32 %v6035, 16
        %v6171 = vrot.slane %v6169, 5
        %v6172 = vor.u32 %v6168, %v6171
        %v6173 = vrot.slane %v6172, 4
        %v6175 = vshll.u32 %v6036, 16
        %v6177 = vrot.slane %v6175, 5
        %v6178 = vsel %vm910, %v6173, %v6177
        %v6179 = vshrl.u32 %v6036, 16
        %v6181 = vrot.slane %v6179, 4
        %v6182 = vor.u32 %v6181, %v6177
        %v6183 = vrot.slane %v6182, 4
        %v6185 = vshll.u32 %v6080, 16
        %v6187 = vrot.slane %v6185, 5
        %v6188 = vsel %vm910, %v6183, %v6187
        %v6190 = vshrl.u32 %v6037, 16
        %v6192 = vrot.slane %v6190, 4
        %v6193 = vshll.u32 %v6037, 16
        %v6195 = vrot.slane %v6193, 5
        %v6196 = vor.u32 %v6192, %v6195
        %v6197 = vrot.slane %v6196, 4
        %v6199 = vshll.u32 %v6038, 16
        %v6201 = vrot.slane %v6199, 5
        %v6202 = vsel %vm910, %v6197, %v6201
        %v6203 = vshrl.u32 %v6038, 16
        %v6205 = vrot.slane %v6203, 4
        %v6206 = vor.u32 %v6205, %v6201
        %v6207 = vrot.slane %v6206, 4
        %v6209 = vshll.u32 %v6081, 16
        %v6211 = vrot.slane %v6209, 5
        %v6212 = vsel %vm910, %v6207, %v6211
        %v6214 = vshrl.u32 %v6039, 16
        %v6216 = vrot.slane %v6214, 4
        %v6217 = vshll.u32 %v6039, 16
        %v6219 = vrot.slane %v6217, 5
        %v6220 = vor.u32 %v6216, %v6219
        %v6221 = vrot.slane %v6220, 4
        %v6223 = vshll.u32 %v6040, 16
        %v6225 = vrot.slane %v6223, 5
        %v6226 = vsel %vm910, %v6221, %v6225
        %v6227 = vshrl.u32 %v6040, 16
        %v6229 = vrot.slane %v6227, 4
        %v6230 = vor.u32 %v6229, %v6225
        %v6231 = vrot.slane %v6230, 4
        %v6233 = vshll.u32 %v6082, 16
        %v6235 = vrot.slane %v6233, 5
        %v6236 = vsel %vm910, %v6231, %v6235
        %v6238 = vshrl.u32 %v6041, 16
        %v6240 = vrot.slane %v6238, 4
        %v6241 = vshll.u32 %v6041, 16
        %v6243 = vrot.slane %v6241, 5
        %v6244 = vor.u32 %v6240, %v6243
        %v6245 = vrot.slane %v6244, 4
        %v6247 = vshll.u32 %v6042, 16
        %v6249 = vrot.slane %v6247, 5
        %v6250 = vsel %vm910, %v6245, %v6249
        %v6251 = vshrl.u32 %v6042, 16
        %v6253 = vrot.slane %v6251, 4
        %v6254 = vor.u32 %v6253, %v6249
        %v6255 = vrot.slane %v6254, 4
        %v6257 = vshll.u32 %v6083, 16
        %v6259 = vrot.slane %v6257, 5
        %v6260 = vsel %vm910, %v6255, %v6259
        %v6262 = vshrl.u32 %v6043, 16
        %v6264 = vrot.slane %v6262, 4
        %v6265 = vshll.u32 %v6043, 16
        %v6267 = vrot.slane %v6265, 5
        %v6268 = vor.u32 %v6264, %v6267
        %v6269 = vrot.slane %v6268, 4
        %v6271 = vshll.u32 %v6044, 16
        %v6273 = vrot.slane %v6271, 5
        %v6274 = vsel %vm910, %v6269, %v6273
        %v6275 = vshrl.u32 %v6044, 16
        %v6277 = vrot.slane %v6275, 4
        %v6278 = vor.u32 %v6277, %v6273
        %v6279 = vrot.slane %v6278, 4
        %v6281 = vshll.u32 %v6084, 16
        %v6283 = vrot.slane %v6281, 5
        %v6284 = vsel %vm910, %v6279, %v6283
        %v6286 = vshrl.u32 %v6045, 16
        %v6288 = vrot.slane %v6286, 4
        %v6289 = vshll.u32 %v6045, 16
        %v6291 = vrot.slane %v6289, 5
        %v6292 = vor.u32 %v6288, %v6291
        %v6293 = vrot.slane %v6292, 4
        %v6295 = vshll.u32 %v6046, 16
        %v6297 = vrot.slane %v6295, 5
        %v6298 = vsel %vm910, %v6293, %v6297
        %v6299 = vshrl.u32 %v6046, 16
        %v6301 = vrot.slane %v6299, 4
        %v6302 = vor.u32 %v6301, %v6297
        %v6303 = vrot.slane %v6302, 4
        %v6305 = vshll.u32 %v6085, 16
        %v6307 = vrot.slane %v6305, 5
        %v6308 = vsel %vm910, %v6303, %v6307
        %v6310 = vshrl.u32 %v6047, 16
        %v6312 = vrot.slane %v6310, 4
        %v6313 = vshll.u32 %v6047, 16
        %v6315 = vrot.slane %v6313, 5
        %v6316 = vor.u32 %v6312, %v6315
        %v6317 = vrot.slane %v6316, 4
        %v6319 = vshll.u32 %v6048, 16
        %v6321 = vrot.slane %v6319, 5
        %v6322 = vsel %vm910, %v6317, %v6321
        %v6323 = vshrl.u32 %v6048, 16
        %v6325 = vrot.slane %v6323, 4
        %v6326 = vor.u32 %v6325, %v6321
        %v6327 = vrot.slane %v6326, 4
        %v6329 = vshll.u32 %v6086, 16
        %v6331 = vrot.slane %v6329, 5
        %v6332 = vsel %vm910, %v6327, %v6331
        %v6334 = vshrl.u32 %v6049, 16
        %v6336 = vrot.slane %v6334, 4
        %v6337 = vshll.u32 %v6049, 16
        %v6339 = vrot.slane %v6337, 5
        %v6340 = vor.u32 %v6336, %v6339
        %v6341 = vrot.slane %v6340, 4
        %v6343 = vshll.u32 %v6050, 16
        %v6345 = vrot.slane %v6343, 5
        %v6346 = vsel %vm910, %v6341, %v6345
        %v6347 = vshrl.u32 %v6050, 16
        %v6349 = vrot.slane %v6347, 4
        %v6350 = vor.u32 %v6349, %v6345
        %v6351 = vrot.slane %v6350, 4
        %v6353 = vshll.u32 %v6087, 16
        %v6355 = vrot.slane %v6353, 5
        %v6356 = vsel %vm910, %v6351, %v6355
        %v6358 = vshrl.u32 %v6051, 16
        %v6360 = vrot.slane %v6358, 4
        %v6361 = vshll.u32 %v6051, 16
        %v6363 = vrot.slane %v6361, 5
        %v6364 = vor.u32 %v6360, %v6363
        %v6365 = vrot.slane %v6364, 4
        %v6367 = vshll.u32 %v6052, 16
        %v6369 = vrot.slane %v6367, 5
        %v6370 = vsel %vm910, %v6365, %v6369
        %v6371 = vshrl.u32 %v6052, 16
        %v6373 = vrot.slane %v6371, 4
        %v6374 = vor.u32 %v6373, %v6369
        %v6375 = vrot.slane %v6374, 4
        %v6377 = vshll.u32 %v6088, 16
        %v6379 = vrot.slane %v6377, 5
        %v6380 = vsel %vm910, %v6375, %v6379
        %v6382 = vshrl.u32 %v6053, 16
        %v6384 = vrot.slane %v6382, 4
        %v6385 = vshll.u32 %v6053, 16
        %v6387 = vrot.slane %v6385, 5
        %v6388 = vor.u32 %v6384, %v6387
        %v6389 = vrot.slane %v6388, 4
        %v6391 = vshll.u32 %v6054, 16
        %v6393 = vrot.slane %v6391, 5
        %v6394 = vsel %vm910, %v6389, %v6393
        %v6395 = vshrl.u32 %v6054, 16
        %v6397 = vrot.slane %v6395, 4
        %v6398 = vor.u32 %v6397, %v6393
        %v6399 = vrot.slane %v6398, 4
        %v6401 = vshll.u32 %v6089, 16
        %v6403 = vrot.slane %v6401, 5
        %v6404 = vsel %vm910, %v6399, %v6403
        %v6406 = vshrl.u32 %v6055, 16
        %v6408 = vrot.slane %v6406, 4
        %v6409 = vshll.u32 %v6055, 16
        %v6411 = vrot.slane %v6409, 5
        %v6412 = vor.u32 %v6408, %v6411
        %v6413 = vrot.slane %v6412, 4
        %v6415 = vshll.u32 %v6056, 16
        %v6417 = vrot.slane %v6415, 5
        %v6418 = vsel %vm910, %v6413, %v6417
        %v6419 = vshrl.u32 %v6056, 16
        %v6421 = vrot.slane %v6419, 4
        %v6422 = vor.u32 %v6421, %v6417
        %v6423 = vrot.slane %v6422, 4
        %v6425 = vshll.u32 %v6090, 16
        %v6427 = vrot.slane %v6425, 5
        %v6428 = vsel %vm910, %v6423, %v6427
        %v6430 = vshrl.u32 %v6057, 16
        %v6432 = vrot.slane %v6430, 4
        %v6433 = vshll.u32 %v6057, 16
        %v6435 = vrot.slane %v6433, 5
        %v6436 = vor.u32 %v6432, %v6435
        %v6437 = vrot.slane %v6436, 4
        %v6439 = vshll.u32 %v6058, 16
        %v6441 = vrot.slane %v6439, 5
        %v6442 = vsel %vm910, %v6437, %v6441
        %v6443 = vshrl.u32 %v6058, 16
        %v6445 = vrot.slane %v6443, 4
        %v6446 = vor.u32 %v6445, %v6441
        %v6447 = vrot.slane %v6446, 4
        %v6449 = vshll.u32 %v6091, 16
        %v6451 = vrot.slane %v6449, 5
        %v6452 = vsel %vm910, %v6447, %v6451
        %v6454 = vshrl.u32 %v6059, 16
        %v6456 = vrot.slane %v6454, 4
        %v6457 = vshll.u32 %v6059, 16
        %v6459 = vrot.slane %v6457, 5
        %v6460 = vor.u32 %v6456, %v6459
        %v6461 = vrot.slane %v6460, 4
        %v6463 = vshll.u32 %v6060, 16
        %v6465 = vrot.slane %v6463, 5
        %v6466 = vsel %vm910, %v6461, %v6465
        %v6467 = vshrl.u32 %v6060, 16
        %v6469 = vrot.slane %v6467, 4
        %v6470 = vor.u32 %v6469, %v6465
        %v6471 = vrot.slane %v6470, 4
        %v6473 = vshll.u32 %v6092, 16
        %v6475 = vrot.slane %v6473, 5
        %v6476 = vsel %vm910, %v6471, %v6475
        %v6477 = vld [vmem:[#allocation7 + $0x40] sm:$0xf]
        %v6478 = vld [vmem:[#allocation7 + $0x44] sm:$0xf]
        %v6479 = vld [vmem:[#allocation7 + $0x48] sm:$0xf]
        %v6480 = vld [vmem:[#allocation7 + $0x4c] sm:$0xf]
        %v6481 = vld [vmem:[#allocation7 + $0x50] sm:$0xf]
        %v6482 = vld [vmem:[#allocation7 + $0x54] sm:$0xf]
        %v6483 = vld [vmem:[#allocation7 + $0x58] sm:$0xf]
        %v6484 = vld [vmem:[#allocation7 + $0x5c] sm:$0xf]
        %v6485 = vld [vmem:[#allocation7 + $0x60] sm:$0xf]
        %v6486 = vld [vmem:[#allocation7 + $0x64] sm:$0xf]
        %v6487 = vld [vmem:[#allocation7 + $0x68] sm:$0xf]
        %v6488 = vld [vmem:[#allocation7 + $0x6c] sm:$0xf]
        %v6489 = vld [vmem:[#allocation7 + $0x70] sm:$0xf]
        %v6490 = vld [vmem:[#allocation7 + $0x74] sm:$0xf]
        %v6491 = vld [vmem:[#allocation7 + $0x78] sm:$0xf]
        %v6492 = vld [vmem:[#allocation7 + $0x7c] sm:$0xf]
        %v6493 = vunpack.c.l.b16 %v6106
        %v6494 = vunpack.c.l.b16 %v6116
        %v6495 = vunpack.c.l.b16 %v6130
        %v6496 = vunpack.c.l.b16 %v6140
        %v6497 = vunpack.c.l.b16 %v6154
        %v6498 = vunpack.c.l.b16 %v6164
        %v6499 = vunpack.c.l.b16 %v6178
        %v6500 = vunpack.c.l.b16 %v6188
        %v6501 = vunpack.c.l.b16 %v6202
        %v6502 = vunpack.c.l.b16 %v6212
        %v6503 = vunpack.c.l.b16 %v6226
        %v6504 = vunpack.c.l.b16 %v6236
        %v6505 = vunpack.c.l.b16 %v6250
        %v6506 = vunpack.c.l.b16 %v6260
        %v6507 = vunpack.c.l.b16 %v6274
        %v6508 = vunpack.c.l.b16 %v6284
        %v6509 = vunpack.c.l.b16 %v6298
        %v6510 = vunpack.c.l.b16 %v6308
        %v6511 = vunpack.c.l.b16 %v6322
        %v6512 = vunpack.c.l.b16 %v6332
        %v6513 = vunpack.c.l.b16 %v6346
        %v6514 = vunpack.c.l.b16 %v6356
        %v6515 = vunpack.c.l.b16 %v6370
        %v6516 = vunpack.c.l.b16 %v6380
        %v6517 = vunpack.c.l.b16 %v6394
        %v6518 = vunpack.c.l.b16 %v6404
        %v6519 = vunpack.c.l.b16 %v6418
        %v6520 = vunpack.c.l.b16 %v6428
        %v6521 = vunpack.c.l.b16 %v6442
        %v6522 = vunpack.c.l.b16 %v6452
        %v6523 = vunpack.c.l.b16 %v6466
        %v6524 = vunpack.c.l.b16 %v6476
        %v6525 = vpack.c.b16 %v6494, %v6493
        %v6526 = vpack.c.b16 %v6496, %v6495
        %v6527 = vpack.c.b16 %v6498, %v6497
        %v6528 = vpack.c.b16 %v6500, %v6499
        %v6529 = vpack.c.b16 %v6502, %v6501
        %v6530 = vpack.c.b16 %v6504, %v6503
        %v6531 = vpack.c.b16 %v6506, %v6505
        %v6532 = vpack.c.b16 %v6508, %v6507
        %v6533 = vpack.c.b16 %v6510, %v6509
        %v6534 = vpack.c.b16 %v6512, %v6511
        %v6535 = vpack.c.b16 %v6514, %v6513
        %v6536 = vpack.c.b16 %v6516, %v6515
        %v6537 = vpack.c.b16 %v6518, %v6517
        %v6538 = vpack.c.b16 %v6520, %v6519
        %v6539 = vpack.c.b16 %v6522, %v6521
        %v6540 = vpack.c.b16 %v6524, %v6523
        %v6573 = vunpack.c.l.b16 %v6477
        %v6574 = vunpack.c.l.b16 %v6478
        %v6575 = vunpack.c.l.b16 %v6479
        %v6576 = vunpack.c.l.b16 %v6480
        %v6577 = vunpack.c.l.b16 %v6481
        %v6578 = vunpack.c.l.b16 %v6482
        %v6579 = vunpack.c.l.b16 %v6483
        %v6580 = vunpack.c.l.b16 %v6484
        %v6581 = vunpack.c.l.b16 %v6485
        %v6582 = vunpack.c.l.b16 %v6486
        %v6583 = vunpack.c.l.b16 %v6487
        %v6584 = vunpack.c.l.b16 %v6488
        %v6585 = vunpack.c.l.b16 %v6489
        %v6586 = vunpack.c.l.b16 %v6490
        %v6587 = vunpack.c.l.b16 %v6491
        %v6588 = vunpack.c.l.b16 %v6492
        %v6589 = vpack.c.b16 %v6574, %v6573
        %v6590 = vpack.c.b16 %v6576, %v6575
        %v6591 = vpack.c.b16 %v6578, %v6577
        %v6592 = vpack.c.b16 %v6580, %v6579
        %v6593 = vpack.c.b16 %v6582, %v6581
        %v6594 = vpack.c.b16 %v6584, %v6583
        %v6595 = vpack.c.b16 %v6586, %v6585
        %v6596 = vpack.c.b16 %v6588, %v6587
        %6605 = vmatpush.bf16.msra.mxu0 %v6596
        %6606 = vmatpush.bf16.msra.mxu0 %v6595
        %6607 = vmatpush.bf16.msra.mxu0 %v6594
        %6608 = vmatpush.bf16.msra.mxu0 %v6593
        %6609 = vmatpush.bf16.msra.mxu0 %v6592
        %6610 = vmatpush.bf16.msra.mxu0 %v6591
        %6611 = vmatpush.bf16.msra.mxu0 %v6590
        %6612 = vmatpush.bf16.msra.mxu0 %v6589
        %6613 = vmatmul.bf16.gmra.mxu0 %v6525
        %v6614 = vpop.f32.mrf.mxu0
        %v6615 = vadd.f32 0.0, %v6614
        %v6616 = vpop.f32.mrf.mxu0
        %v6617 = vadd.f32 0.0, %v6616
        %6618 = vmatmul.bf16.gmra.mxu0 %v6526
        %v6619 = vpop.f32.mrf.mxu0
        %v6620 = vadd.f32 0.0, %v6619
        %v6621 = vpop.f32.mrf.mxu0
        %v6622 = vadd.f32 0.0, %v6621
        %6623 = vmatmul.bf16.gmra.mxu0 %v6527
        %v6624 = vpop.f32.mrf.mxu0
        %v6625 = vadd.f32 0.0, %v6624
        %v6626 = vpop.f32.mrf.mxu0
        %v6627 = vadd.f32 0.0, %v6626
        %6628 = vmatmul.bf16.gmra.mxu0 %v6528
        %v6629 = vpop.f32.mrf.mxu0
        %v6630 = vadd.f32 0.0, %v6629
        %v6631 = vpop.f32.mrf.mxu0
        %v6632 = vadd.f32 0.0, %v6631
        %6633 = vmatmul.bf16.gmra.mxu0 %v6529
        %v6634 = vpop.f32.mrf.mxu0
        %v6635 = vadd.f32 0.0, %v6634
        %v6636 = vpop.f32.mrf.mxu0
        %v6637 = vadd.f32 0.0, %v6636
        %6638 = vmatmul.bf16.gmra.mxu0 %v6530
        %v6639 = vpop.f32.mrf.mxu0
        %v6640 = vadd.f32 0.0, %v6639
        %v6641 = vpop.f32.mrf.mxu0
        %v6642 = vadd.f32 0.0, %v6641
        %6643 = vmatmul.bf16.gmra.mxu0 %v6531
        %v6644 = vpop.f32.mrf.mxu0
        %v6645 = vadd.f32 0.0, %v6644
        %v6646 = vpop.f32.mrf.mxu0
        %v6647 = vadd.f32 0.0, %v6646
        %6648 = vmatmul.bf16.gmra.mxu0 %v6532
        %v6649 = vpop.f32.mrf.mxu0
        %v6650 = vadd.f32 0.0, %v6649
        %v6651 = vpop.f32.mrf.mxu0
        %v6652 = vadd.f32 0.0, %v6651
        %6653 = vmatmul.bf16.gmra.mxu0 %v6533
        %v6654 = vpop.f32.mrf.mxu0
        %v6655 = vadd.f32 0.0, %v6654
        %v6656 = vpop.f32.mrf.mxu0
        %v6657 = vadd.f32 0.0, %v6656
        %6658 = vmatmul.bf16.gmra.mxu0 %v6534
        %v6659 = vpop.f32.mrf.mxu0
        %v6660 = vadd.f32 0.0, %v6659
        %v6661 = vpop.f32.mrf.mxu0
        %v6662 = vadd.f32 0.0, %v6661
        %6663 = vmatmul.bf16.gmra.mxu0 %v6535
        %v6664 = vpop.f32.mrf.mxu0
        %v6665 = vadd.f32 0.0, %v6664
        %v6666 = vpop.f32.mrf.mxu0
        %v6667 = vadd.f32 0.0, %v6666
        %6668 = vmatmul.bf16.gmra.mxu0 %v6536
        %v6669 = vpop.f32.mrf.mxu0
        %v6670 = vadd.f32 0.0, %v6669
        %v6671 = vpop.f32.mrf.mxu0
        %v6672 = vadd.f32 0.0, %v6671
        %6673 = vmatmul.bf16.gmra.mxu0 %v6537
        %v6674 = vpop.f32.mrf.mxu0
        %v6675 = vadd.f32 0.0, %v6674
        %v6676 = vpop.f32.mrf.mxu0
        %v6677 = vadd.f32 0.0, %v6676
        %6678 = vmatmul.bf16.gmra.mxu0 %v6538
        %v6679 = vpop.f32.mrf.mxu0
        %v6680 = vadd.f32 0.0, %v6679
        %v6681 = vpop.f32.mrf.mxu0
        %v6682 = vadd.f32 0.0, %v6681
        %6683 = vmatmul.bf16.gmra.mxu0 %v6539
        %v6684 = vpop.f32.mrf.mxu0
        %v6685 = vadd.f32 0.0, %v6684
        %v6686 = vpop.f32.mrf.mxu0
        %v6687 = vadd.f32 0.0, %v6686
        %6688 = vmatmul.bf16.gmra.mxu0 %v6540
        %v6689 = vpop.f32.mrf.mxu0
        %v6690 = vadd.f32 0.0, %v6689
        %v6691 = vpop.f32.mrf.mxu0
        %v6692 = vadd.f32 0.0, %v6691
        %6693 = vdwg.mxu0
        %v6726 = vunpack.c.l.b16 %v6029
        %v6727 = vunpack.c.l.b16 %v6030
        %v6728 = vunpack.c.l.b16 %v6031
        %v6729 = vunpack.c.l.b16 %v6032
        %v6730 = vunpack.c.l.b16 %v6033
        %v6731 = vunpack.c.l.b16 %v6034
        %v6732 = vunpack.c.l.b16 %v6035
        %v6733 = vunpack.c.l.b16 %v6036
        %v6734 = vunpack.c.l.b16 %v6037
        %v6735 = vunpack.c.l.b16 %v6038
        %v6736 = vunpack.c.l.b16 %v6039
        %v6737 = vunpack.c.l.b16 %v6040
        %v6738 = vunpack.c.l.b16 %v6041
        %v6739 = vunpack.c.l.b16 %v6042
        %v6740 = vunpack.c.l.b16 %v6043
        %v6741 = vunpack.c.l.b16 %v6044
        %v6742 = vunpack.c.l.b16 %v6045
        %v6743 = vunpack.c.l.b16 %v6046
        %v6744 = vunpack.c.l.b16 %v6047
        %v6745 = vunpack.c.l.b16 %v6048
        %v6746 = vunpack.c.l.b16 %v6049
        %v6747 = vunpack.c.l.b16 %v6050
        %v6748 = vunpack.c.l.b16 %v6051
        %v6749 = vunpack.c.l.b16 %v6052
        %v6750 = vunpack.c.l.b16 %v6053
        %v6751 = vunpack.c.l.b16 %v6054
        %v6752 = vunpack.c.l.b16 %v6055
        %v6753 = vunpack.c.l.b16 %v6056
        %v6754 = vunpack.c.l.b16 %v6057
        %v6755 = vunpack.c.l.b16 %v6058
        %v6756 = vunpack.c.l.b16 %v6059
        %v6757 = vunpack.c.l.b16 %v6060
        %v6758 = vpack.c.b16 %v6727, %v6726
        %v6759 = vpack.c.b16 %v6729, %v6728
        %v6760 = vpack.c.b16 %v6731, %v6730
        %v6761 = vpack.c.b16 %v6733, %v6732
        %v6762 = vpack.c.b16 %v6735, %v6734
        %v6763 = vpack.c.b16 %v6737, %v6736
        %v6764 = vpack.c.b16 %v6739, %v6738
        %v6765 = vpack.c.b16 %v6741, %v6740
        %v6766 = vpack.c.b16 %v6743, %v6742
        %v6767 = vpack.c.b16 %v6745, %v6744
        %v6768 = vpack.c.b16 %v6747, %v6746
        %v6769 = vpack.c.b16 %v6749, %v6748
        %v6770 = vpack.c.b16 %v6751, %v6750
        %v6771 = vpack.c.b16 %v6753, %v6752
        %v6772 = vpack.c.b16 %v6755, %v6754
        %v6773 = vpack.c.b16 %v6757, %v6756
        %v6806 = vunpack.c.l.b16 %v6061
        %v6807 = vunpack.c.l.b16 %v6062
        %v6808 = vunpack.c.l.b16 %v6063
        %v6809 = vunpack.c.l.b16 %v6064
        %v6810 = vunpack.c.l.b16 %v6065
        %v6811 = vunpack.c.l.b16 %v6066
        %v6812 = vunpack.c.l.b16 %v6067
        %v6813 = vunpack.c.l.b16 %v6068
        %v6814 = vunpack.c.l.b16 %v6069
        %v6815 = vunpack.c.l.b16 %v6070
        %v6816 = vunpack.c.l.b16 %v6071
        %v6817 = vunpack.c.l.b16 %v6072
        %v6818 = vunpack.c.l.b16 %v6073
        %v6819 = vunpack.c.l.b16 %v6074
        %v6820 = vunpack.c.l.b16 %v6075
        %v6821 = vunpack.c.l.b16 %v6076
        %v6822 = vpack.c.b16 %v6807, %v6806
        %v6823 = vpack.c.b16 %v6809, %v6808
        %v6824 = vpack.c.b16 %v6811, %v6810
        %v6825 = vpack.c.b16 %v6813, %v6812
        %v6826 = vpack.c.b16 %v6815, %v6814
        %v6827 = vpack.c.b16 %v6817, %v6816
        %v6828 = vpack.c.b16 %v6819, %v6818
        %v6829 = vpack.c.b16 %v6821, %v6820
        %6838 = vmatpush.bf16.msra.mxu0 %v6829
        %6839 = vmatpush.bf16.msra.mxu0 %v6828
        %6840 = vmatpush.bf16.msra.mxu0 %v6827
        %6841 = vmatpush.bf16.msra.mxu0 %v6826
        %6842 = vmatpush.bf16.msra.mxu0 %v6825
        %6843 = vmatpush.bf16.msra.mxu0 %v6824
        %6844 = vmatpush.bf16.msra.mxu0 %v6823
        %6845 = vmatpush.bf16.msra.mxu0 %v6822
        %6846 = vmatmul.bf16.gmra.mxu0 %v6758
        %v6847 = vpop.f32.mrf.mxu0
        %v6848 = vadd.f32 %v6615, %v6847
        %v6849 = vpop.f32.mrf.mxu0
        %v6850 = vadd.f32 %v6617, %v6849
        %6851 = vmatmul.bf16.gmra.mxu0 %v6759
        %v6852 = vpop.f32.mrf.mxu0
        %v6853 = vadd.f32 %v6620, %v6852
        %v6854 = vpop.f32.mrf.mxu0
        %v6855 = vadd.f32 %v6622, %v6854
        %6856 = vmatmul.bf16.gmra.mxu0 %v6760
        %v6857 = vpop.f32.mrf.mxu0
        %v6858 = vadd.f32 %v6625, %v6857
        %v6859 = vpop.f32.mrf.mxu0
        %v6860 = vadd.f32 %v6627, %v6859
        %6861 = vmatmul.bf16.gmra.mxu0 %v6761
        %v6862 = vpop.f32.mrf.mxu0
        %v6863 = vadd.f32 %v6630, %v6862
        %v6864 = vpop.f32.mrf.mxu0
        %v6865 = vadd.f32 %v6632, %v6864
        %6866 = vmatmul.bf16.gmra.mxu0 %v6762
        %v6867 = vpop.f32.mrf.mxu0
        %v6868 = vadd.f32 %v6635, %v6867
        %v6869 = vpop.f32.mrf.mxu0
        %v6870 = vadd.f32 %v6637, %v6869
        %6871 = vmatmul.bf16.gmra.mxu0 %v6763
        %v6872 = vpop.f32.mrf.mxu0
        %v6873 = vadd.f32 %v6640, %v6872
        %v6874 = vpop.f32.mrf.mxu0
        %v6875 = vadd.f32 %v6642, %v6874
        %6876 = vmatmul.bf16.gmra.mxu0 %v6764
        %v6877 = vpop.f32.mrf.mxu0
        %v6878 = vadd.f32 %v6645, %v6877
        %v6879 = vpop.f32.mrf.mxu0
        %v6880 = vadd.f32 %v6647, %v6879
        %6881 = vmatmul.bf16.gmra.mxu0 %v6765
        %v6882 = vpop.f32.mrf.mxu0
        %v6883 = vadd.f32 %v6650, %v6882
        %v6884 = vpop.f32.mrf.mxu0
        %v6885 = vadd.f32 %v6652, %v6884
        %6886 = vmatmul.bf16.gmra.mxu0 %v6766
        %v6887 = vpop.f32.mrf.mxu0
        %v6888 = vadd.f32 %v6655, %v6887
        %v6889 = vpop.f32.mrf.mxu0
        %v6890 = vadd.f32 %v6657, %v6889
        %6891 = vmatmul.bf16.gmra.mxu0 %v6767
        %v6892 = vpop.f32.mrf.mxu0
        %v6893 = vadd.f32 %v6660, %v6892
        %v6894 = vpop.f32.mrf.mxu0
        %v6895 = vadd.f32 %v6662, %v6894
        %6896 = vmatmul.bf16.gmra.mxu0 %v6768
        %v6897 = vpop.f32.mrf.mxu0
        %v6898 = vadd.f32 %v6665, %v6897
        %v6899 = vpop.f32.mrf.mxu0
        %v6900 = vadd.f32 %v6667, %v6899
        %6901 = vmatmul.bf16.gmra.mxu0 %v6769
        %v6902 = vpop.f32.mrf.mxu0
        %v6903 = vadd.f32 %v6670, %v6902
        %v6904 = vpop.f32.mrf.mxu0
        %v6905 = vadd.f32 %v6672, %v6904
        %6906 = vmatmul.bf16.gmra.mxu0 %v6770
        %v6907 = vpop.f32.mrf.mxu0
        %v6908 = vadd.f32 %v6675, %v6907
        %v6909 = vpop.f32.mrf.mxu0
        %v6910 = vadd.f32 %v6677, %v6909
        %6911 = vmatmul.bf16.gmra.mxu0 %v6771
        %v6912 = vpop.f32.mrf.mxu0
        %v6913 = vadd.f32 %v6680, %v6912
        %v6914 = vpop.f32.mrf.mxu0
        %v6915 = vadd.f32 %v6682, %v6914
        %6916 = vmatmul.bf16.gmra.mxu0 %v6772
        %v6917 = vpop.f32.mrf.mxu0
        %v6918 = vadd.f32 %v6685, %v6917
        %v6919 = vpop.f32.mrf.mxu0
        %v6920 = vadd.f32 %v6687, %v6919
        %6921 = vmatmul.bf16.gmra.mxu0 %v6773
        %v6922 = vpop.f32.mrf.mxu0
        %v6923 = vadd.f32 %v6690, %v6922
        %v6924 = vpop.f32.mrf.mxu0
        %v6925 = vadd.f32 %v6692, %v6924
        %6926 = vdwg.mxu0
        %v6927 = vld [vmem:[#allocation3] sm:$0xe]
        %v6928 = vld [vmem:[#allocation3 + $0xc] sm:$0xe]
        %v6929 = vld [vmem:[#allocation3 + $0x18] sm:$0xe]
        %v6930 = vld [vmem:[#allocation3 + $0x24] sm:$0xe]
        %v6931 = vld [vmem:[#allocation3 + $0x30] sm:$0xe]
        %v6932 = vld [vmem:[#allocation3 + $0x3c] sm:$0xe]
        %v6933 = vld [vmem:[#allocation3 + $0x48] sm:$0xe]
        %v6934 = vld [vmem:[#allocation3 + $0x54] sm:$0xe]
        %v6935 = vld [vmem:[#allocation3 + $0x60] sm:$0xe]
        %v6936 = vld [vmem:[#allocation3 + $0x6c] sm:$0xe]
        %v6937 = vld [vmem:[#allocation3 + $0x78] sm:$0xe]
        %v6938 = vld [vmem:[#allocation3 + $0x84] sm:$0xe]
        %v6939 = vld [vmem:[#allocation3 + $0x90] sm:$0xe]
        %v6940 = vld [vmem:[#allocation3 + $0x9c] sm:$0xe]
        %v6941 = vld [vmem:[#allocation3 + $0xa8] sm:$0xe]
        %v6942 = vld [vmem:[#allocation3 + $0xb4] sm:$0xe]
        %v6975 = vrot.slane %v6927, 5
        %v6976 = vrot.slane %v6975, 4
        %v6977 = vrot.slane %v6030, 5
        %v6978 = vsel %vm1795, %v6976, %v6977
        %v6979 = vrot.slane %v6977, 4
        %v6980 = vrot.slane %v6077, 5
        %v6981 = vsel %vm1795, %v6979, %v6980
        %v6982 = vrot.slane %v6928, 5
        %v6983 = vrot.slane %v6982, 4
        %v6984 = vrot.slane %v6032, 5
        %v6985 = vsel %vm1795, %v6983, %v6984
        %v6986 = vrot.slane %v6984, 4
        %v6987 = vrot.slane %v6078, 5
        %v6988 = vsel %vm1795, %v6986, %v6987
        %v6989 = vrot.slane %v6929, 5
        %v6990 = vrot.slane %v6989, 4
        %v6991 = vrot.slane %v6034, 5
        %v6992 = vsel %vm1795, %v6990, %v6991
        %v6993 = vrot.slane %v6991, 4
        %v6994 = vrot.slane %v6079, 5
        %v6995 = vsel %vm1795, %v6993, %v6994
        %v6996 = vrot.slane %v6930, 5
        %v6997 = vrot.slane %v6996, 4
        %v6998 = vrot.slane %v6036, 5
        %v6999 = vsel %vm1795, %v6997, %v6998
        %v7000 = vrot.slane %v6998, 4
        %v7001 = vrot.slane %v6080, 5
        %v7002 = vsel %vm1795, %v7000, %v7001
        %v7003 = vrot.slane %v6931, 5
        %v7004 = vrot.slane %v7003, 4
        %v7005 = vrot.slane %v6038, 5
        %v7006 = vsel %vm1795, %v7004, %v7005
        %v7007 = vrot.slane %v7005, 4
        %v7008 = vrot.slane %v6081, 5
        %v7009 = vsel %vm1795, %v7007, %v7008
        %v7010 = vrot.slane %v6932, 5
        %v7011 = vrot.slane %v7010, 4
        %v7012 = vrot.slane %v6040, 5
        %v7013 = vsel %vm1795, %v7011, %v7012
        %v7014 = vrot.slane %v7012, 4
        %v7015 = vrot.slane %v6082, 5
        %v7016 = vsel %vm1795, %v7014, %v7015
        %v7017 = vrot.slane %v6933, 5
        %v7018 = vrot.slane %v7017, 4
        %v7019 = vrot.slane %v6042, 5
        %v7020 = vsel %vm1795, %v7018, %v7019
        %v7021 = vrot.slane %v7019, 4
        %v7022 = vrot.slane %v6083, 5
        %v7023 = vsel %vm1795, %v7021, %v7022
        %v7024 = vrot.slane %v6934, 5
        %v7025 = vrot.slane %v7024, 4
        %v7026 = vrot.slane %v6044, 5
        %v7027 = vsel %vm1795, %v7025, %v7026
        %v7028 = vrot.slane %v7026, 4
        %v7029 = vrot.slane %v6084, 5
        %v7030 = vsel %vm1795, %v7028, %v7029
        %v7031 = vrot.slane %v6935, 5
        %v7032 = vrot.slane %v7031, 4
        %v7033 = vrot.slane %v6046, 5
        %v7034 = vsel %vm1795, %v7032, %v7033
        %v7035 = vrot.slane %v7033, 4
        %v7036 = vrot.slane %v6085, 5
        %v7037 = vsel %vm1795, %v7035, %v7036
        %v7038 = vrot.slane %v6936, 5
        %v7039 = vrot.slane %v7038, 4
        %v7040 = vrot.slane %v6048, 5
        %v7041 = vsel %vm1795, %v7039, %v7040
        %v7042 = vrot.slane %v7040, 4
        %v7043 = vrot.slane %v6086, 5
        %v7044 = vsel %vm1795, %v7042, %v7043
        %v7045 = vrot.slane %v6937, 5
        %v7046 = vrot.slane %v7045, 4
        %v7047 = vrot.slane %v6050, 5
        %v7048 = vsel %vm1795, %v7046, %v7047
        %v7049 = vrot.slane %v7047, 4
        %v7050 = vrot.slane %v6087, 5
        %v7051 = vsel %vm1795, %v7049, %v7050
        %v7052 = vrot.slane %v6938, 5
        %v7053 = vrot.slane %v7052, 4
        %v7054 = vrot.slane %v6052, 5
        %v7055 = vsel %vm1795, %v7053, %v7054
        %v7056 = vrot.slane %v7054, 4
        %v7057 = vrot.slane %v6088, 5
        %v7058 = vsel %vm1795, %v7056, %v7057
        %v7059 = vrot.slane %v6939, 5
        %v7060 = vrot.slane %v7059, 4
        %v7061 = vrot.slane %v6054, 5
        %v7062 = vsel %vm1795, %v7060, %v7061
        %v7063 = vrot.slane %v7061, 4
        %v7064 = vrot.slane %v6089, 5
        %v7065 = vsel %vm1795, %v7063, %v7064
        %v7066 = vrot.slane %v6940, 5
        %v7067 = vrot.slane %v7066, 4
        %v7068 = vrot.slane %v6056, 5
        %v7069 = vsel %vm1795, %v7067, %v7068
        %v7070 = vrot.slane %v7068, 4
        %v7071 = vrot.slane %v6090, 5
        %v7072 = vsel %vm1795, %v7070, %v7071
        %v7073 = vrot.slane %v6941, 5
        %v7074 = vrot.slane %v7073, 4
        %v7075 = vrot.slane %v6058, 5
        %v7076 = vsel %vm1795, %v7074, %v7075
        %v7077 = vrot.slane %v7075, 4
        %v7078 = vrot.slane %v6091, 5
        %v7079 = vsel %vm1795, %v7077, %v7078
        %v7080 = vrot.slane %v6942, 5
        %v7081 = vrot.slane %v7080, 4
        %v7082 = vrot.slane %v6060, 5
        %v7083 = vsel %vm1795, %v7081, %v7082
        %v7084 = vrot.slane %v7082, 4
        %v7085 = vrot.slane %v6092, 5
        %v7086 = vsel %vm1795, %v7084, %v7085
        %v7087 = vld [vmem:[#allocation7 + $0x80] sm:$0xf]
        %v7088 = vld [vmem:[#allocation7 + $0x84] sm:$0xf]
        %v7089 = vld [vmem:[#allocation7 + $0x88] sm:$0xf]
        %v7090 = vld [vmem:[#allocation7 + $0x8c] sm:$0xf]
        %v7091 = vld [vmem:[#allocation7 + $0x90] sm:$0xf]
        %v7092 = vld [vmem:[#allocation7 + $0x94] sm:$0xf]
        %v7093 = vld [vmem:[#allocation7 + $0x98] sm:$0xf]
        %v7094 = vld [vmem:[#allocation7 + $0x9c] sm:$0xf]
        %v7095 = vld [vmem:[#allocation7 + $0xa0] sm:$0xf]
        %v7096 = vld [vmem:[#allocation7 + $0xa4] sm:$0xf]
        %v7097 = vld [vmem:[#allocation7 + $0xa8] sm:$0xf]
        %v7098 = vld [vmem:[#allocation7 + $0xac] sm:$0xf]
        %v7099 = vld [vmem:[#allocation7 + $0xb0] sm:$0xf]
        %v7100 = vld [vmem:[#allocation7 + $0xb4] sm:$0xf]
        %v7101 = vld [vmem:[#allocation7 + $0xb8] sm:$0xf]
        %v7102 = vld [vmem:[#allocation7 + $0xbc] sm:$0xf]
        %v7103 = vunpack.c.l.b16 %v6978
        %v7104 = vunpack.c.l.b16 %v6981
        %v7105 = vunpack.c.l.b16 %v6985
        %v7106 = vunpack.c.l.b16 %v6988
        %v7107 = vunpack.c.l.b16 %v6992
        %v7108 = vunpack.c.l.b16 %v6995
        %v7109 = vunpack.c.l.b16 %v6999
        %v7110 = vunpack.c.l.b16 %v7002
        %v7111 = vunpack.c.l.b16 %v7006
        %v7112 = vunpack.c.l.b16 %v7009
        %v7113 = vunpack.c.l.b16 %v7013
        %v7114 = vunpack.c.l.b16 %v7016
        %v7115 = vunpack.c.l.b16 %v7020
        %v7116 = vunpack.c.l.b16 %v7023
        %v7117 = vunpack.c.l.b16 %v7027
        %v7118 = vunpack.c.l.b16 %v7030
        %v7119 = vunpack.c.l.b16 %v7034
        %v7120 = vunpack.c.l.b16 %v7037
        %v7121 = vunpack.c.l.b16 %v7041
        %v7122 = vunpack.c.l.b16 %v7044
        %v7123 = vunpack.c.l.b16 %v7048
        %v7124 = vunpack.c.l.b16 %v7051
        %v7125 = vunpack.c.l.b16 %v7055
        %v7126 = vunpack.c.l.b16 %v7058
        %v7127 = vunpack.c.l.b16 %v7062
        %v7128 = vunpack.c.l.b16 %v7065
        %v7129 = vunpack.c.l.b16 %v7069
        %v7130 = vunpack.c.l.b16 %v7072
        %v7131 = vunpack.c.l.b16 %v7076
        %v7132 = vunpack.c.l.b16 %v7079
        %v7133 = vunpack.c.l.b16 %v7083
        %v7134 = vunpack.c.l.b16 %v7086
        %v7135 = vpack.c.b16 %v7104, %v7103
        %v7136 = vpack.c.b16 %v7106, %v7105
        %v7137 = vpack.c.b16 %v7108, %v7107
        %v7138 = vpack.c.b16 %v7110, %v7109
        %v7139 = vpack.c.b16 %v7112, %v7111
        %v7140 = vpack.c.b16 %v7114, %v7113
        %v7141 = vpack.c.b16 %v7116, %v7115
        %v7142 = vpack.c.b16 %v7118, %v7117
        %v7143 = vpack.c.b16 %v7120, %v7119
        %v7144 = vpack.c.b16 %v7122, %v7121
        %v7145 = vpack.c.b16 %v7124, %v7123
        %v7146 = vpack.c.b16 %v7126, %v7125
        %v7147 = vpack.c.b16 %v7128, %v7127
        %v7148 = vpack.c.b16 %v7130, %v7129
        %v7149 = vpack.c.b16 %v7132, %v7131
        %v7150 = vpack.c.b16 %v7134, %v7133
        %v7183 = vunpack.c.l.b16 %v7087
        %v7184 = vunpack.c.l.b16 %v7088
        %v7185 = vunpack.c.l.b16 %v7089
        %v7186 = vunpack.c.l.b16 %v7090
        %v7187 = vunpack.c.l.b16 %v7091
        %v7188 = vunpack.c.l.b16 %v7092
        %v7189 = vunpack.c.l.b16 %v7093
        %v7190 = vunpack.c.l.b16 %v7094
        %v7191 = vunpack.c.l.b16 %v7095
        %v7192 = vunpack.c.l.b16 %v7096
        %v7193 = vunpack.c.l.b16 %v7097
        %v7194 = vunpack.c.l.b16 %v7098
        %v7195 = vunpack.c.l.b16 %v7099
        %v7196 = vunpack.c.l.b16 %v7100
        %v7197 = vunpack.c.l.b16 %v7101
        %v7198 = vunpack.c.l.b16 %v7102
        %v7199 = vpack.c.b16 %v7184, %v7183
        %v7200 = vpack.c.b16 %v7186, %v7185
        %v7201 = vpack.c.b16 %v7188, %v7187
        %v7202 = vpack.c.b16 %v7190, %v7189
        %v7203 = vpack.c.b16 %v7192, %v7191
        %v7204 = vpack.c.b16 %v7194, %v7193
        %v7205 = vpack.c.b16 %v7196, %v7195
        %v7206 = vpack.c.b16 %v7198, %v7197
        %7215 = vmatpush.bf16.msra.mxu0 %v7206
        %7216 = vmatpush.bf16.msra.mxu0 %v7205
        %7217 = vmatpush.bf16.msra.mxu0 %v7204
        %7218 = vmatpush.bf16.msra.mxu0 %v7203
        %7219 = vmatpush.bf16.msra.mxu0 %v7202
        %7220 = vmatpush.bf16.msra.mxu0 %v7201
        %7221 = vmatpush.bf16.msra.mxu0 %v7200
        %7222 = vmatpush.bf16.msra.mxu0 %v7199
        %7223 = vmatmul.bf16.gmra.mxu0 %v7135
        %v7224 = vpop.f32.mrf.mxu0
        %v7225 = vadd.f32 0.0, %v7224
        %v7226 = vpop.f32.mrf.mxu0
        %v7227 = vadd.f32 0.0, %v7226
        %7228 = vmatmul.bf16.gmra.mxu0 %v7136
        %v7229 = vpop.f32.mrf.mxu0
        %v7230 = vadd.f32 0.0, %v7229
        %v7231 = vpop.f32.mrf.mxu0
        %v7232 = vadd.f32 0.0, %v7231
        %7233 = vmatmul.bf16.gmra.mxu0 %v7137
        %v7234 = vpop.f32.mrf.mxu0
        %v7235 = vadd.f32 0.0, %v7234
        %v7236 = vpop.f32.mrf.mxu0
        %v7237 = vadd.f32 0.0, %v7236
        %7238 = vmatmul.bf16.gmra.mxu0 %v7138
        %v7239 = vpop.f32.mrf.mxu0
        %v7240 = vadd.f32 0.0, %v7239
        %v7241 = vpop.f32.mrf.mxu0
        %v7242 = vadd.f32 0.0, %v7241
        %7243 = vmatmul.bf16.gmra.mxu0 %v7139
        %v7244 = vpop.f32.mrf.mxu0
        %v7245 = vadd.f32 0.0, %v7244
        %v7246 = vpop.f32.mrf.mxu0
        %v7247 = vadd.f32 0.0, %v7246
        %7248 = vmatmul.bf16.gmra.mxu0 %v7140
        %v7249 = vpop.f32.mrf.mxu0
        %v7250 = vadd.f32 0.0, %v7249
        %v7251 = vpop.f32.mrf.mxu0
        %v7252 = vadd.f32 0.0, %v7251
        %7253 = vmatmul.bf16.gmra.mxu0 %v7141
        %v7254 = vpop.f32.mrf.mxu0
        %v7255 = vadd.f32 0.0, %v7254
        %v7256 = vpop.f32.mrf.mxu0
        %v7257 = vadd.f32 0.0, %v7256
        %7258 = vmatmul.bf16.gmra.mxu0 %v7142
        %v7259 = vpop.f32.mrf.mxu0
        %v7260 = vadd.f32 0.0, %v7259
        %v7261 = vpop.f32.mrf.mxu0
        %v7262 = vadd.f32 0.0, %v7261
        %7263 = vmatmul.bf16.gmra.mxu0 %v7143
        %v7264 = vpop.f32.mrf.mxu0
        %v7265 = vadd.f32 0.0, %v7264
        %v7266 = vpop.f32.mrf.mxu0
        %v7267 = vadd.f32 0.0, %v7266
        %7268 = vmatmul.bf16.gmra.mxu0 %v7144
        %v7269 = vpop.f32.mrf.mxu0
        %v7270 = vadd.f32 0.0, %v7269
        %v7271 = vpop.f32.mrf.mxu0
        %v7272 = vadd.f32 0.0, %v7271
        %7273 = vmatmul.bf16.gmra.mxu0 %v7145
        %v7274 = vpop.f32.mrf.mxu0
        %v7275 = vadd.f32 0.0, %v7274
        %v7276 = vpop.f32.mrf.mxu0
        %v7277 = vadd.f32 0.0, %v7276
        %7278 = vmatmul.bf16.gmra.mxu0 %v7146
        %v7279 = vpop.f32.mrf.mxu0
        %v7280 = vadd.f32 0.0, %v7279
        %v7281 = vpop.f32.mrf.mxu0
        %v7282 = vadd.f32 0.0, %v7281
        %7283 = vmatmul.bf16.gmra.mxu0 %v7147
        %v7284 = vpop.f32.mrf.mxu0
        %v7285 = vadd.f32 0.0, %v7284
        %v7286 = vpop.f32.mrf.mxu0
        %v7287 = vadd.f32 0.0, %v7286
        %7288 = vmatmul.bf16.gmra.mxu0 %v7148
        %v7289 = vpop.f32.mrf.mxu0
        %v7290 = vadd.f32 0.0, %v7289
        %v7291 = vpop.f32.mrf.mxu0
        %v7292 = vadd.f32 0.0, %v7291
        %7293 = vmatmul.bf16.gmra.mxu0 %v7149
        %v7294 = vpop.f32.mrf.mxu0
        %v7295 = vadd.f32 0.0, %v7294
        %v7296 = vpop.f32.mrf.mxu0
        %v7297 = vadd.f32 0.0, %v7296
        %7298 = vmatmul.bf16.gmra.mxu0 %v7150
        %v7299 = vpop.f32.mrf.mxu0
        %v7300 = vadd.f32 0.0, %v7299
        %v7301 = vpop.f32.mrf.mxu0
        %v7302 = vadd.f32 0.0, %v7301
        %7303 = vdwg.mxu0
        %v7304 = vadd.f32 %v6848, %v7225
        %v7305 = vadd.f32 %v6850, %v7227
        %v7306 = vadd.f32 %v6853, %v7230
        %v7307 = vadd.f32 %v6855, %v7232
        %v7308 = vadd.f32 %v6858, %v7235
        %v7309 = vadd.f32 %v6860, %v7237
        %v7310 = vadd.f32 %v6863, %v7240
        %v7311 = vadd.f32 %v6865, %v7242
        %v7312 = vadd.f32 %v6868, %v7245
        %v7313 = vadd.f32 %v6870, %v7247
        %v7314 = vadd.f32 %v6873, %v7250
        %v7315 = vadd.f32 %v6875, %v7252
        %v7316 = vadd.f32 %v6878, %v7255
        %v7317 = vadd.f32 %v6880, %v7257
        %v7318 = vadd.f32 %v6883, %v7260
        %v7319 = vadd.f32 %v6885, %v7262
        %v7320 = vadd.f32 %v6888, %v7265
        %v7321 = vadd.f32 %v6890, %v7267
        %v7322 = vadd.f32 %v6893, %v7270
        %v7323 = vadd.f32 %v6895, %v7272
        %v7324 = vadd.f32 %v6898, %v7275
        %v7325 = vadd.f32 %v6900, %v7277
        %v7326 = vadd.f32 %v6903, %v7280
        %v7327 = vadd.f32 %v6905, %v7282
        %v7328 = vadd.f32 %v6908, %v7285
        %v7329 = vadd.f32 %v6910, %v7287
        %v7330 = vadd.f32 %v6913, %v7290
        %v7331 = vadd.f32 %v6915, %v7292
        %v7332 = vadd.f32 %v6918, %v7295
        %v7333 = vadd.f32 %v6920, %v7297
        %v7334 = vadd.f32 %v6923, %v7300
        %v7335 = vadd.f32 %v6925, %v7302
        %v7336 = vld [vmem:[%s5416] sm:$0xf]
        %v7337 = vld [vmem:[%s5416 + $0x4] sm:$0xf]
        %v7338 = vld [vmem:[%s5416 + $0xc] sm:$0xf]
        %v7339 = vld [vmem:[%s5416 + $0x10] sm:$0xf]
        %v7340 = vld [vmem:[%s5416 + $0x18] sm:$0xf]
        %v7341 = vld [vmem:[%s5416 + $0x1c] sm:$0xf]
        %v7342 = vld [vmem:[%s5416 + $0x24] sm:$0xf]
        %v7343 = vld [vmem:[%s5416 + $0x28] sm:$0xf]
        %v7344 = vld [vmem:[%s5416 + $0x30] sm:$0xf]
        %v7345 = vld [vmem:[%s5416 + $0x34] sm:$0xf]
        %v7346 = vld [vmem:[%s5416 + $0x3c] sm:$0xf]
        %v7347 = vld [vmem:[%s5416 + $0x40] sm:$0xf]
        %v7348 = vld [vmem:[%s5416 + $0x48] sm:$0xf]
        %v7349 = vld [vmem:[%s5416 + $0x4c] sm:$0xf]
        %v7350 = vld [vmem:[%s5416 + $0x54] sm:$0xf]
        %v7351 = vld [vmem:[%s5416 + $0x58] sm:$0xf]
        %v7352 = vld [vmem:[%s5416 + $0x60] sm:$0xf]
        %v7353 = vld [vmem:[%s5416 + $0x64] sm:$0xf]
        %v7354 = vld [vmem:[%s5416 + $0x6c] sm:$0xf]
        %v7355 = vld [vmem:[%s5416 + $0x70] sm:$0xf]
        %v7356 = vld [vmem:[%s5416 + $0x78] sm:$0xf]
        %v7357 = vld [vmem:[%s5416 + $0x7c] sm:$0xf]
        %v7358 = vld [vmem:[%s5416 + $0x84] sm:$0xf]
        %v7359 = vld [vmem:[%s5416 + $0x88] sm:$0xf]
        %v7360 = vld [vmem:[%s5416 + $0x90] sm:$0xf]
        %v7361 = vld [vmem:[%s5416 + $0x94] sm:$0xf]
        %v7362 = vld [vmem:[%s5416 + $0x9c] sm:$0xf]
        %v7363 = vld [vmem:[%s5416 + $0xa0] sm:$0xf]
        %v7364 = vld [vmem:[%s5416 + $0xa8] sm:$0xf]
        %v7365 = vld [vmem:[%s5416 + $0xac] sm:$0xf]
        %v7366 = vld [vmem:[%s5416 + $0xb4] sm:$0xf]
        %v7367 = vld [vmem:[%s5416 + $0xb8] sm:$0xf]
        %v7368 = vld [vmem:[#allocation7 + $0xc0] sm:$0xf]
        %v7369 = vld [vmem:[#allocation7 + $0xc4] sm:$0xf]
        %v7370 = vld [vmem:[#allocation7 + $0xc8] sm:$0xf]
        %v7371 = vld [vmem:[#allocation7 + $0xcc] sm:$0xf]
        %v7372 = vld [vmem:[#allocation7 + $0xd0] sm:$0xf]
        %v7373 = vld [vmem:[#allocation7 + $0xd4] sm:$0xf]
        %v7374 = vld [vmem:[#allocation7 + $0xd8] sm:$0xf]
        %v7375 = vld [vmem:[#allocation7 + $0xdc] sm:$0xf]
        %v7376 = vld [vmem:[#allocation7 + $0xe0] sm:$0xf]
        %v7377 = vld [vmem:[#allocation7 + $0xe4] sm:$0xf]
        %v7378 = vld [vmem:[#allocation7 + $0xe8] sm:$0xf]
        %v7379 = vld [vmem:[#allocation7 + $0xec] sm:$0xf]
        %v7380 = vld [vmem:[#allocation7 + $0xf0] sm:$0xf]
        %v7381 = vld [vmem:[#allocation7 + $0xf4] sm:$0xf]
        %v7382 = vld [vmem:[#allocation7 + $0xf8] sm:$0xf]
        %v7383 = vld [vmem:[#allocation7 + $0xfc] sm:$0xf]
        %v7416 = vunpack.c.l.b16 %v7336
        %v7417 = vunpack.c.l.b16 %v7337
        %v7418 = vunpack.c.l.b16 %v7338
        %v7419 = vunpack.c.l.b16 %v7339
        %v7420 = vunpack.c.l.b16 %v7340
        %v7421 = vunpack.c.l.b16 %v7341
        %v7422 = vunpack.c.l.b16 %v7342
        %v7423 = vunpack.c.l.b16 %v7343
        %v7424 = vunpack.c.l.b16 %v7344
        %v7425 = vunpack.c.l.b16 %v7345
        %v7426 = vunpack.c.l.b16 %v7346
        %v7427 = vunpack.c.l.b16 %v7347
        %v7428 = vunpack.c.l.b16 %v7348
        %v7429 = vunpack.c.l.b16 %v7349
        %v7430 = vunpack.c.l.b16 %v7350
        %v7431 = vunpack.c.l.b16 %v7351
        %v7432 = vunpack.c.l.b16 %v7352
        %v7433 = vunpack.c.l.b16 %v7353
        %v7434 = vunpack.c.l.b16 %v7354
        %v7435 = vunpack.c.l.b16 %v7355
        %v7436 = vunpack.c.l.b16 %v7356
        %v7437 = vunpack.c.l.b16 %v7357
        %v7438 = vunpack.c.l.b16 %v7358
        %v7439 = vunpack.c.l.b16 %v7359
        %v7440 = vunpack.c.l.b16 %v7360
        %v7441 = vunpack.c.l.b16 %v7361
        %v7442 = vunpack.c.l.b16 %v7362
        %v7443 = vunpack.c.l.b16 %v7363
        %v7444 = vunpack.c.l.b16 %v7364
        %v7445 = vunpack.c.l.b16 %v7365
        %v7446 = vunpack.c.l.b16 %v7366
        %v7447 = vunpack.c.l.b16 %v7367
        %v7448 = vpack.c.b16 %v7417, %v7416
        %v7449 = vpack.c.b16 %v7419, %v7418
        %v7450 = vpack.c.b16 %v7421, %v7420
        %v7451 = vpack.c.b16 %v7423, %v7422
        %v7452 = vpack.c.b16 %v7425, %v7424
        %v7453 = vpack.c.b16 %v7427, %v7426
        %v7454 = vpack.c.b16 %v7429, %v7428
        %v7455 = vpack.c.b16 %v7431, %v7430
        %v7456 = vpack.c.b16 %v7433, %v7432
        %v7457 = vpack.c.b16 %v7435, %v7434
        %v7458 = vpack.c.b16 %v7437, %v7436
        %v7459 = vpack.c.b16 %v7439, %v7438
        %v7460 = vpack.c.b16 %v7441, %v7440
        %v7461 = vpack.c.b16 %v7443, %v7442
        %v7462 = vpack.c.b16 %v7445, %v7444
        %v7463 = vpack.c.b16 %v7447, %v7446
        %v7496 = vunpack.c.l.b16 %v7368
        %v7497 = vunpack.c.l.b16 %v7369
        %v7498 = vunpack.c.l.b16 %v7370
        %v7499 = vunpack.c.l.b16 %v7371
        %v7500 = vunpack.c.l.b16 %v7372
        %v7501 = vunpack.c.l.b16 %v7373
        %v7502 = vunpack.c.l.b16 %v7374
        %v7503 = vunpack.c.l.b16 %v7375
        %v7504 = vunpack.c.l.b16 %v7376
        %v7505 = vunpack.c.l.b16 %v7377
        %v7506 = vunpack.c.l.b16 %v7378
        %v7507 = vunpack.c.l.b16 %v7379
        %v7508 = vunpack.c.l.b16 %v7380
        %v7509 = vunpack.c.l.b16 %v7381
        %v7510 = vunpack.c.l.b16 %v7382
        %v7511 = vunpack.c.l.b16 %v7383
        %v7512 = vpack.c.b16 %v7497, %v7496
        %v7513 = vpack.c.b16 %v7499, %v7498
        %v7514 = vpack.c.b16 %v7501, %v7500
        %v7515 = vpack.c.b16 %v7503, %v7502
        %v7516 = vpack.c.b16 %v7505, %v7504
        %v7517 = vpack.c.b16 %v7507, %v7506
        %v7518 = vpack.c.b16 %v7509, %v7508
        %v7519 = vpack.c.b16 %v7511, %v7510
        %7528 = vmatpush.bf16.msra.mxu0 %v7519
        %7529 = vmatpush.bf16.msra.mxu0 %v7518
        %7530 = vmatpush.bf16.msra.mxu0 %v7517
        %7531 = vmatpush.bf16.msra.mxu0 %v7516
        %7532 = vmatpush.bf16.msra.mxu0 %v7515
        %7533 = vmatpush.bf16.msra.mxu0 %v7514
        %7534 = vmatpush.bf16.msra.mxu0 %v7513
        %7535 = vmatpush.bf16.msra.mxu0 %v7512
        %7536 = vmatmul.bf16.gmra.mxu0 %v7448
        %v7537 = vpop.f32.mrf.mxu0
        %v7538 = vadd.f32 0.0, %v7537
        %v7539 = vpop.f32.mrf.mxu0
        %v7540 = vadd.f32 0.0, %v7539
        %7541 = vmatmul.bf16.gmra.mxu0 %v7449
        %v7542 = vpop.f32.mrf.mxu0
        %v7543 = vadd.f32 0.0, %v7542
        %v7544 = vpop.f32.mrf.mxu0
        %v7545 = vadd.f32 0.0, %v7544
        %7546 = vmatmul.bf16.gmra.mxu0 %v7450
        %v7547 = vpop.f32.mrf.mxu0
        %v7548 = vadd.f32 0.0, %v7547
        %v7549 = vpop.f32.mrf.mxu0
        %v7550 = vadd.f32 0.0, %v7549
        %7551 = vmatmul.bf16.gmra.mxu0 %v7451
        %v7552 = vpop.f32.mrf.mxu0
        %v7553 = vadd.f32 0.0, %v7552
        %v7554 = vpop.f32.mrf.mxu0
        %v7555 = vadd.f32 0.0, %v7554
        %7556 = vmatmul.bf16.gmra.mxu0 %v7452
        %v7557 = vpop.f32.mrf.mxu0
        %v7558 = vadd.f32 0.0, %v7557
        %v7559 = vpop.f32.mrf.mxu0
        %v7560 = vadd.f32 0.0, %v7559
        %7561 = vmatmul.bf16.gmra.mxu0 %v7453
        %v7562 = vpop.f32.mrf.mxu0
        %v7563 = vadd.f32 0.0, %v7562
        %v7564 = vpop.f32.mrf.mxu0
        %v7565 = vadd.f32 0.0, %v7564
        %7566 = vmatmul.bf16.gmra.mxu0 %v7454
        %v7567 = vpop.f32.mrf.mxu0
        %v7568 = vadd.f32 0.0, %v7567
        %v7569 = vpop.f32.mrf.mxu0
        %v7570 = vadd.f32 0.0, %v7569
        %7571 = vmatmul.bf16.gmra.mxu0 %v7455
        %v7572 = vpop.f32.mrf.mxu0
        %v7573 = vadd.f32 0.0, %v7572
        %v7574 = vpop.f32.mrf.mxu0
        %v7575 = vadd.f32 0.0, %v7574
        %7576 = vmatmul.bf16.gmra.mxu0 %v7456
        %v7577 = vpop.f32.mrf.mxu0
        %v7578 = vadd.f32 0.0, %v7577
        %v7579 = vpop.f32.mrf.mxu0
        %v7580 = vadd.f32 0.0, %v7579
        %7581 = vmatmul.bf16.gmra.mxu0 %v7457
        %v7582 = vpop.f32.mrf.mxu0
        %v7583 = vadd.f32 0.0, %v7582
        %v7584 = vpop.f32.mrf.mxu0
        %v7585 = vadd.f32 0.0, %v7584
        %7586 = vmatmul.bf16.gmra.mxu0 %v7458
        %v7587 = vpop.f32.mrf.mxu0
        %v7588 = vadd.f32 0.0, %v7587
        %v7589 = vpop.f32.mrf.mxu0
        %v7590 = vadd.f32 0.0, %v7589
        %7591 = vmatmul.bf16.gmra.mxu0 %v7459
        %v7592 = vpop.f32.mrf.mxu0
        %v7593 = vadd.f32 0.0, %v7592
        %v7594 = vpop.f32.mrf.mxu0
        %v7595 = vadd.f32 0.0, %v7594
        %7596 = vmatmul.bf16.gmra.mxu0 %v7460
        %v7597 = vpop.f32.mrf.mxu0
        %v7598 = vadd.f32 0.0, %v7597
        %v7599 = vpop.f32.mrf.mxu0
        %v7600 = vadd.f32 0.0, %v7599
        %7601 = vmatmul.bf16.gmra.mxu0 %v7461
        %v7602 = vpop.f32.mrf.mxu0
        %v7603 = vadd.f32 0.0, %v7602
        %v7604 = vpop.f32.mrf.mxu0
        %v7605 = vadd.f32 0.0, %v7604
        %7606 = vmatmul.bf16.gmra.mxu0 %v7462
        %v7607 = vpop.f32.mrf.mxu0
        %v7608 = vadd.f32 0.0, %v7607
        %v7609 = vpop.f32.mrf.mxu0
        %v7610 = vadd.f32 0.0, %v7609
        %7611 = vmatmul.bf16.gmra.mxu0 %v7463
        %v7612 = vpop.f32.mrf.mxu0
        %v7613 = vadd.f32 0.0, %v7612
        %v7614 = vpop.f32.mrf.mxu0
        %v7615 = vadd.f32 0.0, %v7614
        %7616 = vdwg.mxu0
        %v7617 = vadd.f32 %v7304, %v7538
        %v7618 = vadd.f32 %v7305, %v7540
        %v7619 = vadd.f32 %v7306, %v7543
        %v7620 = vadd.f32 %v7307, %v7545
        %v7621 = vadd.f32 %v7308, %v7548
        %v7622 = vadd.f32 %v7309, %v7550
        %v7623 = vadd.f32 %v7310, %v7553
        %v7624 = vadd.f32 %v7311, %v7555
        %v7625 = vadd.f32 %v7312, %v7558
        %v7626 = vadd.f32 %v7313, %v7560
        %v7627 = vadd.f32 %v7314, %v7563
        %v7628 = vadd.f32 %v7315, %v7565
        %v7629 = vadd.f32 %v7316, %v7568
        %v7630 = vadd.f32 %v7317, %v7570
        %v7631 = vadd.f32 %v7318, %v7573
        %v7632 = vadd.f32 %v7319, %v7575
        %v7633 = vadd.f32 %v7320, %v7578
        %v7634 = vadd.f32 %v7321, %v7580
        %v7635 = vadd.f32 %v7322, %v7583
        %v7636 = vadd.f32 %v7323, %v7585
        %v7637 = vadd.f32 %v7324, %v7588
        %v7638 = vadd.f32 %v7325, %v7590
        %v7639 = vadd.f32 %v7326, %v7593
        %v7640 = vadd.f32 %v7327, %v7595
        %v7641 = vadd.f32 %v7328, %v7598
        %v7642 = vadd.f32 %v7329, %v7600
        %v7643 = vadd.f32 %v7330, %v7603
        %v7644 = vadd.f32 %v7331, %v7605
        %v7645 = vadd.f32 %v7332, %v7608
        %v7646 = vadd.f32 %v7333, %v7610
        %v7647 = vadd.f32 %v7334, %v7613
        %v7648 = vadd.f32 %v7335, %v7615
        %v7649 = vld [vmem:[%s5416] sm:$0xf]
        %v7650 = vld [vmem:[%s5416 + $0x4] sm:$0xf]
        %v7651 = vld [vmem:[%s5416 + $0x8] sm:$0x1]
        %v7652 = vld [vmem:[%s5416 + $0xc] sm:$0xf]
        %v7653 = vld [vmem:[%s5416 + $0x10] sm:$0xf]
        %v7654 = vld [vmem:[%s5416 + $0x14] sm:$0x1]
        %v7655 = vld [vmem:[%s5416 + $0x18] sm:$0xf]
        %v7656 = vld [vmem:[%s5416 + $0x1c] sm:$0xf]
        %v7657 = vld [vmem:[%s5416 + $0x20] sm:$0x1]
        %v7658 = vld [vmem:[%s5416 + $0x24] sm:$0xf]
        %v7659 = vld [vmem:[%s5416 + $0x28] sm:$0xf]
        %v7660 = vld [vmem:[%s5416 + $0x2c] sm:$0x1]
        %v7661 = vld [vmem:[%s5416 + $0x30] sm:$0xf]
        %v7662 = vld [vmem:[%s5416 + $0x34] sm:$0xf]
        %v7663 = vld [vmem:[%s5416 + $0x38] sm:$0x1]
        %v7664 = vld [vmem:[%s5416 + $0x3c] sm:$0xf]
        %v7665 = vld [vmem:[%s5416 + $0x40] sm:$0xf]
        %v7666 = vld [vmem:[%s5416 + $0x44] sm:$0x1]
        %v7667 = vld [vmem:[%s5416 + $0x48] sm:$0xf]
        %v7668 = vld [vmem:[%s5416 + $0x4c] sm:$0xf]
        %v7669 = vld [vmem:[%s5416 + $0x50] sm:$0x1]
        %v7670 = vld [vmem:[%s5416 + $0x54] sm:$0xf]
        %v7671 = vld [vmem:[%s5416 + $0x58] sm:$0xf]
        %v7672 = vld [vmem:[%s5416 + $0x5c] sm:$0x1]
        %v7673 = vld [vmem:[%s5416 + $0x60] sm:$0xf]
        %v7674 = vld [vmem:[%s5416 + $0x64] sm:$0xf]
        %v7675 = vld [vmem:[%s5416 + $0x68] sm:$0x1]
        %v7676 = vld [vmem:[%s5416 + $0x6c] sm:$0xf]
        %v7677 = vld [vmem:[%s5416 + $0x70] sm:$0xf]
        %v7678 = vld [vmem:[%s5416 + $0x74] sm:$0x1]
        %v7679 = vld [vmem:[%s5416 + $0x78] sm:$0xf]
        %v7680 = vld [vmem:[%s5416 + $0x7c] sm:$0xf]
        %v7681 = vld [vmem:[%s5416 + $0x80] sm:$0x1]
        %v7682 = vld [vmem:[%s5416 + $0x84] sm:$0xf]
        %v7683 = vld [vmem:[%s5416 + $0x88] sm:$0xf]
        %v7684 = vld [vmem:[%s5416 + $0x8c] sm:$0x1]
        %v7685 = vld [vmem:[%s5416 + $0x90] sm:$0xf]
        %v7686 = vld [vmem:[%s5416 + $0x94] sm:$0xf]
        %v7687 = vld [vmem:[%s5416 + $0x98] sm:$0x1]
        %v7688 = vld [vmem:[%s5416 + $0x9c] sm:$0xf]
        %v7689 = vld [vmem:[%s5416 + $0xa0] sm:$0xf]
        %v7690 = vld [vmem:[%s5416 + $0xa4] sm:$0x1]
        %v7691 = vld [vmem:[%s5416 + $0xa8] sm:$0xf]
        %v7692 = vld [vmem:[%s5416 + $0xac] sm:$0xf]
        %v7693 = vld [vmem:[%s5416 + $0xb0] sm:$0x1]
        %v7694 = vld [vmem:[%s5416 + $0xb4] sm:$0xf]
        %v7695 = vld [vmem:[%s5416 + $0xb8] sm:$0xf]
        %v7696 = vld [vmem:[%s5416 + $0xbc] sm:$0x1]
        %v7698 = vshrl.u32 %v7649, 16
        %v7700 = vrot.slane %v7698, 4
        %v7701 = vshll.u32 %v7649, 16
        %v7703 = vrot.slane %v7701, 5
        %v7704 = vor.u32 %v7700, %v7703
        %v7705 = vrot.slane %v7704, 4
        %v7707 = vshll.u32 %v7650, 16
        %v7709 = vrot.slane %v7707, 5
        %v7710 = vsel %vm910, %v7705, %v7709
        %v7711 = vshrl.u32 %v7650, 16
        %v7713 = vrot.slane %v7711, 4
        %v7714 = vor.u32 %v7713, %v7709
        %v7715 = vrot.slane %v7714, 4
        %v7717 = vshll.u32 %v7651, 16
        %v7719 = vrot.slane %v7717, 5
        %v7720 = vsel %vm910, %v7715, %v7719
        %v7722 = vshrl.u32 %v7652, 16
        %v7724 = vrot.slane %v7722, 4
        %v7725 = vshll.u32 %v7652, 16
        %v7727 = vrot.slane %v7725, 5
        %v7728 = vor.u32 %v7724, %v7727
        %v7729 = vrot.slane %v7728, 4
        %v7731 = vshll.u32 %v7653, 16
        %v7733 = vrot.slane %v7731, 5
        %v7734 = vsel %vm910, %v7729, %v7733
        %v7735 = vshrl.u32 %v7653, 16
        %v7737 = vrot.slane %v7735, 4
        %v7738 = vor.u32 %v7737, %v7733
        %v7739 = vrot.slane %v7738, 4
        %v7741 = vshll.u32 %v7654, 16
        %v7743 = vrot.slane %v7741, 5
        %v7744 = vsel %vm910, %v7739, %v7743
        %v7746 = vshrl.u32 %v7655, 16
        %v7748 = vrot.slane %v7746, 4
        %v7749 = vshll.u32 %v7655, 16
        %v7751 = vrot.slane %v7749, 5
        %v7752 = vor.u32 %v7748, %v7751
        %v7753 = vrot.slane %v7752, 4
        %v7755 = vshll.u32 %v7656, 16
        %v7757 = vrot.slane %v7755, 5
        %v7758 = vsel %vm910, %v7753, %v7757
        %v7759 = vshrl.u32 %v7656, 16
        %v7761 = vrot.slane %v7759, 4
        %v7762 = vor.u32 %v7761, %v7757
        %v7763 = vrot.slane %v7762, 4
        %v7765 = vshll.u32 %v7657, 16
        %v7767 = vrot.slane %v7765, 5
        %v7768 = vsel %vm910, %v7763, %v7767
        %v7770 = vshrl.u32 %v7658, 16
        %v7772 = vrot.slane %v7770, 4
        %v7773 = vshll.u32 %v7658, 16
        %v7775 = vrot.slane %v7773, 5
        %v7776 = vor.u32 %v7772, %v7775
        %v7777 = vrot.slane %v7776, 4
        %v7779 = vshll.u32 %v7659, 16
        %v7781 = vrot.slane %v7779, 5
        %v7782 = vsel %vm910, %v7777, %v7781
        %v7783 = vshrl.u32 %v7659, 16
        %v7785 = vrot.slane %v7783, 4
        %v7786 = vor.u32 %v7785, %v7781
        %v7787 = vrot.slane %v7786, 4
        %v7789 = vshll.u32 %v7660, 16
        %v7791 = vrot.slane %v7789, 5
        %v7792 = vsel %vm910, %v7787, %v7791
        %v7794 = vshrl.u32 %v7661, 16
        %v7796 = vrot.slane %v7794, 4
        %v7797 = vshll.u32 %v7661, 16
        %v7799 = vrot.slane %v7797, 5
        %v7800 = vor.u32 %v7796, %v7799
        %v7801 = vrot.slane %v7800, 4
        %v7803 = vshll.u32 %v7662, 16
        %v7805 = vrot.slane %v7803, 5
        %v7806 = vsel %vm910, %v7801, %v7805
        %v7807 = vshrl.u32 %v7662, 16
        %v7809 = vrot.slane %v7807, 4
        %v7810 = vor.u32 %v7809, %v7805
        %v7811 = vrot.slane %v7810, 4
        %v7813 = vshll.u32 %v7663, 16
        %v7815 = vrot.slane %v7813, 5
        %v7816 = vsel %vm910, %v7811, %v7815
        %v7818 = vshrl.u32 %v7664, 16
        %v7820 = vrot.slane %v7818, 4
        %v7821 = vshll.u32 %v7664, 16
        %v7823 = vrot.slane %v7821, 5
        %v7824 = vor.u32 %v7820, %v7823
        %v7825 = vrot.slane %v7824, 4
        %v7827 = vshll.u32 %v7665, 16
        %v7829 = vrot.slane %v7827, 5
        %v7830 = vsel %vm910, %v7825, %v7829
        %v7831 = vshrl.u32 %v7665, 16
        %v7833 = vrot.slane %v7831, 4
        %v7834 = vor.u32 %v7833, %v7829
        %v7835 = vrot.slane %v7834, 4
        %v7837 = vshll.u32 %v7666, 16
        %v7839 = vrot.slane %v7837, 5
        %v7840 = vsel %vm910, %v7835, %v7839
        %v7842 = vshrl.u32 %v7667, 16
        %v7844 = vrot.slane %v7842, 4
        %v7845 = vshll.u32 %v7667, 16
        %v7847 = vrot.slane %v7845, 5
        %v7848 = vor.u32 %v7844, %v7847
        %v7849 = vrot.slane %v7848, 4
        %v7851 = vshll.u32 %v7668, 16
        %v7853 = vrot.slane %v7851, 5
        %v7854 = vsel %vm910, %v7849, %v7853
        %v7855 = vshrl.u32 %v7668, 16
        %v7857 = vrot.slane %v7855, 4
        %v7858 = vor.u32 %v7857, %v7853
        %v7859 = vrot.slane %v7858, 4
        %v7861 = vshll.u32 %v7669, 16
        %v7863 = vrot.slane %v7861, 5
        %v7864 = vsel %vm910, %v7859, %v7863
        %v7866 = vshrl.u32 %v7670, 16
        %v7868 = vrot.slane %v7866, 4
        %v7869 = vshll.u32 %v7670, 16
        %v7871 = vrot.slane %v7869, 5
        %v7872 = vor.u32 %v7868, %v7871
        %v7873 = vrot.slane %v7872, 4
        %v7875 = vshll.u32 %v7671, 16
        %v7877 = vrot.slane %v7875, 5
        %v7878 = vsel %vm910, %v7873, %v7877
        %v7879 = vshrl.u32 %v7671, 16
        %v7881 = vrot.slane %v7879, 4
        %v7882 = vor.u32 %v7881, %v7877
        %v7883 = vrot.slane %v7882, 4
        %v7885 = vshll.u32 %v7672, 16
        %v7887 = vrot.slane %v7885, 5
        %v7888 = vsel %vm910, %v7883, %v7887
        %v7890 = vshrl.u32 %v7673, 16
        %v7892 = vrot.slane %v7890, 4
        %v7893 = vshll.u32 %v7673, 16
        %v7895 = vrot.slane %v7893, 5
        %v7896 = vor.u32 %v7892, %v7895
        %v7897 = vrot.slane %v7896, 4
        %v7899 = vshll.u32 %v7674, 16
        %v7901 = vrot.slane %v7899, 5
        %v7902 = vsel %vm910, %v7897, %v7901
        %v7903 = vshrl.u32 %v7674, 16
        %v7905 = vrot.slane %v7903, 4
        %v7906 = vor.u32 %v7905, %v7901
        %v7907 = vrot.slane %v7906, 4
        %v7909 = vshll.u32 %v7675, 16
        %v7911 = vrot.slane %v7909, 5
        %v7912 = vsel %vm910, %v7907, %v7911
        %v7914 = vshrl.u32 %v7676, 16
        %v7916 = vrot.slane %v7914, 4
        %v7917 = vshll.u32 %v7676, 16
        %v7919 = vrot.slane %v7917, 5
        %v7920 = vor.u32 %v7916, %v7919
        %v7921 = vrot.slane %v7920, 4
        %v7923 = vshll.u32 %v7677, 16
        %v7925 = vrot.slane %v7923, 5
        %v7926 = vsel %vm910, %v7921, %v7925
        %v7927 = vshrl.u32 %v7677, 16
        %v7929 = vrot.slane %v7927, 4
        %v7930 = vor.u32 %v7929, %v7925
        %v7931 = vrot.slane %v7930, 4
        %v7933 = vshll.u32 %v7678, 16
        %v7935 = vrot.slane %v7933, 5
        %v7936 = vsel %vm910, %v7931, %v7935
        %v7938 = vshrl.u32 %v7679, 16
        %v7940 = vrot.slane %v7938, 4
        %v7941 = vshll.u32 %v7679, 16
        %v7943 = vrot.slane %v7941, 5
        %v7944 = vor.u32 %v7940, %v7943
        %v7945 = vrot.slane %v7944, 4
        %v7947 = vshll.u32 %v7680, 16
        %v7949 = vrot.slane %v7947, 5
        %v7950 = vsel %vm910, %v7945, %v7949
        %v7951 = vshrl.u32 %v7680, 16
        %v7953 = vrot.slane %v7951, 4
        %v7954 = vor.u32 %v7953, %v7949
        %v7955 = vrot.slane %v7954, 4
        %v7957 = vshll.u32 %v7681, 16
        %v7959 = vrot.slane %v7957, 5
        %v7960 = vsel %vm910, %v7955, %v7959
        %v7962 = vshrl.u32 %v7682, 16
        %v7964 = vrot.slane %v7962, 4
        %v7965 = vshll.u32 %v7682, 16
        %v7967 = vrot.slane %v7965, 5
        %v7968 = vor.u32 %v7964, %v7967
        %v7969 = vrot.slane %v7968, 4
        %v7971 = vshll.u32 %v7683, 16
        %v7973 = vrot.slane %v7971, 5
        %v7974 = vsel %vm910, %v7969, %v7973
        %v7975 = vshrl.u32 %v7683, 16
        %v7977 = vrot.slane %v7975, 4
        %v7978 = vor.u32 %v7977, %v7973
        %v7979 = vrot.slane %v7978, 4
        %v7981 = vshll.u32 %v7684, 16
        %v7983 = vrot.slane %v7981, 5
        %v7984 = vsel %vm910, %v7979, %v7983
        %v7986 = vshrl.u32 %v7685, 16
        %v7988 = vrot.slane %v7986, 4
        %v7989 = vshll.u32 %v7685, 16
        %v7991 = vrot.slane %v7989, 5
        %v7992 = vor.u32 %v7988, %v7991
        %v7993 = vrot.slane %v7992, 4
        %v7995 = vshll.u32 %v7686, 16
        %v7997 = vrot.slane %v7995, 5
        %v7998 = vsel %vm910, %v7993, %v7997
        %v7999 = vshrl.u32 %v7686, 16
        %v8001 = vrot.slane %v7999, 4
        %v8002 = vor.u32 %v8001, %v7997
        %v8003 = vrot.slane %v8002, 4
        %v8005 = vshll.u32 %v7687, 16
        %v8007 = vrot.slane %v8005, 5
        %v8008 = vsel %vm910, %v8003, %v8007
        %v8010 = vshrl.u32 %v7688, 16
        %v8012 = vrot.slane %v8010, 4
        %v8013 = vshll.u32 %v7688, 16
        %v8015 = vrot.slane %v8013, 5
        %v8016 = vor.u32 %v8012, %v8015
        %v8017 = vrot.slane %v8016, 4
        %v8019 = vshll.u32 %v7689, 16
        %v8021 = vrot.slane %v8019, 5
        %v8022 = vsel %vm910, %v8017, %v8021
        %v8023 = vshrl.u32 %v7689, 16
        %v8025 = vrot.slane %v8023, 4
        %v8026 = vor.u32 %v8025, %v8021
        %v8027 = vrot.slane %v8026, 4
        %v8029 = vshll.u32 %v7690, 16
        %v8031 = vrot.slane %v8029, 5
        %v8032 = vsel %vm910, %v8027, %v8031
        %v8034 = vshrl.u32 %v7691, 16
        %v8036 = vrot.slane %v8034, 4
        %v8037 = vshll.u32 %v7691, 16
        %v8039 = vrot.slane %v8037, 5
        %v8040 = vor.u32 %v8036, %v8039
        %v8041 = vrot.slane %v8040, 4
        %v8043 = vshll.u32 %v7692, 16
        %v8045 = vrot.slane %v8043, 5
        %v8046 = vsel %vm910, %v8041, %v8045
        %v8047 = vshrl.u32 %v7692, 16
        %v8049 = vrot.slane %v8047, 4
        %v8050 = vor.u32 %v8049, %v8045
        %v8051 = vrot.slane %v8050, 4
        %v8053 = vshll.u32 %v7693, 16
        %v8055 = vrot.slane %v8053, 5
        %v8056 = vsel %vm910, %v8051, %v8055
        %v8058 = vshrl.u32 %v7694, 16
        %v8060 = vrot.slane %v8058, 4
        %v8061 = vshll.u32 %v7694, 16
        %v8063 = vrot.slane %v8061, 5
        %v8064 = vor.u32 %v8060, %v8063
        %v8065 = vrot.slane %v8064, 4
        %v8067 = vshll.u32 %v7695, 16
        %v8069 = vrot.slane %v8067, 5
        %v8070 = vsel %vm910, %v8065, %v8069
        %v8071 = vshrl.u32 %v7695, 16
        %v8073 = vrot.slane %v8071, 4
        %v8074 = vor.u32 %v8073, %v8069
        %v8075 = vrot.slane %v8074, 4
        %v8077 = vshll.u32 %v7696, 16
        %v8079 = vrot.slane %v8077, 5
        %v8080 = vsel %vm910, %v8075, %v8079
        %v8081 = vld [vmem:[#allocation7 + $0x100] sm:$0xf]
        %v8082 = vld [vmem:[#allocation7 + $0x104] sm:$0xf]
        %v8083 = vld [vmem:[#allocation7 + $0x108] sm:$0xf]
        %v8084 = vld [vmem:[#allocation7 + $0x10c] sm:$0xf]
        %v8085 = vld [vmem:[#allocation7 + $0x110] sm:$0xf]
        %v8086 = vld [vmem:[#allocation7 + $0x114] sm:$0xf]
        %v8087 = vld [vmem:[#allocation7 + $0x118] sm:$0xf]
        %v8088 = vld [vmem:[#allocation7 + $0x11c] sm:$0xf]
        %v8089 = vld [vmem:[#allocation7 + $0x120] sm:$0xf]
        %v8090 = vld [vmem:[#allocation7 + $0x124] sm:$0xf]
        %v8091 = vld [vmem:[#allocation7 + $0x128] sm:$0xf]
        %v8092 = vld [vmem:[#allocation7 + $0x12c] sm:$0xf]
        %v8093 = vld [vmem:[#allocation7 + $0x130] sm:$0xf]
        %v8094 = vld [vmem:[#allocation7 + $0x134] sm:$0xf]
        %v8095 = vld [vmem:[#allocation7 + $0x138] sm:$0xf]
        %v8096 = vld [vmem:[#allocation7 + $0x13c] sm:$0xf]
        %v8097 = vunpack.c.l.b16 %v7710
        %v8098 = vunpack.c.l.b16 %v7720
        %v8099 = vunpack.c.l.b16 %v7734
        %v8100 = vunpack.c.l.b16 %v7744
        %v8101 = vunpack.c.l.b16 %v7758
        %v8102 = vunpack.c.l.b16 %v7768
        %v8103 = vunpack.c.l.b16 %v7782
        %v8104 = vunpack.c.l.b16 %v7792
        %v8105 = vunpack.c.l.b16 %v7806
        %v8106 = vunpack.c.l.b16 %v7816
        %v8107 = vunpack.c.l.b16 %v7830
        %v8108 = vunpack.c.l.b16 %v7840
        %v8109 = vunpack.c.l.b16 %v7854
        %v8110 = vunpack.c.l.b16 %v7864
        %v8111 = vunpack.c.l.b16 %v7878
        %v8112 = vunpack.c.l.b16 %v7888
        %v8113 = vunpack.c.l.b16 %v7902
        %v8114 = vunpack.c.l.b16 %v7912
        %v8115 = vunpack.c.l.b16 %v7926
        %v8116 = vunpack.c.l.b16 %v7936
        %v8117 = vunpack.c.l.b16 %v7950
        %v8118 = vunpack.c.l.b16 %v7960
        %v8119 = vunpack.c.l.b16 %v7974
        %v8120 = vunpack.c.l.b16 %v7984
        %v8121 = vunpack.c.l.b16 %v7998
        %v8122 = vunpack.c.l.b16 %v8008
        %v8123 = vunpack.c.l.b16 %v8022
        %v8124 = vunpack.c.l.b16 %v8032
        %v8125 = vunpack.c.l.b16 %v8046
        %v8126 = vunpack.c.l.b16 %v8056
        %v8127 = vunpack.c.l.b16 %v8070
        %v8128 = vunpack.c.l.b16 %v8080
        %v8129 = vpack.c.b16 %v8098, %v8097
        %v8130 = vpack.c.b16 %v8100, %v8099
        %v8131 = vpack.c.b16 %v8102, %v8101
        %v8132 = vpack.c.b16 %v8104, %v8103
        %v8133 = vpack.c.b16 %v8106, %v8105
        %v8134 = vpack.c.b16 %v8108, %v8107
        %v8135 = vpack.c.b16 %v8110, %v8109
        %v8136 = vpack.c.b16 %v8112, %v8111
        %v8137 = vpack.c.b16 %v8114, %v8113
        %v8138 = vpack.c.b16 %v8116, %v8115
        %v8139 = vpack.c.b16 %v8118, %v8117
        %v8140 = vpack.c.b16 %v8120, %v8119
        %v8141 = vpack.c.b16 %v8122, %v8121
        %v8142 = vpack.c.b16 %v8124, %v8123
        %v8143 = vpack.c.b16 %v8126, %v8125
        %v8144 = vpack.c.b16 %v8128, %v8127
        %v8177 = vunpack.c.l.b16 %v8081
        %v8178 = vunpack.c.l.b16 %v8082
        %v8179 = vunpack.c.l.b16 %v8083
        %v8180 = vunpack.c.l.b16 %v8084
        %v8181 = vunpack.c.l.b16 %v8085
        %v8182 = vunpack.c.l.b16 %v8086
        %v8183 = vunpack.c.l.b16 %v8087
        %v8184 = vunpack.c.l.b16 %v8088
        %v8185 = vunpack.c.l.b16 %v8089
        %v8186 = vunpack.c.l.b16 %v8090
        %v8187 = vunpack.c.l.b16 %v8091
        %v8188 = vunpack.c.l.b16 %v8092
        %v8189 = vunpack.c.l.b16 %v8093
        %v8190 = vunpack.c.l.b16 %v8094
        %v8191 = vunpack.c.l.b16 %v8095
        %v8192 = vunpack.c.l.b16 %v8096
        %v8193 = vpack.c.b16 %v8178, %v8177
        %v8194 = vpack.c.b16 %v8180, %v8179
        %v8195 = vpack.c.b16 %v8182, %v8181
        %v8196 = vpack.c.b16 %v8184, %v8183
        %v8197 = vpack.c.b16 %v8186, %v8185
        %v8198 = vpack.c.b16 %v8188, %v8187
        %v8199 = vpack.c.b16 %v8190, %v8189
        %v8200 = vpack.c.b16 %v8192, %v8191
        %8209 = vmatpush.bf16.msra.mxu0 %v8200
        %8210 = vmatpush.bf16.msra.mxu0 %v8199
        %8211 = vmatpush.bf16.msra.mxu0 %v8198
        %8212 = vmatpush.bf16.msra.mxu0 %v8197
        %8213 = vmatpush.bf16.msra.mxu0 %v8196
        %8214 = vmatpush.bf16.msra.mxu0 %v8195
        %8215 = vmatpush.bf16.msra.mxu0 %v8194
        %8216 = vmatpush.bf16.msra.mxu0 %v8193
        %8217 = vmatmul.bf16.gmra.mxu0 %v8129
        %v8218 = vpop.f32.mrf.mxu0
        %v8219 = vadd.f32 0.0, %v8218
        %v8220 = vpop.f32.mrf.mxu0
        %v8221 = vadd.f32 0.0, %v8220
        %8222 = vmatmul.bf16.gmra.mxu0 %v8130
        %v8223 = vpop.f32.mrf.mxu0
        %v8224 = vadd.f32 0.0, %v8223
        %v8225 = vpop.f32.mrf.mxu0
        %v8226 = vadd.f32 0.0, %v8225
        %8227 = vmatmul.bf16.gmra.mxu0 %v8131
        %v8228 = vpop.f32.mrf.mxu0
        %v8229 = vadd.f32 0.0, %v8228
        %v8230 = vpop.f32.mrf.mxu0
        %v8231 = vadd.f32 0.0, %v8230
        %8232 = vmatmul.bf16.gmra.mxu0 %v8132
        %v8233 = vpop.f32.mrf.mxu0
        %v8234 = vadd.f32 0.0, %v8233
        %v8235 = vpop.f32.mrf.mxu0
        %v8236 = vadd.f32 0.0, %v8235
        %8237 = vmatmul.bf16.gmra.mxu0 %v8133
        %v8238 = vpop.f32.mrf.mxu0
        %v8239 = vadd.f32 0.0, %v8238
        %v8240 = vpop.f32.mrf.mxu0
        %v8241 = vadd.f32 0.0, %v8240
        %8242 = vmatmul.bf16.gmra.mxu0 %v8134
        %v8243 = vpop.f32.mrf.mxu0
        %v8244 = vadd.f32 0.0, %v8243
        %v8245 = vpop.f32.mrf.mxu0
        %v8246 = vadd.f32 0.0, %v8245
        %8247 = vmatmul.bf16.gmra.mxu0 %v8135
        %v8248 = vpop.f32.mrf.mxu0
        %v8249 = vadd.f32 0.0, %v8248
        %v8250 = vpop.f32.mrf.mxu0
        %v8251 = vadd.f32 0.0, %v8250
        %8252 = vmatmul.bf16.gmra.mxu0 %v8136
        %v8253 = vpop.f32.mrf.mxu0
        %v8254 = vadd.f32 0.0, %v8253
        %v8255 = vpop.f32.mrf.mxu0
        %v8256 = vadd.f32 0.0, %v8255
        %8257 = vmatmul.bf16.gmra.mxu0 %v8137
        %v8258 = vpop.f32.mrf.mxu0
        %v8259 = vadd.f32 0.0, %v8258
        %v8260 = vpop.f32.mrf.mxu0
        %v8261 = vadd.f32 0.0, %v8260
        %8262 = vmatmul.bf16.gmra.mxu0 %v8138
        %v8263 = vpop.f32.mrf.mxu0
        %v8264 = vadd.f32 0.0, %v8263
        %v8265 = vpop.f32.mrf.mxu0
        %v8266 = vadd.f32 0.0, %v8265
        %8267 = vmatmul.bf16.gmra.mxu0 %v8139
        %v8268 = vpop.f32.mrf.mxu0
        %v8269 = vadd.f32 0.0, %v8268
        %v8270 = vpop.f32.mrf.mxu0
        %v8271 = vadd.f32 0.0, %v8270
        %8272 = vmatmul.bf16.gmra.mxu0 %v8140
        %v8273 = vpop.f32.mrf.mxu0
        %v8274 = vadd.f32 0.0, %v8273
        %v8275 = vpop.f32.mrf.mxu0
        %v8276 = vadd.f32 0.0, %v8275
        %8277 = vmatmul.bf16.gmra.mxu0 %v8141
        %v8278 = vpop.f32.mrf.mxu0
        %v8279 = vadd.f32 0.0, %v8278
        %v8280 = vpop.f32.mrf.mxu0
        %v8281 = vadd.f32 0.0, %v8280
        %8282 = vmatmul.bf16.gmra.mxu0 %v8142
        %v8283 = vpop.f32.mrf.mxu0
        %v8284 = vadd.f32 0.0, %v8283
        %v8285 = vpop.f32.mrf.mxu0
        %v8286 = vadd.f32 0.0, %v8285
        %8287 = vmatmul.bf16.gmra.mxu0 %v8143
        %v8288 = vpop.f32.mrf.mxu0
        %v8289 = vadd.f32 0.0, %v8288
        %v8290 = vpop.f32.mrf.mxu0
        %v8291 = vadd.f32 0.0, %v8290
        %8292 = vmatmul.bf16.gmra.mxu0 %v8144
        %v8293 = vpop.f32.mrf.mxu0
        %v8294 = vadd.f32 0.0, %v8293
        %v8295 = vpop.f32.mrf.mxu0
        %v8296 = vadd.f32 0.0, %v8295
        %8297 = vdwg.mxu0
        %v8298 = vadd.f32 %v7617, %v8219
        %v8299 = vadd.f32 %v7618, %v8221
        %v8300 = vadd.f32 %v7619, %v8224
        %v8301 = vadd.f32 %v7620, %v8226
        %v8302 = vadd.f32 %v7621, %v8229
        %v8303 = vadd.f32 %v7622, %v8231
        %v8304 = vadd.f32 %v7623, %v8234
        %v8305 = vadd.f32 %v7624, %v8236
        %v8306 = vadd.f32 %v7625, %v8239
        %v8307 = vadd.f32 %v7626, %v8241
        %v8308 = vadd.f32 %v7627, %v8244
        %v8309 = vadd.f32 %v7628, %v8246
        %v8310 = vadd.f32 %v7629, %v8249
        %v8311 = vadd.f32 %v7630, %v8251
        %v8312 = vadd.f32 %v7631, %v8254
        %v8313 = vadd.f32 %v7632, %v8256
        %v8314 = vadd.f32 %v7633, %v8259
        %v8315 = vadd.f32 %v7634, %v8261
        %v8316 = vadd.f32 %v7635, %v8264
        %v8317 = vadd.f32 %v7636, %v8266
        %v8318 = vadd.f32 %v7637, %v8269
        %v8319 = vadd.f32 %v7638, %v8271
        %v8320 = vadd.f32 %v7639, %v8274
        %v8321 = vadd.f32 %v7640, %v8276
        %v8322 = vadd.f32 %v7641, %v8279
        %v8323 = vadd.f32 %v7642, %v8281
        %v8324 = vadd.f32 %v7643, %v8284
        %v8325 = vadd.f32 %v7644, %v8286
        %v8326 = vadd.f32 %v7645, %v8289
        %v8327 = vadd.f32 %v7646, %v8291
        %v8328 = vadd.f32 %v7647, %v8294
        %v8329 = vadd.f32 %v7648, %v8296
        %v8330 = vld [vmem:[%s5416] sm:$0xe]
        %v8331 = vld [vmem:[%s5416 + $0xc] sm:$0xe]
        %v8332 = vld [vmem:[%s5416 + $0x18] sm:$0xe]
        %v8333 = vld [vmem:[%s5416 + $0x24] sm:$0xe]
        %v8334 = vld [vmem:[%s5416 + $0x30] sm:$0xe]
        %v8335 = vld [vmem:[%s5416 + $0x3c] sm:$0xe]
        %v8336 = vld [vmem:[%s5416 + $0x48] sm:$0xe]
        %v8337 = vld [vmem:[%s5416 + $0x54] sm:$0xe]
        %v8338 = vld [vmem:[%s5416 + $0x60] sm:$0xe]
        %v8339 = vld [vmem:[%s5416 + $0x6c] sm:$0xe]
        %v8340 = vld [vmem:[%s5416 + $0x78] sm:$0xe]
        %v8341 = vld [vmem:[%s5416 + $0x84] sm:$0xe]
        %v8342 = vld [vmem:[%s5416 + $0x90] sm:$0xe]
        %v8343 = vld [vmem:[%s5416 + $0x9c] sm:$0xe]
        %v8344 = vld [vmem:[%s5416 + $0xa8] sm:$0xe]
        %v8345 = vld [vmem:[%s5416 + $0xb4] sm:$0xe]
        %v8394 = vrot.slane %v8330, 5
        %v8395 = vrot.slane %v8394, 4
        %v8396 = vrot.slane %v7650, 5
        %v8397 = vsel %vm1795, %v8395, %v8396
        %v8398 = vrot.slane %v8396, 4
        %v8399 = vrot.slane %v7651, 5
        %v8400 = vsel %vm1795, %v8398, %v8399
        %v8401 = vrot.slane %v8331, 5
        %v8402 = vrot.slane %v8401, 4
        %v8403 = vrot.slane %v7653, 5
        %v8404 = vsel %vm1795, %v8402, %v8403
        %v8405 = vrot.slane %v8403, 4
        %v8406 = vrot.slane %v7654, 5
        %v8407 = vsel %vm1795, %v8405, %v8406
        %v8408 = vrot.slane %v8332, 5
        %v8409 = vrot.slane %v8408, 4
        %v8410 = vrot.slane %v7656, 5
        %v8411 = vsel %vm1795, %v8409, %v8410
        %v8412 = vrot.slane %v8410, 4
        %v8413 = vrot.slane %v7657, 5
        %v8414 = vsel %vm1795, %v8412, %v8413
        %v8415 = vrot.slane %v8333, 5
        %v8416 = vrot.slane %v8415, 4
        %v8417 = vrot.slane %v7659, 5
        %v8418 = vsel %vm1795, %v8416, %v8417
        %v8419 = vrot.slane %v8417, 4
        %v8420 = vrot.slane %v7660, 5
        %v8421 = vsel %vm1795, %v8419, %v8420
        %v8422 = vrot.slane %v8334, 5
        %v8423 = vrot.slane %v8422, 4
        %v8424 = vrot.slane %v7662, 5
        %v8425 = vsel %vm1795, %v8423, %v8424
        %v8426 = vrot.slane %v8424, 4
        %v8427 = vrot.slane %v7663, 5
        %v8428 = vsel %vm1795, %v8426, %v8427
        %v8429 = vrot.slane %v8335, 5
        %v8430 = vrot.slane %v8429, 4
        %v8431 = vrot.slane %v7665, 5
        %v8432 = vsel %vm1795, %v8430, %v8431
        %v8433 = vrot.slane %v8431, 4
        %v8434 = vrot.slane %v7666, 5
        %v8435 = vsel %vm1795, %v8433, %v8434
        %v8436 = vrot.slane %v8336, 5
        %v8437 = vrot.slane %v8436, 4
        %v8438 = vrot.slane %v7668, 5
        %v8439 = vsel %vm1795, %v8437, %v8438
        %v8440 = vrot.slane %v8438, 4
        %v8441 = vrot.slane %v7669, 5
        %v8442 = vsel %vm1795, %v8440, %v8441
        %v8443 = vrot.slane %v8337, 5
        %v8444 = vrot.slane %v8443, 4
        %v8445 = vrot.slane %v7671, 5
        %v8446 = vsel %vm1795, %v8444, %v8445
        %v8447 = vrot.slane %v8445, 4
        %v8448 = vrot.slane %v7672, 5
        %v8449 = vsel %vm1795, %v8447, %v8448
        %v8450 = vrot.slane %v8338, 5
        %v8451 = vrot.slane %v8450, 4
        %v8452 = vrot.slane %v7674, 5
        %v8453 = vsel %vm1795, %v8451, %v8452
        %v8454 = vrot.slane %v8452, 4
        %v8455 = vrot.slane %v7675, 5
        %v8456 = vsel %vm1795, %v8454, %v8455
        %v8457 = vrot.slane %v8339, 5
        %v8458 = vrot.slane %v8457, 4
        %v8459 = vrot.slane %v7677, 5
        %v8460 = vsel %vm1795, %v8458, %v8459
        %v8461 = vrot.slane %v8459, 4
        %v8462 = vrot.slane %v7678, 5
        %v8463 = vsel %vm1795, %v8461, %v8462
        %v8464 = vrot.slane %v8340, 5
        %v8465 = vrot.slane %v8464, 4
        %v8466 = vrot.slane %v7680, 5
        %v8467 = vsel %vm1795, %v8465, %v8466
        %v8468 = vrot.slane %v8466, 4
        %v8469 = vrot.slane %v7681, 5
        %v8470 = vsel %vm1795, %v8468, %v8469
        %v8471 = vrot.slane %v8341, 5
        %v8472 = vrot.slane %v8471, 4
        %v8473 = vrot.slane %v7683, 5
        %v8474 = vsel %vm1795, %v8472, %v8473
        %v8475 = vrot.slane %v8473, 4
        %v8476 = vrot.slane %v7684, 5
        %v8477 = vsel %vm1795, %v8475, %v8476
        %v8478 = vrot.slane %v8342, 5
        %v8479 = vrot.slane %v8478, 4
        %v8480 = vrot.slane %v7686, 5
        %v8481 = vsel %vm1795, %v8479, %v8480
        %v8482 = vrot.slane %v8480, 4
        %v8483 = vrot.slane %v7687, 5
        %v8484 = vsel %vm1795, %v8482, %v8483
        %v8485 = vrot.slane %v8343, 5
        %v8486 = vrot.slane %v8485, 4
        %v8487 = vrot.slane %v7689, 5
        %v8488 = vsel %vm1795, %v8486, %v8487
        %v8489 = vrot.slane %v8487, 4
        %v8490 = vrot.slane %v7690, 5
        %v8491 = vsel %vm1795, %v8489, %v8490
        %v8492 = vrot.slane %v8344, 5
        %v8493 = vrot.slane %v8492, 4
        %v8494 = vrot.slane %v7692, 5
        %v8495 = vsel %vm1795, %v8493, %v8494
        %v8496 = vrot.slane %v8494, 4
        %v8497 = vrot.slane %v7693, 5
        %v8498 = vsel %vm1795, %v8496, %v8497
        %v8499 = vrot.slane %v8345, 5
        %v8500 = vrot.slane %v8499, 4
        %v8501 = vrot.slane %v7695, 5
        %v8502 = vsel %vm1795, %v8500, %v8501
        %v8503 = vrot.slane %v8501, 4
        %v8504 = vrot.slane %v7696, 5
        %v8505 = vsel %vm1795, %v8503, %v8504
        %v8506 = vld [vmem:[#allocation7 + $0x140] sm:$0xf]
        %v8507 = vld [vmem:[#allocation7 + $0x144] sm:$0xf]
        %v8508 = vld [vmem:[#allocation7 + $0x148] sm:$0xf]
        %v8509 = vld [vmem:[#allocation7 + $0x14c] sm:$0xf]
        %v8510 = vld [vmem:[#allocation7 + $0x150] sm:$0xf]
        %v8511 = vld [vmem:[#allocation7 + $0x154] sm:$0xf]
        %v8512 = vld [vmem:[#allocation7 + $0x158] sm:$0xf]
        %v8513 = vld [vmem:[#allocation7 + $0x15c] sm:$0xf]
        %v8514 = vld [vmem:[#allocation7 + $0x160] sm:$0xf]
        %v8515 = vld [vmem:[#allocation7 + $0x164] sm:$0xf]
        %v8516 = vld [vmem:[#allocation7 + $0x168] sm:$0xf]
        %v8517 = vld [vmem:[#allocation7 + $0x16c] sm:$0xf]
        %v8518 = vld [vmem:[#allocation7 + $0x170] sm:$0xf]
        %v8519 = vld [vmem:[#allocation7 + $0x174] sm:$0xf]
        %v8520 = vld [vmem:[#allocation7 + $0x178] sm:$0xf]
        %v8521 = vld [vmem:[#allocation7 + $0x17c] sm:$0xf]
        %v8522 = vunpack.c.l.b16 %v8397
        %v8523 = vunpack.c.l.b16 %v8400
        %v8524 = vunpack.c.l.b16 %v8404
        %v8525 = vunpack.c.l.b16 %v8407
        %v8526 = vunpack.c.l.b16 %v8411
        %v8527 = vunpack.c.l.b16 %v8414
        %v8528 = vunpack.c.l.b16 %v8418
        %v8529 = vunpack.c.l.b16 %v8421
        %v8530 = vunpack.c.l.b16 %v8425
        %v8531 = vunpack.c.l.b16 %v8428
        %v8532 = vunpack.c.l.b16 %v8432
        %v8533 = vunpack.c.l.b16 %v8435
        %v8534 = vunpack.c.l.b16 %v8439
        %v8535 = vunpack.c.l.b16 %v8442
        %v8536 = vunpack.c.l.b16 %v8446
        %v8537 = vunpack.c.l.b16 %v8449
        %v8538 = vunpack.c.l.b16 %v8453
        %v8539 = vunpack.c.l.b16 %v8456
        %v8540 = vunpack.c.l.b16 %v8460
        %v8541 = vunpack.c.l.b16 %v8463
        %v8542 = vunpack.c.l.b16 %v8467
        %v8543 = vunpack.c.l.b16 %v8470
        %v8544 = vunpack.c.l.b16 %v8474
        %v8545 = vunpack.c.l.b16 %v8477
        %v8546 = vunpack.c.l.b16 %v8481
        %v8547 = vunpack.c.l.b16 %v8484
        %v8548 = vunpack.c.l.b16 %v8488
        %v8549 = vunpack.c.l.b16 %v8491
        %v8550 = vunpack.c.l.b16 %v8495
        %v8551 = vunpack.c.l.b16 %v8498
        %v8552 = vunpack.c.l.b16 %v8502
        %v8553 = vunpack.c.l.b16 %v8505
        %v8554 = vpack.c.b16 %v8523, %v8522
        %v8555 = vpack.c.b16 %v8525, %v8524
        %v8556 = vpack.c.b16 %v8527, %v8526
        %v8557 = vpack.c.b16 %v8529, %v8528
        %v8558 = vpack.c.b16 %v8531, %v8530
        %v8559 = vpack.c.b16 %v8533, %v8532
        %v8560 = vpack.c.b16 %v8535, %v8534
        %v8561 = vpack.c.b16 %v8537, %v8536
        %v8562 = vpack.c.b16 %v8539, %v8538
        %v8563 = vpack.c.b16 %v8541, %v8540
        %v8564 = vpack.c.b16 %v8543, %v8542
        %v8565 = vpack.c.b16 %v8545, %v8544
        %v8566 = vpack.c.b16 %v8547, %v8546
        %v8567 = vpack.c.b16 %v8549, %v8548
        %v8568 = vpack.c.b16 %v8551, %v8550
        %v8569 = vpack.c.b16 %v8553, %v8552
        %v8602 = vunpack.c.l.b16 %v8506
        %v8603 = vunpack.c.l.b16 %v8507
        %v8604 = vunpack.c.l.b16 %v8508
        %v8605 = vunpack.c.l.b16 %v8509
        %v8606 = vunpack.c.l.b16 %v8510
        %v8607 = vunpack.c.l.b16 %v8511
        %v8608 = vunpack.c.l.b16 %v8512
        %v8609 = vunpack.c.l.b16 %v8513
        %v8610 = vunpack.c.l.b16 %v8514
        %v8611 = vunpack.c.l.b16 %v8515
        %v8612 = vunpack.c.l.b16 %v8516
        %v8613 = vunpack.c.l.b16 %v8517
        %v8614 = vunpack.c.l.b16 %v8518
        %v8615 = vunpack.c.l.b16 %v8519
        %v8616 = vunpack.c.l.b16 %v8520
        %v8617 = vunpack.c.l.b16 %v8521
        %v8618 = vpack.c.b16 %v8603, %v8602
        %v8619 = vpack.c.b16 %v8605, %v8604
        %v8620 = vpack.c.b16 %v8607, %v8606
        %v8621 = vpack.c.b16 %v8609, %v8608
        %v8622 = vpack.c.b16 %v8611, %v8610
        %v8623 = vpack.c.b16 %v8613, %v8612
        %v8624 = vpack.c.b16 %v8615, %v8614
        %v8625 = vpack.c.b16 %v8617, %v8616
        %8634 = vmatpush.bf16.msra.mxu0 %v8625
        %8635 = vmatpush.bf16.msra.mxu0 %v8624
        %8636 = vmatpush.bf16.msra.mxu0 %v8623
        %8637 = vmatpush.bf16.msra.mxu0 %v8622
        %8638 = vmatpush.bf16.msra.mxu0 %v8621
        %8639 = vmatpush.bf16.msra.mxu0 %v8620
        %8640 = vmatpush.bf16.msra.mxu0 %v8619
        %8641 = vmatpush.bf16.msra.mxu0 %v8618
        %8642 = vmatmul.bf16.gmra.mxu0 %v8554
        %v8643 = vpop.f32.mrf.mxu0
        %v8644 = vadd.f32 0.0, %v8643
        %v8645 = vpop.f32.mrf.mxu0
        %v8646 = vadd.f32 0.0, %v8645
        %8647 = vmatmul.bf16.gmra.mxu0 %v8555
        %v8648 = vpop.f32.mrf.mxu0
        %v8649 = vadd.f32 0.0, %v8648
        %v8650 = vpop.f32.mrf.mxu0
        %v8651 = vadd.f32 0.0, %v8650
        %8652 = vmatmul.bf16.gmra.mxu0 %v8556
        %v8653 = vpop.f32.mrf.mxu0
        %v8654 = vadd.f32 0.0, %v8653
        %v8655 = vpop.f32.mrf.mxu0
        %v8656 = vadd.f32 0.0, %v8655
        %8657 = vmatmul.bf16.gmra.mxu0 %v8557
        %v8658 = vpop.f32.mrf.mxu0
        %v8659 = vadd.f32 0.0, %v8658
        %v8660 = vpop.f32.mrf.mxu0
        %v8661 = vadd.f32 0.0, %v8660
        %8662 = vmatmul.bf16.gmra.mxu0 %v8558
        %v8663 = vpop.f32.mrf.mxu0
        %v8664 = vadd.f32 0.0, %v8663
        %v8665 = vpop.f32.mrf.mxu0
        %v8666 = vadd.f32 0.0, %v8665
        %8667 = vmatmul.bf16.gmra.mxu0 %v8559
        %v8668 = vpop.f32.mrf.mxu0
        %v8669 = vadd.f32 0.0, %v8668
        %v8670 = vpop.f32.mrf.mxu0
        %v8671 = vadd.f32 0.0, %v8670
        %8672 = vmatmul.bf16.gmra.mxu0 %v8560
        %v8673 = vpop.f32.mrf.mxu0
        %v8674 = vadd.f32 0.0, %v8673
        %v8675 = vpop.f32.mrf.mxu0
        %v8676 = vadd.f32 0.0, %v8675
        %8677 = vmatmul.bf16.gmra.mxu0 %v8561
        %v8678 = vpop.f32.mrf.mxu0
        %v8679 = vadd.f32 0.0, %v8678
        %v8680 = vpop.f32.mrf.mxu0
        %v8681 = vadd.f32 0.0, %v8680
        %8682 = vmatmul.bf16.gmra.mxu0 %v8562
        %v8683 = vpop.f32.mrf.mxu0
        %v8684 = vadd.f32 0.0, %v8683
        %v8685 = vpop.f32.mrf.mxu0
        %v8686 = vadd.f32 0.0, %v8685
        %8687 = vmatmul.bf16.gmra.mxu0 %v8563
        %v8688 = vpop.f32.mrf.mxu0
        %v8689 = vadd.f32 0.0, %v8688
        %v8690 = vpop.f32.mrf.mxu0
        %v8691 = vadd.f32 0.0, %v8690
        %8692 = vmatmul.bf16.gmra.mxu0 %v8564
        %v8693 = vpop.f32.mrf.mxu0
        %v8694 = vadd.f32 0.0, %v8693
        %v8695 = vpop.f32.mrf.mxu0
        %v8696 = vadd.f32 0.0, %v8695
        %8697 = vmatmul.bf16.gmra.mxu0 %v8565
        %v8698 = vpop.f32.mrf.mxu0
        %v8699 = vadd.f32 0.0, %v8698
        %v8700 = vpop.f32.mrf.mxu0
        %v8701 = vadd.f32 0.0, %v8700
        %8702 = vmatmul.bf16.gmra.mxu0 %v8566
        %v8703 = vpop.f32.mrf.mxu0
        %v8704 = vadd.f32 0.0, %v8703
        %v8705 = vpop.f32.mrf.mxu0
        %v8706 = vadd.f32 0.0, %v8705
        %8707 = vmatmul.bf16.gmra.mxu0 %v8567
        %v8708 = vpop.f32.mrf.mxu0
        %v8709 = vadd.f32 0.0, %v8708
        %v8710 = vpop.f32.mrf.mxu0
        %v8711 = vadd.f32 0.0, %v8710
        %8712 = vmatmul.bf16.gmra.mxu0 %v8568
        %v8713 = vpop.f32.mrf.mxu0
        %v8714 = vadd.f32 0.0, %v8713
        %v8715 = vpop.f32.mrf.mxu0
        %v8716 = vadd.f32 0.0, %v8715
        %8717 = vmatmul.bf16.gmra.mxu0 %v8569
        %v8718 = vpop.f32.mrf.mxu0
        %v8719 = vadd.f32 0.0, %v8718
        %v8720 = vpop.f32.mrf.mxu0
        %v8721 = vadd.f32 0.0, %v8720
        %8722 = vdwg.mxu0
        %v8723 = vadd.f32 %v8298, %v8644
        %v8724 = vadd.f32 %v8299, %v8646
        %v8725 = vadd.f32 %v8300, %v8649
        %v8726 = vadd.f32 %v8301, %v8651
        %v8727 = vadd.f32 %v8302, %v8654
        %v8728 = vadd.f32 %v8303, %v8656
        %v8729 = vadd.f32 %v8304, %v8659
        %v8730 = vadd.f32 %v8305, %v8661
        %v8731 = vadd.f32 %v8306, %v8664
        %v8732 = vadd.f32 %v8307, %v8666
        %v8733 = vadd.f32 %v8308, %v8669
        %v8734 = vadd.f32 %v8309, %v8671
        %v8735 = vadd.f32 %v8310, %v8674
        %v8736 = vadd.f32 %v8311, %v8676
        %v8737 = vadd.f32 %v8312, %v8679
        %v8738 = vadd.f32 %v8313, %v8681
        %v8739 = vadd.f32 %v8314, %v8684
        %v8740 = vadd.f32 %v8315, %v8686
        %v8741 = vadd.f32 %v8316, %v8689
        %v8742 = vadd.f32 %v8317, %v8691
        %v8743 = vadd.f32 %v8318, %v8694
        %v8744 = vadd.f32 %v8319, %v8696
        %v8745 = vadd.f32 %v8320, %v8699
        %v8746 = vadd.f32 %v8321, %v8701
        %v8747 = vadd.f32 %v8322, %v8704
        %v8748 = vadd.f32 %v8323, %v8706
        %v8749 = vadd.f32 %v8324, %v8709
        %v8750 = vadd.f32 %v8325, %v8711
        %v8751 = vadd.f32 %v8326, %v8714
        %v8752 = vadd.f32 %v8327, %v8716
        %v8753 = vadd.f32 %v8328, %v8719
        %v8754 = vadd.f32 %v8329, %v8721
        %s8755 = scalar_lea.vmem [#allocation3], 24
        %v8756 = vld [vmem:[%s8755] sm:$0xf]
        %v8757 = vld [vmem:[%s8755 + $0x4] sm:$0xf]
        %v8758 = vld [vmem:[%s8755 + $0xc] sm:$0xf]
        %v8759 = vld [vmem:[%s8755 + $0x10] sm:$0xf]
        %v8760 = vld [vmem:[%s8755 + $0x18] sm:$0xf]
        %v8761 = vld [vmem:[%s8755 + $0x1c] sm:$0xf]
        %v8762 = vld [vmem:[%s8755 + $0x24] sm:$0xf]
        %v8763 = vld [vmem:[%s8755 + $0x28] sm:$0xf]
        %v8764 = vld [vmem:[%s8755 + $0x30] sm:$0xf]
        %v8765 = vld [vmem:[%s8755 + $0x34] sm:$0xf]
        %v8766 = vld [vmem:[%s8755 + $0x3c] sm:$0xf]
        %v8767 = vld [vmem:[%s8755 + $0x40] sm:$0xf]
        %v8768 = vld [vmem:[%s8755 + $0x48] sm:$0xf]
        %v8769 = vld [vmem:[%s8755 + $0x4c] sm:$0xf]
        %v8770 = vld [vmem:[%s8755 + $0x54] sm:$0xf]
        %v8771 = vld [vmem:[%s8755 + $0x58] sm:$0xf]
        %v8772 = vld [vmem:[%s8755 + $0x60] sm:$0xf]
        %v8773 = vld [vmem:[%s8755 + $0x64] sm:$0xf]
        %v8774 = vld [vmem:[%s8755 + $0x6c] sm:$0xf]
        %v8775 = vld [vmem:[%s8755 + $0x70] sm:$0xf]
        %v8776 = vld [vmem:[%s8755 + $0x78] sm:$0xf]
        %v8777 = vld [vmem:[%s8755 + $0x7c] sm:$0xf]
        %v8778 = vld [vmem:[%s8755 + $0x84] sm:$0xf]
        %v8779 = vld [vmem:[%s8755 + $0x88] sm:$0xf]
        %v8780 = vld [vmem:[%s8755 + $0x90] sm:$0xf]
        %v8781 = vld [vmem:[%s8755 + $0x94] sm:$0xf]
        %v8782 = vld [vmem:[%s8755 + $0x9c] sm:$0xf]
        %v8783 = vld [vmem:[%s8755 + $0xa0] sm:$0xf]
        %v8784 = vld [vmem:[%s8755 + $0xa8] sm:$0xf]
        %v8785 = vld [vmem:[%s8755 + $0xac] sm:$0xf]
        %v8786 = vld [vmem:[%s8755 + $0xb4] sm:$0xf]
        %v8787 = vld [vmem:[%s8755 + $0xb8] sm:$0xf]
        %v8788 = vld [vmem:[#allocation7 + $0x180] sm:$0xf]
        %v8789 = vld [vmem:[#allocation7 + $0x184] sm:$0xf]
        %v8790 = vld [vmem:[#allocation7 + $0x188] sm:$0xf]
        %v8791 = vld [vmem:[#allocation7 + $0x18c] sm:$0xf]
        %v8792 = vld [vmem:[#allocation7 + $0x190] sm:$0xf]
        %v8793 = vld [vmem:[#allocation7 + $0x194] sm:$0xf]
        %v8794 = vld [vmem:[#allocation7 + $0x198] sm:$0xf]
        %v8795 = vld [vmem:[#allocation7 + $0x19c] sm:$0xf]
        %v8796 = vld [vmem:[#allocation7 + $0x1a0] sm:$0xf]
        %v8797 = vld [vmem:[#allocation7 + $0x1a4] sm:$0xf]
        %v8798 = vld [vmem:[#allocation7 + $0x1a8] sm:$0xf]
        %v8799 = vld [vmem:[#allocation7 + $0x1ac] sm:$0xf]
        %v8800 = vld [vmem:[#allocation7 + $0x1b0] sm:$0xf]
        %v8801 = vld [vmem:[#allocation7 + $0x1b4] sm:$0xf]
        %v8802 = vld [vmem:[#allocation7 + $0x1b8] sm:$0xf]
        %v8803 = vld [vmem:[#allocation7 + $0x1bc] sm:$0xf]
        %v8836 = vunpack.c.l.b16 %v8756
        %v8837 = vunpack.c.l.b16 %v8757
        %v8838 = vunpack.c.l.b16 %v8758
        %v8839 = vunpack.c.l.b16 %v8759
        %v8840 = vunpack.c.l.b16 %v8760
        %v8841 = vunpack.c.l.b16 %v8761
        %v8842 = vunpack.c.l.b16 %v8762
        %v8843 = vunpack.c.l.b16 %v8763
        %v8844 = vunpack.c.l.b16 %v8764
        %v8845 = vunpack.c.l.b16 %v8765
        %v8846 = vunpack.c.l.b16 %v8766
        %v8847 = vunpack.c.l.b16 %v8767
        %v8848 = vunpack.c.l.b16 %v8768
        %v8849 = vunpack.c.l.b16 %v8769
        %v8850 = vunpack.c.l.b16 %v8770
        %v8851 = vunpack.c.l.b16 %v8771
        %v8852 = vunpack.c.l.b16 %v8772
        %v8853 = vunpack.c.l.b16 %v8773
        %v8854 = vunpack.c.l.b16 %v8774
        %v8855 = vunpack.c.l.b16 %v8775
        %v8856 = vunpack.c.l.b16 %v8776
        %v8857 = vunpack.c.l.b16 %v8777
        %v8858 = vunpack.c.l.b16 %v8778
        %v8859 = vunpack.c.l.b16 %v8779
        %v8860 = vunpack.c.l.b16 %v8780
        %v8861 = vunpack.c.l.b16 %v8781
        %v8862 = vunpack.c.l.b16 %v8782
        %v8863 = vunpack.c.l.b16 %v8783
        %v8864 = vunpack.c.l.b16 %v8784
        %v8865 = vunpack.c.l.b16 %v8785
        %v8866 = vunpack.c.l.b16 %v8786
        %v8867 = vunpack.c.l.b16 %v8787
        %v8868 = vpack.c.b16 %v8837, %v8836
        %v8869 = vpack.c.b16 %v8839, %v8838
        %v8870 = vpack.c.b16 %v8841, %v8840
        %v8871 = vpack.c.b16 %v8843, %v8842
        %v8872 = vpack.c.b16 %v8845, %v8844
        %v8873 = vpack.c.b16 %v8847, %v8846
        %v8874 = vpack.c.b16 %v8849, %v8848
        %v8875 = vpack.c.b16 %v8851, %v8850
        %v8876 = vpack.c.b16 %v8853, %v8852
        %v8877 = vpack.c.b16 %v8855, %v8854
        %v8878 = vpack.c.b16 %v8857, %v8856
        %v8879 = vpack.c.b16 %v8859, %v8858
        %v8880 = vpack.c.b16 %v8861, %v8860
        %v8881 = vpack.c.b16 %v8863, %v8862
        %v8882 = vpack.c.b16 %v8865, %v8864
        %v8883 = vpack.c.b16 %v8867, %v8866
        %v8916 = vunpack.c.l.b16 %v8788
        %v8917 = vunpack.c.l.b16 %v8789
        %v8918 = vunpack.c.l.b16 %v8790
        %v8919 = vunpack.c.l.b16 %v8791
        %v8920 = vunpack.c.l.b16 %v8792
        %v8921 = vunpack.c.l.b16 %v8793
        %v8922 = vunpack.c.l.b16 %v8794
        %v8923 = vunpack.c.l.b16 %v8795
        %v8924 = vunpack.c.l.b16 %v8796
        %v8925 = vunpack.c.l.b16 %v8797
        %v8926 = vunpack.c.l.b16 %v8798
        %v8927 = vunpack.c.l.b16 %v8799
        %v8928 = vunpack.c.l.b16 %v8800
        %v8929 = vunpack.c.l.b16 %v8801
        %v8930 = vunpack.c.l.b16 %v8802
        %v8931 = vunpack.c.l.b16 %v8803
        %v8932 = vpack.c.b16 %v8917, %v8916
        %v8933 = vpack.c.b16 %v8919, %v8918
        %v8934 = vpack.c.b16 %v8921, %v8920
        %v8935 = vpack.c.b16 %v8923, %v8922
        %v8936 = vpack.c.b16 %v8925, %v8924
        %v8937 = vpack.c.b16 %v8927, %v8926
        %v8938 = vpack.c.b16 %v8929, %v8928
        %v8939 = vpack.c.b16 %v8931, %v8930
        %8948 = vmatpush.bf16.msra.mxu0 %v8939
        %8949 = vmatpush.bf16.msra.mxu0 %v8938
        %8950 = vmatpush.bf16.msra.mxu0 %v8937
        %8951 = vmatpush.bf16.msra.mxu0 %v8936
        %8952 = vmatpush.bf16.msra.mxu0 %v8935
        %8953 = vmatpush.bf16.msra.mxu0 %v8934
        %8954 = vmatpush.bf16.msra.mxu0 %v8933
        %8955 = vmatpush.bf16.msra.mxu0 %v8932
        %8956 = vmatmul.bf16.gmra.mxu0 %v8868
        %v8957 = vpop.f32.mrf.mxu0
        %v8958 = vadd.f32 0.0, %v8957
        %v8959 = vpop.f32.mrf.mxu0
        %v8960 = vadd.f32 0.0, %v8959
        %8961 = vmatmul.bf16.gmra.mxu0 %v8869
        %v8962 = vpop.f32.mrf.mxu0
        %v8963 = vadd.f32 0.0, %v8962
        %v8964 = vpop.f32.mrf.mxu0
        %v8965 = vadd.f32 0.0, %v8964
        %8966 = vmatmul.bf16.gmra.mxu0 %v8870
        %v8967 = vpop.f32.mrf.mxu0
        %v8968 = vadd.f32 0.0, %v8967
        %v8969 = vpop.f32.mrf.mxu0
        %v8970 = vadd.f32 0.0, %v8969
        %8971 = vmatmul.bf16.gmra.mxu0 %v8871
        %v8972 = vpop.f32.mrf.mxu0
        %v8973 = vadd.f32 0.0, %v8972
        %v8974 = vpop.f32.mrf.mxu0
        %v8975 = vadd.f32 0.0, %v8974
        %8976 = vmatmul.bf16.gmra.mxu0 %v8872
        %v8977 = vpop.f32.mrf.mxu0
        %v8978 = vadd.f32 0.0, %v8977
        %v8979 = vpop.f32.mrf.mxu0
        %v8980 = vadd.f32 0.0, %v8979
        %8981 = vmatmul.bf16.gmra.mxu0 %v8873
        %v8982 = vpop.f32.mrf.mxu0
        %v8983 = vadd.f32 0.0, %v8982
        %v8984 = vpop.f32.mrf.mxu0
        %v8985 = vadd.f32 0.0, %v8984
        %8986 = vmatmul.bf16.gmra.mxu0 %v8874
        %v8987 = vpop.f32.mrf.mxu0
        %v8988 = vadd.f32 0.0, %v8987
        %v8989 = vpop.f32.mrf.mxu0
        %v8990 = vadd.f32 0.0, %v8989
        %8991 = vmatmul.bf16.gmra.mxu0 %v8875
        %v8992 = vpop.f32.mrf.mxu0
        %v8993 = vadd.f32 0.0, %v8992
        %v8994 = vpop.f32.mrf.mxu0
        %v8995 = vadd.f32 0.0, %v8994
        %8996 = vmatmul.bf16.gmra.mxu0 %v8876
        %v8997 = vpop.f32.mrf.mxu0
        %v8998 = vadd.f32 0.0, %v8997
        %v8999 = vpop.f32.mrf.mxu0
        %v9000 = vadd.f32 0.0, %v8999
        %9001 = vmatmul.bf16.gmra.mxu0 %v8877
        %v9002 = vpop.f32.mrf.mxu0
        %v9003 = vadd.f32 0.0, %v9002
        %v9004 = vpop.f32.mrf.mxu0
        %v9005 = vadd.f32 0.0, %v9004
        %9006 = vmatmul.bf16.gmra.mxu0 %v8878
        %v9007 = vpop.f32.mrf.mxu0
        %v9008 = vadd.f32 0.0, %v9007
        %v9009 = vpop.f32.mrf.mxu0
        %v9010 = vadd.f32 0.0, %v9009
        %9011 = vmatmul.bf16.gmra.mxu0 %v8879
        %v9012 = vpop.f32.mrf.mxu0
        %v9013 = vadd.f32 0.0, %v9012
        %v9014 = vpop.f32.mrf.mxu0
        %v9015 = vadd.f32 0.0, %v9014
        %9016 = vmatmul.bf16.gmra.mxu0 %v8880
        %v9017 = vpop.f32.mrf.mxu0
        %v9018 = vadd.f32 0.0, %v9017
        %v9019 = vpop.f32.mrf.mxu0
        %v9020 = vadd.f32 0.0, %v9019
        %9021 = vmatmul.bf16.gmra.mxu0 %v8881
        %v9022 = vpop.f32.mrf.mxu0
        %v9023 = vadd.f32 0.0, %v9022
        %v9024 = vpop.f32.mrf.mxu0
        %v9025 = vadd.f32 0.0, %v9024
        %9026 = vmatmul.bf16.gmra.mxu0 %v8882
        %v9027 = vpop.f32.mrf.mxu0
        %v9028 = vadd.f32 0.0, %v9027
        %v9029 = vpop.f32.mrf.mxu0
        %v9030 = vadd.f32 0.0, %v9029
        %9031 = vmatmul.bf16.gmra.mxu0 %v8883
        %v9032 = vpop.f32.mrf.mxu0
        %v9033 = vadd.f32 0.0, %v9032
        %v9034 = vpop.f32.mrf.mxu0
        %v9035 = vadd.f32 0.0, %v9034
        %9036 = vdwg.mxu0
        %v9037 = vadd.f32 %v8723, %v8958
        %v9038 = vadd.f32 %v8724, %v8960
        %v9039 = vadd.f32 %v8725, %v8963
        %v9040 = vadd.f32 %v8726, %v8965
        %v9041 = vadd.f32 %v8727, %v8968
        %v9042 = vadd.f32 %v8728, %v8970
        %v9043 = vadd.f32 %v8729, %v8973
        %v9044 = vadd.f32 %v8730, %v8975
        %v9045 = vadd.f32 %v8731, %v8978
        %v9046 = vadd.f32 %v8732, %v8980
        %v9047 = vadd.f32 %v8733, %v8983
        %v9048 = vadd.f32 %v8734, %v8985
        %v9049 = vadd.f32 %v8735, %v8988
        %v9050 = vadd.f32 %v8736, %v8990
        %v9051 = vadd.f32 %v8737, %v8993
        %v9052 = vadd.f32 %v8738, %v8995
        %v9053 = vadd.f32 %v8739, %v8998
        %v9054 = vadd.f32 %v8740, %v9000
        %v9055 = vadd.f32 %v8741, %v9003
        %v9056 = vadd.f32 %v8742, %v9005
        %v9057 = vadd.f32 %v8743, %v9008
        %v9058 = vadd.f32 %v8744, %v9010
        %v9059 = vadd.f32 %v8745, %v9013
        %v9060 = vadd.f32 %v8746, %v9015
        %v9061 = vadd.f32 %v8747, %v9018
        %v9062 = vadd.f32 %v8748, %v9020
        %v9063 = vadd.f32 %v8749, %v9023
        %v9064 = vadd.f32 %v8750, %v9025
        %v9065 = vadd.f32 %v8751, %v9028
        %v9066 = vadd.f32 %v8752, %v9030
        %v9067 = vadd.f32 %v8753, %v9033
        %v9068 = vadd.f32 %v8754, %v9035
        %v9069 = vld [vmem:[%s8755] sm:$0xf]
        %v9070 = vld [vmem:[%s8755 + $0x4] sm:$0xf]
        %v9071 = vld [vmem:[%s8755 + $0x8] sm:$0x1]
        %v9072 = vld [vmem:[%s8755 + $0xc] sm:$0xf]
        %v9073 = vld [vmem:[%s8755 + $0x10] sm:$0xf]
        %v9074 = vld [vmem:[%s8755 + $0x14] sm:$0x1]
        %v9075 = vld [vmem:[%s8755 + $0x18] sm:$0xf]
        %v9076 = vld [vmem:[%s8755 + $0x1c] sm:$0xf]
        %v9077 = vld [vmem:[%s8755 + $0x20] sm:$0x1]
        %v9078 = vld [vmem:[%s8755 + $0x24] sm:$0xf]
        %v9079 = vld [vmem:[%s8755 + $0x28] sm:$0xf]
        %v9080 = vld [vmem:[%s8755 + $0x2c] sm:$0x1]
        %v9081 = vld [vmem:[%s8755 + $0x30] sm:$0xf]
        %v9082 = vld [vmem:[%s8755 + $0x34] sm:$0xf]
        %v9083 = vld [vmem:[%s8755 + $0x38] sm:$0x1]
        %v9084 = vld [vmem:[%s8755 + $0x3c] sm:$0xf]
        %v9085 = vld [vmem:[%s8755 + $0x40] sm:$0xf]
        %v9086 = vld [vmem:[%s8755 + $0x44] sm:$0x1]
        %v9087 = vld [vmem:[%s8755 + $0x48] sm:$0xf]
        %v9088 = vld [vmem:[%s8755 + $0x4c] sm:$0xf]
        %v9089 = vld [vmem:[%s8755 + $0x50] sm:$0x1]
        %v9090 = vld [vmem:[%s8755 + $0x54] sm:$0xf]
        %v9091 = vld [vmem:[%s8755 + $0x58] sm:$0xf]
        %v9092 = vld [vmem:[%s8755 + $0x5c] sm:$0x1]
        %v9093 = vld [vmem:[%s8755 + $0x60] sm:$0xf]
        %v9094 = vld [vmem:[%s8755 + $0x64] sm:$0xf]
        %v9095 = vld [vmem:[%s8755 + $0x68] sm:$0x1]
        %v9096 = vld [vmem:[%s8755 + $0x6c] sm:$0xf]
        %v9097 = vld [vmem:[%s8755 + $0x70] sm:$0xf]
        %v9098 = vld [vmem:[%s8755 + $0x74] sm:$0x1]
        %v9099 = vld [vmem:[%s8755 + $0x78] sm:$0xf]
        %v9100 = vld [vmem:[%s8755 + $0x7c] sm:$0xf]
        %v9101 = vld [vmem:[%s8755 + $0x80] sm:$0x1]
        %v9102 = vld [vmem:[%s8755 + $0x84] sm:$0xf]
        %v9103 = vld [vmem:[%s8755 + $0x88] sm:$0xf]
        %v9104 = vld [vmem:[%s8755 + $0x8c] sm:$0x1]
        %v9105 = vld [vmem:[%s8755 + $0x90] sm:$0xf]
        %v9106 = vld [vmem:[%s8755 + $0x94] sm:$0xf]
        %v9107 = vld [vmem:[%s8755 + $0x98] sm:$0x1]
        %v9108 = vld [vmem:[%s8755 + $0x9c] sm:$0xf]
        %v9109 = vld [vmem:[%s8755 + $0xa0] sm:$0xf]
        %v9110 = vld [vmem:[%s8755 + $0xa4] sm:$0x1]
        %v9111 = vld [vmem:[%s8755 + $0xa8] sm:$0xf]
        %v9112 = vld [vmem:[%s8755 + $0xac] sm:$0xf]
        %v9113 = vld [vmem:[%s8755 + $0xb0] sm:$0x1]
        %v9114 = vld [vmem:[%s8755 + $0xb4] sm:$0xf]
        %v9115 = vld [vmem:[%s8755 + $0xb8] sm:$0xf]
        %v9116 = vld [vmem:[%s8755 + $0xbc] sm:$0x1]
        %v9118 = vshrl.u32 %v9069, 16
        %v9120 = vrot.slane %v9118, 4
        %v9121 = vshll.u32 %v9069, 16
        %v9123 = vrot.slane %v9121, 5
        %v9124 = vor.u32 %v9120, %v9123
        %v9125 = vrot.slane %v9124, 4
        %v9127 = vshll.u32 %v9070, 16
        %v9129 = vrot.slane %v9127, 5
        %v9130 = vsel %vm910, %v9125, %v9129
        %v9131 = vshrl.u32 %v9070, 16
        %v9133 = vrot.slane %v9131, 4
        %v9134 = vor.u32 %v9133, %v9129
        %v9135 = vrot.slane %v9134, 4
        %v9137 = vshll.u32 %v9071, 16
        %v9139 = vrot.slane %v9137, 5
        %v9140 = vsel %vm910, %v9135, %v9139
        %v9142 = vshrl.u32 %v9072, 16
        %v9144 = vrot.slane %v9142, 4
        %v9145 = vshll.u32 %v9072, 16
        %v9147 = vrot.slane %v9145, 5
        %v9148 = vor.u32 %v9144, %v9147
        %v9149 = vrot.slane %v9148, 4
        %v9151 = vshll.u32 %v9073, 16
        %v9153 = vrot.slane %v9151, 5
        %v9154 = vsel %vm910, %v9149, %v9153
        %v9155 = vshrl.u32 %v9073, 16
        %v9157 = vrot.slane %v9155, 4
        %v9158 = vor.u32 %v9157, %v9153
        %v9159 = vrot.slane %v9158, 4
        %v9161 = vshll.u32 %v9074, 16
        %v9163 = vrot.slane %v9161, 5
        %v9164 = vsel %vm910, %v9159, %v9163
        %v9166 = vshrl.u32 %v9075, 16
        %v9168 = vrot.slane %v9166, 4
        %v9169 = vshll.u32 %v9075, 16
        %v9171 = vrot.slane %v9169, 5
        %v9172 = vor.u32 %v9168, %v9171
        %v9173 = vrot.slane %v9172, 4
        %v9175 = vshll.u32 %v9076, 16
        %v9177 = vrot.slane %v9175, 5
        %v9178 = vsel %vm910, %v9173, %v9177
        %v9179 = vshrl.u32 %v9076, 16
        %v9181 = vrot.slane %v9179, 4
        %v9182 = vor.u32 %v9181, %v9177
        %v9183 = vrot.slane %v9182, 4
        %v9185 = vshll.u32 %v9077, 16
        %v9187 = vrot.slane %v9185, 5
        %v9188 = vsel %vm910, %v9183, %v9187
        %v9190 = vshrl.u32 %v9078, 16
        %v9192 = vrot.slane %v9190, 4
        %v9193 = vshll.u32 %v9078, 16
        %v9195 = vrot.slane %v9193, 5
        %v9196 = vor.u32 %v9192, %v9195
        %v9197 = vrot.slane %v9196, 4
        %v9199 = vshll.u32 %v9079, 16
        %v9201 = vrot.slane %v9199, 5
        %v9202 = vsel %vm910, %v9197, %v9201
        %v9203 = vshrl.u32 %v9079, 16
        %v9205 = vrot.slane %v9203, 4
        %v9206 = vor.u32 %v9205, %v9201
        %v9207 = vrot.slane %v9206, 4
        %v9209 = vshll.u32 %v9080, 16
        %v9211 = vrot.slane %v9209, 5
        %v9212 = vsel %vm910, %v9207, %v9211
        %v9214 = vshrl.u32 %v9081, 16
        %v9216 = vrot.slane %v9214, 4
        %v9217 = vshll.u32 %v9081, 16
        %v9219 = vrot.slane %v9217, 5
        %v9220 = vor.u32 %v9216, %v9219
        %v9221 = vrot.slane %v9220, 4
        %v9223 = vshll.u32 %v9082, 16
        %v9225 = vrot.slane %v9223, 5
        %v9226 = vsel %vm910, %v9221, %v9225
        %v9227 = vshrl.u32 %v9082, 16
        %v9229 = vrot.slane %v9227, 4
        %v9230 = vor.u32 %v9229, %v9225
        %v9231 = vrot.slane %v9230, 4
        %v9233 = vshll.u32 %v9083, 16
        %v9235 = vrot.slane %v9233, 5
        %v9236 = vsel %vm910, %v9231, %v9235
        %v9238 = vshrl.u32 %v9084, 16
        %v9240 = vrot.slane %v9238, 4
        %v9241 = vshll.u32 %v9084, 16
        %v9243 = vrot.slane %v9241, 5
        %v9244 = vor.u32 %v9240, %v9243
        %v9245 = vrot.slane %v9244, 4
        %v9247 = vshll.u32 %v9085, 16
        %v9249 = vrot.slane %v9247, 5
        %v9250 = vsel %vm910, %v9245, %v9249
        %v9251 = vshrl.u32 %v9085, 16
        %v9253 = vrot.slane %v9251, 4
        %v9254 = vor.u32 %v9253, %v9249
        %v9255 = vrot.slane %v9254, 4
        %v9257 = vshll.u32 %v9086, 16
        %v9259 = vrot.slane %v9257, 5
        %v9260 = vsel %vm910, %v9255, %v9259
        %v9262 = vshrl.u32 %v9087, 16
        %v9264 = vrot.slane %v9262, 4
        %v9265 = vshll.u32 %v9087, 16
        %v9267 = vrot.slane %v9265, 5
        %v9268 = vor.u32 %v9264, %v9267
        %v9269 = vrot.slane %v9268, 4
        %v9271 = vshll.u32 %v9088, 16
        %v9273 = vrot.slane %v9271, 5
        %v9274 = vsel %vm910, %v9269, %v9273
        %v9275 = vshrl.u32 %v9088, 16
        %v9277 = vrot.slane %v9275, 4
        %v9278 = vor.u32 %v9277, %v9273
        %v9279 = vrot.slane %v9278, 4
        %v9281 = vshll.u32 %v9089, 16
        %v9283 = vrot.slane %v9281, 5
        %v9284 = vsel %vm910, %v9279, %v9283
        %v9286 = vshrl.u32 %v9090, 16
        %v9288 = vrot.slane %v9286, 4
        %v9289 = vshll.u32 %v9090, 16
        %v9291 = vrot.slane %v9289, 5
        %v9292 = vor.u32 %v9288, %v9291
        %v9293 = vrot.slane %v9292, 4
        %v9295 = vshll.u32 %v9091, 16
        %v9297 = vrot.slane %v9295, 5
        %v9298 = vsel %vm910, %v9293, %v9297
        %v9299 = vshrl.u32 %v9091, 16
        %v9301 = vrot.slane %v9299, 4
        %v9302 = vor.u32 %v9301, %v9297
        %v9303 = vrot.slane %v9302, 4
        %v9305 = vshll.u32 %v9092, 16
        %v9307 = vrot.slane %v9305, 5
        %v9308 = vsel %vm910, %v9303, %v9307
        %v9310 = vshrl.u32 %v9093, 16
        %v9312 = vrot.slane %v9310, 4
        %v9313 = vshll.u32 %v9093, 16
        %v9315 = vrot.slane %v9313, 5
        %v9316 = vor.u32 %v9312, %v9315
        %v9317 = vrot.slane %v9316, 4
        %v9319 = vshll.u32 %v9094, 16
        %v9321 = vrot.slane %v9319, 5
        %v9322 = vsel %vm910, %v9317, %v9321
        %v9323 = vshrl.u32 %v9094, 16
        %v9325 = vrot.slane %v9323, 4
        %v9326 = vor.u32 %v9325, %v9321
        %v9327 = vrot.slane %v9326, 4
        %v9329 = vshll.u32 %v9095, 16
        %v9331 = vrot.slane %v9329, 5
        %v9332 = vsel %vm910, %v9327, %v9331
        %v9334 = vshrl.u32 %v9096, 16
        %v9336 = vrot.slane %v9334, 4
        %v9337 = vshll.u32 %v9096, 16
        %v9339 = vrot.slane %v9337, 5
        %v9340 = vor.u32 %v9336, %v9339
        %v9341 = vrot.slane %v9340, 4
        %v9343 = vshll.u32 %v9097, 16
        %v9345 = vrot.slane %v9343, 5
        %v9346 = vsel %vm910, %v9341, %v9345
        %v9347 = vshrl.u32 %v9097, 16
        %v9349 = vrot.slane %v9347, 4
        %v9350 = vor.u32 %v9349, %v9345
        %v9351 = vrot.slane %v9350, 4
        %v9353 = vshll.u32 %v9098, 16
        %v9355 = vrot.slane %v9353, 5
        %v9356 = vsel %vm910, %v9351, %v9355
        %v9358 = vshrl.u32 %v9099, 16
        %v9360 = vrot.slane %v9358, 4
        %v9361 = vshll.u32 %v9099, 16
        %v9363 = vrot.slane %v9361, 5
        %v9364 = vor.u32 %v9360, %v9363
        %v9365 = vrot.slane %v9364, 4
        %v9367 = vshll.u32 %v9100, 16
        %v9369 = vrot.slane %v9367, 5
        %v9370 = vsel %vm910, %v9365, %v9369
        %v9371 = vshrl.u32 %v9100, 16
        %v9373 = vrot.slane %v9371, 4
        %v9374 = vor.u32 %v9373, %v9369
        %v9375 = vrot.slane %v9374, 4
        %v9377 = vshll.u32 %v9101, 16
        %v9379 = vrot.slane %v9377, 5
        %v9380 = vsel %vm910, %v9375, %v9379
        %v9382 = vshrl.u32 %v9102, 16
        %v9384 = vrot.slane %v9382, 4
        %v9385 = vshll.u32 %v9102, 16
        %v9387 = vrot.slane %v9385, 5
        %v9388 = vor.u32 %v9384, %v9387
        %v9389 = vrot.slane %v9388, 4
        %v9391 = vshll.u32 %v9103, 16
        %v9393 = vrot.slane %v9391, 5
        %v9394 = vsel %vm910, %v9389, %v9393
        %v9395 = vshrl.u32 %v9103, 16
        %v9397 = vrot.slane %v9395, 4
        %v9398 = vor.u32 %v9397, %v9393
        %v9399 = vrot.slane %v9398, 4
        %v9401 = vshll.u32 %v9104, 16
        %v9403 = vrot.slane %v9401, 5
        %v9404 = vsel %vm910, %v9399, %v9403
        %v9406 = vshrl.u32 %v9105, 16
        %v9408 = vrot.slane %v9406, 4
        %v9409 = vshll.u32 %v9105, 16
        %v9411 = vrot.slane %v9409, 5
        %v9412 = vor.u32 %v9408, %v9411
        %v9413 = vrot.slane %v9412, 4
        %v9415 = vshll.u32 %v9106, 16
        %v9417 = vrot.slane %v9415, 5
        %v9418 = vsel %vm910, %v9413, %v9417
        %v9419 = vshrl.u32 %v9106, 16
        %v9421 = vrot.slane %v9419, 4
        %v9422 = vor.u32 %v9421, %v9417
        %v9423 = vrot.slane %v9422, 4
        %v9425 = vshll.u32 %v9107, 16
        %v9427 = vrot.slane %v9425, 5
        %v9428 = vsel %vm910, %v9423, %v9427
        %v9430 = vshrl.u32 %v9108, 16
        %v9432 = vrot.slane %v9430, 4
        %v9433 = vshll.u32 %v9108, 16
        %v9435 = vrot.slane %v9433, 5
        %v9436 = vor.u32 %v9432, %v9435
        %v9437 = vrot.slane %v9436, 4
        %v9439 = vshll.u32 %v9109, 16
        %v9441 = vrot.slane %v9439, 5
        %v9442 = vsel %vm910, %v9437, %v9441
        %v9443 = vshrl.u32 %v9109, 16
        %v9445 = vrot.slane %v9443, 4
        %v9446 = vor.u32 %v9445, %v9441
        %v9447 = vrot.slane %v9446, 4
        %v9449 = vshll.u32 %v9110, 16
        %v9451 = vrot.slane %v9449, 5
        %v9452 = vsel %vm910, %v9447, %v9451
        %v9454 = vshrl.u32 %v9111, 16
        %v9456 = vrot.slane %v9454, 4
        %v9457 = vshll.u32 %v9111, 16
        %v9459 = vrot.slane %v9457, 5
        %v9460 = vor.u32 %v9456, %v9459
        %v9461 = vrot.slane %v9460, 4
        %v9463 = vshll.u32 %v9112, 16
        %v9465 = vrot.slane %v9463, 5
        %v9466 = vsel %vm910, %v9461, %v9465
        %v9467 = vshrl.u32 %v9112, 16
        %v9469 = vrot.slane %v9467, 4
        %v9470 = vor.u32 %v9469, %v9465
        %v9471 = vrot.slane %v9470, 4
        %v9473 = vshll.u32 %v9113, 16
        %v9475 = vrot.slane %v9473, 5
        %v9476 = vsel %vm910, %v9471, %v9475
        %v9478 = vshrl.u32 %v9114, 16
        %v9480 = vrot.slane %v9478, 4
        %v9481 = vshll.u32 %v9114, 16
        %v9483 = vrot.slane %v9481, 5
        %v9484 = vor.u32 %v9480, %v9483
        %v9485 = vrot.slane %v9484, 4
        %v9487 = vshll.u32 %v9115, 16
        %v9489 = vrot.slane %v9487, 5
        %v9490 = vsel %vm910, %v9485, %v9489
        %v9491 = vshrl.u32 %v9115, 16
        %v9493 = vrot.slane %v9491, 4
        %v9494 = vor.u32 %v9493, %v9489
        %v9495 = vrot.slane %v9494, 4
        %v9497 = vshll.u32 %v9116, 16
        %v9499 = vrot.slane %v9497, 5
        %v9500 = vsel %vm910, %v9495, %v9499
        %v9501 = vld [vmem:[#allocation7 + $0x1c0] sm:$0xf]
        %v9502 = vld [vmem:[#allocation7 + $0x1c4] sm:$0xf]
        %v9503 = vld [vmem:[#allocation7 + $0x1c8] sm:$0xf]
        %v9504 = vld [vmem:[#allocation7 + $0x1cc] sm:$0xf]
        %v9505 = vld [vmem:[#allocation7 + $0x1d0] sm:$0xf]
        %v9506 = vld [vmem:[#allocation7 + $0x1d4] sm:$0xf]
        %v9507 = vld [vmem:[#allocation7 + $0x1d8] sm:$0xf]
        %v9508 = vld [vmem:[#allocation7 + $0x1dc] sm:$0xf]
        %v9509 = vld [vmem:[#allocation7 + $0x1e0] sm:$0xf]
        %v9510 = vld [vmem:[#allocation7 + $0x1e4] sm:$0xf]
        %v9511 = vld [vmem:[#allocation7 + $0x1e8] sm:$0xf]
        %v9512 = vld [vmem:[#allocation7 + $0x1ec] sm:$0xf]
        %v9513 = vld [vmem:[#allocation7 + $0x1f0] sm:$0xf]
        %v9514 = vld [vmem:[#allocation7 + $0x1f4] sm:$0xf]
        %v9515 = vld [vmem:[#allocation7 + $0x1f8] sm:$0xf]
        %v9516 = vld [vmem:[#allocation7 + $0x1fc] sm:$0xf]
        %v9517 = vunpack.c.l.b16 %v9130
        %v9518 = vunpack.c.l.b16 %v9140
        %v9519 = vunpack.c.l.b16 %v9154
        %v9520 = vunpack.c.l.b16 %v9164
        %v9521 = vunpack.c.l.b16 %v9178
        %v9522 = vunpack.c.l.b16 %v9188
        %v9523 = vunpack.c.l.b16 %v9202
        %v9524 = vunpack.c.l.b16 %v9212
        %v9525 = vunpack.c.l.b16 %v9226
        %v9526 = vunpack.c.l.b16 %v9236
        %v9527 = vunpack.c.l.b16 %v9250
        %v9528 = vunpack.c.l.b16 %v9260
        %v9529 = vunpack.c.l.b16 %v9274
        %v9530 = vunpack.c.l.b16 %v9284
        %v9531 = vunpack.c.l.b16 %v9298
        %v9532 = vunpack.c.l.b16 %v9308
        %v9533 = vunpack.c.l.b16 %v9322
        %v9534 = vunpack.c.l.b16 %v9332
        %v9535 = vunpack.c.l.b16 %v9346
        %v9536 = vunpack.c.l.b16 %v9356
        %v9537 = vunpack.c.l.b16 %v9370
        %v9538 = vunpack.c.l.b16 %v9380
        %v9539 = vunpack.c.l.b16 %v9394
        %v9540 = vunpack.c.l.b16 %v9404
        %v9541 = vunpack.c.l.b16 %v9418
        %v9542 = vunpack.c.l.b16 %v9428
        %v9543 = vunpack.c.l.b16 %v9442
        %v9544 = vunpack.c.l.b16 %v9452
        %v9545 = vunpack.c.l.b16 %v9466
        %v9546 = vunpack.c.l.b16 %v9476
        %v9547 = vunpack.c.l.b16 %v9490
        %v9548 = vunpack.c.l.b16 %v9500
        %v9549 = vpack.c.b16 %v9518, %v9517
        %v9550 = vpack.c.b16 %v9520, %v9519
        %v9551 = vpack.c.b16 %v9522, %v9521
        %v9552 = vpack.c.b16 %v9524, %v9523
        %v9553 = vpack.c.b16 %v9526, %v9525
        %v9554 = vpack.c.b16 %v9528, %v9527
        %v9555 = vpack.c.b16 %v9530, %v9529
        %v9556 = vpack.c.b16 %v9532, %v9531
        %v9557 = vpack.c.b16 %v9534, %v9533
        %v9558 = vpack.c.b16 %v9536, %v9535
        %v9559 = vpack.c.b16 %v9538, %v9537
        %v9560 = vpack.c.b16 %v9540, %v9539
        %v9561 = vpack.c.b16 %v9542, %v9541
        %v9562 = vpack.c.b16 %v9544, %v9543
        %v9563 = vpack.c.b16 %v9546, %v9545
        %v9564 = vpack.c.b16 %v9548, %v9547
        %v9597 = vunpack.c.l.b16 %v9501
        %v9598 = vunpack.c.l.b16 %v9502
        %v9599 = vunpack.c.l.b16 %v9503
        %v9600 = vunpack.c.l.b16 %v9504
        %v9601 = vunpack.c.l.b16 %v9505
        %v9602 = vunpack.c.l.b16 %v9506
        %v9603 = vunpack.c.l.b16 %v9507
        %v9604 = vunpack.c.l.b16 %v9508
        %v9605 = vunpack.c.l.b16 %v9509
        %v9606 = vunpack.c.l.b16 %v9510
        %v9607 = vunpack.c.l.b16 %v9511
        %v9608 = vunpack.c.l.b16 %v9512
        %v9609 = vunpack.c.l.b16 %v9513
        %v9610 = vunpack.c.l.b16 %v9514
        %v9611 = vunpack.c.l.b16 %v9515
        %v9612 = vunpack.c.l.b16 %v9516
        %v9613 = vpack.c.b16 %v9598, %v9597
        %v9614 = vpack.c.b16 %v9600, %v9599
        %v9615 = vpack.c.b16 %v9602, %v9601
        %v9616 = vpack.c.b16 %v9604, %v9603
        %v9617 = vpack.c.b16 %v9606, %v9605
        %v9618 = vpack.c.b16 %v9608, %v9607
        %v9619 = vpack.c.b16 %v9610, %v9609
        %v9620 = vpack.c.b16 %v9612, %v9611
        %9629 = vmatpush.bf16.msra.mxu0 %v9620
        %9630 = vmatpush.bf16.msra.mxu0 %v9619
        %9631 = vmatpush.bf16.msra.mxu0 %v9618
        %9632 = vmatpush.bf16.msra.mxu0 %v9617
        %9633 = vmatpush.bf16.msra.mxu0 %v9616
        %9634 = vmatpush.bf16.msra.mxu0 %v9615
        %9635 = vmatpush.bf16.msra.mxu0 %v9614
        %9636 = vmatpush.bf16.msra.mxu0 %v9613
        %9637 = vmatmul.bf16.gmra.mxu0 %v9549
        %v9638 = vpop.f32.mrf.mxu0
        %v9639 = vadd.f32 0.0, %v9638
        %v9640 = vpop.f32.mrf.mxu0
        %v9641 = vadd.f32 0.0, %v9640
        %9642 = vmatmul.bf16.gmra.mxu0 %v9550
        %v9643 = vpop.f32.mrf.mxu0
        %v9644 = vadd.f32 0.0, %v9643
        %v9645 = vpop.f32.mrf.mxu0
        %v9646 = vadd.f32 0.0, %v9645
        %9647 = vmatmul.bf16.gmra.mxu0 %v9551
        %v9648 = vpop.f32.mrf.mxu0
        %v9649 = vadd.f32 0.0, %v9648
        %v9650 = vpop.f32.mrf.mxu0
        %v9651 = vadd.f32 0.0, %v9650
        %9652 = vmatmul.bf16.gmra.mxu0 %v9552
        %v9653 = vpop.f32.mrf.mxu0
        %v9654 = vadd.f32 0.0, %v9653
        %v9655 = vpop.f32.mrf.mxu0
        %v9656 = vadd.f32 0.0, %v9655
        %9657 = vmatmul.bf16.gmra.mxu0 %v9553
        %v9658 = vpop.f32.mrf.mxu0
        %v9659 = vadd.f32 0.0, %v9658
        %v9660 = vpop.f32.mrf.mxu0
        %v9661 = vadd.f32 0.0, %v9660
        %9662 = vmatmul.bf16.gmra.mxu0 %v9554
        %v9663 = vpop.f32.mrf.mxu0
        %v9664 = vadd.f32 0.0, %v9663
        %v9665 = vpop.f32.mrf.mxu0
        %v9666 = vadd.f32 0.0, %v9665
        %9667 = vmatmul.bf16.gmra.mxu0 %v9555
        %v9668 = vpop.f32.mrf.mxu0
        %v9669 = vadd.f32 0.0, %v9668
        %v9670 = vpop.f32.mrf.mxu0
        %v9671 = vadd.f32 0.0, %v9670
        %9672 = vmatmul.bf16.gmra.mxu0 %v9556
        %v9673 = vpop.f32.mrf.mxu0
        %v9674 = vadd.f32 0.0, %v9673
        %v9675 = vpop.f32.mrf.mxu0
        %v9676 = vadd.f32 0.0, %v9675
        %9677 = vmatmul.bf16.gmra.mxu0 %v9557
        %v9678 = vpop.f32.mrf.mxu0
        %v9679 = vadd.f32 0.0, %v9678
        %v9680 = vpop.f32.mrf.mxu0
        %v9681 = vadd.f32 0.0, %v9680
        %9682 = vmatmul.bf16.gmra.mxu0 %v9558
        %v9683 = vpop.f32.mrf.mxu0
        %v9684 = vadd.f32 0.0, %v9683
        %v9685 = vpop.f32.mrf.mxu0
        %v9686 = vadd.f32 0.0, %v9685
        %9687 = vmatmul.bf16.gmra.mxu0 %v9559
        %v9688 = vpop.f32.mrf.mxu0
        %v9689 = vadd.f32 0.0, %v9688
        %v9690 = vpop.f32.mrf.mxu0
        %v9691 = vadd.f32 0.0, %v9690
        %9692 = vmatmul.bf16.gmra.mxu0 %v9560
        %v9693 = vpop.f32.mrf.mxu0
        %v9694 = vadd.f32 0.0, %v9693
        %v9695 = vpop.f32.mrf.mxu0
        %v9696 = vadd.f32 0.0, %v9695
        %9697 = vmatmul.bf16.gmra.mxu0 %v9561
        %v9698 = vpop.f32.mrf.mxu0
        %v9699 = vadd.f32 0.0, %v9698
        %v9700 = vpop.f32.mrf.mxu0
        %v9701 = vadd.f32 0.0, %v9700
        %9702 = vmatmul.bf16.gmra.mxu0 %v9562
        %v9703 = vpop.f32.mrf.mxu0
        %v9704 = vadd.f32 0.0, %v9703
        %v9705 = vpop.f32.mrf.mxu0
        %v9706 = vadd.f32 0.0, %v9705
        %9707 = vmatmul.bf16.gmra.mxu0 %v9563
        %v9708 = vpop.f32.mrf.mxu0
        %v9709 = vadd.f32 0.0, %v9708
        %v9710 = vpop.f32.mrf.mxu0
        %v9711 = vadd.f32 0.0, %v9710
        %9712 = vmatmul.bf16.gmra.mxu0 %v9564
        %v9713 = vpop.f32.mrf.mxu0
        %v9714 = vadd.f32 0.0, %v9713
        %v9715 = vpop.f32.mrf.mxu0
        %v9716 = vadd.f32 0.0, %v9715
        %9717 = vdwg.mxu0
        %v9718 = vadd.f32 %v9037, %v9639
        %v9719 = vadd.f32 %v9038, %v9641
        %v9720 = vadd.f32 %v9039, %v9644
        %v9721 = vadd.f32 %v9040, %v9646
        %v9722 = vadd.f32 %v9041, %v9649
        %v9723 = vadd.f32 %v9042, %v9651
        %v9724 = vadd.f32 %v9043, %v9654
        %v9725 = vadd.f32 %v9044, %v9656
        %v9726 = vadd.f32 %v9045, %v9659
        %v9727 = vadd.f32 %v9046, %v9661
        %v9728 = vadd.f32 %v9047, %v9664
        %v9729 = vadd.f32 %v9048, %v9666
        %v9730 = vadd.f32 %v9049, %v9669
        %v9731 = vadd.f32 %v9050, %v9671
        %v9732 = vadd.f32 %v9051, %v9674
        %v9733 = vadd.f32 %v9052, %v9676
        %v9734 = vadd.f32 %v9053, %v9679
        %v9735 = vadd.f32 %v9054, %v9681
        %v9736 = vadd.f32 %v9055, %v9684
        %v9737 = vadd.f32 %v9056, %v9686
        %v9738 = vadd.f32 %v9057, %v9689
        %v9739 = vadd.f32 %v9058, %v9691
        %v9740 = vadd.f32 %v9059, %v9694
        %v9741 = vadd.f32 %v9060, %v9696
        %v9742 = vadd.f32 %v9061, %v9699
        %v9743 = vadd.f32 %v9062, %v9701
        %v9744 = vadd.f32 %v9063, %v9704
        %v9745 = vadd.f32 %v9064, %v9706
        %v9746 = vadd.f32 %v9065, %v9709
        %v9747 = vadd.f32 %v9066, %v9711
        %v9748 = vadd.f32 %v9067, %v9714
        %v9749 = vadd.f32 %v9068, %v9716
        %v9750 = vld [vmem:[%s8755] sm:$0xe]
        %v9751 = vld [vmem:[%s8755 + $0xc] sm:$0xe]
        %v9752 = vld [vmem:[%s8755 + $0x18] sm:$0xe]
        %v9753 = vld [vmem:[%s8755 + $0x24] sm:$0xe]
        %v9754 = vld [vmem:[%s8755 + $0x30] sm:$0xe]
        %v9755 = vld [vmem:[%s8755 + $0x3c] sm:$0xe]
        %v9756 = vld [vmem:[%s8755 + $0x48] sm:$0xe]
        %v9757 = vld [vmem:[%s8755 + $0x54] sm:$0xe]
        %v9758 = vld [vmem:[%s8755 + $0x60] sm:$0xe]
        %v9759 = vld [vmem:[%s8755 + $0x6c] sm:$0xe]
        %v9760 = vld [vmem:[%s8755 + $0x78] sm:$0xe]
        %v9761 = vld [vmem:[%s8755 + $0x84] sm:$0xe]
        %v9762 = vld [vmem:[%s8755 + $0x90] sm:$0xe]
        %v9763 = vld [vmem:[%s8755 + $0x9c] sm:$0xe]
        %v9764 = vld [vmem:[%s8755 + $0xa8] sm:$0xe]
        %v9765 = vld [vmem:[%s8755 + $0xb4] sm:$0xe]
        %v9814 = vrot.slane %v9750, 5
        %v9815 = vrot.slane %v9814, 4
        %v9816 = vrot.slane %v9070, 5
        %v9817 = vsel %vm1795, %v9815, %v9816
        %v9818 = vrot.slane %v9816, 4
        %v9819 = vrot.slane %v9071, 5
        %v9820 = vsel %vm1795, %v9818, %v9819
        %v9821 = vrot.slane %v9751, 5
        %v9822 = vrot.slane %v9821, 4
        %v9823 = vrot.slane %v9073, 5
        %v9824 = vsel %vm1795, %v9822, %v9823
        %v9825 = vrot.slane %v9823, 4
        %v9826 = vrot.slane %v9074, 5
        %v9827 = vsel %vm1795, %v9825, %v9826
        %v9828 = vrot.slane %v9752, 5
        %v9829 = vrot.slane %v9828, 4
        %v9830 = vrot.slane %v9076, 5
        %v9831 = vsel %vm1795, %v9829, %v9830
        %v9832 = vrot.slane %v9830, 4
        %v9833 = vrot.slane %v9077, 5
        %v9834 = vsel %vm1795, %v9832, %v9833
        %v9835 = vrot.slane %v9753, 5
        %v9836 = vrot.slane %v9835, 4
        %v9837 = vrot.slane %v9079, 5
        %v9838 = vsel %vm1795, %v9836, %v9837
        %v9839 = vrot.slane %v9837, 4
        %v9840 = vrot.slane %v9080, 5
        %v9841 = vsel %vm1795, %v9839, %v9840
        %v9842 = vrot.slane %v9754, 5
        %v9843 = vrot.slane %v9842, 4
        %v9844 = vrot.slane %v9082, 5
        %v9845 = vsel %vm1795, %v9843, %v9844
        %v9846 = vrot.slane %v9844, 4
        %v9847 = vrot.slane %v9083, 5
        %v9848 = vsel %vm1795, %v9846, %v9847
        %v9849 = vrot.slane %v9755, 5
        %v9850 = vrot.slane %v9849, 4
        %v9851 = vrot.slane %v9085, 5
        %v9852 = vsel %vm1795, %v9850, %v9851
        %v9853 = vrot.slane %v9851, 4
        %v9854 = vrot.slane %v9086, 5
        %v9855 = vsel %vm1795, %v9853, %v9854
        %v9856 = vrot.slane %v9756, 5
        %v9857 = vrot.slane %v9856, 4
        %v9858 = vrot.slane %v9088, 5
        %v9859 = vsel %vm1795, %v9857, %v9858
        %v9860 = vrot.slane %v9858, 4
        %v9861 = vrot.slane %v9089, 5
        %v9862 = vsel %vm1795, %v9860, %v9861
        %v9863 = vrot.slane %v9757, 5
        %v9864 = vrot.slane %v9863, 4
        %v9865 = vrot.slane %v9091, 5
        %v9866 = vsel %vm1795, %v9864, %v9865
        %v9867 = vrot.slane %v9865, 4
        %v9868 = vrot.slane %v9092, 5
        %v9869 = vsel %vm1795, %v9867, %v9868
        %v9870 = vrot.slane %v9758, 5
        %v9871 = vrot.slane %v9870, 4
        %v9872 = vrot.slane %v9094, 5
        %v9873 = vsel %vm1795, %v9871, %v9872
        %v9874 = vrot.slane %v9872, 4
        %v9875 = vrot.slane %v9095, 5
        %v9876 = vsel %vm1795, %v9874, %v9875
        %v9877 = vrot.slane %v9759, 5
        %v9878 = vrot.slane %v9877, 4
        %v9879 = vrot.slane %v9097, 5
        %v9880 = vsel %vm1795, %v9878, %v9879
        %v9881 = vrot.slane %v9879, 4
        %v9882 = vrot.slane %v9098, 5
        %v9883 = vsel %vm1795, %v9881, %v9882
        %v9884 = vrot.slane %v9760, 5
        %v9885 = vrot.slane %v9884, 4
        %v9886 = vrot.slane %v9100, 5
        %v9887 = vsel %vm1795, %v9885, %v9886
        %v9888 = vrot.slane %v9886, 4
        %v9889 = vrot.slane %v9101, 5
        %v9890 = vsel %vm1795, %v9888, %v9889
        %v9891 = vrot.slane %v9761, 5
        %v9892 = vrot.slane %v9891, 4
        %v9893 = vrot.slane %v9103, 5
        %v9894 = vsel %vm1795, %v9892, %v9893
        %v9895 = vrot.slane %v9893, 4
        %v9896 = vrot.slane %v9104, 5
        %v9897 = vsel %vm1795, %v9895, %v9896
        %v9898 = vrot.slane %v9762, 5
        %v9899 = vrot.slane %v9898, 4
        %v9900 = vrot.slane %v9106, 5
        %v9901 = vsel %vm1795, %v9899, %v9900
        %v9902 = vrot.slane %v9900, 4
        %v9903 = vrot.slane %v9107, 5
        %v9904 = vsel %vm1795, %v9902, %v9903
        %v9905 = vrot.slane %v9763, 5
        %v9906 = vrot.slane %v9905, 4
        %v9907 = vrot.slane %v9109, 5
        %v9908 = vsel %vm1795, %v9906, %v9907
        %v9909 = vrot.slane %v9907, 4
        %v9910 = vrot.slane %v9110, 5
        %v9911 = vsel %vm1795, %v9909, %v9910
        %v9912 = vrot.slane %v9764, 5
        %v9913 = vrot.slane %v9912, 4
        %v9914 = vrot.slane %v9112, 5
        %v9915 = vsel %vm1795, %v9913, %v9914
        %v9916 = vrot.slane %v9914, 4
        %v9917 = vrot.slane %v9113, 5
        %v9918 = vsel %vm1795, %v9916, %v9917
        %v9919 = vrot.slane %v9765, 5
        %v9920 = vrot.slane %v9919, 4
        %v9921 = vrot.slane %v9115, 5
        %v9922 = vsel %vm1795, %v9920, %v9921
        %v9923 = vrot.slane %v9921, 4
        %v9924 = vrot.slane %v9116, 5
        %v9925 = vsel %vm1795, %v9923, %v9924
        %v9926 = vld [vmem:[#allocation7 + $0x200] sm:$0xf]
        %v9927 = vld [vmem:[#allocation7 + $0x204] sm:$0xf]
        %v9928 = vld [vmem:[#allocation7 + $0x208] sm:$0xf]
        %v9929 = vld [vmem:[#allocation7 + $0x20c] sm:$0xf]
        %v9930 = vld [vmem:[#allocation7 + $0x210] sm:$0xf]
        %v9931 = vld [vmem:[#allocation7 + $0x214] sm:$0xf]
        %v9932 = vld [vmem:[#allocation7 + $0x218] sm:$0xf]
        %v9933 = vld [vmem:[#allocation7 + $0x21c] sm:$0xf]
        %v9934 = vld [vmem:[#allocation7 + $0x220] sm:$0xf]
        %v9935 = vld [vmem:[#allocation7 + $0x224] sm:$0xf]
        %v9936 = vld [vmem:[#allocation7 + $0x228] sm:$0xf]
        %v9937 = vld [vmem:[#allocation7 + $0x22c] sm:$0xf]
        %v9938 = vld [vmem:[#allocation7 + $0x230] sm:$0xf]
        %v9939 = vld [vmem:[#allocation7 + $0x234] sm:$0xf]
        %v9940 = vld [vmem:[#allocation7 + $0x238] sm:$0xf]
        %v9941 = vld [vmem:[#allocation7 + $0x23c] sm:$0xf]
        %v9942 = vunpack.c.l.b16 %v9817
        %v9943 = vunpack.c.l.b16 %v9820
        %v9944 = vunpack.c.l.b16 %v9824
        %v9945 = vunpack.c.l.b16 %v9827
        %v9946 = vunpack.c.l.b16 %v9831
        %v9947 = vunpack.c.l.b16 %v9834
        %v9948 = vunpack.c.l.b16 %v9838
        %v9949 = vunpack.c.l.b16 %v9841
        %v9950 = vunpack.c.l.b16 %v9845
        %v9951 = vunpack.c.l.b16 %v9848
        %v9952 = vunpack.c.l.b16 %v9852
        %v9953 = vunpack.c.l.b16 %v9855
        %v9954 = vunpack.c.l.b16 %v9859
        %v9955 = vunpack.c.l.b16 %v9862
        %v9956 = vunpack.c.l.b16 %v9866
        %v9957 = vunpack.c.l.b16 %v9869
        %v9958 = vunpack.c.l.b16 %v9873
        %v9959 = vunpack.c.l.b16 %v9876
        %v9960 = vunpack.c.l.b16 %v9880
        %v9961 = vunpack.c.l.b16 %v9883
        %v9962 = vunpack.c.l.b16 %v9887
        %v9963 = vunpack.c.l.b16 %v9890
        %v9964 = vunpack.c.l.b16 %v9894
        %v9965 = vunpack.c.l.b16 %v9897
        %v9966 = vunpack.c.l.b16 %v9901
        %v9967 = vunpack.c.l.b16 %v9904
        %v9968 = vunpack.c.l.b16 %v9908
        %v9969 = vunpack.c.l.b16 %v9911
        %v9970 = vunpack.c.l.b16 %v9915
        %v9971 = vunpack.c.l.b16 %v9918
        %v9972 = vunpack.c.l.b16 %v9922
        %v9973 = vunpack.c.l.b16 %v9925
        %v9974 = vpack.c.b16 %v9943, %v9942
        %v9975 = vpack.c.b16 %v9945, %v9944
        %v9976 = vpack.c.b16 %v9947, %v9946
        %v9977 = vpack.c.b16 %v9949, %v9948
        %v9978 = vpack.c.b16 %v9951, %v9950
        %v9979 = vpack.c.b16 %v9953, %v9952
        %v9980 = vpack.c.b16 %v9955, %v9954
        %v9981 = vpack.c.b16 %v9957, %v9956
        %v9982 = vpack.c.b16 %v9959, %v9958
        %v9983 = vpack.c.b16 %v9961, %v9960
        %v9984 = vpack.c.b16 %v9963, %v9962
        %v9985 = vpack.c.b16 %v9965, %v9964
        %v9986 = vpack.c.b16 %v9967, %v9966
        %v9987 = vpack.c.b16 %v9969, %v9968
        %v9988 = vpack.c.b16 %v9971, %v9970
        %v9989 = vpack.c.b16 %v9973, %v9972
        %v10022 = vunpack.c.l.b16 %v9926
        %v10023 = vunpack.c.l.b16 %v9927
        %v10024 = vunpack.c.l.b16 %v9928
        %v10025 = vunpack.c.l.b16 %v9929
        %v10026 = vunpack.c.l.b16 %v9930
        %v10027 = vunpack.c.l.b16 %v9931
        %v10028 = vunpack.c.l.b16 %v9932
        %v10029 = vunpack.c.l.b16 %v9933
        %v10030 = vunpack.c.l.b16 %v9934
        %v10031 = vunpack.c.l.b16 %v9935
        %v10032 = vunpack.c.l.b16 %v9936
        %v10033 = vunpack.c.l.b16 %v9937
        %v10034 = vunpack.c.l.b16 %v9938
        %v10035 = vunpack.c.l.b16 %v9939
        %v10036 = vunpack.c.l.b16 %v9940
        %v10037 = vunpack.c.l.b16 %v9941
        %v10038 = vpack.c.b16 %v10023, %v10022
        %v10039 = vpack.c.b16 %v10025, %v10024
        %v10040 = vpack.c.b16 %v10027, %v10026
        %v10041 = vpack.c.b16 %v10029, %v10028
        %v10042 = vpack.c.b16 %v10031, %v10030
        %v10043 = vpack.c.b16 %v10033, %v10032
        %v10044 = vpack.c.b16 %v10035, %v10034
        %v10045 = vpack.c.b16 %v10037, %v10036
        %10054 = vmatpush.bf16.msra.mxu0 %v10045
        %10055 = vmatpush.bf16.msra.mxu0 %v10044
        %10056 = vmatpush.bf16.msra.mxu0 %v10043
        %10057 = vmatpush.bf16.msra.mxu0 %v10042
        %10058 = vmatpush.bf16.msra.mxu0 %v10041
        %10059 = vmatpush.bf16.msra.mxu0 %v10040
        %10060 = vmatpush.bf16.msra.mxu0 %v10039
        %10061 = vmatpush.bf16.msra.mxu0 %v10038
        %10062 = vmatmul.bf16.gmra.mxu0 %v9974
        %v10063 = vpop.f32.mrf.mxu0
        %v10064 = vadd.f32 0.0, %v10063
        %v10065 = vpop.f32.mrf.mxu0
        %v10066 = vadd.f32 0.0, %v10065
        %10067 = vmatmul.bf16.gmra.mxu0 %v9975
        %v10068 = vpop.f32.mrf.mxu0
        %v10069 = vadd.f32 0.0, %v10068
        %v10070 = vpop.f32.mrf.mxu0
        %v10071 = vadd.f32 0.0, %v10070
        %10072 = vmatmul.bf16.gmra.mxu0 %v9976
        %v10073 = vpop.f32.mrf.mxu0
        %v10074 = vadd.f32 0.0, %v10073
        %v10075 = vpop.f32.mrf.mxu0
        %v10076 = vadd.f32 0.0, %v10075
        %10077 = vmatmul.bf16.gmra.mxu0 %v9977
        %v10078 = vpop.f32.mrf.mxu0
        %v10079 = vadd.f32 0.0, %v10078
        %v10080 = vpop.f32.mrf.mxu0
        %v10081 = vadd.f32 0.0, %v10080
        %10082 = vmatmul.bf16.gmra.mxu0 %v9978
        %v10083 = vpop.f32.mrf.mxu0
        %v10084 = vadd.f32 0.0, %v10083
        %v10085 = vpop.f32.mrf.mxu0
        %v10086 = vadd.f32 0.0, %v10085
        %10087 = vmatmul.bf16.gmra.mxu0 %v9979
        %v10088 = vpop.f32.mrf.mxu0
        %v10089 = vadd.f32 0.0, %v10088
        %v10090 = vpop.f32.mrf.mxu0
        %v10091 = vadd.f32 0.0, %v10090
        %10092 = vmatmul.bf16.gmra.mxu0 %v9980
        %v10093 = vpop.f32.mrf.mxu0
        %v10094 = vadd.f32 0.0, %v10093
        %v10095 = vpop.f32.mrf.mxu0
        %v10096 = vadd.f32 0.0, %v10095
        %10097 = vmatmul.bf16.gmra.mxu0 %v9981
        %v10098 = vpop.f32.mrf.mxu0
        %v10099 = vadd.f32 0.0, %v10098
        %v10100 = vpop.f32.mrf.mxu0
        %v10101 = vadd.f32 0.0, %v10100
        %10102 = vmatmul.bf16.gmra.mxu0 %v9982
        %v10103 = vpop.f32.mrf.mxu0
        %v10104 = vadd.f32 0.0, %v10103
        %v10105 = vpop.f32.mrf.mxu0
        %v10106 = vadd.f32 0.0, %v10105
        %10107 = vmatmul.bf16.gmra.mxu0 %v9983
        %v10108 = vpop.f32.mrf.mxu0
        %v10109 = vadd.f32 0.0, %v10108
        %v10110 = vpop.f32.mrf.mxu0
        %v10111 = vadd.f32 0.0, %v10110
        %10112 = vmatmul.bf16.gmra.mxu0 %v9984
        %v10113 = vpop.f32.mrf.mxu0
        %v10114 = vadd.f32 0.0, %v10113
        %v10115 = vpop.f32.mrf.mxu0
        %v10116 = vadd.f32 0.0, %v10115
        %10117 = vmatmul.bf16.gmra.mxu0 %v9985
        %v10118 = vpop.f32.mrf.mxu0
        %v10119 = vadd.f32 0.0, %v10118
        %v10120 = vpop.f32.mrf.mxu0
        %v10121 = vadd.f32 0.0, %v10120
        %10122 = vmatmul.bf16.gmra.mxu0 %v9986
        %v10123 = vpop.f32.mrf.mxu0
        %v10124 = vadd.f32 0.0, %v10123
        %v10125 = vpop.f32.mrf.mxu0
        %v10126 = vadd.f32 0.0, %v10125
        %10127 = vmatmul.bf16.gmra.mxu0 %v9987
        %v10128 = vpop.f32.mrf.mxu0
        %v10129 = vadd.f32 0.0, %v10128
        %v10130 = vpop.f32.mrf.mxu0
        %v10131 = vadd.f32 0.0, %v10130
        %10132 = vmatmul.bf16.gmra.mxu0 %v9988
        %v10133 = vpop.f32.mrf.mxu0
        %v10134 = vadd.f32 0.0, %v10133
        %v10135 = vpop.f32.mrf.mxu0
        %v10136 = vadd.f32 0.0, %v10135
        %10137 = vmatmul.bf16.gmra.mxu0 %v9989
        %v10138 = vpop.f32.mrf.mxu0
        %v10139 = vadd.f32 0.0, %v10138
        %v10140 = vpop.f32.mrf.mxu0
        %v10141 = vadd.f32 0.0, %v10140
        %10142 = vdwg.mxu0
        %v10143 = vadd.f32 %v9718, %v10064
        %v10144 = vadd.f32 %v9719, %v10066
        %v10145 = vadd.f32 %v9720, %v10069
        %v10146 = vadd.f32 %v9721, %v10071
        %v10147 = vadd.f32 %v9722, %v10074
        %v10148 = vadd.f32 %v9723, %v10076
        %v10149 = vadd.f32 %v9724, %v10079
        %v10150 = vadd.f32 %v9725, %v10081
        %v10151 = vadd.f32 %v9726, %v10084
        %v10152 = vadd.f32 %v9727, %v10086
        %v10153 = vadd.f32 %v9728, %v10089
        %v10154 = vadd.f32 %v9729, %v10091
        %v10155 = vadd.f32 %v9730, %v10094
        %v10156 = vadd.f32 %v9731, %v10096
        %v10157 = vadd.f32 %v9732, %v10099
        %v10158 = vadd.f32 %v9733, %v10101
        %v10159 = vadd.f32 %v9734, %v10104
        %v10160 = vadd.f32 %v9735, %v10106
        %v10161 = vadd.f32 %v9736, %v10109
        %v10162 = vadd.f32 %v9737, %v10111
        %v10163 = vadd.f32 %v9738, %v10114
        %v10164 = vadd.f32 %v9739, %v10116
        %v10165 = vadd.f32 %v9740, %v10119
        %v10166 = vadd.f32 %v9741, %v10121
        %v10167 = vadd.f32 %v9742, %v10124
        %v10168 = vadd.f32 %v9743, %v10126
        %v10169 = vadd.f32 %v9744, %v10129
        %v10170 = vadd.f32 %v9745, %v10131
        %v10171 = vadd.f32 %v9746, %v10134
        %v10172 = vadd.f32 %v9747, %v10136
        %v10173 = vadd.f32 %v9748, %v10139
        %v10174 = vadd.f32 %v9749, %v10141
        %v10175 = vld [vmem:[%s4] sm:$0x1]
        %v10177 = vperm.slane %v10175, 0
        %v10179 = vadd.f32 %v10143, %v10177
        %v10180 = vadd.f32 %v10144, %v10177
        %v10181 = vadd.f32 %v10145, %v10177
        %v10182 = vadd.f32 %v10146, %v10177
        %v10183 = vadd.f32 %v10147, %v10177
        %v10184 = vadd.f32 %v10148, %v10177
        %v10185 = vadd.f32 %v10149, %v10177
        %v10186 = vadd.f32 %v10150, %v10177
        %v10187 = vadd.f32 %v10151, %v10177
        %v10188 = vadd.f32 %v10152, %v10177
        %v10189 = vadd.f32 %v10153, %v10177
        %v10190 = vadd.f32 %v10154, %v10177
        %v10191 = vadd.f32 %v10155, %v10177
        %v10192 = vadd.f32 %v10156, %v10177
        %v10193 = vadd.f32 %v10157, %v10177
        %v10194 = vadd.f32 %v10158, %v10177
        %v10195 = vadd.f32 %v10159, %v10177
        %v10196 = vadd.f32 %v10160, %v10177
        %v10197 = vadd.f32 %v10161, %v10177
        %v10198 = vadd.f32 %v10162, %v10177
        %v10199 = vadd.f32 %v10163, %v10177
        %v10200 = vadd.f32 %v10164, %v10177
        %v10201 = vadd.f32 %v10165, %v10177
        %v10202 = vadd.f32 %v10166, %v10177
        %v10203 = vadd.f32 %v10167, %v10177
        %v10204 = vadd.f32 %v10168, %v10177
        %v10205 = vadd.f32 %v10169, %v10177
        %v10206 = vadd.f32 %v10170, %v10177
        %v10207 = vadd.f32 %v10171, %v10177
        %v10208 = vadd.f32 %v10172, %v10177
        %v10209 = vadd.f32 %v10173, %v10177
        %v10210 = vadd.f32 %v10174, %v10177
        %v10211 = vadd.f32 %v10179, %v5997
        %v10212 = vadd.f32 %v10180, %v5998
        %v10213 = vadd.f32 %v10181, %v5999
        %v10214 = vadd.f32 %v10182, %v6000
        %v10215 = vadd.f32 %v10183, %v6001
        %v10216 = vadd.f32 %v10184, %v6002
        %v10217 = vadd.f32 %v10185, %v6003
        %v10218 = vadd.f32 %v10186, %v6004
        %v10219 = vadd.f32 %v10187, %v6005
        %v10220 = vadd.f32 %v10188, %v6006
        %v10221 = vadd.f32 %v10189, %v6007
        %v10222 = vadd.f32 %v10190, %v6008
        %v10223 = vadd.f32 %v10191, %v6009
        %v10224 = vadd.f32 %v10192, %v6010
        %v10225 = vadd.f32 %v10193, %v6011
        %v10226 = vadd.f32 %v10194, %v6012
        %v10227 = vadd.f32 %v10195, %v6013
        %v10228 = vadd.f32 %v10196, %v6014
        %v10229 = vadd.f32 %v10197, %v6015
        %v10230 = vadd.f32 %v10198, %v6016
        %v10231 = vadd.f32 %v10199, %v6017
        %v10232 = vadd.f32 %v10200, %v6018
        %v10233 = vadd.f32 %v10201, %v6019
        %v10234 = vadd.f32 %v10202, %v6020
        %v10235 = vadd.f32 %v10203, %v6021
        %v10236 = vadd.f32 %v10204, %v6022
        %v10237 = vadd.f32 %v10205, %v6023
        %v10238 = vadd.f32 %v10206, %v6024
        %v10239 = vadd.f32 %v10207, %v6025
        %v10240 = vadd.f32 %v10208, %v6026
        %v10241 = vadd.f32 %v10209, %v6027
        %v10242 = vadd.f32 %v10210, %v6028
        %v10243 = vmax.f32 %v10211, 0.0
        %v10244 = vmax.f32 %v10212, 0.0
        %v10245 = vmax.f32 %v10213, 0.0
        %v10246 = vmax.f32 %v10214, 0.0
        %v10247 = vmax.f32 %v10215, 0.0
        %v10248 = vmax.f32 %v10216, 0.0
        %v10249 = vmax.f32 %v10217, 0.0
        %v10250 = vmax.f32 %v10218, 0.0
        %v10251 = vmax.f32 %v10219, 0.0
        %v10252 = vmax.f32 %v10220, 0.0
        %v10253 = vmax.f32 %v10221, 0.0
        %v10254 = vmax.f32 %v10222, 0.0
        %v10255 = vmax.f32 %v10223, 0.0
        %v10256 = vmax.f32 %v10224, 0.0
        %v10257 = vmax.f32 %v10225, 0.0
        %v10258 = vmax.f32 %v10226, 0.0
        %v10259 = vmax.f32 %v10227, 0.0
        %v10260 = vmax.f32 %v10228, 0.0
        %v10261 = vmax.f32 %v10229, 0.0
        %v10262 = vmax.f32 %v10230, 0.0
        %v10263 = vmax.f32 %v10231, 0.0
        %v10264 = vmax.f32 %v10232, 0.0
        %v10265 = vmax.f32 %v10233, 0.0
        %v10266 = vmax.f32 %v10234, 0.0
        %v10267 = vmax.f32 %v10235, 0.0
        %v10268 = vmax.f32 %v10236, 0.0
        %v10269 = vmax.f32 %v10237, 0.0
        %v10270 = vmax.f32 %v10238, 0.0
        %v10271 = vmax.f32 %v10239, 0.0
        %v10272 = vmax.f32 %v10240, 0.0
        %v10273 = vmax.f32 %v10241, 0.0
        %v10274 = vmax.f32 %v10242, 0.0
        %v10275 = vpack.c.bf16 %v10243, %v10243
        %v10276 = vpack.c.bf16 %v10244, %v10244
        %v10277 = vpack.c.bf16 %v10245, %v10245
        %v10278 = vpack.c.bf16 %v10246, %v10246
        %v10279 = vpack.c.bf16 %v10247, %v10247
        %v10280 = vpack.c.bf16 %v10248, %v10248
        %v10281 = vpack.c.bf16 %v10249, %v10249
        %v10282 = vpack.c.bf16 %v10250, %v10250
        %v10283 = vpack.c.bf16 %v10251, %v10251
        %v10284 = vpack.c.bf16 %v10252, %v10252
        %v10285 = vpack.c.bf16 %v10253, %v10253
        %v10286 = vpack.c.bf16 %v10254, %v10254
        %v10287 = vpack.c.bf16 %v10255, %v10255
        %v10288 = vpack.c.bf16 %v10256, %v10256
        %v10289 = vpack.c.bf16 %v10257, %v10257
        %v10290 = vpack.c.bf16 %v10258, %v10258
        %v10291 = vpack.c.bf16 %v10259, %v10259
        %v10292 = vpack.c.bf16 %v10260, %v10260
        %v10293 = vpack.c.bf16 %v10261, %v10261
        %v10294 = vpack.c.bf16 %v10262, %v10262
        %v10295 = vpack.c.bf16 %v10263, %v10263
        %v10296 = vpack.c.bf16 %v10264, %v10264
        %v10297 = vpack.c.bf16 %v10265, %v10265
        %v10298 = vpack.c.bf16 %v10266, %v10266
        %v10299 = vpack.c.bf16 %v10267, %v10267
        %v10300 = vpack.c.bf16 %v10268, %v10268
        %v10301 = vpack.c.bf16 %v10269, %v10269
        %v10302 = vpack.c.bf16 %v10270, %v10270
        %v10303 = vpack.c.bf16 %v10271, %v10271
        %v10304 = vpack.c.bf16 %v10272, %v10272
        %v10305 = vpack.c.bf16 %v10273, %v10273
        %v10306 = vpack.c.bf16 %v10274, %v10274
        %10307 = vst [vmem:[%s251] sm:$0xf] %v10275
        %10308 = vst [vmem:[%s251 + $0x4] sm:$0xf] %v10276
        %10309 = vst [vmem:[%s251 + $0x8] sm:$0xf] %v10277
        %10310 = vst [vmem:[%s251 + $0xc] sm:$0xf] %v10278
        %10311 = vst [vmem:[%s251 + $0x10] sm:$0xf] %v10279
        %10312 = vst [vmem:[%s251 + $0x14] sm:$0xf] %v10280
        %10313 = vst [vmem:[%s251 + $0x18] sm:$0xf] %v10281
        %10314 = vst [vmem:[%s251 + $0x1c] sm:$0xf] %v10282
        %10315 = vst [vmem:[%s251 + $0x20] sm:$0xf] %v10283
        %10316 = vst [vmem:[%s251 + $0x24] sm:$0xf] %v10284
        %10317 = vst [vmem:[%s251 + $0x28] sm:$0xf] %v10285
        %10318 = vst [vmem:[%s251 + $0x2c] sm:$0xf] %v10286
        %10319 = vst [vmem:[%s251 + $0x30] sm:$0xf] %v10287
        %10320 = vst [vmem:[%s251 + $0x34] sm:$0xf] %v10288
        %10321 = vst [vmem:[%s251 + $0x38] sm:$0xf] %v10289
        %10322 = vst [vmem:[%s251 + $0x3c] sm:$0xf] %v10290
        %10323 = vst [vmem:[%s251 + $0x40] sm:$0xf] %v10291
        %10324 = vst [vmem:[%s251 + $0x44] sm:$0xf] %v10292
        %10325 = vst [vmem:[%s251 + $0x48] sm:$0xf] %v10293
        %10326 = vst [vmem:[%s251 + $0x4c] sm:$0xf] %v10294
        %10327 = vst [vmem:[%s251 + $0x50] sm:$0xf] %v10295
        %10328 = vst [vmem:[%s251 + $0x54] sm:$0xf] %v10296
        %10329 = vst [vmem:[%s251 + $0x58] sm:$0xf] %v10297
        %10330 = vst [vmem:[%s251 + $0x5c] sm:$0xf] %v10298
        %10331 = vst [vmem:[%s251 + $0x60] sm:$0xf] %v10299
        %10332 = vst [vmem:[%s251 + $0x64] sm:$0xf] %v10300
        %10333 = vst [vmem:[%s251 + $0x68] sm:$0xf] %v10301
        %10334 = vst [vmem:[%s251 + $0x6c] sm:$0xf] %v10302
        %10335 = vst [vmem:[%s251 + $0x70] sm:$0xf] %v10303
        %10336 = vst [vmem:[%s251 + $0x74] sm:$0xf] %v10304
        %10337 = vst [vmem:[%s251 + $0x78] sm:$0xf] %v10305
        %10338 = vst [vmem:[%s251 + $0x7c] sm:$0xf] %v10306
        %s10339 = sand.u32 %s139, 1
        %s10340 = scalar_lea.sflag [#allocation6], %s10339
        %s10341 = sand.u32 %s139, 1
        %s10342 = smul.addr %s10341, 128
        %s10343 = scalar_lea.vmem [#allocation9], %s10342
        // Predicated region
        $region53: #{tpu_custom_call.1} parent=39 // pred_check
          %p10344 = pneg %p149
        $region54: #{tpu_custom_call.1} parent=39 // pred_check_branch
          %10346 = sbr.rel (%p10344) target = $region56
        $region55: #{tpu_custom_call.1} parent=39 // pred_region
          %10348 = vsyncadd %s10340, 0
          %s10349 = smul.addr %s21, 32
          %s10350 = smul.addr %s10349, 4
          %s10351 = scalar_lea.hbm %s5, %s10350
          %s10352 = sshll.u32 %s10343, 4
          %s10353 = int_to_ptr.vmem [resolvable:$true] %s10352
          %s10354 = sshll.u32 %s10351, 4
          %s10355 = int_to_ptr.hbm [resolvable:$true] %s10354
          %10360 = dma.vmem_to_hbm [thread:$0]  %s10353, 2048, %s10355, %s10340, 64, 64, 4
        $region56: #{tpu_custom_call.1} parent=39 // pred_fallthru
          _
      $region40: #{tpu_custom_call.1} parent=5 // pred_fallthru
        _
      %p10361 = scmp.le.s32.totalorder 2, %s16
      // Predicated region
      $region57: #{tpu_custom_call.1} parent=5 // pred_check
        %p10362 = pneg %p10361
      $region58: #{tpu_custom_call.1} parent=5 // pred_check_branch
        %10364 = sbr.rel (%p10362) target = $region60
      $region59: #{tpu_custom_call.1} parent=5 // pred_region
        %s10365 = ssub.s32 %s16, 2
        // Predicated region
        $region61: #{tpu_custom_call.1} parent=59 // pred_check
          %p10366 = pneg %p155
        $region62: #{tpu_custom_call.1} parent=59 // pred_check_branch
          %10368 = sbr.rel (%p10366) target = $region64
        $region63: #{tpu_custom_call.1} parent=59 // pred_region
          %s10369 = sand.u32 %s140, 1
          %s10370 = scalar_lea.sflag [#allocation6], %s10369
          %s10371 = sand.u32 %s140, 1
          %s10372 = smul.addr %s10371, 128
          %s10373 = scalar_lea.vmem [#allocation9], %s10372
          %10375 = dma.done %s10370, 2048
        $region64: #{tpu_custom_call.1} parent=59 // pred_fallthru
          _
      $region60: #{tpu_custom_call.1} parent=5 // pred_fallthru
        _
    $region6: #{tpu_custom_call.1} parent=1 // loop_footer
      %s20 = sadd.s32 1, %s16
    $region7: #{tpu_custom_call.1} parent=1 // loop_footer_branch
      %15 = sbr.rel target = $region3
    $region8: #{tpu_custom_call.1} parent=1 // loop_exit
      _
    %10376 = vsyncpa [#allocation5], 1
    %s10377 = scalar_lea.sflag [#allocation5], 1
    %10378 = vsyncpa %s10377, 1
    %10379 = vsyncpa [#allocation8], 1
    %10380 = vsyncpa [#allocation6], 1
    %s10381 = scalar_lea.sflag [#allocation6], 1
    %10382 = vsyncpa %s10381, 1

</llo_original>
